<compile_context>
chip_gen: v5e
topology: v5e:2x2
jax: 0.10.0
libtpu: 0.0.40
codegen_flags: <defaults>
</compile_context>

<pallas_src>
import jax
import jax.numpy as jnp
from jax import lax
from jax.experimental import pallas as pl
from jax.experimental.pallas import tpu as pltpu


# ---------------------------------------------------------------------------
# Fused kernel: conv + relu + maxpool(ceil) + flatten + linear
# ---------------------------------------------------------------------------
def tudui_fused_kernel(cw_ref, cb_ref, x_ref, w_ref, b_ref, out_ref,
                       y_scr, feat_scr):
    # cw_ref:  SMEM (81,)   conv weights (Cout,Cin,3,3) flattened row-major
    # cb_ref:  SMEM (3,)    conv bias
    # x_ref:   VMEM (N, Cin, H+2, W+2)  zero-padded input
    # w_ref:   VMEM (1536, 10)          widened linear weight (odd pooled-col rows = 0)
    # b_ref:   VMEM (1, 10)             linear bias
    # out_ref: VMEM (N, 10)
    # y_scr:   VMEM (N, Cout, H+2, W+2) relu(conv) staging (zero border = ceil-mode pad)
    # feat_scr:VMEM (N, Cout*OH*W)      lane-dense widened feature matrix
    N, Cin, Hp, Wp = x_ref.shape
    H, W = Hp - 2, Wp - 2                    # 32, 32
    Cout = cb_ref.shape[0]                   # 3
    OH = -(-(H - 3) // 2) + 1                # 16 (ceil mode)

    # Zero the staging buffer: rows/cols >= H,W stay 0, which is exactly the
    # ceil-mode padding needed after ReLU (relu >= 0, so 0-pad == "ignore").
    y_scr[...] = jnp.zeros_like(y_scr)

    # ---- Conv2d(3,3,3,stride=1,pad=1) + ReLU (VPU shifted-slice formulation) ----
    for co in range(Cout):
        acc = jnp.zeros((N, H, W), jnp.float32)
        for ci in range(Cin):
            for dy in range(3):
                band = x_ref[:, ci, dy:dy + H, :]              # (N, H, W+2)
                for dx in range(3):
                    wv = cw_ref[((co * Cin + ci) * 3 + dy) * 3 + dx]
                    acc = acc + wv * band[:, :, dx:dx + W]
        y_scr[:, co, 0:H, 0:W] = jnp.maximum(acc + cb_ref[co], 0.0)

    # ---- MaxPool2d(3, stride=2, ceil_mode=True) + Flatten ----
    # For each pooled row i: 3x3 window max at ALL column offsets -> lane-dense (N, W)
    # slab stored at lane offset (c*OH + i)*W.  Even lanes are the real pooled values,
    # odd lanes are multiplied by the zero rows interleaved into w_ref.
    for c in range(Cout):
        for i in range(OH):
            r0 = 2 * i
            row3 = jnp.maximum(jnp.maximum(y_scr[:, c, r0, :],
                                           y_scr[:, c, r0 + 1, :]),
                               y_scr[:, c, r0 + 2, :])          # (N, W+2)
            cm = jnp.maximum(jnp.maximum(row3[:, 0:W], row3[:, 1:W + 1]),
                             row3[:, 2:W + 2])                  # (N, W)
            feat_scr[:, (c * OH + i) * W:(c * OH + i + 1) * W] = cm

    # ---- Linear(768 -> 10): one MXU dot on the widened weight ----
    out_ref[...] = jnp.dot(feat_scr[...], w_ref[...],
                           preferred_element_type=jnp.float32) + b_ref[...]


# ---------------------------------------------------------------------------
# Forward wrapper
# ---------------------------------------------------------------------------
def tudui_forward(x, conv_w, conv_b, lin_w, lin_b):
    N, Cin, H, W = x.shape                       # (2, 3, 32, 32)
    Cout = conv_w.shape[0]                       # 3
    K = lin_w.shape[0]                           # 10
    OH = -(-(H - 3) // 2) + 1                    # 16
    OW = -(-(W - 3) // 2) + 1                    # 16
    assert W == 2 * OW and Cout * OH * OW == lin_w.shape[1]

    # conv padding=1 (only activation-path glue left in the wrapper)
    x_pad = jnp.pad(x, ((0, 0), (0, 0), (1, 1), (1, 1)))

    # Widen the linear weight: row (c*OH+i)*W + 2j carries lin_w[:, c*OH*OW + i*OW + j],
    # odd rows are zero -> the in-kernel feature slabs need no stride-2 lane gather,
    # and lin_w is consumed without any per-call transpose inside the kernel.
    wt = jnp.transpose(lin_w).reshape(Cout * OH, OW, K)                  # (48, 16, 10)
    w_wide = jnp.stack([wt, jnp.zeros_like(wt)], axis=2).reshape(Cout * OH * W, K)

    return pl.pallas_call(
        tudui_fused_kernel,
        out_shape=jax.ShapeDtypeStruct((N, K), jnp.float32),
        in_specs=[
            pl.BlockSpec(memory_space=pltpu.MemorySpace.SMEM),   # conv weights (flat)
            pl.BlockSpec(memory_space=pltpu.MemorySpace.SMEM),   # conv bias
            pl.BlockSpec(memory_space=pltpu.MemorySpace.VMEM),   # padded input
            pl.BlockSpec(memory_space=pltpu.MemorySpace.VMEM),   # widened linear weight
            pl.BlockSpec(memory_space=pltpu.MemorySpace.VMEM),   # linear bias (1, K)
        ],
        out_specs=pl.BlockSpec(memory_space=pltpu.MemorySpace.VMEM),
        scratch_shapes=[
            pltpu.VMEM((N, Cout, H + 2, W + 2), jnp.float32),    # relu(conv) + 0-pad
            pltpu.VMEM((N, Cout * OH * W), jnp.float32),         # widened features
        ],
    )(conv_w.reshape(-1), conv_b, x_pad, w_wide, lin_b.reshape(1, -1))


# ---------------------------------------------------------------------------
# Pure-JAX reference (high precision, for correctness check)
# ---------------------------------------------------------------------------
def ref_forward(x, conv_w, conv_b, lin_w, lin_b):
    hp = lax.Precision.HIGHEST
    y = lax.conv_general_dilated(
        x, conv_w, window_strides=(1, 1), padding=((1, 1), (1, 1)),
        dimension_numbers=("NCHW", "OIHW", "NCHW"), precision=hp)
    y = y + conv_b[None, :, None, None]
    y = jnp.pad(y, ((0, 0), (0, 0), (0, 1), (0, 1)), constant_values=-jnp.inf)
    y = lax.reduce_window(y, -jnp.inf, lax.max, (1, 1, 3, 3), (1, 1, 2, 2), "VALID")
    y = jnp.maximum(y, 0.0)
    y = y.reshape(y.shape[0], -1)
    return jnp.dot(y, lin_w.T, precision=hp) + lin_b


if __name__ == "__main__":
    key = jax.random.PRNGKey(0)
    k_x, k_cw, k_cb, k_lw, k_lb = jax.random.split(key, 5)

    # Linear(768,10) with 3 channels and 16x16 pooled output => input (N, 3, 32, 32).
    N, Cin, H, W = 2, 3, 32, 32
    x = jax.random.normal(k_x, (N, Cin, H, W), dtype=jnp.float32)

    # Deterministic parameter init (PyTorch-like uniform bounds).
    kc = 1.0 / jnp.sqrt(3.0 * 3.0 * 3.0)
    conv_w = jax.random.uniform(k_cw, (3, 3, 3, 3), jnp.float32, -kc, kc)
    conv_b = jax.random.uniform(k_cb, (3,), jnp.float32, -kc, kc)
    kl = 1.0 / jnp.sqrt(768.0)
    lin_w = jax.random.uniform(k_lw, (10, 768), jnp.float32, -kl, kl)
    lin_b = jax.random.uniform(k_lb, (10,), jnp.float32, -kl, kl)

    fwd = jax.jit(tudui_forward)
    out = jax.block_until_ready(fwd(x, conv_w, conv_b, lin_w, lin_b))

    ref = jax.block_until_ready(ref_forward(x, conv_w, conv_b, lin_w, lin_b))
    assert out.shape == (N, 10), out.shape
    max_err = float(jnp.max(jnp.abs(out - ref)))
    # Tightened vs. previous 3e-2; margin left only for f32 MXU multi-pass rounding.
    assert max_err < 2e-3, f"max abs error {max_err}"

    print("KERNEL_OK")
</pallas_src>

<mosaic_0001>
module attributes {stable_mosaic.version = 11 : i64} {
  func.func @tudui_fused_kernel(%arg0: memref<81xf32, #tpu.memory_space<smem>>, %arg1: memref<3xf32, #tpu.memory_space<smem>>, %arg2: memref<2x3x34x34xf32, #tpu.memory_space<vmem>>, %arg3: memref<1536x10xf32, #tpu.memory_space<vmem>>, %arg4: memref<1x10xf32, #tpu.memory_space<vmem>>, %arg5: memref<2x10xf32, #tpu.memory_space<vmem>>, %arg6: memref<2x3x34x34xf32, #tpu.memory_space<vmem>>, %arg7: memref<2x1536xf32, #tpu.memory_space<vmem>>) attributes {dimension_semantics = [], scalar_prefetch = 0 : i64, scratch_operands = 2 : i64, tpu.core_type = #tpu.core_type<tc>} {
    %cst = arith.constant 0.000000e+00 : f32
    %0 = vector.broadcast %cst : f32 to vector<2x3x34x34xf32>
    %c0 = arith.constant 0 : index
    %c0_0 = arith.constant 0 : index
    %c0_1 = arith.constant 0 : index
    %c0_2 = arith.constant 0 : index
    %1 = vector.load %arg6[%c0, %c0_0, %c0_1, %c0_2] : memref<2x3x34x34xf32, #tpu.memory_space<vmem>>, vector<2x3x34x34xf32>
    tpu.vector_store %arg6[%c0, %c0_0, %c0_1, %c0_2], %0 {strides = array<i32>} : memref<2x3x34x34xf32, #tpu.memory_space<vmem>>, vector<2x3x34x34xf32>,
    %cst_3 = arith.constant 0.000000e+00 : f32
    %2 = vector.broadcast %cst_3 : f32 to vector<2x32x32xf32>
    %c0_4 = arith.constant 0 : index
    %c0_5 = arith.constant 0 : index
    %c0_6 = arith.constant 0 : index
    %c0_7 = arith.constant 0 : index
    %3 = vector.load %arg2[%c0_4, %c0_5, %c0_6, %c0_7] : memref<2x3x34x34xf32, #tpu.memory_space<vmem>>, vector<2x1x32x34xf32>
    %4 = vector.shape_cast %3 : vector<2x1x32x34xf32> to vector<2x32x34xf32>
    %c0_8 = arith.constant 0 : index
    %5 = memref.load %arg0[%c0_8] : memref<81xf32, #tpu.memory_space<smem>>
    %6 = vector.extract_strided_slice %4 {offsets = [0, 0, 0], sizes = [2, 32, 32], strides = [1, 1, 1]} : vector<2x32x34xf32> to vector<2x32x32xf32>
    %7 = vector.broadcast %5 : f32 to vector<2x32x32xf32>
    %8 = arith.mulf %7, %6 : vector<2x32x32xf32>
    %9 = arith.addf %2, %8 : vector<2x32x32xf32>
    %c1 = arith.constant 1 : index
    %10 = memref.load %arg0[%c1] : memref<81xf32, #tpu.memory_space<smem>>
    %11 = vector.extract_strided_slice %4 {offsets = [0, 0, 1], sizes = [2, 32, 32], strides = [1, 1, 1]} : vector<2x32x34xf32> to vector<2x32x32xf32>
    %12 = vector.broadcast %10 : f32 to vector<2x32x32xf32>
    %13 = arith.mulf %12, %11 : vector<2x32x32xf32>
    %14 = arith.addf %9, %13 : vector<2x32x32xf32>
    %c2 = arith.constant 2 : index
    %15 = memref.load %arg0[%c2] : memref<81xf32, #tpu.memory_space<smem>>
    %16 = vector.extract_strided_slice %4 {offsets = [0, 0, 2], sizes = [2, 32, 32], strides = [1, 1, 1]} : vector<2x32x34xf32> to vector<2x32x32xf32>
    %17 = vector.broadcast %15 : f32 to vector<2x32x32xf32>
    %18 = arith.mulf %17, %16 : vector<2x32x32xf32>
    %19 = arith.addf %14, %18 : vector<2x32x32xf32>
    %c0_9 = arith.constant 0 : index
    %c0_10 = arith.constant 0 : index
    %c1_11 = arith.constant 1 : index
    %c0_12 = arith.constant 0 : index
    %20 = vector.load %arg2[%c0_9, %c0_10, %c1_11, %c0_12] : memref<2x3x34x34xf32, #tpu.memory_space<vmem>>, vector<2x1x32x34xf32>
    %21 = vector.shape_cast %20 : vector<2x1x32x34xf32> to vector<2x32x34xf32>
    %c3 = arith.constant 3 : index
    %22 = memref.load %arg0[%c3] : memref<81xf32, #tpu.memory_space<smem>>
    %23 = vector.extract_strided_slice %21 {offsets = [0, 0, 0], sizes = [2, 32, 32], strides = [1, 1, 1]} : vector<2x32x34xf32> to vector<2x32x32xf32>
    %24 = vector.broadcast %22 : f32 to vector<2x32x32xf32>
    %25 = arith.mulf %24, %23 : vector<2x32x32xf32>
    %26 = arith.addf %19, %25 : vector<2x32x32xf32>
    %c4 = arith.constant 4 : index
    %27 = memref.load %arg0[%c4] : memref<81xf32, #tpu.memory_space<smem>>
    %28 = vector.extract_strided_slice %21 {offsets = [0, 0, 1], sizes = [2, 32, 32], strides = [1, 1, 1]} : vector<2x32x34xf32> to vector<2x32x32xf32>
    %29 = vector.broadcast %27 : f32 to vector<2x32x32xf32>
    %30 = arith.mulf %29, %28 : vector<2x32x32xf32>
    %31 = arith.addf %26, %30 : vector<2x32x32xf32>
    %c5 = arith.constant 5 : index
    %32 = memref.load %arg0[%c5] : memref<81xf32, #tpu.memory_space<smem>>
    %33 = vector.extract_strided_slice %21 {offsets = [0, 0, 2], sizes = [2, 32, 32], strides = [1, 1, 1]} : vector<2x32x34xf32> to vector<2x32x32xf32>
    %34 = vector.broadcast %32 : f32 to vector<2x32x32xf32>
    %35 = arith.mulf %34, %33 : vector<2x32x32xf32>
    %36 = arith.addf %31, %35 : vector<2x32x32xf32>
    %c0_13 = arith.constant 0 : index
    %c0_14 = arith.constant 0 : index
    %c2_15 = arith.constant 2 : index
    %c0_16 = arith.constant 0 : index
    %37 = vector.load %arg2[%c0_13, %c0_14, %c2_15, %c0_16] : memref<2x3x34x34xf32, #tpu.memory_space<vmem>>, vector<2x1x32x34xf32>
    %38 = vector.shape_cast %37 : vector<2x1x32x34xf32> to vector<2x32x34xf32>
    %c6 = arith.constant 6 : index
    %39 = memref.load %arg0[%c6] : memref<81xf32, #tpu.memory_space<smem>>
    %40 = vector.extract_strided_slice %38 {offsets = [0, 0, 0], sizes = [2, 32, 32], strides = [1, 1, 1]} : vector<2x32x34xf32> to vector<2x32x32xf32>
    %41 = vector.broadcast %39 : f32 to vector<2x32x32xf32>
    %42 = arith.mulf %41, %40 : vector<2x32x32xf32>
    %43 = arith.addf %36, %42 : vector<2x32x32xf32>
    %c7 = arith.constant 7 : index
    %44 = memref.load %arg0[%c7] : memref<81xf32, #tpu.memory_space<smem>>
    %45 = vector.extract_strided_slice %38 {offsets = [0, 0, 1], sizes = [2, 32, 32], strides = [1, 1, 1]} : vector<2x32x34xf32> to vector<2x32x32xf32>
    %46 = vector.broadcast %44 : f32 to vector<2x32x32xf32>
    %47 = arith.mulf %46, %45 : vector<2x32x32xf32>
    %48 = arith.addf %43, %47 : vector<2x32x32xf32>
    %c8 = arith.constant 8 : index
    %49 = memref.load %arg0[%c8] : memref<81xf32, #tpu.memory_space<smem>>
    %50 = vector.extract_strided_slice %38 {offsets = [0, 0, 2], sizes = [2, 32, 32], strides = [1, 1, 1]} : vector<2x32x34xf32> to vector<2x32x32xf32>
    %51 = vector.broadcast %49 : f32 to vector<2x32x32xf32>
    %52 = arith.mulf %51, %50 : vector<2x32x32xf32>
    %53 = arith.addf %48, %52 : vector<2x32x32xf32>
    %c0_17 = arith.constant 0 : index
    %c1_18 = arith.constant 1 : index
    %c0_19 = arith.constant 0 : index
    %c0_20 = arith.constant 0 : index
    %54 = vector.load %arg2[%c0_17, %c1_18, %c0_19, %c0_20] : memref<2x3x34x34xf32, #tpu.memory_space<vmem>>, vector<2x1x32x34xf32>
    %55 = vector.shape_cast %54 : vector<2x1x32x34xf32> to vector<2x32x34xf32>
    %c9 = arith.constant 9 : index
    %56 = memref.load %arg0[%c9] : memref<81xf32, #tpu.memory_space<smem>>
    %57 = vector.extract_strided_slice %55 {offsets = [0, 0, 0], sizes = [2, 32, 32], strides = [1, 1, 1]} : vector<2x32x34xf32> to vector<2x32x32xf32>
    %58 = vector.broadcast %56 : f32 to vector<2x32x32xf32>
    %59 = arith.mulf %58, %57 : vector<2x32x32xf32>
    %60 = arith.addf %53, %59 : vector<2x32x32xf32>
    %c10 = arith.constant 10 : index
    %61 = memref.load %arg0[%c10] : memref<81xf32, #tpu.memory_space<smem>>
    %62 = vector.extract_strided_slice %55 {offsets = [0, 0, 1], sizes = [2, 32, 32], strides = [1, 1, 1]} : vector<2x32x34xf32> to vector<2x32x32xf32>
    %63 = vector.broadcast %61 : f32 to vector<2x32x32xf32>
    %64 = arith.mulf %63, %62 : vector<2x32x32xf32>
    %65 = arith.addf %60, %64 : vector<2x32x32xf32>
    %c11 = arith.constant 11 : index
    %66 = memref.load %arg0[%c11] : memref<81xf32, #tpu.memory_space<smem>>
    %67 = vector.extract_strided_slice %55 {offsets = [0, 0, 2], sizes = [2, 32, 32], strides = [1, 1, 1]} : vector<2x32x34xf32> to vector<2x32x32xf32>
    %68 = vector.broadcast %66 : f32 to vector<2x32x32xf32>
    %69 = arith.mulf %68, %67 : vector<2x32x32xf32>
    %70 = arith.addf %65, %69 : vector<2x32x32xf32>
    %c0_21 = arith.constant 0 : index
    %c1_22 = arith.constant 1 : index
    %c1_23 = arith.constant 1 : index
    %c0_24 = arith.constant 0 : index
    %71 = vector.load %arg2[%c0_21, %c1_22, %c1_23, %c0_24] : memref<2x3x34x34xf32, #tpu.memory_space<vmem>>, vector<2x1x32x34xf32>
    %72 = vector.shape_cast %71 : vector<2x1x32x34xf32> to vector<2x32x34xf32>
    %c12 = arith.constant 12 : index
    %73 = memref.load %arg0[%c12] : memref<81xf32, #tpu.memory_space<smem>>
    %74 = vector.extract_strided_slice %72 {offsets = [0, 0, 0], sizes = [2, 32, 32], strides = [1, 1, 1]} : vector<2x32x34xf32> to vector<2x32x32xf32>
    %75 = vector.broadcast %73 : f32 to vector<2x32x32xf32>
    %76 = arith.mulf %75, %74 : vector<2x32x32xf32>
    %77 = arith.addf %70, %76 : vector<2x32x32xf32>
    %c13 = arith.constant 13 : index
    %78 = memref.load %arg0[%c13] : memref<81xf32, #tpu.memory_space<smem>>
    %79 = vector.extract_strided_slice %72 {offsets = [0, 0, 1], sizes = [2, 32, 32], strides = [1, 1, 1]} : vector<2x32x34xf32> to vector<2x32x32xf32>
    %80 = vector.broadcast %78 : f32 to vector<2x32x32xf32>
    %81 = arith.mulf %80, %79 : vector<2x32x32xf32>
    %82 = arith.addf %77, %81 : vector<2x32x32xf32>
    %c14 = arith.constant 14 : index
    %83 = memref.load %arg0[%c14] : memref<81xf32, #tpu.memory_space<smem>>
    %84 = vector.extract_strided_slice %72 {offsets = [0, 0, 2], sizes = [2, 32, 32], strides = [1, 1, 1]} : vector<2x32x34xf32> to vector<2x32x32xf32>
    %85 = vector.broadcast %83 : f32 to vector<2x32x32xf32>
    %86 = arith.mulf %85, %84 : vector<2x32x32xf32>
    %87 = arith.addf %82, %86 : vector<2x32x32xf32>
    %c0_25 = arith.constant 0 : index
    %c1_26 = arith.constant 1 : index
    %c2_27 = arith.constant 2 : index
    %c0_28 = arith.constant 0 : index
    %88 = vector.load %arg2[%c0_25, %c1_26, %c2_27, %c0_28] : memref<2x3x34x34xf32, #tpu.memory_space<vmem>>, vector<2x1x32x34xf32>
    %89 = vector.shape_cast %88 : vector<2x1x32x34xf32> to vector<2x32x34xf32>
    %c15 = arith.constant 15 : index
    %90 = memref.load %arg0[%c15] : memref<81xf32, #tpu.memory_space<smem>>
    %91 = vector.extract_strided_slice %89 {offsets = [0, 0, 0], sizes = [2, 32, 32], strides = [1, 1, 1]} : vector<2x32x34xf32> to vector<2x32x32xf32>
    %92 = vector.broadcast %90 : f32 to vector<2x32x32xf32>
    %93 = arith.mulf %92, %91 : vector<2x32x32xf32>
    %94 = arith.addf %87, %93 : vector<2x32x32xf32>
    %c16 = arith.constant 16 : index
    %95 = memref.load %arg0[%c16] : memref<81xf32, #tpu.memory_space<smem>>
    %96 = vector.extract_strided_slice %89 {offsets = [0, 0, 1], sizes = [2, 32, 32], strides = [1, 1, 1]} : vector<2x32x34xf32> to vector<2x32x32xf32>
    %97 = vector.broadcast %95 : f32 to vector<2x32x32xf32>
    %98 = arith.mulf %97, %96 : vector<2x32x32xf32>
    %99 = arith.addf %94, %98 : vector<2x32x32xf32>
    %c17 = arith.constant 17 : index
    %100 = memref.load %arg0[%c17] : memref<81xf32, #tpu.memory_space<smem>>
    %101 = vector.extract_strided_slice %89 {offsets = [0, 0, 2], sizes = [2, 32, 32], strides = [1, 1, 1]} : vector<2x32x34xf32> to vector<2x32x32xf32>
    %102 = vector.broadcast %100 : f32 to vector<2x32x32xf32>
    %103 = arith.mulf %102, %101 : vector<2x32x32xf32>
    %104 = arith.addf %99, %103 : vector<2x32x32xf32>
    %c0_29 = arith.constant 0 : index
    %c2_30 = arith.constant 2 : index
    %c0_31 = arith.constant 0 : index
    %c0_32 = arith.constant 0 : index
    %105 = vector.load %arg2[%c0_29, %c2_30, %c0_31, %c0_32] : memref<2x3x34x34xf32, #tpu.memory_space<vmem>>, vector<2x1x32x34xf32>
    %106 = vector.shape_cast %105 : vector<2x1x32x34xf32> to vector<2x32x34xf32>
    %c18 = arith.constant 18 : index
    %107 = memref.load %arg0[%c18] : memref<81xf32, #tpu.memory_space<smem>>
    %108 = vector.extract_strided_slice %106 {offsets = [0, 0, 0], sizes = [2, 32, 32], strides = [1, 1, 1]} : vector<2x32x34xf32> to vector<2x32x32xf32>
    %109 = vector.broadcast %107 : f32 to vector<2x32x32xf32>
    %110 = arith.mulf %109, %108 : vector<2x32x32xf32>
    %111 = arith.addf %104, %110 : vector<2x32x32xf32>
    %c19 = arith.constant 19 : index
    %112 = memref.load %arg0[%c19] : memref<81xf32, #tpu.memory_space<smem>>
    %113 = vector.extract_strided_slice %106 {offsets = [0, 0, 1], sizes = [2, 32, 32], strides = [1, 1, 1]} : vector<2x32x34xf32> to vector<2x32x32xf32>
    %114 = vector.broadcast %112 : f32 to vector<2x32x32xf32>
    %115 = arith.mulf %114, %113 : vector<2x32x32xf32>
    %116 = arith.addf %111, %115 : vector<2x32x32xf32>
    %c20 = arith.constant 20 : index
    %117 = memref.load %arg0[%c20] : memref<81xf32, #tpu.memory_space<smem>>
    %118 = vector.extract_strided_slice %106 {offsets = [0, 0, 2], sizes = [2, 32, 32], strides = [1, 1, 1]} : vector<2x32x34xf32> to vector<2x32x32xf32>
    %119 = vector.broadcast %117 : f32 to vector<2x32x32xf32>
    %120 = arith.mulf %119, %118 : vector<2x32x32xf32>
    %121 = arith.addf %116, %120 : vector<2x32x32xf32>
    %c0_33 = arith.constant 0 : index
    %c2_34 = arith.constant 2 : index
    %c1_35 = arith.constant 1 : index
    %c0_36 = arith.constant 0 : index
    %122 = vector.load %arg2[%c0_33, %c2_34, %c1_35, %c0_36] : memref<2x3x34x34xf32, #tpu.memory_space<vmem>>, vector<2x1x32x34xf32>
    %123 = vector.shape_cast %122 : vector<2x1x32x34xf32> to vector<2x32x34xf32>
    %c21 = arith.constant 21 : index
    %124 = memref.load %arg0[%c21] : memref<81xf32, #tpu.memory_space<smem>>
    %125 = vector.extract_strided_slice %123 {offsets = [0, 0, 0], sizes = [2, 32, 32], strides = [1, 1, 1]} : vector<2x32x34xf32> to vector<2x32x32xf32>
    %126 = vector.broadcast %124 : f32 to vector<2x32x32xf32>
    %127 = arith.mulf %126, %125 : vector<2x32x32xf32>
    %128 = arith.addf %121, %127 : vector<2x32x32xf32>
    %c22 = arith.constant 22 : index
    %129 = memref.load %arg0[%c22] : memref<81xf32, #tpu.memory_space<smem>>
    %130 = vector.extract_strided_slice %123 {offsets = [0, 0, 1], sizes = [2, 32, 32], strides = [1, 1, 1]} : vector<2x32x34xf32> to vector<2x32x32xf32>
    %131 = vector.broadcast %129 : f32 to vector<2x32x32xf32>
    %132 = arith.mulf %131, %130 : vector<2x32x32xf32>
    %133 = arith.addf %128, %132 : vector<2x32x32xf32>
    %c23 = arith.constant 23 : index
    %134 = memref.load %arg0[%c23] : memref<81xf32, #tpu.memory_space<smem>>
    %135 = vector.extract_strided_slice %123 {offsets = [0, 0, 2], sizes = [2, 32, 32], strides = [1, 1, 1]} : vector<2x32x34xf32> to vector<2x32x32xf32>
    %136 = vector.broadcast %134 : f32 to vector<2x32x32xf32>
    %137 = arith.mulf %136, %135 : vector<2x32x32xf32>
    %138 = arith.addf %133, %137 : vector<2x32x32xf32>
    %c0_37 = arith.constant 0 : index
    %c2_38 = arith.constant 2 : index
    %c2_39 = arith.constant 2 : index
    %c0_40 = arith.constant 0 : index
    %139 = vector.load %arg2[%c0_37, %c2_38, %c2_39, %c0_40] : memref<2x3x34x34xf32, #tpu.memory_space<vmem>>, vector<2x1x32x34xf32>
    %140 = vector.shape_cast %139 : vector<2x1x32x34xf32> to vector<2x32x34xf32>
    %c24 = arith.constant 24 : index
    %141 = memref.load %arg0[%c24] : memref<81xf32, #tpu.memory_space<smem>>
    %142 = vector.extract_strided_slice %140 {offsets = [0, 0, 0], sizes = [2, 32, 32], strides = [1, 1, 1]} : vector<2x32x34xf32> to vector<2x32x32xf32>
    %143 = vector.broadcast %141 : f32 to vector<2x32x32xf32>
    %144 = arith.mulf %143, %142 : vector<2x32x32xf32>
    %145 = arith.addf %138, %144 : vector<2x32x32xf32>
    %c25 = arith.constant 25 : index
    %146 = memref.load %arg0[%c25] : memref<81xf32, #tpu.memory_space<smem>>
    %147 = vector.extract_strided_slice %140 {offsets = [0, 0, 1], sizes = [2, 32, 32], strides = [1, 1, 1]} : vector<2x32x34xf32> to vector<2x32x32xf32>
    %148 = vector.broadcast %146 : f32 to vector<2x32x32xf32>
    %149 = arith.mulf %148, %147 : vector<2x32x32xf32>
    %150 = arith.addf %145, %149 : vector<2x32x32xf32>
    %c26 = arith.constant 26 : index
    %151 = memref.load %arg0[%c26] : memref<81xf32, #tpu.memory_space<smem>>
    %152 = vector.extract_strided_slice %140 {offsets = [0, 0, 2], sizes = [2, 32, 32], strides = [1, 1, 1]} : vector<2x32x34xf32> to vector<2x32x32xf32>
    %153 = vector.broadcast %151 : f32 to vector<2x32x32xf32>
    %154 = arith.mulf %153, %152 : vector<2x32x32xf32>
    %155 = arith.addf %150, %154 : vector<2x32x32xf32>
    %c0_41 = arith.constant 0 : index
    %156 = memref.load %arg1[%c0_41] : memref<3xf32, #tpu.memory_space<smem>>
    %157 = vector.broadcast %156 : f32 to vector<2x32x32xf32>
    %158 = arith.addf %155, %157 : vector<2x32x32xf32>
    %cst_42 = arith.constant 0.000000e+00 : f32
    %159 = vector.broadcast %cst_42 : f32 to vector<2x32x32xf32>
    %160 = arith.maximumf %158, %159 : vector<2x32x32xf32>
    %c0_43 = arith.constant 0 : index
    %c0_44 = arith.constant 0 : index
    %c0_45 = arith.constant 0 : index
    %c0_46 = arith.constant 0 : index
    %161 = vector.load %arg6[%c0_43, %c0_44, %c0_45, %c0_46] : memref<2x3x34x34xf32, #tpu.memory_space<vmem>>, vector<2x1x32x32xf32>
    %162 = vector.shape_cast %161 : vector<2x1x32x32xf32> to vector<2x32x32xf32>
    %163 = vector.shape_cast %160 : vector<2x32x32xf32> to vector<2x1x32x32xf32>
    tpu.vector_store %arg6[%c0_43, %c0_44, %c0_45, %c0_46], %163 {strides = array<i32>} : memref<2x3x34x34xf32, #tpu.memory_space<vmem>>, vector<2x1x32x32xf32>,
    %cst_47 = arith.constant 0.000000e+00 : f32
    %164 = vector.broadcast %cst_47 : f32 to vector<2x32x32xf32>
    %c0_48 = arith.constant 0 : index
    %c0_49 = arith.constant 0 : index
    %c0_50 = arith.constant 0 : index
    %c0_51 = arith.constant 0 : index
    %165 = vector.load %arg2[%c0_48, %c0_49, %c0_50, %c0_51] : memref<2x3x34x34xf32, #tpu.memory_space<vmem>>, vector<2x1x32x34xf32>
    %166 = vector.shape_cast %165 : vector<2x1x32x34xf32> to vector<2x32x34xf32>
    %c27 = arith.constant 27 : index
    %167 = memref.load %arg0[%c27] : memref<81xf32, #tpu.memory_space<smem>>
    %168 = vector.extract_strided_slice %166 {offsets = [0, 0, 0], sizes = [2, 32, 32], strides = [1, 1, 1]} : vector<2x32x34xf32> to vector<2x32x32xf32>
    %169 = vector.broadcast %167 : f32 to vector<2x32x32xf32>
    %170 = arith.mulf %169, %168 : vector<2x32x32xf32>
    %171 = arith.addf %164, %170 : vector<2x32x32xf32>
    %c28 = arith.constant 28 : index
    %172 = memref.load %arg0[%c28] : memref<81xf32, #tpu.memory_space<smem>>
    %173 = vector.extract_strided_slice %166 {offsets = [0, 0, 1], sizes = [2, 32, 32], strides = [1, 1, 1]} : vector<2x32x34xf32> to vector<2x32x32xf32>
    %174 = vector.broadcast %172 : f32 to vector<2x32x32xf32>
    %175 = arith.mulf %174, %173 : vector<2x32x32xf32>
    %176 = arith.addf %171, %175 : vector<2x32x32xf32>
    %c29 = arith.constant 29 : index
    %177 = memref.load %arg0[%c29] : memref<81xf32, #tpu.memory_space<smem>>
    %178 = vector.extract_strided_slice %166 {offsets = [0, 0, 2], sizes = [2, 32, 32], strides = [1, 1, 1]} : vector<2x32x34xf32> to vector<2x32x32xf32>
    %179 = vector.broadcast %177 : f32 to vector<2x32x32xf32>
    %180 = arith.mulf %179, %178 : vector<2x32x32xf32>
    %181 = arith.addf %176, %180 : vector<2x32x32xf32>
    %c0_52 = arith.constant 0 : index
    %c0_53 = arith.constant 0 : index
    %c1_54 = arith.constant 1 : index
    %c0_55 = arith.constant 0 : index
    %182 = vector.load %arg2[%c0_52, %c0_53, %c1_54, %c0_55] : memref<2x3x34x34xf32, #tpu.memory_space<vmem>>, vector<2x1x32x34xf32>
    %183 = vector.shape_cast %182 : vector<2x1x32x34xf32> to vector<2x32x34xf32>
    %c30 = arith.constant 30 : index
    %184 = memref.load %arg0[%c30] : memref<81xf32, #tpu.memory_space<smem>>
    %185 = vector.extract_strided_slice %183 {offsets = [0, 0, 0], sizes = [2, 32, 32], strides = [1, 1, 1]} : vector<2x32x34xf32> to vector<2x32x32xf32>
    %186 = vector.broadcast %184 : f32 to vector<2x32x32xf32>
    %187 = arith.mulf %186, %185 : vector<2x32x32xf32>
    %188 = arith.addf %181, %187 : vector<2x32x32xf32>
    %c31 = arith.constant 31 : index
    %189 = memref.load %arg0[%c31] : memref<81xf32, #tpu.memory_space<smem>>
    %190 = vector.extract_strided_slice %183 {offsets = [0, 0, 1], sizes = [2, 32, 32], strides = [1, 1, 1]} : vector<2x32x34xf32> to vector<2x32x32xf32>
    %191 = vector.broadcast %189 : f32 to vector<2x32x32xf32>
    %192 = arith.mulf %191, %190 : vector<2x32x32xf32>
    %193 = arith.addf %188, %192 : vector<2x32x32xf32>
    %c32 = arith.constant 32 : index
    %194 = memref.load %arg0[%c32] : memref<81xf32, #tpu.memory_space<smem>>
    %195 = vector.extract_strided_slice %183 {offsets = [0, 0, 2], sizes = [2, 32, 32], strides = [1, 1, 1]} : vector<2x32x34xf32> to vector<2x32x32xf32>
    %196 = vector.broadcast %194 : f32 to vector<2x32x32xf32>
    %197 = arith.mulf %196, %195 : vector<2x32x32xf32>
    %198 = arith.addf %193, %197 : vector<2x32x32xf32>
    %c0_56 = arith.constant 0 : index
    %c0_57 = arith.constant 0 : index
    %c2_58 = arith.constant 2 : index
    %c0_59 = arith.constant 0 : index
    %199 = vector.load %arg2[%c0_56, %c0_57, %c2_58, %c0_59] : memref<2x3x34x34xf32, #tpu.memory_space<vmem>>, vector<2x1x32x34xf32>
    %200 = vector.shape_cast %199 : vector<2x1x32x34xf32> to vector<2x32x34xf32>
    %c33 = arith.constant 33 : index
    %201 = memref.load %arg0[%c33] : memref<81xf32, #tpu.memory_space<smem>>
    %202 = vector.extract_strided_slice %200 {offsets = [0, 0, 0], sizes = [2, 32, 32], strides = [1, 1, 1]} : vector<2x32x34xf32> to vector<2x32x32xf32>
    %203 = vector.broadcast %201 : f32 to vector<2x32x32xf32>
    %204 = arith.mulf %203, %202 : vector<2x32x32xf32>
    %205 = arith.addf %198, %204 : vector<2x32x32xf32>
    %c34 = arith.constant 34 : index
    %206 = memref.load %arg0[%c34] : memref<81xf32, #tpu.memory_space<smem>>
    %207 = vector.extract_strided_slice %200 {offsets = [0, 0, 1], sizes = [2, 32, 32], strides = [1, 1, 1]} : vector<2x32x34xf32> to vector<2x32x32xf32>
    %208 = vector.broadcast %206 : f32 to vector<2x32x32xf32>
    %209 = arith.mulf %208, %207 : vector<2x32x32xf32>
    %210 = arith.addf %205, %209 : vector<2x32x32xf32>
    %c35 = arith.constant 35 : index
    %211 = memref.load %arg0[%c35] : memref<81xf32, #tpu.memory_space<smem>>
    %212 = vector.extract_strided_slice %200 {offsets = [0, 0, 2], sizes = [2, 32, 32], strides = [1, 1, 1]} : vector<2x32x34xf32> to vector<2x32x32xf32>
    %213 = vector.broadcast %211 : f32 to vector<2x32x32xf32>
    %214 = arith.mulf %213, %212 : vector<2x32x32xf32>
    %215 = arith.addf %210, %214 : vector<2x32x32xf32>
    %c0_60 = arith.constant 0 : index
    %c1_61 = arith.constant 1 : index
    %c0_62 = arith.constant 0 : index
    %c0_63 = arith.constant 0 : index
    %216 = vector.load %arg2[%c0_60, %c1_61, %c0_62, %c0_63] : memref<2x3x34x34xf32, #tpu.memory_space<vmem>>, vector<2x1x32x34xf32>
    %217 = vector.shape_cast %216 : vector<2x1x32x34xf32> to vector<2x32x34xf32>
    %c36 = arith.constant 36 : index
    %218 = memref.load %arg0[%c36] : memref<81xf32, #tpu.memory_space<smem>>
    %219 = vector.extract_strided_slice %217 {offsets = [0, 0, 0], sizes = [2, 32, 32], strides = [1, 1, 1]} : vector<2x32x34xf32> to vector<2x32x32xf32>
    %220 = vector.broadcast %218 : f32 to vector<2x32x32xf32>
    %221 = arith.mulf %220, %219 : vector<2x32x32xf32>
    %222 = arith.addf %215, %221 : vector<2x32x32xf32>
    %c37 = arith.constant 37 : index
    %223 = memref.load %arg0[%c37] : memref<81xf32, #tpu.memory_space<smem>>
    %224 = vector.extract_strided_slice %217 {offsets = [0, 0, 1], sizes = [2, 32, 32], strides = [1, 1, 1]} : vector<2x32x34xf32> to vector<2x32x32xf32>
    %225 = vector.broadcast %223 : f32 to vector<2x32x32xf32>
    %226 = arith.mulf %225, %224 : vector<2x32x32xf32>
    %227 = arith.addf %222, %226 : vector<2x32x32xf32>
    %c38 = arith.constant 38 : index
    %228 = memref.load %arg0[%c38] : memref<81xf32, #tpu.memory_space<smem>>
    %229 = vector.extract_strided_slice %217 {offsets = [0, 0, 2], sizes = [2, 32, 32], strides = [1, 1, 1]} : vector<2x32x34xf32> to vector<2x32x32xf32>
    %230 = vector.broadcast %228 : f32 to vector<2x32x32xf32>
    %231 = arith.mulf %230, %229 : vector<2x32x32xf32>
    %232 = arith.addf %227, %231 : vector<2x32x32xf32>
    %c0_64 = arith.constant 0 : index
    %c1_65 = arith.constant 1 : index
    %c1_66 = arith.constant 1 : index
    %c0_67 = arith.constant 0 : index
    %233 = vector.load %arg2[%c0_64, %c1_65, %c1_66, %c0_67] : memref<2x3x34x34xf32, #tpu.memory_space<vmem>>, vector<2x1x32x34xf32>
    %234 = vector.shape_cast %233 : vector<2x1x32x34xf32> to vector<2x32x34xf32>
    %c39 = arith.constant 39 : index
    %235 = memref.load %arg0[%c39] : memref<81xf32, #tpu.memory_space<smem>>
    %236 = vector.extract_strided_slice %234 {offsets = [0, 0, 0], sizes = [2, 32, 32], strides = [1, 1, 1]} : vector<2x32x34xf32> to vector<2x32x32xf32>
    %237 = vector.broadcast %235 : f32 to vector<2x32x32xf32>
    %238 = arith.mulf %237, %236 : vector<2x32x32xf32>
    %239 = arith.addf %232, %238 : vector<2x32x32xf32>
    %c40 = arith.constant 40 : index
    %240 = memref.load %arg0[%c40] : memref<81xf32, #tpu.memory_space<smem>>
    %241 = vector.extract_strided_slice %234 {offsets = [0, 0, 1], sizes = [2, 32, 32], strides = [1, 1, 1]} : vector<2x32x34xf32> to vector<2x32x32xf32>
    %242 = vector.broadcast %240 : f32 to vector<2x32x32xf32>
    %243 = arith.mulf %242, %241 : vector<2x32x32xf32>
    %244 = arith.addf %239, %243 : vector<2x32x32xf32>
    %c41 = arith.constant 41 : index
    %245 = memref.load %arg0[%c41] : memref<81xf32, #tpu.memory_space<smem>>
    %246 = vector.extract_strided_slice %234 {offsets = [0, 0, 2], sizes = [2, 32, 32], strides = [1, 1, 1]} : vector<2x32x34xf32> to vector<2x32x32xf32>
    %247 = vector.broadcast %245 : f32 to vector<2x32x32xf32>
    %248 = arith.mulf %247, %246 : vector<2x32x32xf32>
    %249 = arith.addf %244, %248 : vector<2x32x32xf32>
    %c0_68 = arith.constant 0 : index
    %c1_69 = arith.constant 1 : index
    %c2_70 = arith.constant 2 : index
    %c0_71 = arith.constant 0 : index
    %250 = vector.load %arg2[%c0_68, %c1_69, %c2_70, %c0_71] : memref<2x3x34x34xf32, #tpu.memory_space<vmem>>, vector<2x1x32x34xf32>
    %251 = vector.shape_cast %250 : vector<2x1x32x34xf32> to vector<2x32x34xf32>
    %c42 = arith.constant 42 : index
    %252 = memref.load %arg0[%c42] : memref<81xf32, #tpu.memory_space<smem>>
    %253 = vector.extract_strided_slice %251 {offsets = [0, 0, 0], sizes = [2, 32, 32], strides = [1, 1, 1]} : vector<2x32x34xf32> to vector<2x32x32xf32>
    %254 = vector.broadcast %252 : f32 to vector<2x32x32xf32>
    %255 = arith.mulf %254, %253 : vector<2x32x32xf32>
    %256 = arith.addf %249, %255 : vector<2x32x32xf32>
    %c43 = arith.constant 43 : index
    %257 = memref.load %arg0[%c43] : memref<81xf32, #tpu.memory_space<smem>>
    %258 = vector.extract_strided_slice %251 {offsets = [0, 0, 1], sizes = [2, 32, 32], strides = [1, 1, 1]} : vector<2x32x34xf32> to vector<2x32x32xf32>
    %259 = vector.broadcast %257 : f32 to vector<2x32x32xf32>
    %260 = arith.mulf %259, %258 : vector<2x32x32xf32>
    %261 = arith.addf %256, %260 : vector<2x32x32xf32>
    %c44 = arith.constant 44 : index
    %262 = memref.load %arg0[%c44] : memref<81xf32, #tpu.memory_space<smem>>
    %263 = vector.extract_strided_slice %251 {offsets = [0, 0, 2], sizes = [2, 32, 32], strides = [1, 1, 1]} : vector<2x32x34xf32> to vector<2x32x32xf32>
    %264 = vector.broadcast %262 : f32 to vector<2x32x32xf32>
    %265 = arith.mulf %264, %263 : vector<2x32x32xf32>
    %266 = arith.addf %261, %265 : vector<2x32x32xf32>
    %c0_72 = arith.constant 0 : index
    %c2_73 = arith.constant 2 : index
    %c0_74 = arith.constant 0 : index
    %c0_75 = arith.constant 0 : index
    %267 = vector.load %arg2[%c0_72, %c2_73, %c0_74, %c0_75] : memref<2x3x34x34xf32, #tpu.memory_space<vmem>>, vector<2x1x32x34xf32>
    %268 = vector.shape_cast %267 : vector<2x1x32x34xf32> to vector<2x32x34xf32>
    %c45 = arith.constant 45 : index
    %269 = memref.load %arg0[%c45] : memref<81xf32, #tpu.memory_space<smem>>
    %270 = vector.extract_strided_slice %268 {offsets = [0, 0, 0], sizes = [2, 32, 32], strides = [1, 1, 1]} : vector<2x32x34xf32> to vector<2x32x32xf32>
    %271 = vector.broadcast %269 : f32 to vector<2x32x32xf32>
    %272 = arith.mulf %271, %270 : vector<2x32x32xf32>
    %273 = arith.addf %266, %272 : vector<2x32x32xf32>
    %c46 = arith.constant 46 : index
    %274 = memref.load %arg0[%c46] : memref<81xf32, #tpu.memory_space<smem>>
    %275 = vector.extract_strided_slice %268 {offsets = [0, 0, 1], sizes = [2, 32, 32], strides = [1, 1, 1]} : vector<2x32x34xf32> to vector<2x32x32xf32>
    %276 = vector.broadcast %274 : f32 to vector<2x32x32xf32>
    %277 = arith.mulf %276, %275 : vector<2x32x32xf32>
    %278 = arith.addf %273, %277 : vector<2x32x32xf32>
    %c47 = arith.constant 47 : index
    %279 = memref.load %arg0[%c47] : memref<81xf32, #tpu.memory_space<smem>>
    %280 = vector.extract_strided_slice %268 {offsets = [0, 0, 2], sizes = [2, 32, 32], strides = [1, 1, 1]} : vector<2x32x34xf32> to vector<2x32x32xf32>
    %281 = vector.broadcast %279 : f32 to vector<2x32x32xf32>
    %282 = arith.mulf %281, %280 : vector<2x32x32xf32>
    %283 = arith.addf %278, %282 : vector<2x32x32xf32>
    %c0_76 = arith.constant 0 : index
    %c2_77 = arith.constant 2 : index
    %c1_78 = arith.constant 1 : index
    %c0_79 = arith.constant 0 : index
    %284 = vector.load %arg2[%c0_76, %c2_77, %c1_78, %c0_79] : memref<2x3x34x34xf32, #tpu.memory_space<vmem>>, vector<2x1x32x34xf32>
    %285 = vector.shape_cast %284 : vector<2x1x32x34xf32> to vector<2x32x34xf32>
    %c48 = arith.constant 48 : index
    %286 = memref.load %arg0[%c48] : memref<81xf32, #tpu.memory_space<smem>>
    %287 = vector.extract_strided_slice %285 {offsets = [0, 0, 0], sizes = [2, 32, 32], strides = [1, 1, 1]} : vector<2x32x34xf32> to vector<2x32x32xf32>
    %288 = vector.broadcast %286 : f32 to vector<2x32x32xf32>
    %289 = arith.mulf %288, %287 : vector<2x32x32xf32>
    %290 = arith.addf %283, %289 : vector<2x32x32xf32>
    %c49 = arith.constant 49 : index
    %291 = memref.load %arg0[%c49] : memref<81xf32, #tpu.memory_space<smem>>
    %292 = vector.extract_strided_slice %285 {offsets = [0, 0, 1], sizes = [2, 32, 32], strides = [1, 1, 1]} : vector<2x32x34xf32> to vector<2x32x32xf32>
    %293 = vector.broadcast %291 : f32 to vector<2x32x32xf32>
    %294 = arith.mulf %293, %292 : vector<2x32x32xf32>
    %295 = arith.addf %290, %294 : vector<2x32x32xf32>
    %c50 = arith.constant 50 : index
    %296 = memref.load %arg0[%c50] : memref<81xf32, #tpu.memory_space<smem>>
    %297 = vector.extract_strided_slice %285 {offsets = [0, 0, 2], sizes = [2, 32, 32], strides = [1, 1, 1]} : vector<2x32x34xf32> to vector<2x32x32xf32>
    %298 = vector.broadcast %296 : f32 to vector<2x32x32xf32>
    %299 = arith.mulf %298, %297 : vector<2x32x32xf32>
    %300 = arith.addf %295, %299 : vector<2x32x32xf32>
    %c0_80 = arith.constant 0 : index
    %c2_81 = arith.constant 2 : index
    %c2_82 = arith.constant 2 : index
    %c0_83 = arith.constant 0 : index
    %301 = vector.load %arg2[%c0_80, %c2_81, %c2_82, %c0_83] : memref<2x3x34x34xf32, #tpu.memory_space<vmem>>, vector<2x1x32x34xf32>
    %302 = vector.shape_cast %301 : vector<2x1x32x34xf32> to vector<2x32x34xf32>
    %c51 = arith.constant 51 : index
    %303 = memref.load %arg0[%c51] : memref<81xf32, #tpu.memory_space<smem>>
    %304 = vector.extract_strided_slice %302 {offsets = [0, 0, 0], sizes = [2, 32, 32], strides = [1, 1, 1]} : vector<2x32x34xf32> to vector<2x32x32xf32>
    %305 = vector.broadcast %303 : f32 to vector<2x32x32xf32>
    %306 = arith.mulf %305, %304 : vector<2x32x32xf32>
    %307 = arith.addf %300, %306 : vector<2x32x32xf32>
    %c52 = arith.constant 52 : index
    %308 = memref.load %arg0[%c52] : memref<81xf32, #tpu.memory_space<smem>>
    %309 = vector.extract_strided_slice %302 {offsets = [0, 0, 1], sizes = [2, 32, 32], strides = [1, 1, 1]} : vector<2x32x34xf32> to vector<2x32x32xf32>
    %310 = vector.broadcast %308 : f32 to vector<2x32x32xf32>
    %311 = arith.mulf %310, %309 : vector<2x32x32xf32>
    %312 = arith.addf %307, %311 : vector<2x32x32xf32>
    %c53 = arith.constant 53 : index
    %313 = memref.load %arg0[%c53] : memref<81xf32, #tpu.memory_space<smem>>
    %314 = vector.extract_strided_slice %302 {offsets = [0, 0, 2], sizes = [2, 32, 32], strides = [1, 1, 1]} : vector<2x32x34xf32> to vector<2x32x32xf32>
    %315 = vector.broadcast %313 : f32 to vector<2x32x32xf32>
    %316 = arith.mulf %315, %314 : vector<2x32x32xf32>
    %317 = arith.addf %312, %316 : vector<2x32x32xf32>
    %c1_84 = arith.constant 1 : index
    %318 = memref.load %arg1[%c1_84] : memref<3xf32, #tpu.memory_space<smem>>
    %319 = vector.broadcast %318 : f32 to vector<2x32x32xf32>
    %320 = arith.addf %317, %319 : vector<2x32x32xf32>
    %cst_85 = arith.constant 0.000000e+00 : f32
    %321 = vector.broadcast %cst_85 : f32 to vector<2x32x32xf32>
    %322 = arith.maximumf %320, %321 : vector<2x32x32xf32>
    %c0_86 = arith.constant 0 : index
    %c1_87 = arith.constant 1 : index
    %c0_88 = arith.constant 0 : index
    %c0_89 = arith.constant 0 : index
    %323 = vector.load %arg6[%c0_86, %c1_87, %c0_88, %c0_89] : memref<2x3x34x34xf32, #tpu.memory_space<vmem>>, vector<2x1x32x32xf32>
    %324 = vector.shape_cast %323 : vector<2x1x32x32xf32> to vector<2x32x32xf32>
    %325 = vector.shape_cast %322 : vector<2x32x32xf32> to vector<2x1x32x32xf32>
    tpu.vector_store %arg6[%c0_86, %c1_87, %c0_88, %c0_89], %325 {strides = array<i32>} : memref<2x3x34x34xf32, #tpu.memory_space<vmem>>, vector<2x1x32x32xf32>,
    %cst_90 = arith.constant 0.000000e+00 : f32
    %326 = vector.broadcast %cst_90 : f32 to vector<2x32x32xf32>
    %c0_91 = arith.constant 0 : index
    %c0_92 = arith.constant 0 : index
    %c0_93 = arith.constant 0 : index
    %c0_94 = arith.constant 0 : index
    %327 = vector.load %arg2[%c0_91, %c0_92, %c0_93, %c0_94] : memref<2x3x34x34xf32, #tpu.memory_space<vmem>>, vector<2x1x32x34xf32>
    %328 = vector.shape_cast %327 : vector<2x1x32x34xf32> to vector<2x32x34xf32>
    %c54 = arith.constant 54 : index
    %329 = memref.load %arg0[%c54] : memref<81xf32, #tpu.memory_space<smem>>
    %330 = vector.extract_strided_slice %328 {offsets = [0, 0, 0], sizes = [2, 32, 32], strides = [1, 1, 1]} : vector<2x32x34xf32> to vector<2x32x32xf32>
    %331 = vector.broadcast %329 : f32 to vector<2x32x32xf32>
    %332 = arith.mulf %331, %330 : vector<2x32x32xf32>
    %333 = arith.addf %326, %332 : vector<2x32x32xf32>
    %c55 = arith.constant 55 : index
    %334 = memref.load %arg0[%c55] : memref<81xf32, #tpu.memory_space<smem>>
    %335 = vector.extract_strided_slice %328 {offsets = [0, 0, 1], sizes = [2, 32, 32], strides = [1, 1, 1]} : vector<2x32x34xf32> to vector<2x32x32xf32>
    %336 = vector.broadcast %334 : f32 to vector<2x32x32xf32>
    %337 = arith.mulf %336, %335 : vector<2x32x32xf32>
    %338 = arith.addf %333, %337 : vector<2x32x32xf32>
    %c56 = arith.constant 56 : index
    %339 = memref.load %arg0[%c56] : memref<81xf32, #tpu.memory_space<smem>>
    %340 = vector.extract_strided_slice %328 {offsets = [0, 0, 2], sizes = [2, 32, 32], strides = [1, 1, 1]} : vector<2x32x34xf32> to vector<2x32x32xf32>
    %341 = vector.broadcast %339 : f32 to vector<2x32x32xf32>
    %342 = arith.mulf %341, %340 : vector<2x32x32xf32>
    %343 = arith.addf %338, %342 : vector<2x32x32xf32>
    %c0_95 = arith.constant 0 : index
    %c0_96 = arith.constant 0 : index
    %c1_97 = arith.constant 1 : index
    %c0_98 = arith.constant 0 : index
    %344 = vector.load %arg2[%c0_95, %c0_96, %c1_97, %c0_98] : memref<2x3x34x34xf32, #tpu.memory_space<vmem>>, vector<2x1x32x34xf32>
    %345 = vector.shape_cast %344 : vector<2x1x32x34xf32> to vector<2x32x34xf32>
    %c57 = arith.constant 57 : index
    %346 = memref.load %arg0[%c57] : memref<81xf32, #tpu.memory_space<smem>>
    %347 = vector.extract_strided_slice %345 {offsets = [0, 0, 0], sizes = [2, 32, 32], strides = [1, 1, 1]} : vector<2x32x34xf32> to vector<2x32x32xf32>
    %348 = vector.broadcast %346 : f32 to vector<2x32x32xf32>
    %349 = arith.mulf %348, %347 : vector<2x32x32xf32>
    %350 = arith.addf %343, %349 : vector<2x32x32xf32>
    %c58 = arith.constant 58 : index
    %351 = memref.load %arg0[%c58] : memref<81xf32, #tpu.memory_space<smem>>
    %352 = vector.extract_strided_slice %345 {offsets = [0, 0, 1], sizes = [2, 32, 32], strides = [1, 1, 1]} : vector<2x32x34xf32> to vector<2x32x32xf32>
    %353 = vector.broadcast %351 : f32 to vector<2x32x32xf32>
    %354 = arith.mulf %353, %352 : vector<2x32x32xf32>
    %355 = arith.addf %350, %354 : vector<2x32x32xf32>
    %c59 = arith.constant 59 : index
    %356 = memref.load %arg0[%c59] : memref<81xf32, #tpu.memory_space<smem>>
    %357 = vector.extract_strided_slice %345 {offsets = [0, 0, 2], sizes = [2, 32, 32], strides = [1, 1, 1]} : vector<2x32x34xf32> to vector<2x32x32xf32>
    %358 = vector.broadcast %356 : f32 to vector<2x32x32xf32>
    %359 = arith.mulf %358, %357 : vector<2x32x32xf32>
    %360 = arith.addf %355, %359 : vector<2x32x32xf32>
    %c0_99 = arith.constant 0 : index
    %c0_100 = arith.constant 0 : index
    %c2_101 = arith.constant 2 : index
    %c0_102 = arith.constant 0 : index
    %361 = vector.load %arg2[%c0_99, %c0_100, %c2_101, %c0_102] : memref<2x3x34x34xf32, #tpu.memory_space<vmem>>, vector<2x1x32x34xf32>
    %362 = vector.shape_cast %361 : vector<2x1x32x34xf32> to vector<2x32x34xf32>
    %c60 = arith.constant 60 : index
    %363 = memref.load %arg0[%c60] : memref<81xf32, #tpu.memory_space<smem>>
    %364 = vector.extract_strided_slice %362 {offsets = [0, 0, 0], sizes = [2, 32, 32], strides = [1, 1, 1]} : vector<2x32x34xf32> to vector<2x32x32xf32>
    %365 = vector.broadcast %363 : f32 to vector<2x32x32xf32>
    %366 = arith.mulf %365, %364 : vector<2x32x32xf32>
    %367 = arith.addf %360, %366 : vector<2x32x32xf32>
    %c61 = arith.constant 61 : index
    %368 = memref.load %arg0[%c61] : memref<81xf32, #tpu.memory_space<smem>>
    %369 = vector.extract_strided_slice %362 {offsets = [0, 0, 1], sizes = [2, 32, 32], strides = [1, 1, 1]} : vector<2x32x34xf32> to vector<2x32x32xf32>
    %370 = vector.broadcast %368 : f32 to vector<2x32x32xf32>
    %371 = arith.mulf %370, %369 : vector<2x32x32xf32>
    %372 = arith.addf %367, %371 : vector<2x32x32xf32>
    %c62 = arith.constant 62 : index
    %373 = memref.load %arg0[%c62] : memref<81xf32, #tpu.memory_space<smem>>
    %374 = vector.extract_strided_slice %362 {offsets = [0, 0, 2], sizes = [2, 32, 32], strides = [1, 1, 1]} : vector<2x32x34xf32> to vector<2x32x32xf32>
    %375 = vector.broadcast %373 : f32 to vector<2x32x32xf32>
    %376 = arith.mulf %375, %374 : vector<2x32x32xf32>
    %377 = arith.addf %372, %376 : vector<2x32x32xf32>
    %c0_103 = arith.constant 0 : index
    %c1_104 = arith.constant 1 : index
    %c0_105 = arith.constant 0 : index
    %c0_106 = arith.constant 0 : index
    %378 = vector.load %arg2[%c0_103, %c1_104, %c0_105, %c0_106] : memref<2x3x34x34xf32, #tpu.memory_space<vmem>>, vector<2x1x32x34xf32>
    %379 = vector.shape_cast %378 : vector<2x1x32x34xf32> to vector<2x32x34xf32>
    %c63 = arith.constant 63 : index
    %380 = memref.load %arg0[%c63] : memref<81xf32, #tpu.memory_space<smem>>
    %381 = vector.extract_strided_slice %379 {offsets = [0, 0, 0], sizes = [2, 32, 32], strides = [1, 1, 1]} : vector<2x32x34xf32> to vector<2x32x32xf32>
    %382 = vector.broadcast %380 : f32 to vector<2x32x32xf32>
    %383 = arith.mulf %382, %381 : vector<2x32x32xf32>
    %384 = arith.addf %377, %383 : vector<2x32x32xf32>
    %c64 = arith.constant 64 : index
    %385 = memref.load %arg0[%c64] : memref<81xf32, #tpu.memory_space<smem>>
    %386 = vector.extract_strided_slice %379 {offsets = [0, 0, 1], sizes = [2, 32, 32], strides = [1, 1, 1]} : vector<2x32x34xf32> to vector<2x32x32xf32>
    %387 = vector.broadcast %385 : f32 to vector<2x32x32xf32>
    %388 = arith.mulf %387, %386 : vector<2x32x32xf32>
    %389 = arith.addf %384, %388 : vector<2x32x32xf32>
    %c65 = arith.constant 65 : index
    %390 = memref.load %arg0[%c65] : memref<81xf32, #tpu.memory_space<smem>>
    %391 = vector.extract_strided_slice %379 {offsets = [0, 0, 2], sizes = [2, 32, 32], strides = [1, 1, 1]} : vector<2x32x34xf32> to vector<2x32x32xf32>
    %392 = vector.broadcast %390 : f32 to vector<2x32x32xf32>
    %393 = arith.mulf %392, %391 : vector<2x32x32xf32>
    %394 = arith.addf %389, %393 : vector<2x32x32xf32>
    %c0_107 = arith.constant 0 : index
    %c1_108 = arith.constant 1 : index
    %c1_109 = arith.constant 1 : index
    %c0_110 = arith.constant 0 : index
    %395 = vector.load %arg2[%c0_107, %c1_108, %c1_109, %c0_110] : memref<2x3x34x34xf32, #tpu.memory_space<vmem>>, vector<2x1x32x34xf32>
    %396 = vector.shape_cast %395 : vector<2x1x32x34xf32> to vector<2x32x34xf32>
    %c66 = arith.constant 66 : index
    %397 = memref.load %arg0[%c66] : memref<81xf32, #tpu.memory_space<smem>>
    %398 = vector.extract_strided_slice %396 {offsets = [0, 0, 0], sizes = [2, 32, 32], strides = [1, 1, 1]} : vector<2x32x34xf32> to vector<2x32x32xf32>
    %399 = vector.broadcast %397 : f32 to vector<2x32x32xf32>
    %400 = arith.mulf %399, %398 : vector<2x32x32xf32>
    %401 = arith.addf %394, %400 : vector<2x32x32xf32>
    %c67 = arith.constant 67 : index
    %402 = memref.load %arg0[%c67] : memref<81xf32, #tpu.memory_space<smem>>
    %403 = vector.extract_strided_slice %396 {offsets = [0, 0, 1], sizes = [2, 32, 32], strides = [1, 1, 1]} : vector<2x32x34xf32> to vector<2x32x32xf32>
    %404 = vector.broadcast %402 : f32 to vector<2x32x32xf32>
    %405 = arith.mulf %404, %403 : vector<2x32x32xf32>
    %406 = arith.addf %401, %405 : vector<2x32x32xf32>
    %c68 = arith.constant 68 : index
    %407 = memref.load %arg0[%c68] : memref<81xf32, #tpu.memory_space<smem>>
    %408 = vector.extract_strided_slice %396 {offsets = [0, 0, 2], sizes = [2, 32, 32], strides = [1, 1, 1]} : vector<2x32x34xf32> to vector<2x32x32xf32>
    %409 = vector.broadcast %407 : f32 to vector<2x32x32xf32>
    %410 = arith.mulf %409, %408 : vector<2x32x32xf32>
    %411 = arith.addf %406, %410 : vector<2x32x32xf32>
    %c0_111 = arith.constant 0 : index
    %c1_112 = arith.constant 1 : index
    %c2_113 = arith.constant 2 : index
    %c0_114 = arith.constant 0 : index
    %412 = vector.load %arg2[%c0_111, %c1_112, %c2_113, %c0_114] : memref<2x3x34x34xf32, #tpu.memory_space<vmem>>, vector<2x1x32x34xf32>
    %413 = vector.shape_cast %412 : vector<2x1x32x34xf32> to vector<2x32x34xf32>
    %c69 = arith.constant 69 : index
    %414 = memref.load %arg0[%c69] : memref<81xf32, #tpu.memory_space<smem>>
    %415 = vector.extract_strided_slice %413 {offsets = [0, 0, 0], sizes = [2, 32, 32], strides = [1, 1, 1]} : vector<2x32x34xf32> to vector<2x32x32xf32>
    %416 = vector.broadcast %414 : f32 to vector<2x32x32xf32>
    %417 = arith.mulf %416, %415 : vector<2x32x32xf32>
    %418 = arith.addf %411, %417 : vector<2x32x32xf32>
    %c70 = arith.constant 70 : index
    %419 = memref.load %arg0[%c70] : memref<81xf32, #tpu.memory_space<smem>>
    %420 = vector.extract_strided_slice %413 {offsets = [0, 0, 1], sizes = [2, 32, 32], strides = [1, 1, 1]} : vector<2x32x34xf32> to vector<2x32x32xf32>
    %421 = vector.broadcast %419 : f32 to vector<2x32x32xf32>
    %422 = arith.mulf %421, %420 : vector<2x32x32xf32>
    %423 = arith.addf %418, %422 : vector<2x32x32xf32>
    %c71 = arith.constant 71 : index
    %424 = memref.load %arg0[%c71] : memref<81xf32, #tpu.memory_space<smem>>
    %425 = vector.extract_strided_slice %413 {offsets = [0, 0, 2], sizes = [2, 32, 32], strides = [1, 1, 1]} : vector<2x32x34xf32> to vector<2x32x32xf32>
    %426 = vector.broadcast %424 : f32 to vector<2x32x32xf32>
    %427 = arith.mulf %426, %425 : vector<2x32x32xf32>
    %428 = arith.addf %423, %427 : vector<2x32x32xf32>
    %c0_115 = arith.constant 0 : index
    %c2_116 = arith.constant 2 : index
    %c0_117 = arith.constant 0 : index
    %c0_118 = arith.constant 0 : index
    %429 = vector.load %arg2[%c0_115, %c2_116, %c0_117, %c0_118] : memref<2x3x34x34xf32, #tpu.memory_space<vmem>>, vector<2x1x32x34xf32>
    %430 = vector.shape_cast %429 : vector<2x1x32x34xf32> to vector<2x32x34xf32>
    %c72 = arith.constant 72 : index
    %431 = memref.load %arg0[%c72] : memref<81xf32, #tpu.memory_space<smem>>
    %432 = vector.extract_strided_slice %430 {offsets = [0, 0, 0], sizes = [2, 32, 32], strides = [1, 1, 1]} : vector<2x32x34xf32> to vector<2x32x32xf32>
    %433 = vector.broadcast %431 : f32 to vector<2x32x32xf32>
    %434 = arith.mulf %433, %432 : vector<2x32x32xf32>
    %435 = arith.addf %428, %434 : vector<2x32x32xf32>
    %c73 = arith.constant 73 : index
    %436 = memref.load %arg0[%c73] : memref<81xf32, #tpu.memory_space<smem>>
    %437 = vector.extract_strided_slice %430 {offsets = [0, 0, 1], sizes = [2, 32, 32], strides = [1, 1, 1]} : vector<2x32x34xf32> to vector<2x32x32xf32>
    %438 = vector.broadcast %436 : f32 to vector<2x32x32xf32>
    %439 = arith.mulf %438, %437 : vector<2x32x32xf32>
    %440 = arith.addf %435, %439 : vector<2x32x32xf32>
    %c74 = arith.constant 74 : index
    %441 = memref.load %arg0[%c74] : memref<81xf32, #tpu.memory_space<smem>>
    %442 = vector.extract_strided_slice %430 {offsets = [0, 0, 2], sizes = [2, 32, 32], strides = [1, 1, 1]} : vector<2x32x34xf32> to vector<2x32x32xf32>
    %443 = vector.broadcast %441 : f32 to vector<2x32x32xf32>
    %444 = arith.mulf %443, %442 : vector<2x32x32xf32>
    %445 = arith.addf %440, %444 : vector<2x32x32xf32>
    %c0_119 = arith.constant 0 : index
    %c2_120 = arith.constant 2 : index
    %c1_121 = arith.constant 1 : index
    %c0_122 = arith.constant 0 : index
    %446 = vector.load %arg2[%c0_119, %c2_120, %c1_121, %c0_122] : memref<2x3x34x34xf32, #tpu.memory_space<vmem>>, vector<2x1x32x34xf32>
    %447 = vector.shape_cast %446 : vector<2x1x32x34xf32> to vector<2x32x34xf32>
    %c75 = arith.constant 75 : index
    %448 = memref.load %arg0[%c75] : memref<81xf32, #tpu.memory_space<smem>>
    %449 = vector.extract_strided_slice %447 {offsets = [0, 0, 0], sizes = [2, 32, 32], strides = [1, 1, 1]} : vector<2x32x34xf32> to vector<2x32x32xf32>
    %450 = vector.broadcast %448 : f32 to vector<2x32x32xf32>
    %451 = arith.mulf %450, %449 : vector<2x32x32xf32>
    %452 = arith.addf %445, %451 : vector<2x32x32xf32>
    %c76 = arith.constant 76 : index
    %453 = memref.load %arg0[%c76] : memref<81xf32, #tpu.memory_space<smem>>
    %454 = vector.extract_strided_slice %447 {offsets = [0, 0, 1], sizes = [2, 32, 32], strides = [1, 1, 1]} : vector<2x32x34xf32> to vector<2x32x32xf32>
    %455 = vector.broadcast %453 : f32 to vector<2x32x32xf32>
    %456 = arith.mulf %455, %454 : vector<2x32x32xf32>
    %457 = arith.addf %452, %456 : vector<2x32x32xf32>
    %c77 = arith.constant 77 : index
    %458 = memref.load %arg0[%c77] : memref<81xf32, #tpu.memory_space<smem>>
    %459 = vector.extract_strided_slice %447 {offsets = [0, 0, 2], sizes = [2, 32, 32], strides = [1, 1, 1]} : vector<2x32x34xf32> to vector<2x32x32xf32>
    %460 = vector.broadcast %458 : f32 to vector<2x32x32xf32>
    %461 = arith.mulf %460, %459 : vector<2x32x32xf32>
    %462 = arith.addf %457, %461 : vector<2x32x32xf32>
    %c0_123 = arith.constant 0 : index
    %c2_124 = arith.constant 2 : index
    %c2_125 = arith.constant 2 : index
    %c0_126 = arith.constant 0 : index
    %463 = vector.load %arg2[%c0_123, %c2_124, %c2_125, %c0_126] : memref<2x3x34x34xf32, #tpu.memory_space<vmem>>, vector<2x1x32x34xf32>
    %464 = vector.shape_cast %463 : vector<2x1x32x34xf32> to vector<2x32x34xf32>
    %c78 = arith.constant 78 : index
    %465 = memref.load %arg0[%c78] : memref<81xf32, #tpu.memory_space<smem>>
    %466 = vector.extract_strided_slice %464 {offsets = [0, 0, 0], sizes = [2, 32, 32], strides = [1, 1, 1]} : vector<2x32x34xf32> to vector<2x32x32xf32>
    %467 = vector.broadcast %465 : f32 to vector<2x32x32xf32>
    %468 = arith.mulf %467, %466 : vector<2x32x32xf32>
    %469 = arith.addf %462, %468 : vector<2x32x32xf32>
    %c79 = arith.constant 79 : index
    %470 = memref.load %arg0[%c79] : memref<81xf32, #tpu.memory_space<smem>>
    %471 = vector.extract_strided_slice %464 {offsets = [0, 0, 1], sizes = [2, 32, 32], strides = [1, 1, 1]} : vector<2x32x34xf32> to vector<2x32x32xf32>
    %472 = vector.broadcast %470 : f32 to vector<2x32x32xf32>
    %473 = arith.mulf %472, %471 : vector<2x32x32xf32>
    %474 = arith.addf %469, %473 : vector<2x32x32xf32>
    %c80 = arith.constant 80 : index
    %475 = memref.load %arg0[%c80] : memref<81xf32, #tpu.memory_space<smem>>
    %476 = vector.extract_strided_slice %464 {offsets = [0, 0, 2], sizes = [2, 32, 32], strides = [1, 1, 1]} : vector<2x32x34xf32> to vector<2x32x32xf32>
    %477 = vector.broadcast %475 : f32 to vector<2x32x32xf32>
    %478 = arith.mulf %477, %476 : vector<2x32x32xf32>
    %479 = arith.addf %474, %478 : vector<2x32x32xf32>
    %c2_127 = arith.constant 2 : index
    %480 = memref.load %arg1[%c2_127] : memref<3xf32, #tpu.memory_space<smem>>
    %481 = vector.broadcast %480 : f32 to vector<2x32x32xf32>
    %482 = arith.addf %479, %481 : vector<2x32x32xf32>
    %cst_128 = arith.constant 0.000000e+00 : f32
    %483 = vector.broadcast %cst_128 : f32 to vector<2x32x32xf32>
    %484 = arith.maximumf %482, %483 : vector<2x32x32xf32>
    %c0_129 = arith.constant 0 : index
    %c2_130 = arith.constant 2 : index
    %c0_131 = arith.constant 0 : index
    %c0_132 = arith.constant 0 : index
    %485 = vector.load %arg6[%c0_129, %c2_130, %c0_131, %c0_132] : memref<2x3x34x34xf32, #tpu.memory_space<vmem>>, vector<2x1x32x32xf32>
    %486 = vector.shape_cast %485 : vector<2x1x32x32xf32> to vector<2x32x32xf32>
    %487 = vector.shape_cast %484 : vector<2x32x32xf32> to vector<2x1x32x32xf32>
    tpu.vector_store %arg6[%c0_129, %c2_130, %c0_131, %c0_132], %487 {strides = array<i32>} : memref<2x3x34x34xf32, #tpu.memory_space<vmem>>, vector<2x1x32x32xf32>,
    %c0_133 = arith.constant 0 : index
    %c0_134 = arith.constant 0 : index
    %c0_135 = arith.constant 0 : index
    %c0_136 = arith.constant 0 : index
    %488 = vector.load %arg6[%c0_133, %c0_134, %c0_135, %c0_136] : memref<2x3x34x34xf32, #tpu.memory_space<vmem>>, vector<2x1x1x34xf32>
    %489 = vector.shape_cast %488 : vector<2x1x1x34xf32> to vector<2x34xf32>
    %c0_137 = arith.constant 0 : index
    %c0_138 = arith.constant 0 : index
    %c1_139 = arith.constant 1 : index
    %c0_140 = arith.constant 0 : index
    %490 = vector.load %arg6[%c0_137, %c0_138, %c1_139, %c0_140] : memref<2x3x34x34xf32, #tpu.memory_space<vmem>>, vector<2x1x1x34xf32>
    %491 = vector.shape_cast %490 : vector<2x1x1x34xf32> to vector<2x34xf32>
    %492 = arith.maximumf %489, %491 : vector<2x34xf32>
    %c0_141 = arith.constant 0 : index
    %c0_142 = arith.constant 0 : index
    %c2_143 = arith.constant 2 : index
    %c0_144 = arith.constant 0 : index
    %493 = vector.load %arg6[%c0_141, %c0_142, %c2_143, %c0_144] : memref<2x3x34x34xf32, #tpu.memory_space<vmem>>, vector<2x1x1x34xf32>
    %494 = vector.shape_cast %493 : vector<2x1x1x34xf32> to vector<2x34xf32>
    %495 = arith.maximumf %492, %494 : vector<2x34xf32>
    %496 = vector.extract_strided_slice %495 {offsets = [0, 0], sizes = [2, 32], strides = [1, 1]} : vector<2x34xf32> to vector<2x32xf32>
    %497 = vector.extract_strided_slice %495 {offsets = [0, 1], sizes = [2, 32], strides = [1, 1]} : vector<2x34xf32> to vector<2x32xf32>
    %498 = arith.maximumf %496, %497 : vector<2x32xf32>
    %499 = vector.extract_strided_slice %495 {offsets = [0, 2], sizes = [2, 32], strides = [1, 1]} : vector<2x34xf32> to vector<2x32xf32>
    %500 = arith.maximumf %498, %499 : vector<2x32xf32>
    %c0_145 = arith.constant 0 : index
    %c0_146 = arith.constant 0 : index
    %501 = vector.load %arg7[%c0_145, %c0_146] : memref<2x1536xf32, #tpu.memory_space<vmem>>, vector<2x32xf32>
    tpu.vector_store %arg7[%c0_145, %c0_146], %500 {strides = array<i32>} : memref<2x1536xf32, #tpu.memory_space<vmem>>, vector<2x32xf32>,
    %c0_147 = arith.constant 0 : index
    %c0_148 = arith.constant 0 : index
    %c2_149 = arith.constant 2 : index
    %c0_150 = arith.constant 0 : index
    %502 = vector.load %arg6[%c0_147, %c0_148, %c2_149, %c0_150] : memref<2x3x34x34xf32, #tpu.memory_space<vmem>>, vector<2x1x1x34xf32>
    %503 = vector.shape_cast %502 : vector<2x1x1x34xf32> to vector<2x34xf32>
    %c0_151 = arith.constant 0 : index
    %c0_152 = arith.constant 0 : index
    %c3_153 = arith.constant 3 : index
    %c0_154 = arith.constant 0 : index
    %504 = vector.load %arg6[%c0_151, %c0_152, %c3_153, %c0_154] : memref<2x3x34x34xf32, #tpu.memory_space<vmem>>, vector<2x1x1x34xf32>
    %505 = vector.shape_cast %504 : vector<2x1x1x34xf32> to vector<2x34xf32>
    %506 = arith.maximumf %503, %505 : vector<2x34xf32>
    %c0_155 = arith.constant 0 : index
    %c0_156 = arith.constant 0 : index
    %c4_157 = arith.constant 4 : index
    %c0_158 = arith.constant 0 : index
    %507 = vector.load %arg6[%c0_155, %c0_156, %c4_157, %c0_158] : memref<2x3x34x34xf32, #tpu.memory_space<vmem>>, vector<2x1x1x34xf32>
    %508 = vector.shape_cast %507 : vector<2x1x1x34xf32> to vector<2x34xf32>
    %509 = arith.maximumf %506, %508 : vector<2x34xf32>
    %510 = vector.extract_strided_slice %509 {offsets = [0, 0], sizes = [2, 32], strides = [1, 1]} : vector<2x34xf32> to vector<2x32xf32>
    %511 = vector.extract_strided_slice %509 {offsets = [0, 1], sizes = [2, 32], strides = [1, 1]} : vector<2x34xf32> to vector<2x32xf32>
    %512 = arith.maximumf %510, %511 : vector<2x32xf32>
    %513 = vector.extract_strided_slice %509 {offsets = [0, 2], sizes = [2, 32], strides = [1, 1]} : vector<2x34xf32> to vector<2x32xf32>
    %514 = arith.maximumf %512, %513 : vector<2x32xf32>
    %c0_159 = arith.constant 0 : index
    %c32_160 = arith.constant 32 : index
    %515 = vector.load %arg7[%c0_159, %c32_160] : memref<2x1536xf32, #tpu.memory_space<vmem>>, vector<2x32xf32>
    tpu.vector_store %arg7[%c0_159, %c32_160], %514 {strides = array<i32>} : memref<2x1536xf32, #tpu.memory_space<vmem>>, vector<2x32xf32>,
    %c0_161 = arith.constant 0 : index
    %c0_162 = arith.constant 0 : index
    %c4_163 = arith.constant 4 : index
    %c0_164 = arith.constant 0 : index
    %516 = vector.load %arg6[%c0_161, %c0_162, %c4_163, %c0_164] : memref<2x3x34x34xf32, #tpu.memory_space<vmem>>, vector<2x1x1x34xf32>
    %517 = vector.shape_cast %516 : vector<2x1x1x34xf32> to vector<2x34xf32>
    %c0_165 = arith.constant 0 : index
    %c0_166 = arith.constant 0 : index
    %c5_167 = arith.constant 5 : index
    %c0_168 = arith.constant 0 : index
    %518 = vector.load %arg6[%c0_165, %c0_166, %c5_167, %c0_168] : memref<2x3x34x34xf32, #tpu.memory_space<vmem>>, vector<2x1x1x34xf32>
    %519 = vector.shape_cast %518 : vector<2x1x1x34xf32> to vector<2x34xf32>
    %520 = arith.maximumf %517, %519 : vector<2x34xf32>
    %c0_169 = arith.constant 0 : index
    %c0_170 = arith.constant 0 : index
    %c6_171 = arith.constant 6 : index
    %c0_172 = arith.constant 0 : index
    %521 = vector.load %arg6[%c0_169, %c0_170, %c6_171, %c0_172] : memref<2x3x34x34xf32, #tpu.memory_space<vmem>>, vector<2x1x1x34xf32>
    %522 = vector.shape_cast %521 : vector<2x1x1x34xf32> to vector<2x34xf32>
    %523 = arith.maximumf %520, %522 : vector<2x34xf32>
    %524 = vector.extract_strided_slice %523 {offsets = [0, 0], sizes = [2, 32], strides = [1, 1]} : vector<2x34xf32> to vector<2x32xf32>
    %525 = vector.extract_strided_slice %523 {offsets = [0, 1], sizes = [2, 32], strides = [1, 1]} : vector<2x34xf32> to vector<2x32xf32>
    %526 = arith.maximumf %524, %525 : vector<2x32xf32>
    %527 = vector.extract_strided_slice %523 {offsets = [0, 2], sizes = [2, 32], strides = [1, 1]} : vector<2x34xf32> to vector<2x32xf32>
    %528 = arith.maximumf %526, %527 : vector<2x32xf32>
    %c0_173 = arith.constant 0 : index
    %c64_174 = arith.constant 64 : index
    %529 = vector.load %arg7[%c0_173, %c64_174] : memref<2x1536xf32, #tpu.memory_space<vmem>>, vector<2x32xf32>
    tpu.vector_store %arg7[%c0_173, %c64_174], %528 {strides = array<i32>} : memref<2x1536xf32, #tpu.memory_space<vmem>>, vector<2x32xf32>,
    %c0_175 = arith.constant 0 : index
    %c0_176 = arith.constant 0 : index
    %c6_177 = arith.constant 6 : index
    %c0_178 = arith.constant 0 : index
    %530 = vector.load %arg6[%c0_175, %c0_176, %c6_177, %c0_178] : memref<2x3x34x34xf32, #tpu.memory_space<vmem>>, vector<2x1x1x34xf32>
    %531 = vector.shape_cast %530 : vector<2x1x1x34xf32> to vector<2x34xf32>
    %c0_179 = arith.constant 0 : index
    %c0_180 = arith.constant 0 : index
    %c7_181 = arith.constant 7 : index
    %c0_182 = arith.constant 0 : index
    %532 = vector.load %arg6[%c0_179, %c0_180, %c7_181, %c0_182] : memref<2x3x34x34xf32, #tpu.memory_space<vmem>>, vector<2x1x1x34xf32>
    %533 = vector.shape_cast %532 : vector<2x1x1x34xf32> to vector<2x34xf32>
    %534 = arith.maximumf %531, %533 : vector<2x34xf32>
    %c0_183 = arith.constant 0 : index
    %c0_184 = arith.constant 0 : index
    %c8_185 = arith.constant 8 : index
    %c0_186 = arith.constant 0 : index
    %535 = vector.load %arg6[%c0_183, %c0_184, %c8_185, %c0_186] : memref<2x3x34x34xf32, #tpu.memory_space<vmem>>, vector<2x1x1x34xf32>
    %536 = vector.shape_cast %535 : vector<2x1x1x34xf32> to vector<2x34xf32>
    %537 = arith.maximumf %534, %536 : vector<2x34xf32>
    %538 = vector.extract_strided_slice %537 {offsets = [0, 0], sizes = [2, 32], strides = [1, 1]} : vector<2x34xf32> to vector<2x32xf32>
    %539 = vector.extract_strided_slice %537 {offsets = [0, 1], sizes = [2, 32], strides = [1, 1]} : vector<2x34xf32> to vector<2x32xf32>
    %540 = arith.maximumf %538, %539 : vector<2x32xf32>
    %541 = vector.extract_strided_slice %537 {offsets = [0, 2], sizes = [2, 32], strides = [1, 1]} : vector<2x34xf32> to vector<2x32xf32>
    %542 = arith.maximumf %540, %541 : vector<2x32xf32>
    %c0_187 = arith.constant 0 : index
    %c96 = arith.constant 96 : index
    %543 = vector.load %arg7[%c0_187, %c96] : memref<2x1536xf32, #tpu.memory_space<vmem>>, vector<2x32xf32>
    tpu.vector_store %arg7[%c0_187, %c96], %542 {strides = array<i32>} : memref<2x1536xf32, #tpu.memory_space<vmem>>, vector<2x32xf32>,
    %c0_188 = arith.constant 0 : index
    %c0_189 = arith.constant 0 : index
    %c8_190 = arith.constant 8 : index
    %c0_191 = arith.constant 0 : index
    %544 = vector.load %arg6[%c0_188, %c0_189, %c8_190, %c0_191] : memref<2x3x34x34xf32, #tpu.memory_space<vmem>>, vector<2x1x1x34xf32>
    %545 = vector.shape_cast %544 : vector<2x1x1x34xf32> to vector<2x34xf32>
    %c0_192 = arith.constant 0 : index
    %c0_193 = arith.constant 0 : index
    %c9_194 = arith.constant 9 : index
    %c0_195 = arith.constant 0 : index
    %546 = vector.load %arg6[%c0_192, %c0_193, %c9_194, %c0_195] : memref<2x3x34x34xf32, #tpu.memory_space<vmem>>, vector<2x1x1x34xf32>
    %547 = vector.shape_cast %546 : vector<2x1x1x34xf32> to vector<2x34xf32>
    %548 = arith.maximumf %545, %547 : vector<2x34xf32>
    %c0_196 = arith.constant 0 : index
    %c0_197 = arith.constant 0 : index
    %c10_198 = arith.constant 10 : index
    %c0_199 = arith.constant 0 : index
    %549 = vector.load %arg6[%c0_196, %c0_197, %c10_198, %c0_199] : memref<2x3x34x34xf32, #tpu.memory_space<vmem>>, vector<2x1x1x34xf32>
    %550 = vector.shape_cast %549 : vector<2x1x1x34xf32> to vector<2x34xf32>
    %551 = arith.maximumf %548, %550 : vector<2x34xf32>
    %552 = vector.extract_strided_slice %551 {offsets = [0, 0], sizes = [2, 32], strides = [1, 1]} : vector<2x34xf32> to vector<2x32xf32>
    %553 = vector.extract_strided_slice %551 {offsets = [0, 1], sizes = [2, 32], strides = [1, 1]} : vector<2x34xf32> to vector<2x32xf32>
    %554 = arith.maximumf %552, %553 : vector<2x32xf32>
    %555 = vector.extract_strided_slice %551 {offsets = [0, 2], sizes = [2, 32], strides = [1, 1]} : vector<2x34xf32> to vector<2x32xf32>
    %556 = arith.maximumf %554, %555 : vector<2x32xf32>
    %c0_200 = arith.constant 0 : index
    %c128 = arith.constant 128 : index
    %557 = vector.load %arg7[%c0_200, %c128] : memref<2x1536xf32, #tpu.memory_space<vmem>>, vector<2x32xf32>
    tpu.vector_store %arg7[%c0_200, %c128], %556 {strides = array<i32>} : memref<2x1536xf32, #tpu.memory_space<vmem>>, vector<2x32xf32>,
    %c0_201 = arith.constant 0 : index
    %c0_202 = arith.constant 0 : index
    %c10_203 = arith.constant 10 : index
    %c0_204 = arith.constant 0 : index
    %558 = vector.load %arg6[%c0_201, %c0_202, %c10_203, %c0_204] : memref<2x3x34x34xf32, #tpu.memory_space<vmem>>, vector<2x1x1x34xf32>
    %559 = vector.shape_cast %558 : vector<2x1x1x34xf32> to vector<2x34xf32>
    %c0_205 = arith.constant 0 : index
    %c0_206 = arith.constant 0 : index
    %c11_207 = arith.constant 11 : index
    %c0_208 = arith.constant 0 : index
    %560 = vector.load %arg6[%c0_205, %c0_206, %c11_207, %c0_208] : memref<2x3x34x34xf32, #tpu.memory_space<vmem>>, vector<2x1x1x34xf32>
    %561 = vector.shape_cast %560 : vector<2x1x1x34xf32> to vector<2x34xf32>
    %562 = arith.maximumf %559, %561 : vector<2x34xf32>
    %c0_209 = arith.constant 0 : index
    %c0_210 = arith.constant 0 : index
    %c12_211 = arith.constant 12 : index
    %c0_212 = arith.constant 0 : index
    %563 = vector.load %arg6[%c0_209, %c0_210, %c12_211, %c0_212] : memref<2x3x34x34xf32, #tpu.memory_space<vmem>>, vector<2x1x1x34xf32>
    %564 = vector.shape_cast %563 : vector<2x1x1x34xf32> to vector<2x34xf32>
    %565 = arith.maximumf %562, %564 : vector<2x34xf32>
    %566 = vector.extract_strided_slice %565 {offsets = [0, 0], sizes = [2, 32], strides = [1, 1]} : vector<2x34xf32> to vector<2x32xf32>
    %567 = vector.extract_strided_slice %565 {offsets = [0, 1], sizes = [2, 32], strides = [1, 1]} : vector<2x34xf32> to vector<2x32xf32>
    %568 = arith.maximumf %566, %567 : vector<2x32xf32>
    %569 = vector.extract_strided_slice %565 {offsets = [0, 2], sizes = [2, 32], strides = [1, 1]} : vector<2x34xf32> to vector<2x32xf32>
    %570 = arith.maximumf %568, %569 : vector<2x32xf32>
    %c0_213 = arith.constant 0 : index
    %c160 = arith.constant 160 : index
    %571 = vector.load %arg7[%c0_213, %c160] : memref<2x1536xf32, #tpu.memory_space<vmem>>, vector<2x32xf32>
    tpu.vector_store %arg7[%c0_213, %c160], %570 {strides = array<i32>} : memref<2x1536xf32, #tpu.memory_space<vmem>>, vector<2x32xf32>,
    %c0_214 = arith.constant 0 : index
    %c0_215 = arith.constant 0 : index
    %c12_216 = arith.constant 12 : index
    %c0_217 = arith.constant 0 : index
    %572 = vector.load %arg6[%c0_214, %c0_215, %c12_216, %c0_217] : memref<2x3x34x34xf32, #tpu.memory_space<vmem>>, vector<2x1x1x34xf32>
    %573 = vector.shape_cast %572 : vector<2x1x1x34xf32> to vector<2x34xf32>
    %c0_218 = arith.constant 0 : index
    %c0_219 = arith.constant 0 : index
    %c13_220 = arith.constant 13 : index
    %c0_221 = arith.constant 0 : index
    %574 = vector.load %arg6[%c0_218, %c0_219, %c13_220, %c0_221] : memref<2x3x34x34xf32, #tpu.memory_space<vmem>>, vector<2x1x1x34xf32>
    %575 = vector.shape_cast %574 : vector<2x1x1x34xf32> to vector<2x34xf32>
    %576 = arith.maximumf %573, %575 : vector<2x34xf32>
    %c0_222 = arith.constant 0 : index
    %c0_223 = arith.constant 0 : index
    %c14_224 = arith.constant 14 : index
    %c0_225 = arith.constant 0 : index
    %577 = vector.load %arg6[%c0_222, %c0_223, %c14_224, %c0_225] : memref<2x3x34x34xf32, #tpu.memory_space<vmem>>, vector<2x1x1x34xf32>
    %578 = vector.shape_cast %577 : vector<2x1x1x34xf32> to vector<2x34xf32>
    %579 = arith.maximumf %576, %578 : vector<2x34xf32>
    %580 = vector.extract_strided_slice %579 {offsets = [0, 0], sizes = [2, 32], strides = [1, 1]} : vector<2x34xf32> to vector<2x32xf32>
    %581 = vector.extract_strided_slice %579 {offsets = [0, 1], sizes = [2, 32], strides = [1, 1]} : vector<2x34xf32> to vector<2x32xf32>
    %582 = arith.maximumf %580, %581 : vector<2x32xf32>
    %583 = vector.extract_strided_slice %579 {offsets = [0, 2], sizes = [2, 32], strides = [1, 1]} : vector<2x34xf32> to vector<2x32xf32>
    %584 = arith.maximumf %582, %583 : vector<2x32xf32>
    %c0_226 = arith.constant 0 : index
    %c192 = arith.constant 192 : index
    %585 = vector.load %arg7[%c0_226, %c192] : memref<2x1536xf32, #tpu.memory_space<vmem>>, vector<2x32xf32>
    tpu.vector_store %arg7[%c0_226, %c192], %584 {strides = array<i32>} : memref<2x1536xf32, #tpu.memory_space<vmem>>, vector<2x32xf32>,
    %c0_227 = arith.constant 0 : index
    %c0_228 = arith.constant 0 : index
    %c14_229 = arith.constant 14 : index
    %c0_230 = arith.constant 0 : index
    %586 = vector.load %arg6[%c0_227, %c0_228, %c14_229, %c0_230] : memref<2x3x34x34xf32, #tpu.memory_space<vmem>>, vector<2x1x1x34xf32>
    %587 = vector.shape_cast %586 : vector<2x1x1x34xf32> to vector<2x34xf32>
    %c0_231 = arith.constant 0 : index
    %c0_232 = arith.constant 0 : index
    %c15_233 = arith.constant 15 : index
    %c0_234 = arith.constant 0 : index
    %588 = vector.load %arg6[%c0_231, %c0_232, %c15_233, %c0_234] : memref<2x3x34x34xf32, #tpu.memory_space<vmem>>, vector<2x1x1x34xf32>
    %589 = vector.shape_cast %588 : vector<2x1x1x34xf32> to vector<2x34xf32>
    %590 = arith.maximumf %587, %589 : vector<2x34xf32>
    %c0_235 = arith.constant 0 : index
    %c0_236 = arith.constant 0 : index
    %c16_237 = arith.constant 16 : index
    %c0_238 = arith.constant 0 : index
    %591 = vector.load %arg6[%c0_235, %c0_236, %c16_237, %c0_238] : memref<2x3x34x34xf32, #tpu.memory_space<vmem>>, vector<2x1x1x34xf32>
    %592 = vector.shape_cast %591 : vector<2x1x1x34xf32> to vector<2x34xf32>
    %593 = arith.maximumf %590, %592 : vector<2x34xf32>
    %594 = vector.extract_strided_slice %593 {offsets = [0, 0], sizes = [2, 32], strides = [1, 1]} : vector<2x34xf32> to vector<2x32xf32>
    %595 = vector.extract_strided_slice %593 {offsets = [0, 1], sizes = [2, 32], strides = [1, 1]} : vector<2x34xf32> to vector<2x32xf32>
    %596 = arith.maximumf %594, %595 : vector<2x32xf32>
    %597 = vector.extract_strided_slice %593 {offsets = [0, 2], sizes = [2, 32], strides = [1, 1]} : vector<2x34xf32> to vector<2x32xf32>
    %598 = arith.maximumf %596, %597 : vector<2x32xf32>
    %c0_239 = arith.constant 0 : index
    %c224 = arith.constant 224 : index
    %599 = vector.load %arg7[%c0_239, %c224] : memref<2x1536xf32, #tpu.memory_space<vmem>>, vector<2x32xf32>
    tpu.vector_store %arg7[%c0_239, %c224], %598 {strides = array<i32>} : memref<2x1536xf32, #tpu.memory_space<vmem>>, vector<2x32xf32>,
    %c0_240 = arith.constant 0 : index
    %c0_241 = arith.constant 0 : index
    %c16_242 = arith.constant 16 : index
    %c0_243 = arith.constant 0 : index
    %600 = vector.load %arg6[%c0_240, %c0_241, %c16_242, %c0_243] : memref<2x3x34x34xf32, #tpu.memory_space<vmem>>, vector<2x1x1x34xf32>
    %601 = vector.shape_cast %600 : vector<2x1x1x34xf32> to vector<2x34xf32>
    %c0_244 = arith.constant 0 : index
    %c0_245 = arith.constant 0 : index
    %c17_246 = arith.constant 17 : index
    %c0_247 = arith.constant 0 : index
    %602 = vector.load %arg6[%c0_244, %c0_245, %c17_246, %c0_247] : memref<2x3x34x34xf32, #tpu.memory_space<vmem>>, vector<2x1x1x34xf32>
    %603 = vector.shape_cast %602 : vector<2x1x1x34xf32> to vector<2x34xf32>
    %604 = arith.maximumf %601, %603 : vector<2x34xf32>
    %c0_248 = arith.constant 0 : index
    %c0_249 = arith.constant 0 : index
    %c18_250 = arith.constant 18 : index
    %c0_251 = arith.constant 0 : index
    %605 = vector.load %arg6[%c0_248, %c0_249, %c18_250, %c0_251] : memref<2x3x34x34xf32, #tpu.memory_space<vmem>>, vector<2x1x1x34xf32>
    %606 = vector.shape_cast %605 : vector<2x1x1x34xf32> to vector<2x34xf32>
    %607 = arith.maximumf %604, %606 : vector<2x34xf32>
    %608 = vector.extract_strided_slice %607 {offsets = [0, 0], sizes = [2, 32], strides = [1, 1]} : vector<2x34xf32> to vector<2x32xf32>
    %609 = vector.extract_strided_slice %607 {offsets = [0, 1], sizes = [2, 32], strides = [1, 1]} : vector<2x34xf32> to vector<2x32xf32>
    %610 = arith.maximumf %608, %609 : vector<2x32xf32>
    %611 = vector.extract_strided_slice %607 {offsets = [0, 2], sizes = [2, 32], strides = [1, 1]} : vector<2x34xf32> to vector<2x32xf32>
    %612 = arith.maximumf %610, %611 : vector<2x32xf32>
    %c0_252 = arith.constant 0 : index
    %c256 = arith.constant 256 : index
    %613 = vector.load %arg7[%c0_252, %c256] : memref<2x1536xf32, #tpu.memory_space<vmem>>, vector<2x32xf32>
    tpu.vector_store %arg7[%c0_252, %c256], %612 {strides = array<i32>} : memref<2x1536xf32, #tpu.memory_space<vmem>>, vector<2x32xf32>,
    %c0_253 = arith.constant 0 : index
    %c0_254 = arith.constant 0 : index
    %c18_255 = arith.constant 18 : index
    %c0_256 = arith.constant 0 : index
    %614 = vector.load %arg6[%c0_253, %c0_254, %c18_255, %c0_256] : memref<2x3x34x34xf32, #tpu.memory_space<vmem>>, vector<2x1x1x34xf32>
    %615 = vector.shape_cast %614 : vector<2x1x1x34xf32> to vector<2x34xf32>
    %c0_257 = arith.constant 0 : index
    %c0_258 = arith.constant 0 : index
    %c19_259 = arith.constant 19 : index
    %c0_260 = arith.constant 0 : index
    %616 = vector.load %arg6[%c0_257, %c0_258, %c19_259, %c0_260] : memref<2x3x34x34xf32, #tpu.memory_space<vmem>>, vector<2x1x1x34xf32>
    %617 = vector.shape_cast %616 : vector<2x1x1x34xf32> to vector<2x34xf32>
    %618 = arith.maximumf %615, %617 : vector<2x34xf32>
    %c0_261 = arith.constant 0 : index
    %c0_262 = arith.constant 0 : index
    %c20_263 = arith.constant 20 : index
    %c0_264 = arith.constant 0 : index
    %619 = vector.load %arg6[%c0_261, %c0_262, %c20_263, %c0_264] : memref<2x3x34x34xf32, #tpu.memory_space<vmem>>, vector<2x1x1x34xf32>
    %620 = vector.shape_cast %619 : vector<2x1x1x34xf32> to vector<2x34xf32>
    %621 = arith.maximumf %618, %620 : vector<2x34xf32>
    %622 = vector.extract_strided_slice %621 {offsets = [0, 0], sizes = [2, 32], strides = [1, 1]} : vector<2x34xf32> to vector<2x32xf32>
    %623 = vector.extract_strided_slice %621 {offsets = [0, 1], sizes = [2, 32], strides = [1, 1]} : vector<2x34xf32> to vector<2x32xf32>
    %624 = arith.maximumf %622, %623 : vector<2x32xf32>
    %625 = vector.extract_strided_slice %621 {offsets = [0, 2], sizes = [2, 32], strides = [1, 1]} : vector<2x34xf32> to vector<2x32xf32>
    %626 = arith.maximumf %624, %625 : vector<2x32xf32>
    %c0_265 = arith.constant 0 : index
    %c288 = arith.constant 288 : index
    %627 = vector.load %arg7[%c0_265, %c288] : memref<2x1536xf32, #tpu.memory_space<vmem>>, vector<2x32xf32>
    tpu.vector_store %arg7[%c0_265, %c288], %626 {strides = array<i32>} : memref<2x1536xf32, #tpu.memory_space<vmem>>, vector<2x32xf32>,
    %c0_266 = arith.constant 0 : index
    %c0_267 = arith.constant 0 : index
    %c20_268 = arith.constant 20 : index
    %c0_269 = arith.constant 0 : index
    %628 = vector.load %arg6[%c0_266, %c0_267, %c20_268, %c0_269] : memref<2x3x34x34xf32, #tpu.memory_space<vmem>>, vector<2x1x1x34xf32>
    %629 = vector.shape_cast %628 : vector<2x1x1x34xf32> to vector<2x34xf32>
    %c0_270 = arith.constant 0 : index
    %c0_271 = arith.constant 0 : index
    %c21_272 = arith.constant 21 : index
    %c0_273 = arith.constant 0 : index
    %630 = vector.load %arg6[%c0_270, %c0_271, %c21_272, %c0_273] : memref<2x3x34x34xf32, #tpu.memory_space<vmem>>, vector<2x1x1x34xf32>
    %631 = vector.shape_cast %630 : vector<2x1x1x34xf32> to vector<2x34xf32>
    %632 = arith.maximumf %629, %631 : vector<2x34xf32>
    %c0_274 = arith.constant 0 : index
    %c0_275 = arith.constant 0 : index
    %c22_276 = arith.constant 22 : index
    %c0_277 = arith.constant 0 : index
    %633 = vector.load %arg6[%c0_274, %c0_275, %c22_276, %c0_277] : memref<2x3x34x34xf32, #tpu.memory_space<vmem>>, vector<2x1x1x34xf32>
    %634 = vector.shape_cast %633 : vector<2x1x1x34xf32> to vector<2x34xf32>
    %635 = arith.maximumf %632, %634 : vector<2x34xf32>
    %636 = vector.extract_strided_slice %635 {offsets = [0, 0], sizes = [2, 32], strides = [1, 1]} : vector<2x34xf32> to vector<2x32xf32>
    %637 = vector.extract_strided_slice %635 {offsets = [0, 1], sizes = [2, 32], strides = [1, 1]} : vector<2x34xf32> to vector<2x32xf32>
    %638 = arith.maximumf %636, %637 : vector<2x32xf32>
    %639 = vector.extract_strided_slice %635 {offsets = [0, 2], sizes = [2, 32], strides = [1, 1]} : vector<2x34xf32> to vector<2x32xf32>
    %640 = arith.maximumf %638, %639 : vector<2x32xf32>
    %c0_278 = arith.constant 0 : index
    %c320 = arith.constant 320 : index
    %641 = vector.load %arg7[%c0_278, %c320] : memref<2x1536xf32, #tpu.memory_space<vmem>>, vector<2x32xf32>
    tpu.vector_store %arg7[%c0_278, %c320], %640 {strides = array<i32>} : memref<2x1536xf32, #tpu.memory_space<vmem>>, vector<2x32xf32>,
    %c0_279 = arith.constant 0 : index
    %c0_280 = arith.constant 0 : index
    %c22_281 = arith.constant 22 : index
    %c0_282 = arith.constant 0 : index
    %642 = vector.load %arg6[%c0_279, %c0_280, %c22_281, %c0_282] : memref<2x3x34x34xf32, #tpu.memory_space<vmem>>, vector<2x1x1x34xf32>
    %643 = vector.shape_cast %642 : vector<2x1x1x34xf32> to vector<2x34xf32>
    %c0_283 = arith.constant 0 : index
    %c0_284 = arith.constant 0 : index
    %c23_285 = arith.constant 23 : index
    %c0_286 = arith.constant 0 : index
    %644 = vector.load %arg6[%c0_283, %c0_284, %c23_285, %c0_286] : memref<2x3x34x34xf32, #tpu.memory_space<vmem>>, vector<2x1x1x34xf32>
    %645 = vector.shape_cast %644 : vector<2x1x1x34xf32> to vector<2x34xf32>
    %646 = arith.maximumf %643, %645 : vector<2x34xf32>
    %c0_287 = arith.constant 0 : index
    %c0_288 = arith.constant 0 : index
    %c24_289 = arith.constant 24 : index
    %c0_290 = arith.constant 0 : index
    %647 = vector.load %arg6[%c0_287, %c0_288, %c24_289, %c0_290] : memref<2x3x34x34xf32, #tpu.memory_space<vmem>>, vector<2x1x1x34xf32>
    %648 = vector.shape_cast %647 : vector<2x1x1x34xf32> to vector<2x34xf32>
    %649 = arith.maximumf %646, %648 : vector<2x34xf32>
    %650 = vector.extract_strided_slice %649 {offsets = [0, 0], sizes = [2, 32], strides = [1, 1]} : vector<2x34xf32> to vector<2x32xf32>
    %651 = vector.extract_strided_slice %649 {offsets = [0, 1], sizes = [2, 32], strides = [1, 1]} : vector<2x34xf32> to vector<2x32xf32>
    %652 = arith.maximumf %650, %651 : vector<2x32xf32>
    %653 = vector.extract_strided_slice %649 {offsets = [0, 2], sizes = [2, 32], strides = [1, 1]} : vector<2x34xf32> to vector<2x32xf32>
    %654 = arith.maximumf %652, %653 : vector<2x32xf32>
    %c0_291 = arith.constant 0 : index
    %c352 = arith.constant 352 : index
    %655 = vector.load %arg7[%c0_291, %c352] : memref<2x1536xf32, #tpu.memory_space<vmem>>, vector<2x32xf32>
    tpu.vector_store %arg7[%c0_291, %c352], %654 {strides = array<i32>} : memref<2x1536xf32, #tpu.memory_space<vmem>>, vector<2x32xf32>,
    %c0_292 = arith.constant 0 : index
    %c0_293 = arith.constant 0 : index
    %c24_294 = arith.constant 24 : index
    %c0_295 = arith.constant 0 : index
    %656 = vector.load %arg6[%c0_292, %c0_293, %c24_294, %c0_295] : memref<2x3x34x34xf32, #tpu.memory_space<vmem>>, vector<2x1x1x34xf32>
    %657 = vector.shape_cast %656 : vector<2x1x1x34xf32> to vector<2x34xf32>
    %c0_296 = arith.constant 0 : index
    %c0_297 = arith.constant 0 : index
    %c25_298 = arith.constant 25 : index
    %c0_299 = arith.constant 0 : index
    %658 = vector.load %arg6[%c0_296, %c0_297, %c25_298, %c0_299] : memref<2x3x34x34xf32, #tpu.memory_space<vmem>>, vector<2x1x1x34xf32>
    %659 = vector.shape_cast %658 : vector<2x1x1x34xf32> to vector<2x34xf32>
    %660 = arith.maximumf %657, %659 : vector<2x34xf32>
    %c0_300 = arith.constant 0 : index
    %c0_301 = arith.constant 0 : index
    %c26_302 = arith.constant 26 : index
    %c0_303 = arith.constant 0 : index
    %661 = vector.load %arg6[%c0_300, %c0_301, %c26_302, %c0_303] : memref<2x3x34x34xf32, #tpu.memory_space<vmem>>, vector<2x1x1x34xf32>
    %662 = vector.shape_cast %661 : vector<2x1x1x34xf32> to vector<2x34xf32>
    %663 = arith.maximumf %660, %662 : vector<2x34xf32>
    %664 = vector.extract_strided_slice %663 {offsets = [0, 0], sizes = [2, 32], strides = [1, 1]} : vector<2x34xf32> to vector<2x32xf32>
    %665 = vector.extract_strided_slice %663 {offsets = [0, 1], sizes = [2, 32], strides = [1, 1]} : vector<2x34xf32> to vector<2x32xf32>
    %666 = arith.maximumf %664, %665 : vector<2x32xf32>
    %667 = vector.extract_strided_slice %663 {offsets = [0, 2], sizes = [2, 32], strides = [1, 1]} : vector<2x34xf32> to vector<2x32xf32>
    %668 = arith.maximumf %666, %667 : vector<2x32xf32>
    %c0_304 = arith.constant 0 : index
    %c384 = arith.constant 384 : index
    %669 = vector.load %arg7[%c0_304, %c384] : memref<2x1536xf32, #tpu.memory_space<vmem>>, vector<2x32xf32>
    tpu.vector_store %arg7[%c0_304, %c384], %668 {strides = array<i32>} : memref<2x1536xf32, #tpu.memory_space<vmem>>, vector<2x32xf32>,
    %c0_305 = arith.constant 0 : index
    %c0_306 = arith.constant 0 : index
    %c26_307 = arith.constant 26 : index
    %c0_308 = arith.constant 0 : index
    %670 = vector.load %arg6[%c0_305, %c0_306, %c26_307, %c0_308] : memref<2x3x34x34xf32, #tpu.memory_space<vmem>>, vector<2x1x1x34xf32>
    %671 = vector.shape_cast %670 : vector<2x1x1x34xf32> to vector<2x34xf32>
    %c0_309 = arith.constant 0 : index
    %c0_310 = arith.constant 0 : index
    %c27_311 = arith.constant 27 : index
    %c0_312 = arith.constant 0 : index
    %672 = vector.load %arg6[%c0_309, %c0_310, %c27_311, %c0_312] : memref<2x3x34x34xf32, #tpu.memory_space<vmem>>, vector<2x1x1x34xf32>
    %673 = vector.shape_cast %672 : vector<2x1x1x34xf32> to vector<2x34xf32>
    %674 = arith.maximumf %671, %673 : vector<2x34xf32>
    %c0_313 = arith.constant 0 : index
    %c0_314 = arith.constant 0 : index
    %c28_315 = arith.constant 28 : index
    %c0_316 = arith.constant 0 : index
    %675 = vector.load %arg6[%c0_313, %c0_314, %c28_315, %c0_316] : memref<2x3x34x34xf32, #tpu.memory_space<vmem>>, vector<2x1x1x34xf32>
    %676 = vector.shape_cast %675 : vector<2x1x1x34xf32> to vector<2x34xf32>
    %677 = arith.maximumf %674, %676 : vector<2x34xf32>
    %678 = vector.extract_strided_slice %677 {offsets = [0, 0], sizes = [2, 32], strides = [1, 1]} : vector<2x34xf32> to vector<2x32xf32>
    %679 = vector.extract_strided_slice %677 {offsets = [0, 1], sizes = [2, 32], strides = [1, 1]} : vector<2x34xf32> to vector<2x32xf32>
    %680 = arith.maximumf %678, %679 : vector<2x32xf32>
    %681 = vector.extract_strided_slice %677 {offsets = [0, 2], sizes = [2, 32], strides = [1, 1]} : vector<2x34xf32> to vector<2x32xf32>
    %682 = arith.maximumf %680, %681 : vector<2x32xf32>
    %c0_317 = arith.constant 0 : index
    %c416 = arith.constant 416 : index
    %683 = vector.load %arg7[%c0_317, %c416] : memref<2x1536xf32, #tpu.memory_space<vmem>>, vector<2x32xf32>
    tpu.vector_store %arg7[%c0_317, %c416], %682 {strides = array<i32>} : memref<2x1536xf32, #tpu.memory_space<vmem>>, vector<2x32xf32>,
    %c0_318 = arith.constant 0 : index
    %c0_319 = arith.constant 0 : index
    %c28_320 = arith.constant 28 : index
    %c0_321 = arith.constant 0 : index
    %684 = vector.load %arg6[%c0_318, %c0_319, %c28_320, %c0_321] : memref<2x3x34x34xf32, #tpu.memory_space<vmem>>, vector<2x1x1x34xf32>
    %685 = vector.shape_cast %684 : vector<2x1x1x34xf32> to vector<2x34xf32>
    %c0_322 = arith.constant 0 : index
    %c0_323 = arith.constant 0 : index
    %c29_324 = arith.constant 29 : index
    %c0_325 = arith.constant 0 : index
    %686 = vector.load %arg6[%c0_322, %c0_323, %c29_324, %c0_325] : memref<2x3x34x34xf32, #tpu.memory_space<vmem>>, vector<2x1x1x34xf32>
    %687 = vector.shape_cast %686 : vector<2x1x1x34xf32> to vector<2x34xf32>
    %688 = arith.maximumf %685, %687 : vector<2x34xf32>
    %c0_326 = arith.constant 0 : index
    %c0_327 = arith.constant 0 : index
    %c30_328 = arith.constant 30 : index
    %c0_329 = arith.constant 0 : index
    %689 = vector.load %arg6[%c0_326, %c0_327, %c30_328, %c0_329] : memref<2x3x34x34xf32, #tpu.memory_space<vmem>>, vector<2x1x1x34xf32>
    %690 = vector.shape_cast %689 : vector<2x1x1x34xf32> to vector<2x34xf32>
    %691 = arith.maximumf %688, %690 : vector<2x34xf32>
    %692 = vector.extract_strided_slice %691 {offsets = [0, 0], sizes = [2, 32], strides = [1, 1]} : vector<2x34xf32> to vector<2x32xf32>
    %693 = vector.extract_strided_slice %691 {offsets = [0, 1], sizes = [2, 32], strides = [1, 1]} : vector<2x34xf32> to vector<2x32xf32>
    %694 = arith.maximumf %692, %693 : vector<2x32xf32>
    %695 = vector.extract_strided_slice %691 {offsets = [0, 2], sizes = [2, 32], strides = [1, 1]} : vector<2x34xf32> to vector<2x32xf32>
    %696 = arith.maximumf %694, %695 : vector<2x32xf32>
    %c0_330 = arith.constant 0 : index
    %c448 = arith.constant 448 : index
    %697 = vector.load %arg7[%c0_330, %c448] : memref<2x1536xf32, #tpu.memory_space<vmem>>, vector<2x32xf32>
    tpu.vector_store %arg7[%c0_330, %c448], %696 {strides = array<i32>} : memref<2x1536xf32, #tpu.memory_space<vmem>>, vector<2x32xf32>,
    %c0_331 = arith.constant 0 : index
    %c0_332 = arith.constant 0 : index
    %c30_333 = arith.constant 30 : index
    %c0_334 = arith.constant 0 : index
    %698 = vector.load %arg6[%c0_331, %c0_332, %c30_333, %c0_334] : memref<2x3x34x34xf32, #tpu.memory_space<vmem>>, vector<2x1x1x34xf32>
    %699 = vector.shape_cast %698 : vector<2x1x1x34xf32> to vector<2x34xf32>
    %c0_335 = arith.constant 0 : index
    %c0_336 = arith.constant 0 : index
    %c31_337 = arith.constant 31 : index
    %c0_338 = arith.constant 0 : index
    %700 = vector.load %arg6[%c0_335, %c0_336, %c31_337, %c0_338] : memref<2x3x34x34xf32, #tpu.memory_space<vmem>>, vector<2x1x1x34xf32>
    %701 = vector.shape_cast %700 : vector<2x1x1x34xf32> to vector<2x34xf32>
    %702 = arith.maximumf %699, %701 : vector<2x34xf32>
    %c0_339 = arith.constant 0 : index
    %c0_340 = arith.constant 0 : index
    %c32_341 = arith.constant 32 : index
    %c0_342 = arith.constant 0 : index
    %703 = vector.load %arg6[%c0_339, %c0_340, %c32_341, %c0_342] : memref<2x3x34x34xf32, #tpu.memory_space<vmem>>, vector<2x1x1x34xf32>
    %704 = vector.shape_cast %703 : vector<2x1x1x34xf32> to vector<2x34xf32>
    %705 = arith.maximumf %702, %704 : vector<2x34xf32>
    %706 = vector.extract_strided_slice %705 {offsets = [0, 0], sizes = [2, 32], strides = [1, 1]} : vector<2x34xf32> to vector<2x32xf32>
    %707 = vector.extract_strided_slice %705 {offsets = [0, 1], sizes = [2, 32], strides = [1, 1]} : vector<2x34xf32> to vector<2x32xf32>
    %708 = arith.maximumf %706, %707 : vector<2x32xf32>
    %709 = vector.extract_strided_slice %705 {offsets = [0, 2], sizes = [2, 32], strides = [1, 1]} : vector<2x34xf32> to vector<2x32xf32>
    %710 = arith.maximumf %708, %709 : vector<2x32xf32>
    %c0_343 = arith.constant 0 : index
    %c480 = arith.constant 480 : index
    %711 = vector.load %arg7[%c0_343, %c480] : memref<2x1536xf32, #tpu.memory_space<vmem>>, vector<2x32xf32>
    tpu.vector_store %arg7[%c0_343, %c480], %710 {strides = array<i32>} : memref<2x1536xf32, #tpu.memory_space<vmem>>, vector<2x32xf32>,
    %c0_344 = arith.constant 0 : index
    %c1_345 = arith.constant 1 : index
    %c0_346 = arith.constant 0 : index
    %c0_347 = arith.constant 0 : index
    %712 = vector.load %arg6[%c0_344, %c1_345, %c0_346, %c0_347] : memref<2x3x34x34xf32, #tpu.memory_space<vmem>>, vector<2x1x1x34xf32>
    %713 = vector.shape_cast %712 : vector<2x1x1x34xf32> to vector<2x34xf32>
    %c0_348 = arith.constant 0 : index
    %c1_349 = arith.constant 1 : index
    %c1_350 = arith.constant 1 : index
    %c0_351 = arith.constant 0 : index
    %714 = vector.load %arg6[%c0_348, %c1_349, %c1_350, %c0_351] : memref<2x3x34x34xf32, #tpu.memory_space<vmem>>, vector<2x1x1x34xf32>
    %715 = vector.shape_cast %714 : vector<2x1x1x34xf32> to vector<2x34xf32>
    %716 = arith.maximumf %713, %715 : vector<2x34xf32>
    %c0_352 = arith.constant 0 : index
    %c1_353 = arith.constant 1 : index
    %c2_354 = arith.constant 2 : index
    %c0_355 = arith.constant 0 : index
    %717 = vector.load %arg6[%c0_352, %c1_353, %c2_354, %c0_355] : memref<2x3x34x34xf32, #tpu.memory_space<vmem>>, vector<2x1x1x34xf32>
    %718 = vector.shape_cast %717 : vector<2x1x1x34xf32> to vector<2x34xf32>
    %719 = arith.maximumf %716, %718 : vector<2x34xf32>
    %720 = vector.extract_strided_slice %719 {offsets = [0, 0], sizes = [2, 32], strides = [1, 1]} : vector<2x34xf32> to vector<2x32xf32>
    %721 = vector.extract_strided_slice %719 {offsets = [0, 1], sizes = [2, 32], strides = [1, 1]} : vector<2x34xf32> to vector<2x32xf32>
    %722 = arith.maximumf %720, %721 : vector<2x32xf32>
    %723 = vector.extract_strided_slice %719 {offsets = [0, 2], sizes = [2, 32], strides = [1, 1]} : vector<2x34xf32> to vector<2x32xf32>
    %724 = arith.maximumf %722, %723 : vector<2x32xf32>
    %c0_356 = arith.constant 0 : index
    %c512 = arith.constant 512 : index
    %725 = vector.load %arg7[%c0_356, %c512] : memref<2x1536xf32, #tpu.memory_space<vmem>>, vector<2x32xf32>
    tpu.vector_store %arg7[%c0_356, %c512], %724 {strides = array<i32>} : memref<2x1536xf32, #tpu.memory_space<vmem>>, vector<2x32xf32>,
    %c0_357 = arith.constant 0 : index
    %c1_358 = arith.constant 1 : index
    %c2_359 = arith.constant 2 : index
    %c0_360 = arith.constant 0 : index
    %726 = vector.load %arg6[%c0_357, %c1_358, %c2_359, %c0_360] : memref<2x3x34x34xf32, #tpu.memory_space<vmem>>, vector<2x1x1x34xf32>
    %727 = vector.shape_cast %726 : vector<2x1x1x34xf32> to vector<2x34xf32>
    %c0_361 = arith.constant 0 : index
    %c1_362 = arith.constant 1 : index
    %c3_363 = arith.constant 3 : index
    %c0_364 = arith.constant 0 : index
    %728 = vector.load %arg6[%c0_361, %c1_362, %c3_363, %c0_364] : memref<2x3x34x34xf32, #tpu.memory_space<vmem>>, vector<2x1x1x34xf32>
    %729 = vector.shape_cast %728 : vector<2x1x1x34xf32> to vector<2x34xf32>
    %730 = arith.maximumf %727, %729 : vector<2x34xf32>
    %c0_365 = arith.constant 0 : index
    %c1_366 = arith.constant 1 : index
    %c4_367 = arith.constant 4 : index
    %c0_368 = arith.constant 0 : index
    %731 = vector.load %arg6[%c0_365, %c1_366, %c4_367, %c0_368] : memref<2x3x34x34xf32, #tpu.memory_space<vmem>>, vector<2x1x1x34xf32>
    %732 = vector.shape_cast %731 : vector<2x1x1x34xf32> to vector<2x34xf32>
    %733 = arith.maximumf %730, %732 : vector<2x34xf32>
    %734 = vector.extract_strided_slice %733 {offsets = [0, 0], sizes = [2, 32], strides = [1, 1]} : vector<2x34xf32> to vector<2x32xf32>
    %735 = vector.extract_strided_slice %733 {offsets = [0, 1], sizes = [2, 32], strides = [1, 1]} : vector<2x34xf32> to vector<2x32xf32>
    %736 = arith.maximumf %734, %735 : vector<2x32xf32>
    %737 = vector.extract_strided_slice %733 {offsets = [0, 2], sizes = [2, 32], strides = [1, 1]} : vector<2x34xf32> to vector<2x32xf32>
    %738 = arith.maximumf %736, %737 : vector<2x32xf32>
    %c0_369 = arith.constant 0 : index
    %c544 = arith.constant 544 : index
    %739 = vector.load %arg7[%c0_369, %c544] : memref<2x1536xf32, #tpu.memory_space<vmem>>, vector<2x32xf32>
    tpu.vector_store %arg7[%c0_369, %c544], %738 {strides = array<i32>} : memref<2x1536xf32, #tpu.memory_space<vmem>>, vector<2x32xf32>,
    %c0_370 = arith.constant 0 : index
    %c1_371 = arith.constant 1 : index
    %c4_372 = arith.constant 4 : index
    %c0_373 = arith.constant 0 : index
    %740 = vector.load %arg6[%c0_370, %c1_371, %c4_372, %c0_373] : memref<2x3x34x34xf32, #tpu.memory_space<vmem>>, vector<2x1x1x34xf32>
    %741 = vector.shape_cast %740 : vector<2x1x1x34xf32> to vector<2x34xf32>
    %c0_374 = arith.constant 0 : index
    %c1_375 = arith.constant 1 : index
    %c5_376 = arith.constant 5 : index
    %c0_377 = arith.constant 0 : index
    %742 = vector.load %arg6[%c0_374, %c1_375, %c5_376, %c0_377] : memref<2x3x34x34xf32, #tpu.memory_space<vmem>>, vector<2x1x1x34xf32>
    %743 = vector.shape_cast %742 : vector<2x1x1x34xf32> to vector<2x34xf32>
    %744 = arith.maximumf %741, %743 : vector<2x34xf32>
    %c0_378 = arith.constant 0 : index
    %c1_379 = arith.constant 1 : index
    %c6_380 = arith.constant 6 : index
    %c0_381 = arith.constant 0 : index
    %745 = vector.load %arg6[%c0_378, %c1_379, %c6_380, %c0_381] : memref<2x3x34x34xf32, #tpu.memory_space<vmem>>, vector<2x1x1x34xf32>
    %746 = vector.shape_cast %745 : vector<2x1x1x34xf32> to vector<2x34xf32>
    %747 = arith.maximumf %744, %746 : vector<2x34xf32>
    %748 = vector.extract_strided_slice %747 {offsets = [0, 0], sizes = [2, 32], strides = [1, 1]} : vector<2x34xf32> to vector<2x32xf32>
    %749 = vector.extract_strided_slice %747 {offsets = [0, 1], sizes = [2, 32], strides = [1, 1]} : vector<2x34xf32> to vector<2x32xf32>
    %750 = arith.maximumf %748, %749 : vector<2x32xf32>
    %751 = vector.extract_strided_slice %747 {offsets = [0, 2], sizes = [2, 32], strides = [1, 1]} : vector<2x34xf32> to vector<2x32xf32>
    %752 = arith.maximumf %750, %751 : vector<2x32xf32>
    %c0_382 = arith.constant 0 : index
    %c576 = arith.constant 576 : index
    %753 = vector.load %arg7[%c0_382, %c576] : memref<2x1536xf32, #tpu.memory_space<vmem>>, vector<2x32xf32>
    tpu.vector_store %arg7[%c0_382, %c576], %752 {strides = array<i32>} : memref<2x1536xf32, #tpu.memory_space<vmem>>, vector<2x32xf32>,
    %c0_383 = arith.constant 0 : index
    %c1_384 = arith.constant 1 : index
    %c6_385 = arith.constant 6 : index
    %c0_386 = arith.constant 0 : index
    %754 = vector.load %arg6[%c0_383, %c1_384, %c6_385, %c0_386] : memref<2x3x34x34xf32, #tpu.memory_space<vmem>>, vector<2x1x1x34xf32>
    %755 = vector.shape_cast %754 : vector<2x1x1x34xf32> to vector<2x34xf32>
    %c0_387 = arith.constant 0 : index
    %c1_388 = arith.constant 1 : index
    %c7_389 = arith.constant 7 : index
    %c0_390 = arith.constant 0 : index
    %756 = vector.load %arg6[%c0_387, %c1_388, %c7_389, %c0_390] : memref<2x3x34x34xf32, #tpu.memory_space<vmem>>, vector<2x1x1x34xf32>
    %757 = vector.shape_cast %756 : vector<2x1x1x34xf32> to vector<2x34xf32>
    %758 = arith.maximumf %755, %757 : vector<2x34xf32>
    %c0_391 = arith.constant 0 : index
    %c1_392 = arith.constant 1 : index
    %c8_393 = arith.constant 8 : index
    %c0_394 = arith.constant 0 : index
    %759 = vector.load %arg6[%c0_391, %c1_392, %c8_393, %c0_394] : memref<2x3x34x34xf32, #tpu.memory_space<vmem>>, vector<2x1x1x34xf32>
    %760 = vector.shape_cast %759 : vector<2x1x1x34xf32> to vector<2x34xf32>
    %761 = arith.maximumf %758, %760 : vector<2x34xf32>
    %762 = vector.extract_strided_slice %761 {offsets = [0, 0], sizes = [2, 32], strides = [1, 1]} : vector<2x34xf32> to vector<2x32xf32>
    %763 = vector.extract_strided_slice %761 {offsets = [0, 1], sizes = [2, 32], strides = [1, 1]} : vector<2x34xf32> to vector<2x32xf32>
    %764 = arith.maximumf %762, %763 : vector<2x32xf32>
    %765 = vector.extract_strided_slice %761 {offsets = [0, 2], sizes = [2, 32], strides = [1, 1]} : vector<2x34xf32> to vector<2x32xf32>
    %766 = arith.maximumf %764, %765 : vector<2x32xf32>
    %c0_395 = arith.constant 0 : index
    %c608 = arith.constant 608 : index
    %767 = vector.load %arg7[%c0_395, %c608] : memref<2x1536xf32, #tpu.memory_space<vmem>>, vector<2x32xf32>
    tpu.vector_store %arg7[%c0_395, %c608], %766 {strides = array<i32>} : memref<2x1536xf32, #tpu.memory_space<vmem>>, vector<2x32xf32>,
    %c0_396 = arith.constant 0 : index
    %c1_397 = arith.constant 1 : index
    %c8_398 = arith.constant 8 : index
    %c0_399 = arith.constant 0 : index
    %768 = vector.load %arg6[%c0_396, %c1_397, %c8_398, %c0_399] : memref<2x3x34x34xf32, #tpu.memory_space<vmem>>, vector<2x1x1x34xf32>
    %769 = vector.shape_cast %768 : vector<2x1x1x34xf32> to vector<2x34xf32>
    %c0_400 = arith.constant 0 : index
    %c1_401 = arith.constant 1 : index
    %c9_402 = arith.constant 9 : index
    %c0_403 = arith.constant 0 : index
    %770 = vector.load %arg6[%c0_400, %c1_401, %c9_402, %c0_403] : memref<2x3x34x34xf32, #tpu.memory_space<vmem>>, vector<2x1x1x34xf32>
    %771 = vector.shape_cast %770 : vector<2x1x1x34xf32> to vector<2x34xf32>
    %772 = arith.maximumf %769, %771 : vector<2x34xf32>
    %c0_404 = arith.constant 0 : index
    %c1_405 = arith.constant 1 : index
    %c10_406 = arith.constant 10 : index
    %c0_407 = arith.constant 0 : index
    %773 = vector.load %arg6[%c0_404, %c1_405, %c10_406, %c0_407] : memref<2x3x34x34xf32, #tpu.memory_space<vmem>>, vector<2x1x1x34xf32>
    %774 = vector.shape_cast %773 : vector<2x1x1x34xf32> to vector<2x34xf32>
    %775 = arith.maximumf %772, %774 : vector<2x34xf32>
    %776 = vector.extract_strided_slice %775 {offsets = [0, 0], sizes = [2, 32], strides = [1, 1]} : vector<2x34xf32> to vector<2x32xf32>
    %777 = vector.extract_strided_slice %775 {offsets = [0, 1], sizes = [2, 32], strides = [1, 1]} : vector<2x34xf32> to vector<2x32xf32>
    %778 = arith.maximumf %776, %777 : vector<2x32xf32>
    %779 = vector.extract_strided_slice %775 {offsets = [0, 2], sizes = [2, 32], strides = [1, 1]} : vector<2x34xf32> to vector<2x32xf32>
    %780 = arith.maximumf %778, %779 : vector<2x32xf32>
    %c0_408 = arith.constant 0 : index
    %c640 = arith.constant 640 : index
    %781 = vector.load %arg7[%c0_408, %c640] : memref<2x1536xf32, #tpu.memory_space<vmem>>, vector<2x32xf32>
    tpu.vector_store %arg7[%c0_408, %c640], %780 {strides = array<i32>} : memref<2x1536xf32, #tpu.memory_space<vmem>>, vector<2x32xf32>,
    %c0_409 = arith.constant 0 : index
    %c1_410 = arith.constant 1 : index
    %c10_411 = arith.constant 10 : index
    %c0_412 = arith.constant 0 : index
    %782 = vector.load %arg6[%c0_409, %c1_410, %c10_411, %c0_412] : memref<2x3x34x34xf32, #tpu.memory_space<vmem>>, vector<2x1x1x34xf32>
    %783 = vector.shape_cast %782 : vector<2x1x1x34xf32> to vector<2x34xf32>
    %c0_413 = arith.constant 0 : index
    %c1_414 = arith.constant 1 : index
    %c11_415 = arith.constant 11 : index
    %c0_416 = arith.constant 0 : index
    %784 = vector.load %arg6[%c0_413, %c1_414, %c11_415, %c0_416] : memref<2x3x34x34xf32, #tpu.memory_space<vmem>>, vector<2x1x1x34xf32>
    %785 = vector.shape_cast %784 : vector<2x1x1x34xf32> to vector<2x34xf32>
    %786 = arith.maximumf %783, %785 : vector<2x34xf32>
    %c0_417 = arith.constant 0 : index
    %c1_418 = arith.constant 1 : index
    %c12_419 = arith.constant 12 : index
    %c0_420 = arith.constant 0 : index
    %787 = vector.load %arg6[%c0_417, %c1_418, %c12_419, %c0_420] : memref<2x3x34x34xf32, #tpu.memory_space<vmem>>, vector<2x1x1x34xf32>
    %788 = vector.shape_cast %787 : vector<2x1x1x34xf32> to vector<2x34xf32>
    %789 = arith.maximumf %786, %788 : vector<2x34xf32>
    %790 = vector.extract_strided_slice %789 {offsets = [0, 0], sizes = [2, 32], strides = [1, 1]} : vector<2x34xf32> to vector<2x32xf32>
    %791 = vector.extract_strided_slice %789 {offsets = [0, 1], sizes = [2, 32], strides = [1, 1]} : vector<2x34xf32> to vector<2x32xf32>
    %792 = arith.maximumf %790, %791 : vector<2x32xf32>
    %793 = vector.extract_strided_slice %789 {offsets = [0, 2], sizes = [2, 32], strides = [1, 1]} : vector<2x34xf32> to vector<2x32xf32>
    %794 = arith.maximumf %792, %793 : vector<2x32xf32>
    %c0_421 = arith.constant 0 : index
    %c672 = arith.constant 672 : index
    %795 = vector.load %arg7[%c0_421, %c672] : memref<2x1536xf32, #tpu.memory_space<vmem>>, vector<2x32xf32>
    tpu.vector_store %arg7[%c0_421, %c672], %794 {strides = array<i32>} : memref<2x1536xf32, #tpu.memory_space<vmem>>, vector<2x32xf32>,
    %c0_422 = arith.constant 0 : index
    %c1_423 = arith.constant 1 : index
    %c12_424 = arith.constant 12 : index
    %c0_425 = arith.constant 0 : index
    %796 = vector.load %arg6[%c0_422, %c1_423, %c12_424, %c0_425] : memref<2x3x34x34xf32, #tpu.memory_space<vmem>>, vector<2x1x1x34xf32>
    %797 = vector.shape_cast %796 : vector<2x1x1x34xf32> to vector<2x34xf32>
    %c0_426 = arith.constant 0 : index
    %c1_427 = arith.constant 1 : index
    %c13_428 = arith.constant 13 : index
    %c0_429 = arith.constant 0 : index
    %798 = vector.load %arg6[%c0_426, %c1_427, %c13_428, %c0_429] : memref<2x3x34x34xf32, #tpu.memory_space<vmem>>, vector<2x1x1x34xf32>
    %799 = vector.shape_cast %798 : vector<2x1x1x34xf32> to vector<2x34xf32>
    %800 = arith.maximumf %797, %799 : vector<2x34xf32>
    %c0_430 = arith.constant 0 : index
    %c1_431 = arith.constant 1 : index
    %c14_432 = arith.constant 14 : index
    %c0_433 = arith.constant 0 : index
    %801 = vector.load %arg6[%c0_430, %c1_431, %c14_432, %c0_433] : memref<2x3x34x34xf32, #tpu.memory_space<vmem>>, vector<2x1x1x34xf32>
    %802 = vector.shape_cast %801 : vector<2x1x1x34xf32> to vector<2x34xf32>
    %803 = arith.maximumf %800, %802 : vector<2x34xf32>
    %804 = vector.extract_strided_slice %803 {offsets = [0, 0], sizes = [2, 32], strides = [1, 1]} : vector<2x34xf32> to vector<2x32xf32>
    %805 = vector.extract_strided_slice %803 {offsets = [0, 1], sizes = [2, 32], strides = [1, 1]} : vector<2x34xf32> to vector<2x32xf32>
    %806 = arith.maximumf %804, %805 : vector<2x32xf32>
    %807 = vector.extract_strided_slice %803 {offsets = [0, 2], sizes = [2, 32], strides = [1, 1]} : vector<2x34xf32> to vector<2x32xf32>
    %808 = arith.maximumf %806, %807 : vector<2x32xf32>
    %c0_434 = arith.constant 0 : index
    %c704 = arith.constant 704 : index
    %809 = vector.load %arg7[%c0_434, %c704] : memref<2x1536xf32, #tpu.memory_space<vmem>>, vector<2x32xf32>
    tpu.vector_store %arg7[%c0_434, %c704], %808 {strides = array<i32>} : memref<2x1536xf32, #tpu.memory_space<vmem>>, vector<2x32xf32>,
    %c0_435 = arith.constant 0 : index
    %c1_436 = arith.constant 1 : index
    %c14_437 = arith.constant 14 : index
    %c0_438 = arith.constant 0 : index
    %810 = vector.load %arg6[%c0_435, %c1_436, %c14_437, %c0_438] : memref<2x3x34x34xf32, #tpu.memory_space<vmem>>, vector<2x1x1x34xf32>
    %811 = vector.shape_cast %810 : vector<2x1x1x34xf32> to vector<2x34xf32>
    %c0_439 = arith.constant 0 : index
    %c1_440 = arith.constant 1 : index
    %c15_441 = arith.constant 15 : index
    %c0_442 = arith.constant 0 : index
    %812 = vector.load %arg6[%c0_439, %c1_440, %c15_441, %c0_442] : memref<2x3x34x34xf32, #tpu.memory_space<vmem>>, vector<2x1x1x34xf32>
    %813 = vector.shape_cast %812 : vector<2x1x1x34xf32> to vector<2x34xf32>
    %814 = arith.maximumf %811, %813 : vector<2x34xf32>
    %c0_443 = arith.constant 0 : index
    %c1_444 = arith.constant 1 : index
    %c16_445 = arith.constant 16 : index
    %c0_446 = arith.constant 0 : index
    %815 = vector.load %arg6[%c0_443, %c1_444, %c16_445, %c0_446] : memref<2x3x34x34xf32, #tpu.memory_space<vmem>>, vector<2x1x1x34xf32>
    %816 = vector.shape_cast %815 : vector<2x1x1x34xf32> to vector<2x34xf32>
    %817 = arith.maximumf %814, %816 : vector<2x34xf32>
    %818 = vector.extract_strided_slice %817 {offsets = [0, 0], sizes = [2, 32], strides = [1, 1]} : vector<2x34xf32> to vector<2x32xf32>
    %819 = vector.extract_strided_slice %817 {offsets = [0, 1], sizes = [2, 32], strides = [1, 1]} : vector<2x34xf32> to vector<2x32xf32>
    %820 = arith.maximumf %818, %819 : vector<2x32xf32>
    %821 = vector.extract_strided_slice %817 {offsets = [0, 2], sizes = [2, 32], strides = [1, 1]} : vector<2x34xf32> to vector<2x32xf32>
    %822 = arith.maximumf %820, %821 : vector<2x32xf32>
    %c0_447 = arith.constant 0 : index
    %c736 = arith.constant 736 : index
    %823 = vector.load %arg7[%c0_447, %c736] : memref<2x1536xf32, #tpu.memory_space<vmem>>, vector<2x32xf32>
    tpu.vector_store %arg7[%c0_447, %c736], %822 {strides = array<i32>} : memref<2x1536xf32, #tpu.memory_space<vmem>>, vector<2x32xf32>,
    %c0_448 = arith.constant 0 : index
    %c1_449 = arith.constant 1 : index
    %c16_450 = arith.constant 16 : index
    %c0_451 = arith.constant 0 : index
    %824 = vector.load %arg6[%c0_448, %c1_449, %c16_450, %c0_451] : memref<2x3x34x34xf32, #tpu.memory_space<vmem>>, vector<2x1x1x34xf32>
    %825 = vector.shape_cast %824 : vector<2x1x1x34xf32> to vector<2x34xf32>
    %c0_452 = arith.constant 0 : index
    %c1_453 = arith.constant 1 : index
    %c17_454 = arith.constant 17 : index
    %c0_455 = arith.constant 0 : index
    %826 = vector.load %arg6[%c0_452, %c1_453, %c17_454, %c0_455] : memref<2x3x34x34xf32, #tpu.memory_space<vmem>>, vector<2x1x1x34xf32>
    %827 = vector.shape_cast %826 : vector<2x1x1x34xf32> to vector<2x34xf32>
    %828 = arith.maximumf %825, %827 : vector<2x34xf32>
    %c0_456 = arith.constant 0 : index
    %c1_457 = arith.constant 1 : index
    %c18_458 = arith.constant 18 : index
    %c0_459 = arith.constant 0 : index
    %829 = vector.load %arg6[%c0_456, %c1_457, %c18_458, %c0_459] : memref<2x3x34x34xf32, #tpu.memory_space<vmem>>, vector<2x1x1x34xf32>
    %830 = vector.shape_cast %829 : vector<2x1x1x34xf32> to vector<2x34xf32>
    %831 = arith.maximumf %828, %830 : vector<2x34xf32>
    %832 = vector.extract_strided_slice %831 {offsets = [0, 0], sizes = [2, 32], strides = [1, 1]} : vector<2x34xf32> to vector<2x32xf32>
    %833 = vector.extract_strided_slice %831 {offsets = [0, 1], sizes = [2, 32], strides = [1, 1]} : vector<2x34xf32> to vector<2x32xf32>
    %834 = arith.maximumf %832, %833 : vector<2x32xf32>
    %835 = vector.extract_strided_slice %831 {offsets = [0, 2], sizes = [2, 32], strides = [1, 1]} : vector<2x34xf32> to vector<2x32xf32>
    %836 = arith.maximumf %834, %835 : vector<2x32xf32>
    %c0_460 = arith.constant 0 : index
    %c768 = arith.constant 768 : index
    %837 = vector.load %arg7[%c0_460, %c768] : memref<2x1536xf32, #tpu.memory_space<vmem>>, vector<2x32xf32>
    tpu.vector_store %arg7[%c0_460, %c768], %836 {strides = array<i32>} : memref<2x1536xf32, #tpu.memory_space<vmem>>, vector<2x32xf32>,
    %c0_461 = arith.constant 0 : index
    %c1_462 = arith.constant 1 : index
    %c18_463 = arith.constant 18 : index
    %c0_464 = arith.constant 0 : index
    %838 = vector.load %arg6[%c0_461, %c1_462, %c18_463, %c0_464] : memref<2x3x34x34xf32, #tpu.memory_space<vmem>>, vector<2x1x1x34xf32>
    %839 = vector.shape_cast %838 : vector<2x1x1x34xf32> to vector<2x34xf32>
    %c0_465 = arith.constant 0 : index
    %c1_466 = arith.constant 1 : index
    %c19_467 = arith.constant 19 : index
    %c0_468 = arith.constant 0 : index
    %840 = vector.load %arg6[%c0_465, %c1_466, %c19_467, %c0_468] : memref<2x3x34x34xf32, #tpu.memory_space<vmem>>, vector<2x1x1x34xf32>
    %841 = vector.shape_cast %840 : vector<2x1x1x34xf32> to vector<2x34xf32>
    %842 = arith.maximumf %839, %841 : vector<2x34xf32>
    %c0_469 = arith.constant 0 : index
    %c1_470 = arith.constant 1 : index
    %c20_471 = arith.constant 20 : index
    %c0_472 = arith.constant 0 : index
    %843 = vector.load %arg6[%c0_469, %c1_470, %c20_471, %c0_472] : memref<2x3x34x34xf32, #tpu.memory_space<vmem>>, vector<2x1x1x34xf32>
    %844 = vector.shape_cast %843 : vector<2x1x1x34xf32> to vector<2x34xf32>
    %845 = arith.maximumf %842, %844 : vector<2x34xf32>
    %846 = vector.extract_strided_slice %845 {offsets = [0, 0], sizes = [2, 32], strides = [1, 1]} : vector<2x34xf32> to vector<2x32xf32>
    %847 = vector.extract_strided_slice %845 {offsets = [0, 1], sizes = [2, 32], strides = [1, 1]} : vector<2x34xf32> to vector<2x32xf32>
    %848 = arith.maximumf %846, %847 : vector<2x32xf32>
    %849 = vector.extract_strided_slice %845 {offsets = [0, 2], sizes = [2, 32], strides = [1, 1]} : vector<2x34xf32> to vector<2x32xf32>
    %850 = arith.maximumf %848, %849 : vector<2x32xf32>
    %c0_473 = arith.constant 0 : index
    %c800 = arith.constant 800 : index
    %851 = vector.load %arg7[%c0_473, %c800] : memref<2x1536xf32, #tpu.memory_space<vmem>>, vector<2x32xf32>
    tpu.vector_store %arg7[%c0_473, %c800], %850 {strides = array<i32>} : memref<2x1536xf32, #tpu.memory_space<vmem>>, vector<2x32xf32>,
    %c0_474 = arith.constant 0 : index
    %c1_475 = arith.constant 1 : index
    %c20_476 = arith.constant 20 : index
    %c0_477 = arith.constant 0 : index
    %852 = vector.load %arg6[%c0_474, %c1_475, %c20_476, %c0_477] : memref<2x3x34x34xf32, #tpu.memory_space<vmem>>, vector<2x1x1x34xf32>
    %853 = vector.shape_cast %852 : vector<2x1x1x34xf32> to vector<2x34xf32>
    %c0_478 = arith.constant 0 : index
    %c1_479 = arith.constant 1 : index
    %c21_480 = arith.constant 21 : index
    %c0_481 = arith.constant 0 : index
    %854 = vector.load %arg6[%c0_478, %c1_479, %c21_480, %c0_481] : memref<2x3x34x34xf32, #tpu.memory_space<vmem>>, vector<2x1x1x34xf32>
    %855 = vector.shape_cast %854 : vector<2x1x1x34xf32> to vector<2x34xf32>
    %856 = arith.maximumf %853, %855 : vector<2x34xf32>
    %c0_482 = arith.constant 0 : index
    %c1_483 = arith.constant 1 : index
    %c22_484 = arith.constant 22 : index
    %c0_485 = arith.constant 0 : index
    %857 = vector.load %arg6[%c0_482, %c1_483, %c22_484, %c0_485] : memref<2x3x34x34xf32, #tpu.memory_space<vmem>>, vector<2x1x1x34xf32>
    %858 = vector.shape_cast %857 : vector<2x1x1x34xf32> to vector<2x34xf32>
    %859 = arith.maximumf %856, %858 : vector<2x34xf32>
    %860 = vector.extract_strided_slice %859 {offsets = [0, 0], sizes = [2, 32], strides = [1, 1]} : vector<2x34xf32> to vector<2x32xf32>
    %861 = vector.extract_strided_slice %859 {offsets = [0, 1], sizes = [2, 32], strides = [1, 1]} : vector<2x34xf32> to vector<2x32xf32>
    %862 = arith.maximumf %860, %861 : vector<2x32xf32>
    %863 = vector.extract_strided_slice %859 {offsets = [0, 2], sizes = [2, 32], strides = [1, 1]} : vector<2x34xf32> to vector<2x32xf32>
    %864 = arith.maximumf %862, %863 : vector<2x32xf32>
    %c0_486 = arith.constant 0 : index
    %c832 = arith.constant 832 : index
    %865 = vector.load %arg7[%c0_486, %c832] : memref<2x1536xf32, #tpu.memory_space<vmem>>, vector<2x32xf32>
    tpu.vector_store %arg7[%c0_486, %c832], %864 {strides = array<i32>} : memref<2x1536xf32, #tpu.memory_space<vmem>>, vector<2x32xf32>,
    %c0_487 = arith.constant 0 : index
    %c1_488 = arith.constant 1 : index
    %c22_489 = arith.constant 22 : index
    %c0_490 = arith.constant 0 : index
    %866 = vector.load %arg6[%c0_487, %c1_488, %c22_489, %c0_490] : memref<2x3x34x34xf32, #tpu.memory_space<vmem>>, vector<2x1x1x34xf32>
    %867 = vector.shape_cast %866 : vector<2x1x1x34xf32> to vector<2x34xf32>
    %c0_491 = arith.constant 0 : index
    %c1_492 = arith.constant 1 : index
    %c23_493 = arith.constant 23 : index
    %c0_494 = arith.constant 0 : index
    %868 = vector.load %arg6[%c0_491, %c1_492, %c23_493, %c0_494] : memref<2x3x34x34xf32, #tpu.memory_space<vmem>>, vector<2x1x1x34xf32>
    %869 = vector.shape_cast %868 : vector<2x1x1x34xf32> to vector<2x34xf32>
    %870 = arith.maximumf %867, %869 : vector<2x34xf32>
    %c0_495 = arith.constant 0 : index
    %c1_496 = arith.constant 1 : index
    %c24_497 = arith.constant 24 : index
    %c0_498 = arith.constant 0 : index
    %871 = vector.load %arg6[%c0_495, %c1_496, %c24_497, %c0_498] : memref<2x3x34x34xf32, #tpu.memory_space<vmem>>, vector<2x1x1x34xf32>
    %872 = vector.shape_cast %871 : vector<2x1x1x34xf32> to vector<2x34xf32>
    %873 = arith.maximumf %870, %872 : vector<2x34xf32>
    %874 = vector.extract_strided_slice %873 {offsets = [0, 0], sizes = [2, 32], strides = [1, 1]} : vector<2x34xf32> to vector<2x32xf32>
    %875 = vector.extract_strided_slice %873 {offsets = [0, 1], sizes = [2, 32], strides = [1, 1]} : vector<2x34xf32> to vector<2x32xf32>
    %876 = arith.maximumf %874, %875 : vector<2x32xf32>
    %877 = vector.extract_strided_slice %873 {offsets = [0, 2], sizes = [2, 32], strides = [1, 1]} : vector<2x34xf32> to vector<2x32xf32>
    %878 = arith.maximumf %876, %877 : vector<2x32xf32>
    %c0_499 = arith.constant 0 : index
    %c864 = arith.constant 864 : index
    %879 = vector.load %arg7[%c0_499, %c864] : memref<2x1536xf32, #tpu.memory_space<vmem>>, vector<2x32xf32>
    tpu.vector_store %arg7[%c0_499, %c864], %878 {strides = array<i32>} : memref<2x1536xf32, #tpu.memory_space<vmem>>, vector<2x32xf32>,
    %c0_500 = arith.constant 0 : index
    %c1_501 = arith.constant 1 : index
    %c24_502 = arith.constant 24 : index
    %c0_503 = arith.constant 0 : index
    %880 = vector.load %arg6[%c0_500, %c1_501, %c24_502, %c0_503] : memref<2x3x34x34xf32, #tpu.memory_space<vmem>>, vector<2x1x1x34xf32>
    %881 = vector.shape_cast %880 : vector<2x1x1x34xf32> to vector<2x34xf32>
    %c0_504 = arith.constant 0 : index
    %c1_505 = arith.constant 1 : index
    %c25_506 = arith.constant 25 : index
    %c0_507 = arith.constant 0 : index
    %882 = vector.load %arg6[%c0_504, %c1_505, %c25_506, %c0_507] : memref<2x3x34x34xf32, #tpu.memory_space<vmem>>, vector<2x1x1x34xf32>
    %883 = vector.shape_cast %882 : vector<2x1x1x34xf32> to vector<2x34xf32>
    %884 = arith.maximumf %881, %883 : vector<2x34xf32>
    %c0_508 = arith.constant 0 : index
    %c1_509 = arith.constant 1 : index
    %c26_510 = arith.constant 26 : index
    %c0_511 = arith.constant 0 : index
    %885 = vector.load %arg6[%c0_508, %c1_509, %c26_510, %c0_511] : memref<2x3x34x34xf32, #tpu.memory_space<vmem>>, vector<2x1x1x34xf32>
    %886 = vector.shape_cast %885 : vector<2x1x1x34xf32> to vector<2x34xf32>
    %887 = arith.maximumf %884, %886 : vector<2x34xf32>
    %888 = vector.extract_strided_slice %887 {offsets = [0, 0], sizes = [2, 32], strides = [1, 1]} : vector<2x34xf32> to vector<2x32xf32>
    %889 = vector.extract_strided_slice %887 {offsets = [0, 1], sizes = [2, 32], strides = [1, 1]} : vector<2x34xf32> to vector<2x32xf32>
    %890 = arith.maximumf %888, %889 : vector<2x32xf32>
    %891 = vector.extract_strided_slice %887 {offsets = [0, 2], sizes = [2, 32], strides = [1, 1]} : vector<2x34xf32> to vector<2x32xf32>
    %892 = arith.maximumf %890, %891 : vector<2x32xf32>
    %c0_512 = arith.constant 0 : index
    %c896 = arith.constant 896 : index
    %893 = vector.load %arg7[%c0_512, %c896] : memref<2x1536xf32, #tpu.memory_space<vmem>>, vector<2x32xf32>
    tpu.vector_store %arg7[%c0_512, %c896], %892 {strides = array<i32>} : memref<2x1536xf32, #tpu.memory_space<vmem>>, vector<2x32xf32>,
    %c0_513 = arith.constant 0 : index
    %c1_514 = arith.constant 1 : index
    %c26_515 = arith.constant 26 : index
    %c0_516 = arith.constant 0 : index
    %894 = vector.load %arg6[%c0_513, %c1_514, %c26_515, %c0_516] : memref<2x3x34x34xf32, #tpu.memory_space<vmem>>, vector<2x1x1x34xf32>
    %895 = vector.shape_cast %894 : vector<2x1x1x34xf32> to vector<2x34xf32>
    %c0_517 = arith.constant 0 : index
    %c1_518 = arith.constant 1 : index
    %c27_519 = arith.constant 27 : index
    %c0_520 = arith.constant 0 : index
    %896 = vector.load %arg6[%c0_517, %c1_518, %c27_519, %c0_520] : memref<2x3x34x34xf32, #tpu.memory_space<vmem>>, vector<2x1x1x34xf32>
    %897 = vector.shape_cast %896 : vector<2x1x1x34xf32> to vector<2x34xf32>
    %898 = arith.maximumf %895, %897 : vector<2x34xf32>
    %c0_521 = arith.constant 0 : index
    %c1_522 = arith.constant 1 : index
    %c28_523 = arith.constant 28 : index
    %c0_524 = arith.constant 0 : index
    %899 = vector.load %arg6[%c0_521, %c1_522, %c28_523, %c0_524] : memref<2x3x34x34xf32, #tpu.memory_space<vmem>>, vector<2x1x1x34xf32>
    %900 = vector.shape_cast %899 : vector<2x1x1x34xf32> to vector<2x34xf32>
    %901 = arith.maximumf %898, %900 : vector<2x34xf32>
    %902 = vector.extract_strided_slice %901 {offsets = [0, 0], sizes = [2, 32], strides = [1, 1]} : vector<2x34xf32> to vector<2x32xf32>
    %903 = vector.extract_strided_slice %901 {offsets = [0, 1], sizes = [2, 32], strides = [1, 1]} : vector<2x34xf32> to vector<2x32xf32>
    %904 = arith.maximumf %902, %903 : vector<2x32xf32>
    %905 = vector.extract_strided_slice %901 {offsets = [0, 2], sizes = [2, 32], strides = [1, 1]} : vector<2x34xf32> to vector<2x32xf32>
    %906 = arith.maximumf %904, %905 : vector<2x32xf32>
    %c0_525 = arith.constant 0 : index
    %c928 = arith.constant 928 : index
    %907 = vector.load %arg7[%c0_525, %c928] : memref<2x1536xf32, #tpu.memory_space<vmem>>, vector<2x32xf32>
    tpu.vector_store %arg7[%c0_525, %c928], %906 {strides = array<i32>} : memref<2x1536xf32, #tpu.memory_space<vmem>>, vector<2x32xf32>,
    %c0_526 = arith.constant 0 : index
    %c1_527 = arith.constant 1 : index
    %c28_528 = arith.constant 28 : index
    %c0_529 = arith.constant 0 : index
    %908 = vector.load %arg6[%c0_526, %c1_527, %c28_528, %c0_529] : memref<2x3x34x34xf32, #tpu.memory_space<vmem>>, vector<2x1x1x34xf32>
    %909 = vector.shape_cast %908 : vector<2x1x1x34xf32> to vector<2x34xf32>
    %c0_530 = arith.constant 0 : index
    %c1_531 = arith.constant 1 : index
    %c29_532 = arith.constant 29 : index
    %c0_533 = arith.constant 0 : index
    %910 = vector.load %arg6[%c0_530, %c1_531, %c29_532, %c0_533] : memref<2x3x34x34xf32, #tpu.memory_space<vmem>>, vector<2x1x1x34xf32>
    %911 = vector.shape_cast %910 : vector<2x1x1x34xf32> to vector<2x34xf32>
    %912 = arith.maximumf %909, %911 : vector<2x34xf32>
    %c0_534 = arith.constant 0 : index
    %c1_535 = arith.constant 1 : index
    %c30_536 = arith.constant 30 : index
    %c0_537 = arith.constant 0 : index
    %913 = vector.load %arg6[%c0_534, %c1_535, %c30_536, %c0_537] : memref<2x3x34x34xf32, #tpu.memory_space<vmem>>, vector<2x1x1x34xf32>
    %914 = vector.shape_cast %913 : vector<2x1x1x34xf32> to vector<2x34xf32>
    %915 = arith.maximumf %912, %914 : vector<2x34xf32>
    %916 = vector.extract_strided_slice %915 {offsets = [0, 0], sizes = [2, 32], strides = [1, 1]} : vector<2x34xf32> to vector<2x32xf32>
    %917 = vector.extract_strided_slice %915 {offsets = [0, 1], sizes = [2, 32], strides = [1, 1]} : vector<2x34xf32> to vector<2x32xf32>
    %918 = arith.maximumf %916, %917 : vector<2x32xf32>
    %919 = vector.extract_strided_slice %915 {offsets = [0, 2], sizes = [2, 32], strides = [1, 1]} : vector<2x34xf32> to vector<2x32xf32>
    %920 = arith.maximumf %918, %919 : vector<2x32xf32>
    %c0_538 = arith.constant 0 : index
    %c960 = arith.constant 960 : index
    %921 = vector.load %arg7[%c0_538, %c960] : memref<2x1536xf32, #tpu.memory_space<vmem>>, vector<2x32xf32>
    tpu.vector_store %arg7[%c0_538, %c960], %920 {strides = array<i32>} : memref<2x1536xf32, #tpu.memory_space<vmem>>, vector<2x32xf32>,
    %c0_539 = arith.constant 0 : index
    %c1_540 = arith.constant 1 : index
    %c30_541 = arith.constant 30 : index
    %c0_542 = arith.constant 0 : index
    %922 = vector.load %arg6[%c0_539, %c1_540, %c30_541, %c0_542] : memref<2x3x34x34xf32, #tpu.memory_space<vmem>>, vector<2x1x1x34xf32>
    %923 = vector.shape_cast %922 : vector<2x1x1x34xf32> to vector<2x34xf32>
    %c0_543 = arith.constant 0 : index
    %c1_544 = arith.constant 1 : index
    %c31_545 = arith.constant 31 : index
    %c0_546 = arith.constant 0 : index
    %924 = vector.load %arg6[%c0_543, %c1_544, %c31_545, %c0_546] : memref<2x3x34x34xf32, #tpu.memory_space<vmem>>, vector<2x1x1x34xf32>
    %925 = vector.shape_cast %924 : vector<2x1x1x34xf32> to vector<2x34xf32>
    %926 = arith.maximumf %923, %925 : vector<2x34xf32>
    %c0_547 = arith.constant 0 : index
    %c1_548 = arith.constant 1 : index
    %c32_549 = arith.constant 32 : index
    %c0_550 = arith.constant 0 : index
    %927 = vector.load %arg6[%c0_547, %c1_548, %c32_549, %c0_550] : memref<2x3x34x34xf32, #tpu.memory_space<vmem>>, vector<2x1x1x34xf32>
    %928 = vector.shape_cast %927 : vector<2x1x1x34xf32> to vector<2x34xf32>
    %929 = arith.maximumf %926, %928 : vector<2x34xf32>
    %930 = vector.extract_strided_slice %929 {offsets = [0, 0], sizes = [2, 32], strides = [1, 1]} : vector<2x34xf32> to vector<2x32xf32>
    %931 = vector.extract_strided_slice %929 {offsets = [0, 1], sizes = [2, 32], strides = [1, 1]} : vector<2x34xf32> to vector<2x32xf32>
    %932 = arith.maximumf %930, %931 : vector<2x32xf32>
    %933 = vector.extract_strided_slice %929 {offsets = [0, 2], sizes = [2, 32], strides = [1, 1]} : vector<2x34xf32> to vector<2x32xf32>
    %934 = arith.maximumf %932, %933 : vector<2x32xf32>
    %c0_551 = arith.constant 0 : index
    %c992 = arith.constant 992 : index
    %935 = vector.load %arg7[%c0_551, %c992] : memref<2x1536xf32, #tpu.memory_space<vmem>>, vector<2x32xf32>
    tpu.vector_store %arg7[%c0_551, %c992], %934 {strides = array<i32>} : memref<2x1536xf32, #tpu.memory_space<vmem>>, vector<2x32xf32>,
    %c0_552 = arith.constant 0 : index
    %c2_553 = arith.constant 2 : index
    %c0_554 = arith.constant 0 : index
    %c0_555 = arith.constant 0 : index
    %936 = vector.load %arg6[%c0_552, %c2_553, %c0_554, %c0_555] : memref<2x3x34x34xf32, #tpu.memory_space<vmem>>, vector<2x1x1x34xf32>
    %937 = vector.shape_cast %936 : vector<2x1x1x34xf32> to vector<2x34xf32>
    %c0_556 = arith.constant 0 : index
    %c2_557 = arith.constant 2 : index
    %c1_558 = arith.constant 1 : index
    %c0_559 = arith.constant 0 : index
    %938 = vector.load %arg6[%c0_556, %c2_557, %c1_558, %c0_559] : memref<2x3x34x34xf32, #tpu.memory_space<vmem>>, vector<2x1x1x34xf32>
    %939 = vector.shape_cast %938 : vector<2x1x1x34xf32> to vector<2x34xf32>
    %940 = arith.maximumf %937, %939 : vector<2x34xf32>
    %c0_560 = arith.constant 0 : index
    %c2_561 = arith.constant 2 : index
    %c2_562 = arith.constant 2 : index
    %c0_563 = arith.constant 0 : index
    %941 = vector.load %arg6[%c0_560, %c2_561, %c2_562, %c0_563] : memref<2x3x34x34xf32, #tpu.memory_space<vmem>>, vector<2x1x1x34xf32>
    %942 = vector.shape_cast %941 : vector<2x1x1x34xf32> to vector<2x34xf32>
    %943 = arith.maximumf %940, %942 : vector<2x34xf32>
    %944 = vector.extract_strided_slice %943 {offsets = [0, 0], sizes = [2, 32], strides = [1, 1]} : vector<2x34xf32> to vector<2x32xf32>
    %945 = vector.extract_strided_slice %943 {offsets = [0, 1], sizes = [2, 32], strides = [1, 1]} : vector<2x34xf32> to vector<2x32xf32>
    %946 = arith.maximumf %944, %945 : vector<2x32xf32>
    %947 = vector.extract_strided_slice %943 {offsets = [0, 2], sizes = [2, 32], strides = [1, 1]} : vector<2x34xf32> to vector<2x32xf32>
    %948 = arith.maximumf %946, %947 : vector<2x32xf32>
    %c0_564 = arith.constant 0 : index
    %c1024 = arith.constant 1024 : index
    %949 = vector.load %arg7[%c0_564, %c1024] : memref<2x1536xf32, #tpu.memory_space<vmem>>, vector<2x32xf32>
    tpu.vector_store %arg7[%c0_564, %c1024], %948 {strides = array<i32>} : memref<2x1536xf32, #tpu.memory_space<vmem>>, vector<2x32xf32>,
    %c0_565 = arith.constant 0 : index
    %c2_566 = arith.constant 2 : index
    %c2_567 = arith.constant 2 : index
    %c0_568 = arith.constant 0 : index
    %950 = vector.load %arg6[%c0_565, %c2_566, %c2_567, %c0_568] : memref<2x3x34x34xf32, #tpu.memory_space<vmem>>, vector<2x1x1x34xf32>
    %951 = vector.shape_cast %950 : vector<2x1x1x34xf32> to vector<2x34xf32>
    %c0_569 = arith.constant 0 : index
    %c2_570 = arith.constant 2 : index
    %c3_571 = arith.constant 3 : index
    %c0_572 = arith.constant 0 : index
    %952 = vector.load %arg6[%c0_569, %c2_570, %c3_571, %c0_572] : memref<2x3x34x34xf32, #tpu.memory_space<vmem>>, vector<2x1x1x34xf32>
    %953 = vector.shape_cast %952 : vector<2x1x1x34xf32> to vector<2x34xf32>
    %954 = arith.maximumf %951, %953 : vector<2x34xf32>
    %c0_573 = arith.constant 0 : index
    %c2_574 = arith.constant 2 : index
    %c4_575 = arith.constant 4 : index
    %c0_576 = arith.constant 0 : index
    %955 = vector.load %arg6[%c0_573, %c2_574, %c4_575, %c0_576] : memref<2x3x34x34xf32, #tpu.memory_space<vmem>>, vector<2x1x1x34xf32>
    %956 = vector.shape_cast %955 : vector<2x1x1x34xf32> to vector<2x34xf32>
    %957 = arith.maximumf %954, %956 : vector<2x34xf32>
    %958 = vector.extract_strided_slice %957 {offsets = [0, 0], sizes = [2, 32], strides = [1, 1]} : vector<2x34xf32> to vector<2x32xf32>
    %959 = vector.extract_strided_slice %957 {offsets = [0, 1], sizes = [2, 32], strides = [1, 1]} : vector<2x34xf32> to vector<2x32xf32>
    %960 = arith.maximumf %958, %959 : vector<2x32xf32>
    %961 = vector.extract_strided_slice %957 {offsets = [0, 2], sizes = [2, 32], strides = [1, 1]} : vector<2x34xf32> to vector<2x32xf32>
    %962 = arith.maximumf %960, %961 : vector<2x32xf32>
    %c0_577 = arith.constant 0 : index
    %c1056 = arith.constant 1056 : index
    %963 = vector.load %arg7[%c0_577, %c1056] : memref<2x1536xf32, #tpu.memory_space<vmem>>, vector<2x32xf32>
    tpu.vector_store %arg7[%c0_577, %c1056], %962 {strides = array<i32>} : memref<2x1536xf32, #tpu.memory_space<vmem>>, vector<2x32xf32>,
    %c0_578 = arith.constant 0 : index
    %c2_579 = arith.constant 2 : index
    %c4_580 = arith.constant 4 : index
    %c0_581 = arith.constant 0 : index
    %964 = vector.load %arg6[%c0_578, %c2_579, %c4_580, %c0_581] : memref<2x3x34x34xf32, #tpu.memory_space<vmem>>, vector<2x1x1x34xf32>
    %965 = vector.shape_cast %964 : vector<2x1x1x34xf32> to vector<2x34xf32>
    %c0_582 = arith.constant 0 : index
    %c2_583 = arith.constant 2 : index
    %c5_584 = arith.constant 5 : index
    %c0_585 = arith.constant 0 : index
    %966 = vector.load %arg6[%c0_582, %c2_583, %c5_584, %c0_585] : memref<2x3x34x34xf32, #tpu.memory_space<vmem>>, vector<2x1x1x34xf32>
    %967 = vector.shape_cast %966 : vector<2x1x1x34xf32> to vector<2x34xf32>
    %968 = arith.maximumf %965, %967 : vector<2x34xf32>
    %c0_586 = arith.constant 0 : index
    %c2_587 = arith.constant 2 : index
    %c6_588 = arith.constant 6 : index
    %c0_589 = arith.constant 0 : index
    %969 = vector.load %arg6[%c0_586, %c2_587, %c6_588, %c0_589] : memref<2x3x34x34xf32, #tpu.memory_space<vmem>>, vector<2x1x1x34xf32>
    %970 = vector.shape_cast %969 : vector<2x1x1x34xf32> to vector<2x34xf32>
    %971 = arith.maximumf %968, %970 : vector<2x34xf32>
    %972 = vector.extract_strided_slice %971 {offsets = [0, 0], sizes = [2, 32], strides = [1, 1]} : vector<2x34xf32> to vector<2x32xf32>
    %973 = vector.extract_strided_slice %971 {offsets = [0, 1], sizes = [2, 32], strides = [1, 1]} : vector<2x34xf32> to vector<2x32xf32>
    %974 = arith.maximumf %972, %973 : vector<2x32xf32>
    %975 = vector.extract_strided_slice %971 {offsets = [0, 2], sizes = [2, 32], strides = [1, 1]} : vector<2x34xf32> to vector<2x32xf32>
    %976 = arith.maximumf %974, %975 : vector<2x32xf32>
    %c0_590 = arith.constant 0 : index
    %c1088 = arith.constant 1088 : index
    %977 = vector.load %arg7[%c0_590, %c1088] : memref<2x1536xf32, #tpu.memory_space<vmem>>, vector<2x32xf32>
    tpu.vector_store %arg7[%c0_590, %c1088], %976 {strides = array<i32>} : memref<2x1536xf32, #tpu.memory_space<vmem>>, vector<2x32xf32>,
    %c0_591 = arith.constant 0 : index
    %c2_592 = arith.constant 2 : index
    %c6_593 = arith.constant 6 : index
    %c0_594 = arith.constant 0 : index
    %978 = vector.load %arg6[%c0_591, %c2_592, %c6_593, %c0_594] : memref<2x3x34x34xf32, #tpu.memory_space<vmem>>, vector<2x1x1x34xf32>
    %979 = vector.shape_cast %978 : vector<2x1x1x34xf32> to vector<2x34xf32>
    %c0_595 = arith.constant 0 : index
    %c2_596 = arith.constant 2 : index
    %c7_597 = arith.constant 7 : index
    %c0_598 = arith.constant 0 : index
    %980 = vector.load %arg6[%c0_595, %c2_596, %c7_597, %c0_598] : memref<2x3x34x34xf32, #tpu.memory_space<vmem>>, vector<2x1x1x34xf32>
    %981 = vector.shape_cast %980 : vector<2x1x1x34xf32> to vector<2x34xf32>
    %982 = arith.maximumf %979, %981 : vector<2x34xf32>
    %c0_599 = arith.constant 0 : index
    %c2_600 = arith.constant 2 : index
    %c8_601 = arith.constant 8 : index
    %c0_602 = arith.constant 0 : index
    %983 = vector.load %arg6[%c0_599, %c2_600, %c8_601, %c0_602] : memref<2x3x34x34xf32, #tpu.memory_space<vmem>>, vector<2x1x1x34xf32>
    %984 = vector.shape_cast %983 : vector<2x1x1x34xf32> to vector<2x34xf32>
    %985 = arith.maximumf %982, %984 : vector<2x34xf32>
    %986 = vector.extract_strided_slice %985 {offsets = [0, 0], sizes = [2, 32], strides = [1, 1]} : vector<2x34xf32> to vector<2x32xf32>
    %987 = vector.extract_strided_slice %985 {offsets = [0, 1], sizes = [2, 32], strides = [1, 1]} : vector<2x34xf32> to vector<2x32xf32>
    %988 = arith.maximumf %986, %987 : vector<2x32xf32>
    %989 = vector.extract_strided_slice %985 {offsets = [0, 2], sizes = [2, 32], strides = [1, 1]} : vector<2x34xf32> to vector<2x32xf32>
    %990 = arith.maximumf %988, %989 : vector<2x32xf32>
    %c0_603 = arith.constant 0 : index
    %c1120 = arith.constant 1120 : index
    %991 = vector.load %arg7[%c0_603, %c1120] : memref<2x1536xf32, #tpu.memory_space<vmem>>, vector<2x32xf32>
    tpu.vector_store %arg7[%c0_603, %c1120], %990 {strides = array<i32>} : memref<2x1536xf32, #tpu.memory_space<vmem>>, vector<2x32xf32>,
    %c0_604 = arith.constant 0 : index
    %c2_605 = arith.constant 2 : index
    %c8_606 = arith.constant 8 : index
    %c0_607 = arith.constant 0 : index
    %992 = vector.load %arg6[%c0_604, %c2_605, %c8_606, %c0_607] : memref<2x3x34x34xf32, #tpu.memory_space<vmem>>, vector<2x1x1x34xf32>
    %993 = vector.shape_cast %992 : vector<2x1x1x34xf32> to vector<2x34xf32>
    %c0_608 = arith.constant 0 : index
    %c2_609 = arith.constant 2 : index
    %c9_610 = arith.constant 9 : index
    %c0_611 = arith.constant 0 : index
    %994 = vector.load %arg6[%c0_608, %c2_609, %c9_610, %c0_611] : memref<2x3x34x34xf32, #tpu.memory_space<vmem>>, vector<2x1x1x34xf32>
    %995 = vector.shape_cast %994 : vector<2x1x1x34xf32> to vector<2x34xf32>
    %996 = arith.maximumf %993, %995 : vector<2x34xf32>
    %c0_612 = arith.constant 0 : index
    %c2_613 = arith.constant 2 : index
    %c10_614 = arith.constant 10 : index
    %c0_615 = arith.constant 0 : index
    %997 = vector.load %arg6[%c0_612, %c2_613, %c10_614, %c0_615] : memref<2x3x34x34xf32, #tpu.memory_space<vmem>>, vector<2x1x1x34xf32>
    %998 = vector.shape_cast %997 : vector<2x1x1x34xf32> to vector<2x34xf32>
    %999 = arith.maximumf %996, %998 : vector<2x34xf32>
    %1000 = vector.extract_strided_slice %999 {offsets = [0, 0], sizes = [2, 32], strides = [1, 1]} : vector<2x34xf32> to vector<2x32xf32>
    %1001 = vector.extract_strided_slice %999 {offsets = [0, 1], sizes = [2, 32], strides = [1, 1]} : vector<2x34xf32> to vector<2x32xf32>
    %1002 = arith.maximumf %1000, %1001 : vector<2x32xf32>
    %1003 = vector.extract_strided_slice %999 {offsets = [0, 2], sizes = [2, 32], strides = [1, 1]} : vector<2x34xf32> to vector<2x32xf32>
    %1004 = arith.maximumf %1002, %1003 : vector<2x32xf32>
    %c0_616 = arith.constant 0 : index
    %c1152 = arith.constant 1152 : index
    %1005 = vector.load %arg7[%c0_616, %c1152] : memref<2x1536xf32, #tpu.memory_space<vmem>>, vector<2x32xf32>
    tpu.vector_store %arg7[%c0_616, %c1152], %1004 {strides = array<i32>} : memref<2x1536xf32, #tpu.memory_space<vmem>>, vector<2x32xf32>,
    %c0_617 = arith.constant 0 : index
    %c2_618 = arith.constant 2 : index
    %c10_619 = arith.constant 10 : index
    %c0_620 = arith.constant 0 : index
    %1006 = vector.load %arg6[%c0_617, %c2_618, %c10_619, %c0_620] : memref<2x3x34x34xf32, #tpu.memory_space<vmem>>, vector<2x1x1x34xf32>
    %1007 = vector.shape_cast %1006 : vector<2x1x1x34xf32> to vector<2x34xf32>
    %c0_621 = arith.constant 0 : index
    %c2_622 = arith.constant 2 : index
    %c11_623 = arith.constant 11 : index
    %c0_624 = arith.constant 0 : index
    %1008 = vector.load %arg6[%c0_621, %c2_622, %c11_623, %c0_624] : memref<2x3x34x34xf32, #tpu.memory_space<vmem>>, vector<2x1x1x34xf32>
    %1009 = vector.shape_cast %1008 : vector<2x1x1x34xf32> to vector<2x34xf32>
    %1010 = arith.maximumf %1007, %1009 : vector<2x34xf32>
    %c0_625 = arith.constant 0 : index
    %c2_626 = arith.constant 2 : index
    %c12_627 = arith.constant 12 : index
    %c0_628 = arith.constant 0 : index
    %1011 = vector.load %arg6[%c0_625, %c2_626, %c12_627, %c0_628] : memref<2x3x34x34xf32, #tpu.memory_space<vmem>>, vector<2x1x1x34xf32>
    %1012 = vector.shape_cast %1011 : vector<2x1x1x34xf32> to vector<2x34xf32>
    %1013 = arith.maximumf %1010, %1012 : vector<2x34xf32>
    %1014 = vector.extract_strided_slice %1013 {offsets = [0, 0], sizes = [2, 32], strides = [1, 1]} : vector<2x34xf32> to vector<2x32xf32>
    %1015 = vector.extract_strided_slice %1013 {offsets = [0, 1], sizes = [2, 32], strides = [1, 1]} : vector<2x34xf32> to vector<2x32xf32>
    %1016 = arith.maximumf %1014, %1015 : vector<2x32xf32>
    %1017 = vector.extract_strided_slice %1013 {offsets = [0, 2], sizes = [2, 32], strides = [1, 1]} : vector<2x34xf32> to vector<2x32xf32>
    %1018 = arith.maximumf %1016, %1017 : vector<2x32xf32>
    %c0_629 = arith.constant 0 : index
    %c1184 = arith.constant 1184 : index
    %1019 = vector.load %arg7[%c0_629, %c1184] : memref<2x1536xf32, #tpu.memory_space<vmem>>, vector<2x32xf32>
    tpu.vector_store %arg7[%c0_629, %c1184], %1018 {strides = array<i32>} : memref<2x1536xf32, #tpu.memory_space<vmem>>, vector<2x32xf32>,
    %c0_630 = arith.constant 0 : index
    %c2_631 = arith.constant 2 : index
    %c12_632 = arith.constant 12 : index
    %c0_633 = arith.constant 0 : index
    %1020 = vector.load %arg6[%c0_630, %c2_631, %c12_632, %c0_633] : memref<2x3x34x34xf32, #tpu.memory_space<vmem>>, vector<2x1x1x34xf32>
    %1021 = vector.shape_cast %1020 : vector<2x1x1x34xf32> to vector<2x34xf32>
    %c0_634 = arith.constant 0 : index
    %c2_635 = arith.constant 2 : index
    %c13_636 = arith.constant 13 : index
    %c0_637 = arith.constant 0 : index
    %1022 = vector.load %arg6[%c0_634, %c2_635, %c13_636, %c0_637] : memref<2x3x34x34xf32, #tpu.memory_space<vmem>>, vector<2x1x1x34xf32>
    %1023 = vector.shape_cast %1022 : vector<2x1x1x34xf32> to vector<2x34xf32>
    %1024 = arith.maximumf %1021, %1023 : vector<2x34xf32>
    %c0_638 = arith.constant 0 : index
    %c2_639 = arith.constant 2 : index
    %c14_640 = arith.constant 14 : index
    %c0_641 = arith.constant 0 : index
    %1025 = vector.load %arg6[%c0_638, %c2_639, %c14_640, %c0_641] : memref<2x3x34x34xf32, #tpu.memory_space<vmem>>, vector<2x1x1x34xf32>
    %1026 = vector.shape_cast %1025 : vector<2x1x1x34xf32> to vector<2x34xf32>
    %1027 = arith.maximumf %1024, %1026 : vector<2x34xf32>
    %1028 = vector.extract_strided_slice %1027 {offsets = [0, 0], sizes = [2, 32], strides = [1, 1]} : vector<2x34xf32> to vector<2x32xf32>
    %1029 = vector.extract_strided_slice %1027 {offsets = [0, 1], sizes = [2, 32], strides = [1, 1]} : vector<2x34xf32> to vector<2x32xf32>
    %1030 = arith.maximumf %1028, %1029 : vector<2x32xf32>
    %1031 = vector.extract_strided_slice %1027 {offsets = [0, 2], sizes = [2, 32], strides = [1, 1]} : vector<2x34xf32> to vector<2x32xf32>
    %1032 = arith.maximumf %1030, %1031 : vector<2x32xf32>
    %c0_642 = arith.constant 0 : index
    %c1216 = arith.constant 1216 : index
    %1033 = vector.load %arg7[%c0_642, %c1216] : memref<2x1536xf32, #tpu.memory_space<vmem>>, vector<2x32xf32>
    tpu.vector_store %arg7[%c0_642, %c1216], %1032 {strides = array<i32>} : memref<2x1536xf32, #tpu.memory_space<vmem>>, vector<2x32xf32>,
    %c0_643 = arith.constant 0 : index
    %c2_644 = arith.constant 2 : index
    %c14_645 = arith.constant 14 : index
    %c0_646 = arith.constant 0 : index
    %1034 = vector.load %arg6[%c0_643, %c2_644, %c14_645, %c0_646] : memref<2x3x34x34xf32, #tpu.memory_space<vmem>>, vector<2x1x1x34xf32>
    %1035 = vector.shape_cast %1034 : vector<2x1x1x34xf32> to vector<2x34xf32>
    %c0_647 = arith.constant 0 : index
    %c2_648 = arith.constant 2 : index
    %c15_649 = arith.constant 15 : index
    %c0_650 = arith.constant 0 : index
    %1036 = vector.load %arg6[%c0_647, %c2_648, %c15_649, %c0_650] : memref<2x3x34x34xf32, #tpu.memory_space<vmem>>, vector<2x1x1x34xf32>
    %1037 = vector.shape_cast %1036 : vector<2x1x1x34xf32> to vector<2x34xf32>
    %1038 = arith.maximumf %1035, %1037 : vector<2x34xf32>
    %c0_651 = arith.constant 0 : index
    %c2_652 = arith.constant 2 : index
    %c16_653 = arith.constant 16 : index
    %c0_654 = arith.constant 0 : index
    %1039 = vector.load %arg6[%c0_651, %c2_652, %c16_653, %c0_654] : memref<2x3x34x34xf32, #tpu.memory_space<vmem>>, vector<2x1x1x34xf32>
    %1040 = vector.shape_cast %1039 : vector<2x1x1x34xf32> to vector<2x34xf32>
    %1041 = arith.maximumf %1038, %1040 : vector<2x34xf32>
    %1042 = vector.extract_strided_slice %1041 {offsets = [0, 0], sizes = [2, 32], strides = [1, 1]} : vector<2x34xf32> to vector<2x32xf32>
    %1043 = vector.extract_strided_slice %1041 {offsets = [0, 1], sizes = [2, 32], strides = [1, 1]} : vector<2x34xf32> to vector<2x32xf32>
    %1044 = arith.maximumf %1042, %1043 : vector<2x32xf32>
    %1045 = vector.extract_strided_slice %1041 {offsets = [0, 2], sizes = [2, 32], strides = [1, 1]} : vector<2x34xf32> to vector<2x32xf32>
    %1046 = arith.maximumf %1044, %1045 : vector<2x32xf32>
    %c0_655 = arith.constant 0 : index
    %c1248 = arith.constant 1248 : index
    %1047 = vector.load %arg7[%c0_655, %c1248] : memref<2x1536xf32, #tpu.memory_space<vmem>>, vector<2x32xf32>
    tpu.vector_store %arg7[%c0_655, %c1248], %1046 {strides = array<i32>} : memref<2x1536xf32, #tpu.memory_space<vmem>>, vector<2x32xf32>,
    %c0_656 = arith.constant 0 : index
    %c2_657 = arith.constant 2 : index
    %c16_658 = arith.constant 16 : index
    %c0_659 = arith.constant 0 : index
    %1048 = vector.load %arg6[%c0_656, %c2_657, %c16_658, %c0_659] : memref<2x3x34x34xf32, #tpu.memory_space<vmem>>, vector<2x1x1x34xf32>
    %1049 = vector.shape_cast %1048 : vector<2x1x1x34xf32> to vector<2x34xf32>
    %c0_660 = arith.constant 0 : index
    %c2_661 = arith.constant 2 : index
    %c17_662 = arith.constant 17 : index
    %c0_663 = arith.constant 0 : index
    %1050 = vector.load %arg6[%c0_660, %c2_661, %c17_662, %c0_663] : memref<2x3x34x34xf32, #tpu.memory_space<vmem>>, vector<2x1x1x34xf32>
    %1051 = vector.shape_cast %1050 : vector<2x1x1x34xf32> to vector<2x34xf32>
    %1052 = arith.maximumf %1049, %1051 : vector<2x34xf32>
    %c0_664 = arith.constant 0 : index
    %c2_665 = arith.constant 2 : index
    %c18_666 = arith.constant 18 : index
    %c0_667 = arith.constant 0 : index
    %1053 = vector.load %arg6[%c0_664, %c2_665, %c18_666, %c0_667] : memref<2x3x34x34xf32, #tpu.memory_space<vmem>>, vector<2x1x1x34xf32>
    %1054 = vector.shape_cast %1053 : vector<2x1x1x34xf32> to vector<2x34xf32>
    %1055 = arith.maximumf %1052, %1054 : vector<2x34xf32>
    %1056 = vector.extract_strided_slice %1055 {offsets = [0, 0], sizes = [2, 32], strides = [1, 1]} : vector<2x34xf32> to vector<2x32xf32>
    %1057 = vector.extract_strided_slice %1055 {offsets = [0, 1], sizes = [2, 32], strides = [1, 1]} : vector<2x34xf32> to vector<2x32xf32>
    %1058 = arith.maximumf %1056, %1057 : vector<2x32xf32>
    %1059 = vector.extract_strided_slice %1055 {offsets = [0, 2], sizes = [2, 32], strides = [1, 1]} : vector<2x34xf32> to vector<2x32xf32>
    %1060 = arith.maximumf %1058, %1059 : vector<2x32xf32>
    %c0_668 = arith.constant 0 : index
    %c1280 = arith.constant 1280 : index
    %1061 = vector.load %arg7[%c0_668, %c1280] : memref<2x1536xf32, #tpu.memory_space<vmem>>, vector<2x32xf32>
    tpu.vector_store %arg7[%c0_668, %c1280], %1060 {strides = array<i32>} : memref<2x1536xf32, #tpu.memory_space<vmem>>, vector<2x32xf32>,
    %c0_669 = arith.constant 0 : index
    %c2_670 = arith.constant 2 : index
    %c18_671 = arith.constant 18 : index
    %c0_672 = arith.constant 0 : index
    %1062 = vector.load %arg6[%c0_669, %c2_670, %c18_671, %c0_672] : memref<2x3x34x34xf32, #tpu.memory_space<vmem>>, vector<2x1x1x34xf32>
    %1063 = vector.shape_cast %1062 : vector<2x1x1x34xf32> to vector<2x34xf32>
    %c0_673 = arith.constant 0 : index
    %c2_674 = arith.constant 2 : index
    %c19_675 = arith.constant 19 : index
    %c0_676 = arith.constant 0 : index
    %1064 = vector.load %arg6[%c0_673, %c2_674, %c19_675, %c0_676] : memref<2x3x34x34xf32, #tpu.memory_space<vmem>>, vector<2x1x1x34xf32>
    %1065 = vector.shape_cast %1064 : vector<2x1x1x34xf32> to vector<2x34xf32>
    %1066 = arith.maximumf %1063, %1065 : vector<2x34xf32>
    %c0_677 = arith.constant 0 : index
    %c2_678 = arith.constant 2 : index
    %c20_679 = arith.constant 20 : index
    %c0_680 = arith.constant 0 : index
    %1067 = vector.load %arg6[%c0_677, %c2_678, %c20_679, %c0_680] : memref<2x3x34x34xf32, #tpu.memory_space<vmem>>, vector<2x1x1x34xf32>
    %1068 = vector.shape_cast %1067 : vector<2x1x1x34xf32> to vector<2x34xf32>
    %1069 = arith.maximumf %1066, %1068 : vector<2x34xf32>
    %1070 = vector.extract_strided_slice %1069 {offsets = [0, 0], sizes = [2, 32], strides = [1, 1]} : vector<2x34xf32> to vector<2x32xf32>
    %1071 = vector.extract_strided_slice %1069 {offsets = [0, 1], sizes = [2, 32], strides = [1, 1]} : vector<2x34xf32> to vector<2x32xf32>
    %1072 = arith.maximumf %1070, %1071 : vector<2x32xf32>
    %1073 = vector.extract_strided_slice %1069 {offsets = [0, 2], sizes = [2, 32], strides = [1, 1]} : vector<2x34xf32> to vector<2x32xf32>
    %1074 = arith.maximumf %1072, %1073 : vector<2x32xf32>
    %c0_681 = arith.constant 0 : index
    %c1312 = arith.constant 1312 : index
    %1075 = vector.load %arg7[%c0_681, %c1312] : memref<2x1536xf32, #tpu.memory_space<vmem>>, vector<2x32xf32>
    tpu.vector_store %arg7[%c0_681, %c1312], %1074 {strides = array<i32>} : memref<2x1536xf32, #tpu.memory_space<vmem>>, vector<2x32xf32>,
    %c0_682 = arith.constant 0 : index
    %c2_683 = arith.constant 2 : index
    %c20_684 = arith.constant 20 : index
    %c0_685 = arith.constant 0 : index
    %1076 = vector.load %arg6[%c0_682, %c2_683, %c20_684, %c0_685] : memref<2x3x34x34xf32, #tpu.memory_space<vmem>>, vector<2x1x1x34xf32>
    %1077 = vector.shape_cast %1076 : vector<2x1x1x34xf32> to vector<2x34xf32>
    %c0_686 = arith.constant 0 : index
    %c2_687 = arith.constant 2 : index
    %c21_688 = arith.constant 21 : index
    %c0_689 = arith.constant 0 : index
    %1078 = vector.load %arg6[%c0_686, %c2_687, %c21_688, %c0_689] : memref<2x3x34x34xf32, #tpu.memory_space<vmem>>, vector<2x1x1x34xf32>
    %1079 = vector.shape_cast %1078 : vector<2x1x1x34xf32> to vector<2x34xf32>
    %1080 = arith.maximumf %1077, %1079 : vector<2x34xf32>
    %c0_690 = arith.constant 0 : index
    %c2_691 = arith.constant 2 : index
    %c22_692 = arith.constant 22 : index
    %c0_693 = arith.constant 0 : index
    %1081 = vector.load %arg6[%c0_690, %c2_691, %c22_692, %c0_693] : memref<2x3x34x34xf32, #tpu.memory_space<vmem>>, vector<2x1x1x34xf32>
    %1082 = vector.shape_cast %1081 : vector<2x1x1x34xf32> to vector<2x34xf32>
    %1083 = arith.maximumf %1080, %1082 : vector<2x34xf32>
    %1084 = vector.extract_strided_slice %1083 {offsets = [0, 0], sizes = [2, 32], strides = [1, 1]} : vector<2x34xf32> to vector<2x32xf32>
    %1085 = vector.extract_strided_slice %1083 {offsets = [0, 1], sizes = [2, 32], strides = [1, 1]} : vector<2x34xf32> to vector<2x32xf32>
    %1086 = arith.maximumf %1084, %1085 : vector<2x32xf32>
    %1087 = vector.extract_strided_slice %1083 {offsets = [0, 2], sizes = [2, 32], strides = [1, 1]} : vector<2x34xf32> to vector<2x32xf32>
    %1088 = arith.maximumf %1086, %1087 : vector<2x32xf32>
    %c0_694 = arith.constant 0 : index
    %c1344 = arith.constant 1344 : index
    %1089 = vector.load %arg7[%c0_694, %c1344] : memref<2x1536xf32, #tpu.memory_space<vmem>>, vector<2x32xf32>
    tpu.vector_store %arg7[%c0_694, %c1344], %1088 {strides = array<i32>} : memref<2x1536xf32, #tpu.memory_space<vmem>>, vector<2x32xf32>,
    %c0_695 = arith.constant 0 : index
    %c2_696 = arith.constant 2 : index
    %c22_697 = arith.constant 22 : index
    %c0_698 = arith.constant 0 : index
    %1090 = vector.load %arg6[%c0_695, %c2_696, %c22_697, %c0_698] : memref<2x3x34x34xf32, #tpu.memory_space<vmem>>, vector<2x1x1x34xf32>
    %1091 = vector.shape_cast %1090 : vector<2x1x1x34xf32> to vector<2x34xf32>
    %c0_699 = arith.constant 0 : index
    %c2_700 = arith.constant 2 : index
    %c23_701 = arith.constant 23 : index
    %c0_702 = arith.constant 0 : index
    %1092 = vector.load %arg6[%c0_699, %c2_700, %c23_701, %c0_702] : memref<2x3x34x34xf32, #tpu.memory_space<vmem>>, vector<2x1x1x34xf32>
    %1093 = vector.shape_cast %1092 : vector<2x1x1x34xf32> to vector<2x34xf32>
    %1094 = arith.maximumf %1091, %1093 : vector<2x34xf32>
    %c0_703 = arith.constant 0 : index
    %c2_704 = arith.constant 2 : index
    %c24_705 = arith.constant 24 : index
    %c0_706 = arith.constant 0 : index
    %1095 = vector.load %arg6[%c0_703, %c2_704, %c24_705, %c0_706] : memref<2x3x34x34xf32, #tpu.memory_space<vmem>>, vector<2x1x1x34xf32>
    %1096 = vector.shape_cast %1095 : vector<2x1x1x34xf32> to vector<2x34xf32>
    %1097 = arith.maximumf %1094, %1096 : vector<2x34xf32>
    %1098 = vector.extract_strided_slice %1097 {offsets = [0, 0], sizes = [2, 32], strides = [1, 1]} : vector<2x34xf32> to vector<2x32xf32>
    %1099 = vector.extract_strided_slice %1097 {offsets = [0, 1], sizes = [2, 32], strides = [1, 1]} : vector<2x34xf32> to vector<2x32xf32>
    %1100 = arith.maximumf %1098, %1099 : vector<2x32xf32>
    %1101 = vector.extract_strided_slice %1097 {offsets = [0, 2], sizes = [2, 32], strides = [1, 1]} : vector<2x34xf32> to vector<2x32xf32>
    %1102 = arith.maximumf %1100, %1101 : vector<2x32xf32>
    %c0_707 = arith.constant 0 : index
    %c1376 = arith.constant 1376 : index
    %1103 = vector.load %arg7[%c0_707, %c1376] : memref<2x1536xf32, #tpu.memory_space<vmem>>, vector<2x32xf32>
    tpu.vector_store %arg7[%c0_707, %c1376], %1102 {strides = array<i32>} : memref<2x1536xf32, #tpu.memory_space<vmem>>, vector<2x32xf32>,
    %c0_708 = arith.constant 0 : index
    %c2_709 = arith.constant 2 : index
    %c24_710 = arith.constant 24 : index
    %c0_711 = arith.constant 0 : index
    %1104 = vector.load %arg6[%c0_708, %c2_709, %c24_710, %c0_711] : memref<2x3x34x34xf32, #tpu.memory_space<vmem>>, vector<2x1x1x34xf32>
    %1105 = vector.shape_cast %1104 : vector<2x1x1x34xf32> to vector<2x34xf32>
    %c0_712 = arith.constant 0 : index
    %c2_713 = arith.constant 2 : index
    %c25_714 = arith.constant 25 : index
    %c0_715 = arith.constant 0 : index
    %1106 = vector.load %arg6[%c0_712, %c2_713, %c25_714, %c0_715] : memref<2x3x34x34xf32, #tpu.memory_space<vmem>>, vector<2x1x1x34xf32>
    %1107 = vector.shape_cast %1106 : vector<2x1x1x34xf32> to vector<2x34xf32>
    %1108 = arith.maximumf %1105, %1107 : vector<2x34xf32>
    %c0_716 = arith.constant 0 : index
    %c2_717 = arith.constant 2 : index
    %c26_718 = arith.constant 26 : index
    %c0_719 = arith.constant 0 : index
    %1109 = vector.load %arg6[%c0_716, %c2_717, %c26_718, %c0_719] : memref<2x3x34x34xf32, #tpu.memory_space<vmem>>, vector<2x1x1x34xf32>
    %1110 = vector.shape_cast %1109 : vector<2x1x1x34xf32> to vector<2x34xf32>
    %1111 = arith.maximumf %1108, %1110 : vector<2x34xf32>
    %1112 = vector.extract_strided_slice %1111 {offsets = [0, 0], sizes = [2, 32], strides = [1, 1]} : vector<2x34xf32> to vector<2x32xf32>
    %1113 = vector.extract_strided_slice %1111 {offsets = [0, 1], sizes = [2, 32], strides = [1, 1]} : vector<2x34xf32> to vector<2x32xf32>
    %1114 = arith.maximumf %1112, %1113 : vector<2x32xf32>
    %1115 = vector.extract_strided_slice %1111 {offsets = [0, 2], sizes = [2, 32], strides = [1, 1]} : vector<2x34xf32> to vector<2x32xf32>
    %1116 = arith.maximumf %1114, %1115 : vector<2x32xf32>
    %c0_720 = arith.constant 0 : index
    %c1408 = arith.constant 1408 : index
    %1117 = vector.load %arg7[%c0_720, %c1408] : memref<2x1536xf32, #tpu.memory_space<vmem>>, vector<2x32xf32>
    tpu.vector_store %arg7[%c0_720, %c1408], %1116 {strides = array<i32>} : memref<2x1536xf32, #tpu.memory_space<vmem>>, vector<2x32xf32>,
    %c0_721 = arith.constant 0 : index
    %c2_722 = arith.constant 2 : index
    %c26_723 = arith.constant 26 : index
    %c0_724 = arith.constant 0 : index
    %1118 = vector.load %arg6[%c0_721, %c2_722, %c26_723, %c0_724] : memref<2x3x34x34xf32, #tpu.memory_space<vmem>>, vector<2x1x1x34xf32>
    %1119 = vector.shape_cast %1118 : vector<2x1x1x34xf32> to vector<2x34xf32>
    %c0_725 = arith.constant 0 : index
    %c2_726 = arith.constant 2 : index
    %c27_727 = arith.constant 27 : index
    %c0_728 = arith.constant 0 : index
    %1120 = vector.load %arg6[%c0_725, %c2_726, %c27_727, %c0_728] : memref<2x3x34x34xf32, #tpu.memory_space<vmem>>, vector<2x1x1x34xf32>
    %1121 = vector.shape_cast %1120 : vector<2x1x1x34xf32> to vector<2x34xf32>
    %1122 = arith.maximumf %1119, %1121 : vector<2x34xf32>
    %c0_729 = arith.constant 0 : index
    %c2_730 = arith.constant 2 : index
    %c28_731 = arith.constant 28 : index
    %c0_732 = arith.constant 0 : index
    %1123 = vector.load %arg6[%c0_729, %c2_730, %c28_731, %c0_732] : memref<2x3x34x34xf32, #tpu.memory_space<vmem>>, vector<2x1x1x34xf32>
    %1124 = vector.shape_cast %1123 : vector<2x1x1x34xf32> to vector<2x34xf32>
    %1125 = arith.maximumf %1122, %1124 : vector<2x34xf32>
    %1126 = vector.extract_strided_slice %1125 {offsets = [0, 0], sizes = [2, 32], strides = [1, 1]} : vector<2x34xf32> to vector<2x32xf32>
    %1127 = vector.extract_strided_slice %1125 {offsets = [0, 1], sizes = [2, 32], strides = [1, 1]} : vector<2x34xf32> to vector<2x32xf32>
    %1128 = arith.maximumf %1126, %1127 : vector<2x32xf32>
    %1129 = vector.extract_strided_slice %1125 {offsets = [0, 2], sizes = [2, 32], strides = [1, 1]} : vector<2x34xf32> to vector<2x32xf32>
    %1130 = arith.maximumf %1128, %1129 : vector<2x32xf32>
    %c0_733 = arith.constant 0 : index
    %c1440 = arith.constant 1440 : index
    %1131 = vector.load %arg7[%c0_733, %c1440] : memref<2x1536xf32, #tpu.memory_space<vmem>>, vector<2x32xf32>
    tpu.vector_store %arg7[%c0_733, %c1440], %1130 {strides = array<i32>} : memref<2x1536xf32, #tpu.memory_space<vmem>>, vector<2x32xf32>,
    %c0_734 = arith.constant 0 : index
    %c2_735 = arith.constant 2 : index
    %c28_736 = arith.constant 28 : index
    %c0_737 = arith.constant 0 : index
    %1132 = vector.load %arg6[%c0_734, %c2_735, %c28_736, %c0_737] : memref<2x3x34x34xf32, #tpu.memory_space<vmem>>, vector<2x1x1x34xf32>
    %1133 = vector.shape_cast %1132 : vector<2x1x1x34xf32> to vector<2x34xf32>
    %c0_738 = arith.constant 0 : index
    %c2_739 = arith.constant 2 : index
    %c29_740 = arith.constant 29 : index
    %c0_741 = arith.constant 0 : index
    %1134 = vector.load %arg6[%c0_738, %c2_739, %c29_740, %c0_741] : memref<2x3x34x34xf32, #tpu.memory_space<vmem>>, vector<2x1x1x34xf32>
    %1135 = vector.shape_cast %1134 : vector<2x1x1x34xf32> to vector<2x34xf32>
    %1136 = arith.maximumf %1133, %1135 : vector<2x34xf32>
    %c0_742 = arith.constant 0 : index
    %c2_743 = arith.constant 2 : index
    %c30_744 = arith.constant 30 : index
    %c0_745 = arith.constant 0 : index
    %1137 = vector.load %arg6[%c0_742, %c2_743, %c30_744, %c0_745] : memref<2x3x34x34xf32, #tpu.memory_space<vmem>>, vector<2x1x1x34xf32>
    %1138 = vector.shape_cast %1137 : vector<2x1x1x34xf32> to vector<2x34xf32>
    %1139 = arith.maximumf %1136, %1138 : vector<2x34xf32>
    %1140 = vector.extract_strided_slice %1139 {offsets = [0, 0], sizes = [2, 32], strides = [1, 1]} : vector<2x34xf32> to vector<2x32xf32>
    %1141 = vector.extract_strided_slice %1139 {offsets = [0, 1], sizes = [2, 32], strides = [1, 1]} : vector<2x34xf32> to vector<2x32xf32>
    %1142 = arith.maximumf %1140, %1141 : vector<2x32xf32>
    %1143 = vector.extract_strided_slice %1139 {offsets = [0, 2], sizes = [2, 32], strides = [1, 1]} : vector<2x34xf32> to vector<2x32xf32>
    %1144 = arith.maximumf %1142, %1143 : vector<2x32xf32>
    %c0_746 = arith.constant 0 : index
    %c1472 = arith.constant 1472 : index
    %1145 = vector.load %arg7[%c0_746, %c1472] : memref<2x1536xf32, #tpu.memory_space<vmem>>, vector<2x32xf32>
    tpu.vector_store %arg7[%c0_746, %c1472], %1144 {strides = array<i32>} : memref<2x1536xf32, #tpu.memory_space<vmem>>, vector<2x32xf32>,
    %c0_747 = arith.constant 0 : index
    %c2_748 = arith.constant 2 : index
    %c30_749 = arith.constant 30 : index
    %c0_750 = arith.constant 0 : index
    %1146 = vector.load %arg6[%c0_747, %c2_748, %c30_749, %c0_750] : memref<2x3x34x34xf32, #tpu.memory_space<vmem>>, vector<2x1x1x34xf32>
    %1147 = vector.shape_cast %1146 : vector<2x1x1x34xf32> to vector<2x34xf32>
    %c0_751 = arith.constant 0 : index
    %c2_752 = arith.constant 2 : index
    %c31_753 = arith.constant 31 : index
    %c0_754 = arith.constant 0 : index
    %1148 = vector.load %arg6[%c0_751, %c2_752, %c31_753, %c0_754] : memref<2x3x34x34xf32, #tpu.memory_space<vmem>>, vector<2x1x1x34xf32>
    %1149 = vector.shape_cast %1148 : vector<2x1x1x34xf32> to vector<2x34xf32>
    %1150 = arith.maximumf %1147, %1149 : vector<2x34xf32>
    %c0_755 = arith.constant 0 : index
    %c2_756 = arith.constant 2 : index
    %c32_757 = arith.constant 32 : index
    %c0_758 = arith.constant 0 : index
    %1151 = vector.load %arg6[%c0_755, %c2_756, %c32_757, %c0_758] : memref<2x3x34x34xf32, #tpu.memory_space<vmem>>, vector<2x1x1x34xf32>
    %1152 = vector.shape_cast %1151 : vector<2x1x1x34xf32> to vector<2x34xf32>
    %1153 = arith.maximumf %1150, %1152 : vector<2x34xf32>
    %1154 = vector.extract_strided_slice %1153 {offsets = [0, 0], sizes = [2, 32], strides = [1, 1]} : vector<2x34xf32> to vector<2x32xf32>
    %1155 = vector.extract_strided_slice %1153 {offsets = [0, 1], sizes = [2, 32], strides = [1, 1]} : vector<2x34xf32> to vector<2x32xf32>
    %1156 = arith.maximumf %1154, %1155 : vector<2x32xf32>
    %1157 = vector.extract_strided_slice %1153 {offsets = [0, 2], sizes = [2, 32], strides = [1, 1]} : vector<2x34xf32> to vector<2x32xf32>
    %1158 = arith.maximumf %1156, %1157 : vector<2x32xf32>
    %c0_759 = arith.constant 0 : index
    %c1504 = arith.constant 1504 : index
    %1159 = vector.load %arg7[%c0_759, %c1504] : memref<2x1536xf32, #tpu.memory_space<vmem>>, vector<2x32xf32>
    tpu.vector_store %arg7[%c0_759, %c1504], %1158 {strides = array<i32>} : memref<2x1536xf32, #tpu.memory_space<vmem>>, vector<2x32xf32>,
    %c0_760 = arith.constant 0 : index
    %c0_761 = arith.constant 0 : index
    %1160 = vector.load %arg7[%c0_760, %c0_761] : memref<2x1536xf32, #tpu.memory_space<vmem>>, vector<2x1536xf32>
    %c0_762 = arith.constant 0 : index
    %c0_763 = arith.constant 0 : index
    %1161 = vector.load %arg3[%c0_762, %c0_763] : memref<1536x10xf32, #tpu.memory_space<vmem>>, vector<1536x10xf32>
    %cst_764 = arith.constant dense<0.000000e+00> : vector<2x10xf32>
    %1162 = tpu.matmul %1160, %1161, %cst_764 {dimension_numbers = #tpu.dot_dimension_numbers<[1], [0], [0], [1], [0, 0, 1, 1], [], []>} : vector<2x1536xf32>, vector<1536x10xf32>, vector<2x10xf32> -> vector<2x10xf32>
    %c0_765 = arith.constant 0 : index
    %c0_766 = arith.constant 0 : index
    %1163 = vector.load %arg4[%c0_765, %c0_766] : memref<1x10xf32, #tpu.memory_space<vmem>>, vector<1x10xf32>
    %1164 = vector.broadcast %1163 : vector<1x10xf32> to vector<2x10xf32>
    %1165 = arith.addf %1162, %1164 : vector<2x10xf32>
    %c0_767 = arith.constant 0 : index
    %c0_768 = arith.constant 0 : index
    %1166 = vector.load %arg5[%c0_767, %c0_768] : memref<2x10xf32, #tpu.memory_space<vmem>>, vector<2x10xf32>
    tpu.vector_store %arg5[%c0_767, %c0_768], %1165 {strides = array<i32>} : memref<2x10xf32, #tpu.memory_space<vmem>>, vector<2x10xf32>,
    return
  }
}

</mosaic_0001>

<llo_original>
// kernel: tudui_forward.1
$region0: #{tudui_forward.1}
  #allocation0 [shape = 'u32[]', space=smem, size = 0x4, offset = 0x4, fixed_abs, tag = 'smem constant byte address 0x4 - core index']
  #allocation1 [shape = 'u32[72,128]{1,0:T(1,128)}', space=vmem, size = 0x9000, scoped, tag = 'internal scratch']
  #allocation2 [shape = 'f32[2,3,34,34]{3,2,1,0:T(8,128)}', space=vmem, size = 0x1e000, scoped, tag = 'scratch operand']
  #allocation3 [shape = 'f32[2,1536]{1,0:T(2,128)}', space=vmem, size = 0x3000, scoped, tag = 'scratch operand']
  %s0 = inlined_call_operand.vmem [shape: f32[81], index: 0, kind: input, shape index: {}]
  %s1 = inlined_call_operand.vmem [shape: f32[3], index: 1, kind: input, shape index: {}]
  %s2 = inlined_call_operand.vmem [shape: f32[2,3,34,34], index: 2, kind: input, shape index: {}]
  %s3 = inlined_call_operand.vmem [shape: f32[1536,10], index: 3, kind: input, shape index: {}]
  %s4 = inlined_call_operand.vmem [shape: f32[1,10], index: 4, kind: input, shape index: {}]
  %s5 = inlined_call_operand.hbm [shape: f32[2,10], index: 5, kind: output, shape index: {}]
  %s6 = sld [smem:[#allocation0]]
  $region38: #{tudui_forward.1} parent=0
    _
  %s8 = ssub.s32 1, %s6
  %s9 = scalar_select 0, %s8, %s6
  $region1: #{tudui_forward.1} parent=0
    #allocation4 [shape = 'u8[512]{0}', space=smem, size = 0x200, scoped, tag = 'input window, operand 0, single buffered']
    #allocation5 [shape = 's32[1]{0}', space=sflag, size = 0x4, scoped, tag = 'scoped memory for tudui_forward.1']
    #allocation6 [shape = 's32[1]{0}', space=sflag, size = 0x4, scoped, tag = 'scoped memory for tudui_forward.1']
    #allocation7 [shape = 'u8[512]{0}', space=smem, size = 0x200, scoped, tag = 'input window, operand 1, single buffered']
    #allocation8 [shape = 's32[1]{0}', space=sflag, size = 0x4, scoped, tag = 'scoped memory for tudui_forward.1']
    #allocation9 [shape = 'u8[1024]{0}', space=vmem, size = 0x400, scoped, tag = 'output window, operand 0, single buffered']
    %10 = vsyncpa [#allocation6], 0
    %11 = vsyncpa [#allocation8], 0
    %12 = vsyncpa [#allocation5], 0
    // Predicated region
    $region2: #{tudui_forward.1} parent=1 // pred_check
      _
    $region3: #{tudui_forward.1} parent=1 // pred_check_branch
      %14 = sbr.rel (0) target = $region5
    $region4: #{tudui_forward.1} parent=1 // pred_region
      %16 = vsyncadd [#allocation6], 0
      %s18 = sshll.u32 %s0, 4
      %s19 = int_to_ptr.vmem [resolvable:$true] %s18
      %21 = dma.vmem_to_smem %s19, 16, [#allocation4], [#allocation6]
    $region5: #{tudui_forward.1} parent=1 // pred_fallthru
      _
    // Predicated region
    $region6: #{tudui_forward.1} parent=1 // pred_check
      _
    $region7: #{tudui_forward.1} parent=1 // pred_check_branch
      %23 = sbr.rel (0) target = $region9
    $region8: #{tudui_forward.1} parent=1 // pred_region
      %25 = vsyncadd [#allocation8], 0
      %s27 = sshll.u32 %s1, 4
      %s28 = int_to_ptr.vmem [resolvable:$true] %s27
      %30 = dma.vmem_to_smem %s28, 16, [#allocation7], [#allocation8]
    $region9: #{tudui_forward.1} parent=1 // pred_fallthru
      _
    // Predicated region
    $region10: #{tudui_forward.1} parent=1 // pred_check
      _
    $region11: #{tudui_forward.1} parent=1 // pred_check_branch
      %32 = sbr.rel (0) target = $region13
    $region12: #{tudui_forward.1} parent=1 // pred_region
      _
    $region13: #{tudui_forward.1} parent=1 // pred_fallthru
      _
    // Predicated region
    $region14: #{tudui_forward.1} parent=1 // pred_check
      _
    $region15: #{tudui_forward.1} parent=1 // pred_check_branch
      %34 = sbr.rel (0) target = $region17
    $region16: #{tudui_forward.1} parent=1 // pred_region
      _
    $region17: #{tudui_forward.1} parent=1 // pred_fallthru
      _
    // Predicated region
    $region18: #{tudui_forward.1} parent=1 // pred_check
      _
    $region19: #{tudui_forward.1} parent=1 // pred_check_branch
      %36 = sbr.rel (0) target = $region21
    $region20: #{tudui_forward.1} parent=1 // pred_region
      _
    $region21: #{tudui_forward.1} parent=1 // pred_fallthru
      _
    // Predicated region
    $region22: #{tudui_forward.1} parent=1 // pred_check
      _
    $region23: #{tudui_forward.1} parent=1 // pred_check_branch
      %38 = sbr.rel (0) target = $region25
    $region24: #{tudui_forward.1} parent=1 // pred_region
      %40 = dma.done [#allocation6], 16
    $region25: #{tudui_forward.1} parent=1 // pred_fallthru
      _
    // Predicated region
    $region26: #{tudui_forward.1} parent=1 // pred_check
      _
    $region27: #{tudui_forward.1} parent=1 // pred_check_branch
      %42 = sbr.rel (0) target = $region29
    $region28: #{tudui_forward.1} parent=1 // pred_region
      %44 = dma.done [#allocation8], 16
    $region29: #{tudui_forward.1} parent=1 // pred_fallthru
      _
    %45 = sfence
    %vm46 = vcmask 277504
    %47 = vst.msk [vmem:[#allocation2] sm:$0xff] %vm46, 0.0
    %48 = vst.msk [vmem:[#allocation2 + $0x8] sm:$0xff] %vm46, 0.0
    %49 = vst.msk [vmem:[#allocation2 + $0x10] sm:$0xff] %vm46, 0.0
    %50 = vst.msk [vmem:[#allocation2 + $0x18] sm:$0xff] %vm46, 0.0
    %vm51 = vcmask 271360
    %52 = vst.msk [vmem:[#allocation2 + $0x20] sm:$0x3] %vm51, 0.0
    %53 = vst.msk [vmem:[#allocation2 + $0x28] sm:$0xff] %vm46, 0.0
    %54 = vst.msk [vmem:[#allocation2 + $0x30] sm:$0xff] %vm46, 0.0
    %55 = vst.msk [vmem:[#allocation2 + $0x38] sm:$0xff] %vm46, 0.0
    %56 = vst.msk [vmem:[#allocation2 + $0x40] sm:$0xff] %vm46, 0.0
    %57 = vst.msk [vmem:[#allocation2 + $0x48] sm:$0x3] %vm51, 0.0
    %58 = vst.msk [vmem:[#allocation2 + $0x50] sm:$0xff] %vm46, 0.0
    %59 = vst.msk [vmem:[#allocation2 + $0x58] sm:$0xff] %vm46, 0.0
    %60 = vst.msk [vmem:[#allocation2 + $0x60] sm:$0xff] %vm46, 0.0
    %61 = vst.msk [vmem:[#allocation2 + $0x68] sm:$0xff] %vm46, 0.0
    %62 = vst.msk [vmem:[#allocation2 + $0x70] sm:$0x3] %vm51, 0.0
    %63 = vst.msk [vmem:[#allocation2 + $0x78] sm:$0xff] %vm46, 0.0
    %64 = vst.msk [vmem:[#allocation2 + $0x80] sm:$0xff] %vm46, 0.0
    %65 = vst.msk [vmem:[#allocation2 + $0x88] sm:$0xff] %vm46, 0.0
    %66 = vst.msk [vmem:[#allocation2 + $0x90] sm:$0xff] %vm46, 0.0
    %67 = vst.msk [vmem:[#allocation2 + $0x98] sm:$0x3] %vm51, 0.0
    %68 = vst.msk [vmem:[#allocation2 + $0xa0] sm:$0xff] %vm46, 0.0
    %69 = vst.msk [vmem:[#allocation2 + $0xa8] sm:$0xff] %vm46, 0.0
    %70 = vst.msk [vmem:[#allocation2 + $0xb0] sm:$0xff] %vm46, 0.0
    %71 = vst.msk [vmem:[#allocation2 + $0xb8] sm:$0xff] %vm46, 0.0
    %72 = vst.msk [vmem:[#allocation2 + $0xc0] sm:$0x3] %vm51, 0.0
    %73 = vst.msk [vmem:[#allocation2 + $0xc8] sm:$0xff] %vm46, 0.0
    %74 = vst.msk [vmem:[#allocation2 + $0xd0] sm:$0xff] %vm46, 0.0
    %75 = vst.msk [vmem:[#allocation2 + $0xd8] sm:$0xff] %vm46, 0.0
    %76 = vst.msk [vmem:[#allocation2 + $0xe0] sm:$0xff] %vm46, 0.0
    %77 = vst.msk [vmem:[#allocation2 + $0xe8] sm:$0x3] %vm51, 0.0
    %v78 = vld [vmem:[%s2] sm:$0xff]
    %v79 = vld [vmem:[%s2 + $0x8] sm:$0xff]
    %v80 = vld [vmem:[%s2 + $0x10] sm:$0xff]
    %v81 = vld [vmem:[%s2 + $0x18] sm:$0xff]
    %v82 = vld [vmem:[%s2 + $0x78] sm:$0xff]
    %v83 = vld [vmem:[%s2 + $0x80] sm:$0xff]
    %v84 = vld [vmem:[%s2 + $0x88] sm:$0xff]
    %v85 = vld [vmem:[%s2 + $0x90] sm:$0xff]
    %s86 = sld [smem:[#allocation4]]
    %v87 = vstv %s86
    %v88 = vmul.f32 %v87, %v78
    %v89 = vmul.f32 %v87, %v79
    %v90 = vmul.f32 %v87, %v80
    %v91 = vmul.f32 %v87, %v81
    %v92 = vmul.f32 %v87, %v82
    %v93 = vmul.f32 %v87, %v83
    %v94 = vmul.f32 %v87, %v84
    %v95 = vmul.f32 %v87, %v85
    %v96 = vadd.f32 %v88, 0.0
    %v97 = vadd.f32 %v89, 0.0
    %v98 = vadd.f32 %v90, 0.0
    %v99 = vadd.f32 %v91, 0.0
    %v100 = vadd.f32 %v92, 0.0
    %v101 = vadd.f32 %v93, 0.0
    %v102 = vadd.f32 %v94, 0.0
    %v103 = vadd.f32 %v95, 0.0
    %s104 = sld [smem:[#allocation4 + $0x1]]
    %v105 = vstv %s104
    %v106 = vmul.f32 %v105, %v78
    %v107 = vmul.f32 %v105, %v79
    %v108 = vmul.f32 %v105, %v80
    %v109 = vmul.f32 %v105, %v81
    %v110 = vmul.f32 %v105, %v82
    %v111 = vmul.f32 %v105, %v83
    %v112 = vmul.f32 %v105, %v84
    %v113 = vmul.f32 %v105, %v85
    %122 = vrot.lane.b32.xlu0 %v106, 127
    %v123 = vpop.permute.xlu0 %122
    %124 = vrot.lane.b32.xlu0 %v107, 127
    %v125 = vpop.permute.xlu0 %124
    %126 = vrot.lane.b32.xlu0 %v108, 127
    %v127 = vpop.permute.xlu0 %126
    %128 = vrot.lane.b32.xlu0 %v109, 127
    %v129 = vpop.permute.xlu0 %128
    %130 = vrot.lane.b32.xlu0 %v110, 127
    %v131 = vpop.permute.xlu0 %130
    %132 = vrot.lane.b32.xlu0 %v111, 127
    %v133 = vpop.permute.xlu0 %132
    %134 = vrot.lane.b32.xlu0 %v112, 127
    %v135 = vpop.permute.xlu0 %134
    %136 = vrot.lane.b32.xlu0 %v113, 127
    %v137 = vpop.permute.xlu0 %136
    %v146 = vadd.f32 %v96, %v123
    %v147 = vadd.f32 %v97, %v125
    %v148 = vadd.f32 %v98, %v127
    %v149 = vadd.f32 %v99, %v129
    %v150 = vadd.f32 %v100, %v131
    %v151 = vadd.f32 %v101, %v133
    %v152 = vadd.f32 %v102, %v135
    %v153 = vadd.f32 %v103, %v137
    %s154 = sld [smem:[#allocation4 + $0x2]]
    %v155 = vstv %s154
    %v156 = vmul.f32 %v155, %v78
    %v157 = vmul.f32 %v155, %v79
    %v158 = vmul.f32 %v155, %v80
    %v159 = vmul.f32 %v155, %v81
    %v160 = vmul.f32 %v155, %v82
    %v161 = vmul.f32 %v155, %v83
    %v162 = vmul.f32 %v155, %v84
    %v163 = vmul.f32 %v155, %v85
    %172 = vrot.lane.b32.xlu0 %v156, 126
    %v173 = vpop.permute.xlu0 %172
    %174 = vrot.lane.b32.xlu0 %v157, 126
    %v175 = vpop.permute.xlu0 %174
    %176 = vrot.lane.b32.xlu0 %v158, 126
    %v177 = vpop.permute.xlu0 %176
    %178 = vrot.lane.b32.xlu0 %v159, 126
    %v179 = vpop.permute.xlu0 %178
    %180 = vrot.lane.b32.xlu0 %v160, 126
    %v181 = vpop.permute.xlu0 %180
    %182 = vrot.lane.b32.xlu0 %v161, 126
    %v183 = vpop.permute.xlu0 %182
    %184 = vrot.lane.b32.xlu0 %v162, 126
    %v185 = vpop.permute.xlu0 %184
    %186 = vrot.lane.b32.xlu0 %v163, 126
    %v187 = vpop.permute.xlu0 %186
    %v196 = vadd.f32 %v146, %v173
    %v197 = vadd.f32 %v147, %v175
    %v198 = vadd.f32 %v148, %v177
    %v199 = vadd.f32 %v149, %v179
    %v200 = vadd.f32 %v150, %v181
    %v201 = vadd.f32 %v151, %v183
    %v202 = vadd.f32 %v152, %v185
    %v203 = vadd.f32 %v153, %v187
    %v204 = vld [vmem:[%s2 + $0x1] sm:$0xff]
    %v205 = vld [vmem:[%s2 + $0x9] sm:$0xff]
    %v206 = vld [vmem:[%s2 + $0x11] sm:$0xff]
    %v207 = vld [vmem:[%s2 + $0x19] sm:$0xff]
    %v208 = vld [vmem:[%s2 + $0x79] sm:$0xff]
    %v209 = vld [vmem:[%s2 + $0x81] sm:$0xff]
    %v210 = vld [vmem:[%s2 + $0x89] sm:$0xff]
    %v211 = vld [vmem:[%s2 + $0x91] sm:$0xff]
    %s212 = sld [smem:[#allocation4 + $0x3]]
    %v213 = vstv %s212
    %v214 = vmul.f32 %v213, %v204
    %v215 = vmul.f32 %v213, %v205
    %v216 = vmul.f32 %v213, %v206
    %v217 = vmul.f32 %v213, %v207
    %v218 = vmul.f32 %v213, %v208
    %v219 = vmul.f32 %v213, %v209
    %v220 = vmul.f32 %v213, %v210
    %v221 = vmul.f32 %v213, %v211
    %v222 = vadd.f32 %v196, %v214
    %v223 = vadd.f32 %v197, %v215
    %v224 = vadd.f32 %v198, %v216
    %v225 = vadd.f32 %v199, %v217
    %v226 = vadd.f32 %v200, %v218
    %v227 = vadd.f32 %v201, %v219
    %v228 = vadd.f32 %v202, %v220
    %v229 = vadd.f32 %v203, %v221
    %s230 = sld [smem:[#allocation4 + $0x4]]
    %v231 = vstv %s230
    %v232 = vmul.f32 %v231, %v204
    %v233 = vmul.f32 %v231, %v205
    %v234 = vmul.f32 %v231, %v206
    %v235 = vmul.f32 %v231, %v207
    %v236 = vmul.f32 %v231, %v208
    %v237 = vmul.f32 %v231, %v209
    %v238 = vmul.f32 %v231, %v210
    %v239 = vmul.f32 %v231, %v211
    %248 = vrot.lane.b32.xlu0 %v232, 127
    %v249 = vpop.permute.xlu0 %248
    %250 = vrot.lane.b32.xlu0 %v233, 127
    %v251 = vpop.permute.xlu0 %250
    %252 = vrot.lane.b32.xlu0 %v234, 127
    %v253 = vpop.permute.xlu0 %252
    %254 = vrot.lane.b32.xlu0 %v235, 127
    %v255 = vpop.permute.xlu0 %254
    %256 = vrot.lane.b32.xlu0 %v236, 127
    %v257 = vpop.permute.xlu0 %256
    %258 = vrot.lane.b32.xlu0 %v237, 127
    %v259 = vpop.permute.xlu0 %258
    %260 = vrot.lane.b32.xlu0 %v238, 127
    %v261 = vpop.permute.xlu0 %260
    %262 = vrot.lane.b32.xlu0 %v239, 127
    %v263 = vpop.permute.xlu0 %262
    %v272 = vadd.f32 %v222, %v249
    %v273 = vadd.f32 %v223, %v251
    %v274 = vadd.f32 %v224, %v253
    %v275 = vadd.f32 %v225, %v255
    %v276 = vadd.f32 %v226, %v257
    %v277 = vadd.f32 %v227, %v259
    %v278 = vadd.f32 %v228, %v261
    %v279 = vadd.f32 %v229, %v263
    %s280 = sld [smem:[#allocation4 + $0x5]]
    %v281 = vstv %s280
    %v282 = vmul.f32 %v281, %v204
    %v283 = vmul.f32 %v281, %v205
    %v284 = vmul.f32 %v281, %v206
    %v285 = vmul.f32 %v281, %v207
    %v286 = vmul.f32 %v281, %v208
    %v287 = vmul.f32 %v281, %v209
    %v288 = vmul.f32 %v281, %v210
    %v289 = vmul.f32 %v281, %v211
    %298 = vrot.lane.b32.xlu0 %v282, 126
    %v299 = vpop.permute.xlu0 %298
    %300 = vrot.lane.b32.xlu0 %v283, 126
    %v301 = vpop.permute.xlu0 %300
    %302 = vrot.lane.b32.xlu0 %v284, 126
    %v303 = vpop.permute.xlu0 %302
    %304 = vrot.lane.b32.xlu0 %v285, 126
    %v305 = vpop.permute.xlu0 %304
    %306 = vrot.lane.b32.xlu0 %v286, 126
    %v307 = vpop.permute.xlu0 %306
    %308 = vrot.lane.b32.xlu0 %v287, 126
    %v309 = vpop.permute.xlu0 %308
    %310 = vrot.lane.b32.xlu0 %v288, 126
    %v311 = vpop.permute.xlu0 %310
    %312 = vrot.lane.b32.xlu0 %v289, 126
    %v313 = vpop.permute.xlu0 %312
    %v322 = vadd.f32 %v272, %v299
    %v323 = vadd.f32 %v273, %v301
    %v324 = vadd.f32 %v274, %v303
    %v325 = vadd.f32 %v275, %v305
    %v326 = vadd.f32 %v276, %v307
    %v327 = vadd.f32 %v277, %v309
    %v328 = vadd.f32 %v278, %v311
    %v329 = vadd.f32 %v279, %v313
    %v330 = vld [vmem:[%s2 + $0x2] sm:$0xff]
    %v331 = vld [vmem:[%s2 + $0xa] sm:$0xff]
    %v332 = vld [vmem:[%s2 + $0x12] sm:$0xff]
    %v333 = vld [vmem:[%s2 + $0x1a] sm:$0xff]
    %v334 = vld [vmem:[%s2 + $0x7a] sm:$0xff]
    %v335 = vld [vmem:[%s2 + $0x82] sm:$0xff]
    %v336 = vld [vmem:[%s2 + $0x8a] sm:$0xff]
    %v337 = vld [vmem:[%s2 + $0x92] sm:$0xff]
    %s338 = sld [smem:[#allocation4 + $0x6]]
    %v339 = vstv %s338
    %v340 = vmul.f32 %v339, %v330
    %v341 = vmul.f32 %v339, %v331
    %v342 = vmul.f32 %v339, %v332
    %v343 = vmul.f32 %v339, %v333
    %v344 = vmul.f32 %v339, %v334
    %v345 = vmul.f32 %v339, %v335
    %v346 = vmul.f32 %v339, %v336
    %v347 = vmul.f32 %v339, %v337
    %v348 = vadd.f32 %v322, %v340
    %v349 = vadd.f32 %v323, %v341
    %v350 = vadd.f32 %v324, %v342
    %v351 = vadd.f32 %v325, %v343
    %v352 = vadd.f32 %v326, %v344
    %v353 = vadd.f32 %v327, %v345
    %v354 = vadd.f32 %v328, %v346
    %v355 = vadd.f32 %v329, %v347
    %s356 = sld [smem:[#allocation4 + $0x7]]
    %v357 = vstv %s356
    %v358 = vmul.f32 %v357, %v330
    %v359 = vmul.f32 %v357, %v331
    %v360 = vmul.f32 %v357, %v332
    %v361 = vmul.f32 %v357, %v333
    %v362 = vmul.f32 %v357, %v334
    %v363 = vmul.f32 %v357, %v335
    %v364 = vmul.f32 %v357, %v336
    %v365 = vmul.f32 %v357, %v337
    %374 = vrot.lane.b32.xlu0 %v358, 127
    %v375 = vpop.permute.xlu0 %374
    %376 = vrot.lane.b32.xlu0 %v359, 127
    %v377 = vpop.permute.xlu0 %376
    %378 = vrot.lane.b32.xlu0 %v360, 127
    %v379 = vpop.permute.xlu0 %378
    %380 = vrot.lane.b32.xlu0 %v361, 127
    %v381 = vpop.permute.xlu0 %380
    %382 = vrot.lane.b32.xlu0 %v362, 127
    %v383 = vpop.permute.xlu0 %382
    %384 = vrot.lane.b32.xlu0 %v363, 127
    %v385 = vpop.permute.xlu0 %384
    %386 = vrot.lane.b32.xlu0 %v364, 127
    %v387 = vpop.permute.xlu0 %386
    %388 = vrot.lane.b32.xlu0 %v365, 127
    %v389 = vpop.permute.xlu0 %388
    %v398 = vadd.f32 %v348, %v375
    %v399 = vadd.f32 %v349, %v377
    %v400 = vadd.f32 %v350, %v379
    %v401 = vadd.f32 %v351, %v381
    %v402 = vadd.f32 %v352, %v383
    %v403 = vadd.f32 %v353, %v385
    %v404 = vadd.f32 %v354, %v387
    %v405 = vadd.f32 %v355, %v389
    %s406 = sld [smem:[#allocation4 + $0x8]]
    %v407 = vstv %s406
    %v408 = vmul.f32 %v407, %v330
    %v409 = vmul.f32 %v407, %v331
    %v410 = vmul.f32 %v407, %v332
    %v411 = vmul.f32 %v407, %v333
    %v412 = vmul.f32 %v407, %v334
    %v413 = vmul.f32 %v407, %v335
    %v414 = vmul.f32 %v407, %v336
    %v415 = vmul.f32 %v407, %v337
    %424 = vrot.lane.b32.xlu0 %v408, 126
    %v425 = vpop.permute.xlu0 %424
    %426 = vrot.lane.b32.xlu0 %v409, 126
    %v427 = vpop.permute.xlu0 %426
    %428 = vrot.lane.b32.xlu0 %v410, 126
    %v429 = vpop.permute.xlu0 %428
    %430 = vrot.lane.b32.xlu0 %v411, 126
    %v431 = vpop.permute.xlu0 %430
    %432 = vrot.lane.b32.xlu0 %v412, 126
    %v433 = vpop.permute.xlu0 %432
    %434 = vrot.lane.b32.xlu0 %v413, 126
    %v435 = vpop.permute.xlu0 %434
    %436 = vrot.lane.b32.xlu0 %v414, 126
    %v437 = vpop.permute.xlu0 %436
    %438 = vrot.lane.b32.xlu0 %v415, 126
    %v439 = vpop.permute.xlu0 %438
    %v448 = vadd.f32 %v398, %v425
    %v449 = vadd.f32 %v399, %v427
    %v450 = vadd.f32 %v400, %v429
    %v451 = vadd.f32 %v401, %v431
    %v452 = vadd.f32 %v402, %v433
    %v453 = vadd.f32 %v403, %v435
    %v454 = vadd.f32 %v404, %v437
    %v455 = vadd.f32 %v405, %v439
    %s456 = scalar_lea.vmem %s2, 40
    %v457 = vld [vmem:[%s456] sm:$0xff]
    %v458 = vld [vmem:[%s456 + $0x8] sm:$0xff]
    %v459 = vld [vmem:[%s456 + $0x10] sm:$0xff]
    %v460 = vld [vmem:[%s456 + $0x18] sm:$0xff]
    %v461 = vld [vmem:[%s456 + $0x78] sm:$0xff]
    %v462 = vld [vmem:[%s456 + $0x80] sm:$0xff]
    %v463 = vld [vmem:[%s456 + $0x88] sm:$0xff]
    %v464 = vld [vmem:[%s456 + $0x90] sm:$0xff]
    %s465 = sld [smem:[#allocation4 + $0x9]]
    %v466 = vstv %s465
    %v467 = vmul.f32 %v466, %v457
    %v468 = vmul.f32 %v466, %v458
    %v469 = vmul.f32 %v466, %v459
    %v470 = vmul.f32 %v466, %v460
    %v471 = vmul.f32 %v466, %v461
    %v472 = vmul.f32 %v466, %v462
    %v473 = vmul.f32 %v466, %v463
    %v474 = vmul.f32 %v466, %v464
    %v475 = vadd.f32 %v448, %v467
    %v476 = vadd.f32 %v449, %v468
    %v477 = vadd.f32 %v450, %v469
    %v478 = vadd.f32 %v451, %v470
    %v479 = vadd.f32 %v452, %v471
    %v480 = vadd.f32 %v453, %v472
    %v481 = vadd.f32 %v454, %v473
    %v482 = vadd.f32 %v455, %v474
    %s483 = sld [smem:[#allocation4 + $0xa]]
    %v484 = vstv %s483
    %v485 = vmul.f32 %v484, %v457
    %v486 = vmul.f32 %v484, %v458
    %v487 = vmul.f32 %v484, %v459
    %v488 = vmul.f32 %v484, %v460
    %v489 = vmul.f32 %v484, %v461
    %v490 = vmul.f32 %v484, %v462
    %v491 = vmul.f32 %v484, %v463
    %v492 = vmul.f32 %v484, %v464
    %501 = vrot.lane.b32.xlu0 %v485, 127
    %v502 = vpop.permute.xlu0 %501
    %503 = vrot.lane.b32.xlu0 %v486, 127
    %v504 = vpop.permute.xlu0 %503
    %505 = vrot.lane.b32.xlu0 %v487, 127
    %v506 = vpop.permute.xlu0 %505
    %507 = vrot.lane.b32.xlu0 %v488, 127
    %v508 = vpop.permute.xlu0 %507
    %509 = vrot.lane.b32.xlu0 %v489, 127
    %v510 = vpop.permute.xlu0 %509
    %511 = vrot.lane.b32.xlu0 %v490, 127
    %v512 = vpop.permute.xlu0 %511
    %513 = vrot.lane.b32.xlu0 %v491, 127
    %v514 = vpop.permute.xlu0 %513
    %515 = vrot.lane.b32.xlu0 %v492, 127
    %v516 = vpop.permute.xlu0 %515
    %v525 = vadd.f32 %v475, %v502
    %v526 = vadd.f32 %v476, %v504
    %v527 = vadd.f32 %v477, %v506
    %v528 = vadd.f32 %v478, %v508
    %v529 = vadd.f32 %v479, %v510
    %v530 = vadd.f32 %v480, %v512
    %v531 = vadd.f32 %v481, %v514
    %v532 = vadd.f32 %v482, %v516
    %s533 = sld [smem:[#allocation4 + $0xb]]
    %v534 = vstv %s533
    %v535 = vmul.f32 %v534, %v457
    %v536 = vmul.f32 %v534, %v458
    %v537 = vmul.f32 %v534, %v459
    %v538 = vmul.f32 %v534, %v460
    %v539 = vmul.f32 %v534, %v461
    %v540 = vmul.f32 %v534, %v462
    %v541 = vmul.f32 %v534, %v463
    %v542 = vmul.f32 %v534, %v464
    %551 = vrot.lane.b32.xlu0 %v535, 126
    %v552 = vpop.permute.xlu0 %551
    %553 = vrot.lane.b32.xlu0 %v536, 126
    %v554 = vpop.permute.xlu0 %553
    %555 = vrot.lane.b32.xlu0 %v537, 126
    %v556 = vpop.permute.xlu0 %555
    %557 = vrot.lane.b32.xlu0 %v538, 126
    %v558 = vpop.permute.xlu0 %557
    %559 = vrot.lane.b32.xlu0 %v539, 126
    %v560 = vpop.permute.xlu0 %559
    %561 = vrot.lane.b32.xlu0 %v540, 126
    %v562 = vpop.permute.xlu0 %561
    %563 = vrot.lane.b32.xlu0 %v541, 126
    %v564 = vpop.permute.xlu0 %563
    %565 = vrot.lane.b32.xlu0 %v542, 126
    %v566 = vpop.permute.xlu0 %565
    %v575 = vadd.f32 %v525, %v552
    %v576 = vadd.f32 %v526, %v554
    %v577 = vadd.f32 %v527, %v556
    %v578 = vadd.f32 %v528, %v558
    %v579 = vadd.f32 %v529, %v560
    %v580 = vadd.f32 %v530, %v562
    %v581 = vadd.f32 %v531, %v564
    %v582 = vadd.f32 %v532, %v566
    %v583 = vld [vmem:[%s456 + $0x1] sm:$0xff]
    %v584 = vld [vmem:[%s456 + $0x9] sm:$0xff]
    %v585 = vld [vmem:[%s456 + $0x11] sm:$0xff]
    %v586 = vld [vmem:[%s456 + $0x19] sm:$0xff]
    %v587 = vld [vmem:[%s456 + $0x79] sm:$0xff]
    %v588 = vld [vmem:[%s456 + $0x81] sm:$0xff]
    %v589 = vld [vmem:[%s456 + $0x89] sm:$0xff]
    %v590 = vld [vmem:[%s456 + $0x91] sm:$0xff]
    %s591 = sld [smem:[#allocation4 + $0xc]]
    %v592 = vstv %s591
    %v593 = vmul.f32 %v592, %v583
    %v594 = vmul.f32 %v592, %v584
    %v595 = vmul.f32 %v592, %v585
    %v596 = vmul.f32 %v592, %v586
    %v597 = vmul.f32 %v592, %v587
    %v598 = vmul.f32 %v592, %v588
    %v599 = vmul.f32 %v592, %v589
    %v600 = vmul.f32 %v592, %v590
    %v601 = vadd.f32 %v575, %v593
    %v602 = vadd.f32 %v576, %v594
    %v603 = vadd.f32 %v577, %v595
    %v604 = vadd.f32 %v578, %v596
    %v605 = vadd.f32 %v579, %v597
    %v606 = vadd.f32 %v580, %v598
    %v607 = vadd.f32 %v581, %v599
    %v608 = vadd.f32 %v582, %v600
    %s609 = sld [smem:[#allocation4 + $0xd]]
    %v610 = vstv %s609
    %v611 = vmul.f32 %v610, %v583
    %v612 = vmul.f32 %v610, %v584
    %v613 = vmul.f32 %v610, %v585
    %v614 = vmul.f32 %v610, %v586
    %v615 = vmul.f32 %v610, %v587
    %v616 = vmul.f32 %v610, %v588
    %v617 = vmul.f32 %v610, %v589
    %v618 = vmul.f32 %v610, %v590
    %627 = vrot.lane.b32.xlu0 %v611, 127
    %v628 = vpop.permute.xlu0 %627
    %629 = vrot.lane.b32.xlu0 %v612, 127
    %v630 = vpop.permute.xlu0 %629
    %631 = vrot.lane.b32.xlu0 %v613, 127
    %v632 = vpop.permute.xlu0 %631
    %633 = vrot.lane.b32.xlu0 %v614, 127
    %v634 = vpop.permute.xlu0 %633
    %635 = vrot.lane.b32.xlu0 %v615, 127
    %v636 = vpop.permute.xlu0 %635
    %637 = vrot.lane.b32.xlu0 %v616, 127
    %v638 = vpop.permute.xlu0 %637
    %639 = vrot.lane.b32.xlu0 %v617, 127
    %v640 = vpop.permute.xlu0 %639
    %641 = vrot.lane.b32.xlu0 %v618, 127
    %v642 = vpop.permute.xlu0 %641
    %v651 = vadd.f32 %v601, %v628
    %v652 = vadd.f32 %v602, %v630
    %v653 = vadd.f32 %v603, %v632
    %v654 = vadd.f32 %v604, %v634
    %v655 = vadd.f32 %v605, %v636
    %v656 = vadd.f32 %v606, %v638
    %v657 = vadd.f32 %v607, %v640
    %v658 = vadd.f32 %v608, %v642
    %s659 = sld [smem:[#allocation4 + $0xe]]
    %v660 = vstv %s659
    %v661 = vmul.f32 %v660, %v583
    %v662 = vmul.f32 %v660, %v584
    %v663 = vmul.f32 %v660, %v585
    %v664 = vmul.f32 %v660, %v586
    %v665 = vmul.f32 %v660, %v587
    %v666 = vmul.f32 %v660, %v588
    %v667 = vmul.f32 %v660, %v589
    %v668 = vmul.f32 %v660, %v590
    %677 = vrot.lane.b32.xlu0 %v661, 126
    %v678 = vpop.permute.xlu0 %677
    %679 = vrot.lane.b32.xlu0 %v662, 126
    %v680 = vpop.permute.xlu0 %679
    %681 = vrot.lane.b32.xlu0 %v663, 126
    %v682 = vpop.permute.xlu0 %681
    %683 = vrot.lane.b32.xlu0 %v664, 126
    %v684 = vpop.permute.xlu0 %683
    %685 = vrot.lane.b32.xlu0 %v665, 126
    %v686 = vpop.permute.xlu0 %685
    %687 = vrot.lane.b32.xlu0 %v666, 126
    %v688 = vpop.permute.xlu0 %687
    %689 = vrot.lane.b32.xlu0 %v667, 126
    %v690 = vpop.permute.xlu0 %689
    %691 = vrot.lane.b32.xlu0 %v668, 126
    %v692 = vpop.permute.xlu0 %691
    %v701 = vadd.f32 %v651, %v678
    %v702 = vadd.f32 %v652, %v680
    %v703 = vadd.f32 %v653, %v682
    %v704 = vadd.f32 %v654, %v684
    %v705 = vadd.f32 %v655, %v686
    %v706 = vadd.f32 %v656, %v688
    %v707 = vadd.f32 %v657, %v690
    %v708 = vadd.f32 %v658, %v692
    %v709 = vld [vmem:[%s456 + $0x2] sm:$0xff]
    %v710 = vld [vmem:[%s456 + $0xa] sm:$0xff]
    %v711 = vld [vmem:[%s456 + $0x12] sm:$0xff]
    %v712 = vld [vmem:[%s456 + $0x1a] sm:$0xff]
    %v713 = vld [vmem:[%s456 + $0x7a] sm:$0xff]
    %v714 = vld [vmem:[%s456 + $0x82] sm:$0xff]
    %v715 = vld [vmem:[%s456 + $0x8a] sm:$0xff]
    %v716 = vld [vmem:[%s456 + $0x92] sm:$0xff]
    %s717 = sld [smem:[#allocation4 + $0xf]]
    %v718 = vstv %s717
    %v719 = vmul.f32 %v718, %v709
    %v720 = vmul.f32 %v718, %v710
    %v721 = vmul.f32 %v718, %v711
    %v722 = vmul.f32 %v718, %v712
    %v723 = vmul.f32 %v718, %v713
    %v724 = vmul.f32 %v718, %v714
    %v725 = vmul.f32 %v718, %v715
    %v726 = vmul.f32 %v718, %v716
    %v727 = vadd.f32 %v701, %v719
    %v728 = vadd.f32 %v702, %v720
    %v729 = vadd.f32 %v703, %v721
    %v730 = vadd.f32 %v704, %v722
    %v731 = vadd.f32 %v705, %v723
    %v732 = vadd.f32 %v706, %v724
    %v733 = vadd.f32 %v707, %v725
    %v734 = vadd.f32 %v708, %v726
    %s735 = sld [smem:[#allocation4 + $0x10]]
    %v736 = vstv %s735
    %v737 = vmul.f32 %v736, %v709
    %v738 = vmul.f32 %v736, %v710
    %v739 = vmul.f32 %v736, %v711
    %v740 = vmul.f32 %v736, %v712
    %v741 = vmul.f32 %v736, %v713
    %v742 = vmul.f32 %v736, %v714
    %v743 = vmul.f32 %v736, %v715
    %v744 = vmul.f32 %v736, %v716
    %753 = vrot.lane.b32.xlu0 %v737, 127
    %v754 = vpop.permute.xlu0 %753
    %755 = vrot.lane.b32.xlu0 %v738, 127
    %v756 = vpop.permute.xlu0 %755
    %757 = vrot.lane.b32.xlu0 %v739, 127
    %v758 = vpop.permute.xlu0 %757
    %759 = vrot.lane.b32.xlu0 %v740, 127
    %v760 = vpop.permute.xlu0 %759
    %761 = vrot.lane.b32.xlu0 %v741, 127
    %v762 = vpop.permute.xlu0 %761
    %763 = vrot.lane.b32.xlu0 %v742, 127
    %v764 = vpop.permute.xlu0 %763
    %765 = vrot.lane.b32.xlu0 %v743, 127
    %v766 = vpop.permute.xlu0 %765
    %767 = vrot.lane.b32.xlu0 %v744, 127
    %v768 = vpop.permute.xlu0 %767
    %v777 = vadd.f32 %v727, %v754
    %v778 = vadd.f32 %v728, %v756
    %v779 = vadd.f32 %v729, %v758
    %v780 = vadd.f32 %v730, %v760
    %v781 = vadd.f32 %v731, %v762
    %v782 = vadd.f32 %v732, %v764
    %v783 = vadd.f32 %v733, %v766
    %v784 = vadd.f32 %v734, %v768
    %s785 = sld [smem:[#allocation4 + $0x11]]
    %v786 = vstv %s785
    %v787 = vmul.f32 %v786, %v709
    %v788 = vmul.f32 %v786, %v710
    %v789 = vmul.f32 %v786, %v711
    %v790 = vmul.f32 %v786, %v712
    %v791 = vmul.f32 %v786, %v713
    %v792 = vmul.f32 %v786, %v714
    %v793 = vmul.f32 %v786, %v715
    %v794 = vmul.f32 %v786, %v716
    %803 = vrot.lane.b32.xlu0 %v787, 126
    %v804 = vpop.permute.xlu0 %803
    %805 = vrot.lane.b32.xlu0 %v788, 126
    %v806 = vpop.permute.xlu0 %805
    %807 = vrot.lane.b32.xlu0 %v789, 126
    %v808 = vpop.permute.xlu0 %807
    %809 = vrot.lane.b32.xlu0 %v790, 126
    %v810 = vpop.permute.xlu0 %809
    %811 = vrot.lane.b32.xlu0 %v791, 126
    %v812 = vpop.permute.xlu0 %811
    %813 = vrot.lane.b32.xlu0 %v792, 126
    %v814 = vpop.permute.xlu0 %813
    %815 = vrot.lane.b32.xlu0 %v793, 126
    %v816 = vpop.permute.xlu0 %815
    %817 = vrot.lane.b32.xlu0 %v794, 126
    %v818 = vpop.permute.xlu0 %817
    %v827 = vadd.f32 %v777, %v804
    %v828 = vadd.f32 %v778, %v806
    %v829 = vadd.f32 %v779, %v808
    %v830 = vadd.f32 %v780, %v810
    %v831 = vadd.f32 %v781, %v812
    %v832 = vadd.f32 %v782, %v814
    %v833 = vadd.f32 %v783, %v816
    %v834 = vadd.f32 %v784, %v818
    %s835 = scalar_lea.vmem %s2, 80
    %v836 = vld [vmem:[%s835] sm:$0xff]
    %v837 = vld [vmem:[%s835 + $0x8] sm:$0xff]
    %v838 = vld [vmem:[%s835 + $0x10] sm:$0xff]
    %v839 = vld [vmem:[%s835 + $0x18] sm:$0xff]
    %v840 = vld [vmem:[%s835 + $0x78] sm:$0xff]
    %v841 = vld [vmem:[%s835 + $0x80] sm:$0xff]
    %v842 = vld [vmem:[%s835 + $0x88] sm:$0xff]
    %v843 = vld [vmem:[%s835 + $0x90] sm:$0xff]
    %s844 = sld [smem:[#allocation4 + $0x12]]
    %v845 = vstv %s844
    %v846 = vmul.f32 %v845, %v836
    %v847 = vmul.f32 %v845, %v837
    %v848 = vmul.f32 %v845, %v838
    %v849 = vmul.f32 %v845, %v839
    %v850 = vmul.f32 %v845, %v840
    %v851 = vmul.f32 %v845, %v841
    %v852 = vmul.f32 %v845, %v842
    %v853 = vmul.f32 %v845, %v843
    %v854 = vadd.f32 %v827, %v846
    %v855 = vadd.f32 %v828, %v847
    %v856 = vadd.f32 %v829, %v848
    %v857 = vadd.f32 %v830, %v849
    %v858 = vadd.f32 %v831, %v850
    %v859 = vadd.f32 %v832, %v851
    %v860 = vadd.f32 %v833, %v852
    %v861 = vadd.f32 %v834, %v853
    %s862 = sld [smem:[#allocation4 + $0x13]]
    %v863 = vstv %s862
    %v864 = vmul.f32 %v863, %v836
    %v865 = vmul.f32 %v863, %v837
    %v866 = vmul.f32 %v863, %v838
    %v867 = vmul.f32 %v863, %v839
    %v868 = vmul.f32 %v863, %v840
    %v869 = vmul.f32 %v863, %v841
    %v870 = vmul.f32 %v863, %v842
    %v871 = vmul.f32 %v863, %v843
    %880 = vrot.lane.b32.xlu0 %v864, 127
    %v881 = vpop.permute.xlu0 %880
    %882 = vrot.lane.b32.xlu0 %v865, 127
    %v883 = vpop.permute.xlu0 %882
    %884 = vrot.lane.b32.xlu0 %v866, 127
    %v885 = vpop.permute.xlu0 %884
    %886 = vrot.lane.b32.xlu0 %v867, 127
    %v887 = vpop.permute.xlu0 %886
    %888 = vrot.lane.b32.xlu0 %v868, 127
    %v889 = vpop.permute.xlu0 %888
    %890 = vrot.lane.b32.xlu0 %v869, 127
    %v891 = vpop.permute.xlu0 %890
    %892 = vrot.lane.b32.xlu0 %v870, 127
    %v893 = vpop.permute.xlu0 %892
    %894 = vrot.lane.b32.xlu0 %v871, 127
    %v895 = vpop.permute.xlu0 %894
    %v904 = vadd.f32 %v854, %v881
    %v905 = vadd.f32 %v855, %v883
    %v906 = vadd.f32 %v856, %v885
    %v907 = vadd.f32 %v857, %v887
    %v908 = vadd.f32 %v858, %v889
    %v909 = vadd.f32 %v859, %v891
    %v910 = vadd.f32 %v860, %v893
    %v911 = vadd.f32 %v861, %v895
    %s912 = sld [smem:[#allocation4 + $0x14]]
    %v913 = vstv %s912
    %v914 = vmul.f32 %v913, %v836
    %v915 = vmul.f32 %v913, %v837
    %v916 = vmul.f32 %v913, %v838
    %v917 = vmul.f32 %v913, %v839
    %v918 = vmul.f32 %v913, %v840
    %v919 = vmul.f32 %v913, %v841
    %v920 = vmul.f32 %v913, %v842
    %v921 = vmul.f32 %v913, %v843
    %930 = vrot.lane.b32.xlu0 %v914, 126
    %v931 = vpop.permute.xlu0 %930
    %932 = vrot.lane.b32.xlu0 %v915, 126
    %v933 = vpop.permute.xlu0 %932
    %934 = vrot.lane.b32.xlu0 %v916, 126
    %v935 = vpop.permute.xlu0 %934
    %936 = vrot.lane.b32.xlu0 %v917, 126
    %v937 = vpop.permute.xlu0 %936
    %938 = vrot.lane.b32.xlu0 %v918, 126
    %v939 = vpop.permute.xlu0 %938
    %940 = vrot.lane.b32.xlu0 %v919, 126
    %v941 = vpop.permute.xlu0 %940
    %942 = vrot.lane.b32.xlu0 %v920, 126
    %v943 = vpop.permute.xlu0 %942
    %944 = vrot.lane.b32.xlu0 %v921, 126
    %v945 = vpop.permute.xlu0 %944
    %v954 = vadd.f32 %v904, %v931
    %v955 = vadd.f32 %v905, %v933
    %v956 = vadd.f32 %v906, %v935
    %v957 = vadd.f32 %v907, %v937
    %v958 = vadd.f32 %v908, %v939
    %v959 = vadd.f32 %v909, %v941
    %v960 = vadd.f32 %v910, %v943
    %v961 = vadd.f32 %v911, %v945
    %v962 = vld [vmem:[%s835 + $0x1] sm:$0xff]
    %v963 = vld [vmem:[%s835 + $0x9] sm:$0xff]
    %v964 = vld [vmem:[%s835 + $0x11] sm:$0xff]
    %v965 = vld [vmem:[%s835 + $0x19] sm:$0xff]
    %v966 = vld [vmem:[%s835 + $0x79] sm:$0xff]
    %v967 = vld [vmem:[%s835 + $0x81] sm:$0xff]
    %v968 = vld [vmem:[%s835 + $0x89] sm:$0xff]
    %v969 = vld [vmem:[%s835 + $0x91] sm:$0xff]
    %s970 = sld [smem:[#allocation4 + $0x15]]
    %v971 = vstv %s970
    %v972 = vmul.f32 %v971, %v962
    %v973 = vmul.f32 %v971, %v963
    %v974 = vmul.f32 %v971, %v964
    %v975 = vmul.f32 %v971, %v965
    %v976 = vmul.f32 %v971, %v966
    %v977 = vmul.f32 %v971, %v967
    %v978 = vmul.f32 %v971, %v968
    %v979 = vmul.f32 %v971, %v969
    %v980 = vadd.f32 %v954, %v972
    %v981 = vadd.f32 %v955, %v973
    %v982 = vadd.f32 %v956, %v974
    %v983 = vadd.f32 %v957, %v975
    %v984 = vadd.f32 %v958, %v976
    %v985 = vadd.f32 %v959, %v977
    %v986 = vadd.f32 %v960, %v978
    %v987 = vadd.f32 %v961, %v979
    %s988 = sld [smem:[#allocation4 + $0x16]]
    %v989 = vstv %s988
    %v990 = vmul.f32 %v989, %v962
    %v991 = vmul.f32 %v989, %v963
    %v992 = vmul.f32 %v989, %v964
    %v993 = vmul.f32 %v989, %v965
    %v994 = vmul.f32 %v989, %v966
    %v995 = vmul.f32 %v989, %v967
    %v996 = vmul.f32 %v989, %v968
    %v997 = vmul.f32 %v989, %v969
    %1006 = vrot.lane.b32.xlu0 %v990, 127
    %v1007 = vpop.permute.xlu0 %1006
    %1008 = vrot.lane.b32.xlu0 %v991, 127
    %v1009 = vpop.permute.xlu0 %1008
    %1010 = vrot.lane.b32.xlu0 %v992, 127
    %v1011 = vpop.permute.xlu0 %1010
    %1012 = vrot.lane.b32.xlu0 %v993, 127
    %v1013 = vpop.permute.xlu0 %1012
    %1014 = vrot.lane.b32.xlu0 %v994, 127
    %v1015 = vpop.permute.xlu0 %1014
    %1016 = vrot.lane.b32.xlu0 %v995, 127
    %v1017 = vpop.permute.xlu0 %1016
    %1018 = vrot.lane.b32.xlu0 %v996, 127
    %v1019 = vpop.permute.xlu0 %1018
    %1020 = vrot.lane.b32.xlu0 %v997, 127
    %v1021 = vpop.permute.xlu0 %1020
    %v1030 = vadd.f32 %v980, %v1007
    %v1031 = vadd.f32 %v981, %v1009
    %v1032 = vadd.f32 %v982, %v1011
    %v1033 = vadd.f32 %v983, %v1013
    %v1034 = vadd.f32 %v984, %v1015
    %v1035 = vadd.f32 %v985, %v1017
    %v1036 = vadd.f32 %v986, %v1019
    %v1037 = vadd.f32 %v987, %v1021
    %s1038 = sld [smem:[#allocation4 + $0x17]]
    %v1039 = vstv %s1038
    %v1040 = vmul.f32 %v1039, %v962
    %v1041 = vmul.f32 %v1039, %v963
    %v1042 = vmul.f32 %v1039, %v964
    %v1043 = vmul.f32 %v1039, %v965
    %v1044 = vmul.f32 %v1039, %v966
    %v1045 = vmul.f32 %v1039, %v967
    %v1046 = vmul.f32 %v1039, %v968
    %v1047 = vmul.f32 %v1039, %v969
    %1056 = vrot.lane.b32.xlu0 %v1040, 126
    %v1057 = vpop.permute.xlu0 %1056
    %1058 = vrot.lane.b32.xlu0 %v1041, 126
    %v1059 = vpop.permute.xlu0 %1058
    %1060 = vrot.lane.b32.xlu0 %v1042, 126
    %v1061 = vpop.permute.xlu0 %1060
    %1062 = vrot.lane.b32.xlu0 %v1043, 126
    %v1063 = vpop.permute.xlu0 %1062
    %1064 = vrot.lane.b32.xlu0 %v1044, 126
    %v1065 = vpop.permute.xlu0 %1064
    %1066 = vrot.lane.b32.xlu0 %v1045, 126
    %v1067 = vpop.permute.xlu0 %1066
    %1068 = vrot.lane.b32.xlu0 %v1046, 126
    %v1069 = vpop.permute.xlu0 %1068
    %1070 = vrot.lane.b32.xlu0 %v1047, 126
    %v1071 = vpop.permute.xlu0 %1070
    %v1080 = vadd.f32 %v1030, %v1057
    %v1081 = vadd.f32 %v1031, %v1059
    %v1082 = vadd.f32 %v1032, %v1061
    %v1083 = vadd.f32 %v1033, %v1063
    %v1084 = vadd.f32 %v1034, %v1065
    %v1085 = vadd.f32 %v1035, %v1067
    %v1086 = vadd.f32 %v1036, %v1069
    %v1087 = vadd.f32 %v1037, %v1071
    %v1088 = vld [vmem:[%s835 + $0x2] sm:$0xff]
    %v1089 = vld [vmem:[%s835 + $0xa] sm:$0xff]
    %v1090 = vld [vmem:[%s835 + $0x12] sm:$0xff]
    %v1091 = vld [vmem:[%s835 + $0x1a] sm:$0xff]
    %v1092 = vld [vmem:[%s835 + $0x7a] sm:$0xff]
    %v1093 = vld [vmem:[%s835 + $0x82] sm:$0xff]
    %v1094 = vld [vmem:[%s835 + $0x8a] sm:$0xff]
    %v1095 = vld [vmem:[%s835 + $0x92] sm:$0xff]
    %s1096 = sld [smem:[#allocation4 + $0x18]]
    %v1097 = vstv %s1096
    %v1098 = vmul.f32 %v1097, %v1088
    %v1099 = vmul.f32 %v1097, %v1089
    %v1100 = vmul.f32 %v1097, %v1090
    %v1101 = vmul.f32 %v1097, %v1091
    %v1102 = vmul.f32 %v1097, %v1092
    %v1103 = vmul.f32 %v1097, %v1093
    %v1104 = vmul.f32 %v1097, %v1094
    %v1105 = vmul.f32 %v1097, %v1095
    %v1106 = vadd.f32 %v1080, %v1098
    %v1107 = vadd.f32 %v1081, %v1099
    %v1108 = vadd.f32 %v1082, %v1100
    %v1109 = vadd.f32 %v1083, %v1101
    %v1110 = vadd.f32 %v1084, %v1102
    %v1111 = vadd.f32 %v1085, %v1103
    %v1112 = vadd.f32 %v1086, %v1104
    %v1113 = vadd.f32 %v1087, %v1105
    %s1114 = sld [smem:[#allocation4 + $0x19]]
    %v1115 = vstv %s1114
    %v1116 = vmul.f32 %v1115, %v1088
    %v1117 = vmul.f32 %v1115, %v1089
    %v1118 = vmul.f32 %v1115, %v1090
    %v1119 = vmul.f32 %v1115, %v1091
    %v1120 = vmul.f32 %v1115, %v1092
    %v1121 = vmul.f32 %v1115, %v1093
    %v1122 = vmul.f32 %v1115, %v1094
    %v1123 = vmul.f32 %v1115, %v1095
    %1132 = vrot.lane.b32.xlu0 %v1116, 127
    %v1133 = vpop.permute.xlu0 %1132
    %1134 = vrot.lane.b32.xlu0 %v1117, 127
    %v1135 = vpop.permute.xlu0 %1134
    %1136 = vrot.lane.b32.xlu0 %v1118, 127
    %v1137 = vpop.permute.xlu0 %1136
    %1138 = vrot.lane.b32.xlu0 %v1119, 127
    %v1139 = vpop.permute.xlu0 %1138
    %1140 = vrot.lane.b32.xlu0 %v1120, 127
    %v1141 = vpop.permute.xlu0 %1140
    %1142 = vrot.lane.b32.xlu0 %v1121, 127
    %v1143 = vpop.permute.xlu0 %1142
    %1144 = vrot.lane.b32.xlu0 %v1122, 127
    %v1145 = vpop.permute.xlu0 %1144
    %1146 = vrot.lane.b32.xlu0 %v1123, 127
    %v1147 = vpop.permute.xlu0 %1146
    %v1156 = vadd.f32 %v1106, %v1133
    %v1157 = vadd.f32 %v1107, %v1135
    %v1158 = vadd.f32 %v1108, %v1137
    %v1159 = vadd.f32 %v1109, %v1139
    %v1160 = vadd.f32 %v1110, %v1141
    %v1161 = vadd.f32 %v1111, %v1143
    %v1162 = vadd.f32 %v1112, %v1145
    %v1163 = vadd.f32 %v1113, %v1147
    %s1164 = sld [smem:[#allocation4 + $0x1a]]
    %v1165 = vstv %s1164
    %v1166 = vmul.f32 %v1165, %v1088
    %v1167 = vmul.f32 %v1165, %v1089
    %v1168 = vmul.f32 %v1165, %v1090
    %v1169 = vmul.f32 %v1165, %v1091
    %v1170 = vmul.f32 %v1165, %v1092
    %v1171 = vmul.f32 %v1165, %v1093
    %v1172 = vmul.f32 %v1165, %v1094
    %v1173 = vmul.f32 %v1165, %v1095
    %1182 = vrot.lane.b32.xlu0 %v1166, 126
    %v1183 = vpop.permute.xlu0 %1182
    %1184 = vrot.lane.b32.xlu0 %v1167, 126
    %v1185 = vpop.permute.xlu0 %1184
    %1186 = vrot.lane.b32.xlu0 %v1168, 126
    %v1187 = vpop.permute.xlu0 %1186
    %1188 = vrot.lane.b32.xlu0 %v1169, 126
    %v1189 = vpop.permute.xlu0 %1188
    %1190 = vrot.lane.b32.xlu0 %v1170, 126
    %v1191 = vpop.permute.xlu0 %1190
    %1192 = vrot.lane.b32.xlu0 %v1171, 126
    %v1193 = vpop.permute.xlu0 %1192
    %1194 = vrot.lane.b32.xlu0 %v1172, 126
    %v1195 = vpop.permute.xlu0 %1194
    %1196 = vrot.lane.b32.xlu0 %v1173, 126
    %v1197 = vpop.permute.xlu0 %1196
    %v1206 = vadd.f32 %v1156, %v1183
    %v1207 = vadd.f32 %v1157, %v1185
    %v1208 = vadd.f32 %v1158, %v1187
    %v1209 = vadd.f32 %v1159, %v1189
    %v1210 = vadd.f32 %v1160, %v1191
    %v1211 = vadd.f32 %v1161, %v1193
    %v1212 = vadd.f32 %v1162, %v1195
    %v1213 = vadd.f32 %v1163, %v1197
    %s1214 = sld [smem:[#allocation7]]
    %v1215 = vstv %s1214
    %v1216 = vadd.f32 %v1206, %v1215
    %v1217 = vadd.f32 %v1207, %v1215
    %v1218 = vadd.f32 %v1208, %v1215
    %v1219 = vadd.f32 %v1209, %v1215
    %v1220 = vadd.f32 %v1210, %v1215
    %v1221 = vadd.f32 %v1211, %v1215
    %v1222 = vadd.f32 %v1212, %v1215
    %v1223 = vadd.f32 %v1213, %v1215
    %v1224 = vmax.f32 %v1216, 0.0
    %v1225 = vmax.f32 %v1217, 0.0
    %v1226 = vmax.f32 %v1218, 0.0
    %v1227 = vmax.f32 %v1219, 0.0
    %v1228 = vmax.f32 %v1220, 0.0
    %v1229 = vmax.f32 %v1221, 0.0
    %v1230 = vmax.f32 %v1222, 0.0
    %v1231 = vmax.f32 %v1223, 0.0
    %vm1232 = vcmask 261120
    %1233 = vst.msk [vmem:[#allocation2] sm:$0xff] %vm1232, %v1224
    %1234 = vst.msk [vmem:[#allocation2 + $0x8] sm:$0xff] %vm1232, %v1225
    %1235 = vst.msk [vmem:[#allocation2 + $0x10] sm:$0xff] %vm1232, %v1226
    %1236 = vst.msk [vmem:[#allocation2 + $0x18] sm:$0xff] %vm1232, %v1227
    %1237 = vst.msk [vmem:[#allocation2 + $0x78] sm:$0xff] %vm1232, %v1228
    %1238 = vst.msk [vmem:[#allocation2 + $0x80] sm:$0xff] %vm1232, %v1229
    %1239 = vst.msk [vmem:[#allocation2 + $0x88] sm:$0xff] %vm1232, %v1230
    %1240 = vst.msk [vmem:[#allocation2 + $0x90] sm:$0xff] %vm1232, %v1231
    %v1241 = vld [vmem:[%s2] sm:$0xff]
    %v1242 = vld [vmem:[%s2 + $0x8] sm:$0xff]
    %v1243 = vld [vmem:[%s2 + $0x10] sm:$0xff]
    %v1244 = vld [vmem:[%s2 + $0x18] sm:$0xff]
    %v1245 = vld [vmem:[%s2 + $0x78] sm:$0xff]
    %v1246 = vld [vmem:[%s2 + $0x80] sm:$0xff]
    %v1247 = vld [vmem:[%s2 + $0x88] sm:$0xff]
    %v1248 = vld [vmem:[%s2 + $0x90] sm:$0xff]
    %s1249 = sld [smem:[#allocation4 + $0x1b]]
    %v1250 = vstv %s1249
    %v1251 = vmul.f32 %v1250, %v1241
    %v1252 = vmul.f32 %v1250, %v1242
    %v1253 = vmul.f32 %v1250, %v1243
    %v1254 = vmul.f32 %v1250, %v1244
    %v1255 = vmul.f32 %v1250, %v1245
    %v1256 = vmul.f32 %v1250, %v1246
    %v1257 = vmul.f32 %v1250, %v1247
    %v1258 = vmul.f32 %v1250, %v1248
    %v1259 = vadd.f32 %v1251, 0.0
    %v1260 = vadd.f32 %v1252, 0.0
    %v1261 = vadd.f32 %v1253, 0.0
    %v1262 = vadd.f32 %v1254, 0.0
    %v1263 = vadd.f32 %v1255, 0.0
    %v1264 = vadd.f32 %v1256, 0.0
    %v1265 = vadd.f32 %v1257, 0.0
    %v1266 = vadd.f32 %v1258, 0.0
    %s1267 = sld [smem:[#allocation4 + $0x1c]]
    %v1268 = vstv %s1267
    %v1269 = vmul.f32 %v1268, %v1241
    %v1270 = vmul.f32 %v1268, %v1242
    %v1271 = vmul.f32 %v1268, %v1243
    %v1272 = vmul.f32 %v1268, %v1244
    %v1273 = vmul.f32 %v1268, %v1245
    %v1274 = vmul.f32 %v1268, %v1246
    %v1275 = vmul.f32 %v1268, %v1247
    %v1276 = vmul.f32 %v1268, %v1248
    %1285 = vrot.lane.b32.xlu0 %v1269, 127
    %v1286 = vpop.permute.xlu0 %1285
    %1287 = vrot.lane.b32.xlu0 %v1270, 127
    %v1288 = vpop.permute.xlu0 %1287
    %1289 = vrot.lane.b32.xlu0 %v1271, 127
    %v1290 = vpop.permute.xlu0 %1289
    %1291 = vrot.lane.b32.xlu0 %v1272, 127
    %v1292 = vpop.permute.xlu0 %1291
    %1293 = vrot.lane.b32.xlu0 %v1273, 127
    %v1294 = vpop.permute.xlu0 %1293
    %1295 = vrot.lane.b32.xlu0 %v1274, 127
    %v1296 = vpop.permute.xlu0 %1295
    %1297 = vrot.lane.b32.xlu0 %v1275, 127
    %v1298 = vpop.permute.xlu0 %1297
    %1299 = vrot.lane.b32.xlu0 %v1276, 127
    %v1300 = vpop.permute.xlu0 %1299
    %v1309 = vadd.f32 %v1259, %v1286
    %v1310 = vadd.f32 %v1260, %v1288
    %v1311 = vadd.f32 %v1261, %v1290
    %v1312 = vadd.f32 %v1262, %v1292
    %v1313 = vadd.f32 %v1263, %v1294
    %v1314 = vadd.f32 %v1264, %v1296
    %v1315 = vadd.f32 %v1265, %v1298
    %v1316 = vadd.f32 %v1266, %v1300
    %s1317 = sld [smem:[#allocation4 + $0x1d]]
    %v1318 = vstv %s1317
    %v1319 = vmul.f32 %v1318, %v1241
    %v1320 = vmul.f32 %v1318, %v1242
    %v1321 = vmul.f32 %v1318, %v1243
    %v1322 = vmul.f32 %v1318, %v1244
    %v1323 = vmul.f32 %v1318, %v1245
    %v1324 = vmul.f32 %v1318, %v1246
    %v1325 = vmul.f32 %v1318, %v1247
    %v1326 = vmul.f32 %v1318, %v1248
    %1335 = vrot.lane.b32.xlu0 %v1319, 126
    %v1336 = vpop.permute.xlu0 %1335
    %1337 = vrot.lane.b32.xlu0 %v1320, 126
    %v1338 = vpop.permute.xlu0 %1337
    %1339 = vrot.lane.b32.xlu0 %v1321, 126
    %v1340 = vpop.permute.xlu0 %1339
    %1341 = vrot.lane.b32.xlu0 %v1322, 126
    %v1342 = vpop.permute.xlu0 %1341
    %1343 = vrot.lane.b32.xlu0 %v1323, 126
    %v1344 = vpop.permute.xlu0 %1343
    %1345 = vrot.lane.b32.xlu0 %v1324, 126
    %v1346 = vpop.permute.xlu0 %1345
    %1347 = vrot.lane.b32.xlu0 %v1325, 126
    %v1348 = vpop.permute.xlu0 %1347
    %1349 = vrot.lane.b32.xlu0 %v1326, 126
    %v1350 = vpop.permute.xlu0 %1349
    %v1359 = vadd.f32 %v1309, %v1336
    %v1360 = vadd.f32 %v1310, %v1338
    %v1361 = vadd.f32 %v1311, %v1340
    %v1362 = vadd.f32 %v1312, %v1342
    %v1363 = vadd.f32 %v1313, %v1344
    %v1364 = vadd.f32 %v1314, %v1346
    %v1365 = vadd.f32 %v1315, %v1348
    %v1366 = vadd.f32 %v1316, %v1350
    %v1367 = vld [vmem:[%s2 + $0x1] sm:$0xff]
    %v1368 = vld [vmem:[%s2 + $0x9] sm:$0xff]
    %v1369 = vld [vmem:[%s2 + $0x11] sm:$0xff]
    %v1370 = vld [vmem:[%s2 + $0x19] sm:$0xff]
    %v1371 = vld [vmem:[%s2 + $0x79] sm:$0xff]
    %v1372 = vld [vmem:[%s2 + $0x81] sm:$0xff]
    %v1373 = vld [vmem:[%s2 + $0x89] sm:$0xff]
    %v1374 = vld [vmem:[%s2 + $0x91] sm:$0xff]
    %s1375 = sld [smem:[#allocation4 + $0x1e]]
    %v1376 = vstv %s1375
    %v1377 = vmul.f32 %v1376, %v1367
    %v1378 = vmul.f32 %v1376, %v1368
    %v1379 = vmul.f32 %v1376, %v1369
    %v1380 = vmul.f32 %v1376, %v1370
    %v1381 = vmul.f32 %v1376, %v1371
    %v1382 = vmul.f32 %v1376, %v1372
    %v1383 = vmul.f32 %v1376, %v1373
    %v1384 = vmul.f32 %v1376, %v1374
    %v1385 = vadd.f32 %v1359, %v1377
    %v1386 = vadd.f32 %v1360, %v1378
    %v1387 = vadd.f32 %v1361, %v1379
    %v1388 = vadd.f32 %v1362, %v1380
    %v1389 = vadd.f32 %v1363, %v1381
    %v1390 = vadd.f32 %v1364, %v1382
    %v1391 = vadd.f32 %v1365, %v1383
    %v1392 = vadd.f32 %v1366, %v1384
    %s1393 = sld [smem:[#allocation4 + $0x1f]]
    %v1394 = vstv %s1393
    %v1395 = vmul.f32 %v1394, %v1367
    %v1396 = vmul.f32 %v1394, %v1368
    %v1397 = vmul.f32 %v1394, %v1369
    %v1398 = vmul.f32 %v1394, %v1370
    %v1399 = vmul.f32 %v1394, %v1371
    %v1400 = vmul.f32 %v1394, %v1372
    %v1401 = vmul.f32 %v1394, %v1373
    %v1402 = vmul.f32 %v1394, %v1374
    %1411 = vrot.lane.b32.xlu0 %v1395, 127
    %v1412 = vpop.permute.xlu0 %1411
    %1413 = vrot.lane.b32.xlu0 %v1396, 127
    %v1414 = vpop.permute.xlu0 %1413
    %1415 = vrot.lane.b32.xlu0 %v1397, 127
    %v1416 = vpop.permute.xlu0 %1415
    %1417 = vrot.lane.b32.xlu0 %v1398, 127
    %v1418 = vpop.permute.xlu0 %1417
    %1419 = vrot.lane.b32.xlu0 %v1399, 127
    %v1420 = vpop.permute.xlu0 %1419
    %1421 = vrot.lane.b32.xlu0 %v1400, 127
    %v1422 = vpop.permute.xlu0 %1421
    %1423 = vrot.lane.b32.xlu0 %v1401, 127
    %v1424 = vpop.permute.xlu0 %1423
    %1425 = vrot.lane.b32.xlu0 %v1402, 127
    %v1426 = vpop.permute.xlu0 %1425
    %v1435 = vadd.f32 %v1385, %v1412
    %v1436 = vadd.f32 %v1386, %v1414
    %v1437 = vadd.f32 %v1387, %v1416
    %v1438 = vadd.f32 %v1388, %v1418
    %v1439 = vadd.f32 %v1389, %v1420
    %v1440 = vadd.f32 %v1390, %v1422
    %v1441 = vadd.f32 %v1391, %v1424
    %v1442 = vadd.f32 %v1392, %v1426
    %s1443 = sld [smem:[#allocation4 + $0x20]]
    %v1444 = vstv %s1443
    %v1445 = vmul.f32 %v1444, %v1367
    %v1446 = vmul.f32 %v1444, %v1368
    %v1447 = vmul.f32 %v1444, %v1369
    %v1448 = vmul.f32 %v1444, %v1370
    %v1449 = vmul.f32 %v1444, %v1371
    %v1450 = vmul.f32 %v1444, %v1372
    %v1451 = vmul.f32 %v1444, %v1373
    %v1452 = vmul.f32 %v1444, %v1374
    %1461 = vrot.lane.b32.xlu0 %v1445, 126
    %v1462 = vpop.permute.xlu0 %1461
    %1463 = vrot.lane.b32.xlu0 %v1446, 126
    %v1464 = vpop.permute.xlu0 %1463
    %1465 = vrot.lane.b32.xlu0 %v1447, 126
    %v1466 = vpop.permute.xlu0 %1465
    %1467 = vrot.lane.b32.xlu0 %v1448, 126
    %v1468 = vpop.permute.xlu0 %1467
    %1469 = vrot.lane.b32.xlu0 %v1449, 126
    %v1470 = vpop.permute.xlu0 %1469
    %1471 = vrot.lane.b32.xlu0 %v1450, 126
    %v1472 = vpop.permute.xlu0 %1471
    %1473 = vrot.lane.b32.xlu0 %v1451, 126
    %v1474 = vpop.permute.xlu0 %1473
    %1475 = vrot.lane.b32.xlu0 %v1452, 126
    %v1476 = vpop.permute.xlu0 %1475
    %v1485 = vadd.f32 %v1435, %v1462
    %v1486 = vadd.f32 %v1436, %v1464
    %v1487 = vadd.f32 %v1437, %v1466
    %v1488 = vadd.f32 %v1438, %v1468
    %v1489 = vadd.f32 %v1439, %v1470
    %v1490 = vadd.f32 %v1440, %v1472
    %v1491 = vadd.f32 %v1441, %v1474
    %v1492 = vadd.f32 %v1442, %v1476
    %v1493 = vld [vmem:[%s2 + $0x2] sm:$0xff]
    %v1494 = vld [vmem:[%s2 + $0xa] sm:$0xff]
    %v1495 = vld [vmem:[%s2 + $0x12] sm:$0xff]
    %v1496 = vld [vmem:[%s2 + $0x1a] sm:$0xff]
    %v1497 = vld [vmem:[%s2 + $0x7a] sm:$0xff]
    %v1498 = vld [vmem:[%s2 + $0x82] sm:$0xff]
    %v1499 = vld [vmem:[%s2 + $0x8a] sm:$0xff]
    %v1500 = vld [vmem:[%s2 + $0x92] sm:$0xff]
    %s1501 = sld [smem:[#allocation4 + $0x21]]
    %v1502 = vstv %s1501
    %v1503 = vmul.f32 %v1502, %v1493
    %v1504 = vmul.f32 %v1502, %v1494
    %v1505 = vmul.f32 %v1502, %v1495
    %v1506 = vmul.f32 %v1502, %v1496
    %v1507 = vmul.f32 %v1502, %v1497
    %v1508 = vmul.f32 %v1502, %v1498
    %v1509 = vmul.f32 %v1502, %v1499
    %v1510 = vmul.f32 %v1502, %v1500
    %v1511 = vadd.f32 %v1485, %v1503
    %v1512 = vadd.f32 %v1486, %v1504
    %v1513 = vadd.f32 %v1487, %v1505
    %v1514 = vadd.f32 %v1488, %v1506
    %v1515 = vadd.f32 %v1489, %v1507
    %v1516 = vadd.f32 %v1490, %v1508
    %v1517 = vadd.f32 %v1491, %v1509
    %v1518 = vadd.f32 %v1492, %v1510
    %s1519 = sld [smem:[#allocation4 + $0x22]]
    %v1520 = vstv %s1519
    %v1521 = vmul.f32 %v1520, %v1493
    %v1522 = vmul.f32 %v1520, %v1494
    %v1523 = vmul.f32 %v1520, %v1495
    %v1524 = vmul.f32 %v1520, %v1496
    %v1525 = vmul.f32 %v1520, %v1497
    %v1526 = vmul.f32 %v1520, %v1498
    %v1527 = vmul.f32 %v1520, %v1499
    %v1528 = vmul.f32 %v1520, %v1500
    %1537 = vrot.lane.b32.xlu0 %v1521, 127
    %v1538 = vpop.permute.xlu0 %1537
    %1539 = vrot.lane.b32.xlu0 %v1522, 127
    %v1540 = vpop.permute.xlu0 %1539
    %1541 = vrot.lane.b32.xlu0 %v1523, 127
    %v1542 = vpop.permute.xlu0 %1541
    %1543 = vrot.lane.b32.xlu0 %v1524, 127
    %v1544 = vpop.permute.xlu0 %1543
    %1545 = vrot.lane.b32.xlu0 %v1525, 127
    %v1546 = vpop.permute.xlu0 %1545
    %1547 = vrot.lane.b32.xlu0 %v1526, 127
    %v1548 = vpop.permute.xlu0 %1547
    %1549 = vrot.lane.b32.xlu0 %v1527, 127
    %v1550 = vpop.permute.xlu0 %1549
    %1551 = vrot.lane.b32.xlu0 %v1528, 127
    %v1552 = vpop.permute.xlu0 %1551
    %v1561 = vadd.f32 %v1511, %v1538
    %v1562 = vadd.f32 %v1512, %v1540
    %v1563 = vadd.f32 %v1513, %v1542
    %v1564 = vadd.f32 %v1514, %v1544
    %v1565 = vadd.f32 %v1515, %v1546
    %v1566 = vadd.f32 %v1516, %v1548
    %v1567 = vadd.f32 %v1517, %v1550
    %v1568 = vadd.f32 %v1518, %v1552
    %s1569 = sld [smem:[#allocation4 + $0x23]]
    %v1570 = vstv %s1569
    %v1571 = vmul.f32 %v1570, %v1493
    %v1572 = vmul.f32 %v1570, %v1494
    %v1573 = vmul.f32 %v1570, %v1495
    %v1574 = vmul.f32 %v1570, %v1496
    %v1575 = vmul.f32 %v1570, %v1497
    %v1576 = vmul.f32 %v1570, %v1498
    %v1577 = vmul.f32 %v1570, %v1499
    %v1578 = vmul.f32 %v1570, %v1500
    %1587 = vrot.lane.b32.xlu0 %v1571, 126
    %v1588 = vpop.permute.xlu0 %1587
    %1589 = vrot.lane.b32.xlu0 %v1572, 126
    %v1590 = vpop.permute.xlu0 %1589
    %1591 = vrot.lane.b32.xlu0 %v1573, 126
    %v1592 = vpop.permute.xlu0 %1591
    %1593 = vrot.lane.b32.xlu0 %v1574, 126
    %v1594 = vpop.permute.xlu0 %1593
    %1595 = vrot.lane.b32.xlu0 %v1575, 126
    %v1596 = vpop.permute.xlu0 %1595
    %1597 = vrot.lane.b32.xlu0 %v1576, 126
    %v1598 = vpop.permute.xlu0 %1597
    %1599 = vrot.lane.b32.xlu0 %v1577, 126
    %v1600 = vpop.permute.xlu0 %1599
    %1601 = vrot.lane.b32.xlu0 %v1578, 126
    %v1602 = vpop.permute.xlu0 %1601
    %v1611 = vadd.f32 %v1561, %v1588
    %v1612 = vadd.f32 %v1562, %v1590
    %v1613 = vadd.f32 %v1563, %v1592
    %v1614 = vadd.f32 %v1564, %v1594
    %v1615 = vadd.f32 %v1565, %v1596
    %v1616 = vadd.f32 %v1566, %v1598
    %v1617 = vadd.f32 %v1567, %v1600
    %v1618 = vadd.f32 %v1568, %v1602
    %v1619 = vld [vmem:[%s456] sm:$0xff]
    %v1620 = vld [vmem:[%s456 + $0x8] sm:$0xff]
    %v1621 = vld [vmem:[%s456 + $0x10] sm:$0xff]
    %v1622 = vld [vmem:[%s456 + $0x18] sm:$0xff]
    %v1623 = vld [vmem:[%s456 + $0x78] sm:$0xff]
    %v1624 = vld [vmem:[%s456 + $0x80] sm:$0xff]
    %v1625 = vld [vmem:[%s456 + $0x88] sm:$0xff]
    %v1626 = vld [vmem:[%s456 + $0x90] sm:$0xff]
    %s1627 = sld [smem:[#allocation4 + $0x24]]
    %v1628 = vstv %s1627
    %v1629 = vmul.f32 %v1628, %v1619
    %v1630 = vmul.f32 %v1628, %v1620
    %v1631 = vmul.f32 %v1628, %v1621
    %v1632 = vmul.f32 %v1628, %v1622
    %v1633 = vmul.f32 %v1628, %v1623
    %v1634 = vmul.f32 %v1628, %v1624
    %v1635 = vmul.f32 %v1628, %v1625
    %v1636 = vmul.f32 %v1628, %v1626
    %v1637 = vadd.f32 %v1611, %v1629
    %v1638 = vadd.f32 %v1612, %v1630
    %v1639 = vadd.f32 %v1613, %v1631
    %v1640 = vadd.f32 %v1614, %v1632
    %v1641 = vadd.f32 %v1615, %v1633
    %v1642 = vadd.f32 %v1616, %v1634
    %v1643 = vadd.f32 %v1617, %v1635
    %v1644 = vadd.f32 %v1618, %v1636
    %s1645 = sld [smem:[#allocation4 + $0x25]]
    %v1646 = vstv %s1645
    %v1647 = vmul.f32 %v1646, %v1619
    %v1648 = vmul.f32 %v1646, %v1620
    %v1649 = vmul.f32 %v1646, %v1621
    %v1650 = vmul.f32 %v1646, %v1622
    %v1651 = vmul.f32 %v1646, %v1623
    %v1652 = vmul.f32 %v1646, %v1624
    %v1653 = vmul.f32 %v1646, %v1625
    %v1654 = vmul.f32 %v1646, %v1626
    %1663 = vrot.lane.b32.xlu0 %v1647, 127
    %v1664 = vpop.permute.xlu0 %1663
    %1665 = vrot.lane.b32.xlu0 %v1648, 127
    %v1666 = vpop.permute.xlu0 %1665
    %1667 = vrot.lane.b32.xlu0 %v1649, 127
    %v1668 = vpop.permute.xlu0 %1667
    %1669 = vrot.lane.b32.xlu0 %v1650, 127
    %v1670 = vpop.permute.xlu0 %1669
    %1671 = vrot.lane.b32.xlu0 %v1651, 127
    %v1672 = vpop.permute.xlu0 %1671
    %1673 = vrot.lane.b32.xlu0 %v1652, 127
    %v1674 = vpop.permute.xlu0 %1673
    %1675 = vrot.lane.b32.xlu0 %v1653, 127
    %v1676 = vpop.permute.xlu0 %1675
    %1677 = vrot.lane.b32.xlu0 %v1654, 127
    %v1678 = vpop.permute.xlu0 %1677
    %v1687 = vadd.f32 %v1637, %v1664
    %v1688 = vadd.f32 %v1638, %v1666
    %v1689 = vadd.f32 %v1639, %v1668
    %v1690 = vadd.f32 %v1640, %v1670
    %v1691 = vadd.f32 %v1641, %v1672
    %v1692 = vadd.f32 %v1642, %v1674
    %v1693 = vadd.f32 %v1643, %v1676
    %v1694 = vadd.f32 %v1644, %v1678
    %s1695 = sld [smem:[#allocation4 + $0x26]]
    %v1696 = vstv %s1695
    %v1697 = vmul.f32 %v1696, %v1619
    %v1698 = vmul.f32 %v1696, %v1620
    %v1699 = vmul.f32 %v1696, %v1621
    %v1700 = vmul.f32 %v1696, %v1622
    %v1701 = vmul.f32 %v1696, %v1623
    %v1702 = vmul.f32 %v1696, %v1624
    %v1703 = vmul.f32 %v1696, %v1625
    %v1704 = vmul.f32 %v1696, %v1626
    %1713 = vrot.lane.b32.xlu0 %v1697, 126
    %v1714 = vpop.permute.xlu0 %1713
    %1715 = vrot.lane.b32.xlu0 %v1698, 126
    %v1716 = vpop.permute.xlu0 %1715
    %1717 = vrot.lane.b32.xlu0 %v1699, 126
    %v1718 = vpop.permute.xlu0 %1717
    %1719 = vrot.lane.b32.xlu0 %v1700, 126
    %v1720 = vpop.permute.xlu0 %1719
    %1721 = vrot.lane.b32.xlu0 %v1701, 126
    %v1722 = vpop.permute.xlu0 %1721
    %1723 = vrot.lane.b32.xlu0 %v1702, 126
    %v1724 = vpop.permute.xlu0 %1723
    %1725 = vrot.lane.b32.xlu0 %v1703, 126
    %v1726 = vpop.permute.xlu0 %1725
    %1727 = vrot.lane.b32.xlu0 %v1704, 126
    %v1728 = vpop.permute.xlu0 %1727
    %v1737 = vadd.f32 %v1687, %v1714
    %v1738 = vadd.f32 %v1688, %v1716
    %v1739 = vadd.f32 %v1689, %v1718
    %v1740 = vadd.f32 %v1690, %v1720
    %v1741 = vadd.f32 %v1691, %v1722
    %v1742 = vadd.f32 %v1692, %v1724
    %v1743 = vadd.f32 %v1693, %v1726
    %v1744 = vadd.f32 %v1694, %v1728
    %v1745 = vld [vmem:[%s456 + $0x1] sm:$0xff]
    %v1746 = vld [vmem:[%s456 + $0x9] sm:$0xff]
    %v1747 = vld [vmem:[%s456 + $0x11] sm:$0xff]
    %v1748 = vld [vmem:[%s456 + $0x19] sm:$0xff]
    %v1749 = vld [vmem:[%s456 + $0x79] sm:$0xff]
    %v1750 = vld [vmem:[%s456 + $0x81] sm:$0xff]
    %v1751 = vld [vmem:[%s456 + $0x89] sm:$0xff]
    %v1752 = vld [vmem:[%s456 + $0x91] sm:$0xff]
    %s1753 = sld [smem:[#allocation4 + $0x27]]
    %v1754 = vstv %s1753
    %v1755 = vmul.f32 %v1754, %v1745
    %v1756 = vmul.f32 %v1754, %v1746
    %v1757 = vmul.f32 %v1754, %v1747
    %v1758 = vmul.f32 %v1754, %v1748
    %v1759 = vmul.f32 %v1754, %v1749
    %v1760 = vmul.f32 %v1754, %v1750
    %v1761 = vmul.f32 %v1754, %v1751
    %v1762 = vmul.f32 %v1754, %v1752
    %v1763 = vadd.f32 %v1737, %v1755
    %v1764 = vadd.f32 %v1738, %v1756
    %v1765 = vadd.f32 %v1739, %v1757
    %v1766 = vadd.f32 %v1740, %v1758
    %v1767 = vadd.f32 %v1741, %v1759
    %v1768 = vadd.f32 %v1742, %v1760
    %v1769 = vadd.f32 %v1743, %v1761
    %v1770 = vadd.f32 %v1744, %v1762
    %s1771 = sld [smem:[#allocation4 + $0x28]]
    %v1772 = vstv %s1771
    %v1773 = vmul.f32 %v1772, %v1745
    %v1774 = vmul.f32 %v1772, %v1746
    %v1775 = vmul.f32 %v1772, %v1747
    %v1776 = vmul.f32 %v1772, %v1748
    %v1777 = vmul.f32 %v1772, %v1749
    %v1778 = vmul.f32 %v1772, %v1750
    %v1779 = vmul.f32 %v1772, %v1751
    %v1780 = vmul.f32 %v1772, %v1752
    %1789 = vrot.lane.b32.xlu0 %v1773, 127
    %v1790 = vpop.permute.xlu0 %1789
    %1791 = vrot.lane.b32.xlu0 %v1774, 127
    %v1792 = vpop.permute.xlu0 %1791
    %1793 = vrot.lane.b32.xlu0 %v1775, 127
    %v1794 = vpop.permute.xlu0 %1793
    %1795 = vrot.lane.b32.xlu0 %v1776, 127
    %v1796 = vpop.permute.xlu0 %1795
    %1797 = vrot.lane.b32.xlu0 %v1777, 127
    %v1798 = vpop.permute.xlu0 %1797
    %1799 = vrot.lane.b32.xlu0 %v1778, 127
    %v1800 = vpop.permute.xlu0 %1799
    %1801 = vrot.lane.b32.xlu0 %v1779, 127
    %v1802 = vpop.permute.xlu0 %1801
    %1803 = vrot.lane.b32.xlu0 %v1780, 127
    %v1804 = vpop.permute.xlu0 %1803
    %v1813 = vadd.f32 %v1763, %v1790
    %v1814 = vadd.f32 %v1764, %v1792
    %v1815 = vadd.f32 %v1765, %v1794
    %v1816 = vadd.f32 %v1766, %v1796
    %v1817 = vadd.f32 %v1767, %v1798
    %v1818 = vadd.f32 %v1768, %v1800
    %v1819 = vadd.f32 %v1769, %v1802
    %v1820 = vadd.f32 %v1770, %v1804
    %s1821 = sld [smem:[#allocation4 + $0x29]]
    %v1822 = vstv %s1821
    %v1823 = vmul.f32 %v1822, %v1745
    %v1824 = vmul.f32 %v1822, %v1746
    %v1825 = vmul.f32 %v1822, %v1747
    %v1826 = vmul.f32 %v1822, %v1748
    %v1827 = vmul.f32 %v1822, %v1749
    %v1828 = vmul.f32 %v1822, %v1750
    %v1829 = vmul.f32 %v1822, %v1751
    %v1830 = vmul.f32 %v1822, %v1752
    %1839 = vrot.lane.b32.xlu0 %v1823, 126
    %v1840 = vpop.permute.xlu0 %1839
    %1841 = vrot.lane.b32.xlu0 %v1824, 126
    %v1842 = vpop.permute.xlu0 %1841
    %1843 = vrot.lane.b32.xlu0 %v1825, 126
    %v1844 = vpop.permute.xlu0 %1843
    %1845 = vrot.lane.b32.xlu0 %v1826, 126
    %v1846 = vpop.permute.xlu0 %1845
    %1847 = vrot.lane.b32.xlu0 %v1827, 126
    %v1848 = vpop.permute.xlu0 %1847
    %1849 = vrot.lane.b32.xlu0 %v1828, 126
    %v1850 = vpop.permute.xlu0 %1849
    %1851 = vrot.lane.b32.xlu0 %v1829, 126
    %v1852 = vpop.permute.xlu0 %1851
    %1853 = vrot.lane.b32.xlu0 %v1830, 126
    %v1854 = vpop.permute.xlu0 %1853
    %v1863 = vadd.f32 %v1813, %v1840
    %v1864 = vadd.f32 %v1814, %v1842
    %v1865 = vadd.f32 %v1815, %v1844
    %v1866 = vadd.f32 %v1816, %v1846
    %v1867 = vadd.f32 %v1817, %v1848
    %v1868 = vadd.f32 %v1818, %v1850
    %v1869 = vadd.f32 %v1819, %v1852
    %v1870 = vadd.f32 %v1820, %v1854
    %v1871 = vld [vmem:[%s456 + $0x2] sm:$0xff]
    %v1872 = vld [vmem:[%s456 + $0xa] sm:$0xff]
    %v1873 = vld [vmem:[%s456 + $0x12] sm:$0xff]
    %v1874 = vld [vmem:[%s456 + $0x1a] sm:$0xff]
    %v1875 = vld [vmem:[%s456 + $0x7a] sm:$0xff]
    %v1876 = vld [vmem:[%s456 + $0x82] sm:$0xff]
    %v1877 = vld [vmem:[%s456 + $0x8a] sm:$0xff]
    %v1878 = vld [vmem:[%s456 + $0x92] sm:$0xff]
    %s1879 = sld [smem:[#allocation4 + $0x2a]]
    %v1880 = vstv %s1879
    %v1881 = vmul.f32 %v1880, %v1871
    %v1882 = vmul.f32 %v1880, %v1872
    %v1883 = vmul.f32 %v1880, %v1873
    %v1884 = vmul.f32 %v1880, %v1874
    %v1885 = vmul.f32 %v1880, %v1875
    %v1886 = vmul.f32 %v1880, %v1876
    %v1887 = vmul.f32 %v1880, %v1877
    %v1888 = vmul.f32 %v1880, %v1878
    %v1889 = vadd.f32 %v1863, %v1881
    %v1890 = vadd.f32 %v1864, %v1882
    %v1891 = vadd.f32 %v1865, %v1883
    %v1892 = vadd.f32 %v1866, %v1884
    %v1893 = vadd.f32 %v1867, %v1885
    %v1894 = vadd.f32 %v1868, %v1886
    %v1895 = vadd.f32 %v1869, %v1887
    %v1896 = vadd.f32 %v1870, %v1888
    %s1897 = sld [smem:[#allocation4 + $0x2b]]
    %v1898 = vstv %s1897
    %v1899 = vmul.f32 %v1898, %v1871
    %v1900 = vmul.f32 %v1898, %v1872
    %v1901 = vmul.f32 %v1898, %v1873
    %v1902 = vmul.f32 %v1898, %v1874
    %v1903 = vmul.f32 %v1898, %v1875
    %v1904 = vmul.f32 %v1898, %v1876
    %v1905 = vmul.f32 %v1898, %v1877
    %v1906 = vmul.f32 %v1898, %v1878
    %1915 = vrot.lane.b32.xlu0 %v1899, 127
    %v1916 = vpop.permute.xlu0 %1915
    %1917 = vrot.lane.b32.xlu0 %v1900, 127
    %v1918 = vpop.permute.xlu0 %1917
    %1919 = vrot.lane.b32.xlu0 %v1901, 127
    %v1920 = vpop.permute.xlu0 %1919
    %1921 = vrot.lane.b32.xlu0 %v1902, 127
    %v1922 = vpop.permute.xlu0 %1921
    %1923 = vrot.lane.b32.xlu0 %v1903, 127
    %v1924 = vpop.permute.xlu0 %1923
    %1925 = vrot.lane.b32.xlu0 %v1904, 127
    %v1926 = vpop.permute.xlu0 %1925
    %1927 = vrot.lane.b32.xlu0 %v1905, 127
    %v1928 = vpop.permute.xlu0 %1927
    %1929 = vrot.lane.b32.xlu0 %v1906, 127
    %v1930 = vpop.permute.xlu0 %1929
    %v1939 = vadd.f32 %v1889, %v1916
    %v1940 = vadd.f32 %v1890, %v1918
    %v1941 = vadd.f32 %v1891, %v1920
    %v1942 = vadd.f32 %v1892, %v1922
    %v1943 = vadd.f32 %v1893, %v1924
    %v1944 = vadd.f32 %v1894, %v1926
    %v1945 = vadd.f32 %v1895, %v1928
    %v1946 = vadd.f32 %v1896, %v1930
    %s1947 = sld [smem:[#allocation4 + $0x2c]]
    %v1948 = vstv %s1947
    %v1949 = vmul.f32 %v1948, %v1871
    %v1950 = vmul.f32 %v1948, %v1872
    %v1951 = vmul.f32 %v1948, %v1873
    %v1952 = vmul.f32 %v1948, %v1874
    %v1953 = vmul.f32 %v1948, %v1875
    %v1954 = vmul.f32 %v1948, %v1876
    %v1955 = vmul.f32 %v1948, %v1877
    %v1956 = vmul.f32 %v1948, %v1878
    %1965 = vrot.lane.b32.xlu0 %v1949, 126
    %v1966 = vpop.permute.xlu0 %1965
    %1967 = vrot.lane.b32.xlu0 %v1950, 126
    %v1968 = vpop.permute.xlu0 %1967
    %1969 = vrot.lane.b32.xlu0 %v1951, 126
    %v1970 = vpop.permute.xlu0 %1969
    %1971 = vrot.lane.b32.xlu0 %v1952, 126
    %v1972 = vpop.permute.xlu0 %1971
    %1973 = vrot.lane.b32.xlu0 %v1953, 126
    %v1974 = vpop.permute.xlu0 %1973
    %1975 = vrot.lane.b32.xlu0 %v1954, 126
    %v1976 = vpop.permute.xlu0 %1975
    %1977 = vrot.lane.b32.xlu0 %v1955, 126
    %v1978 = vpop.permute.xlu0 %1977
    %1979 = vrot.lane.b32.xlu0 %v1956, 126
    %v1980 = vpop.permute.xlu0 %1979
    %v1989 = vadd.f32 %v1939, %v1966
    %v1990 = vadd.f32 %v1940, %v1968
    %v1991 = vadd.f32 %v1941, %v1970
    %v1992 = vadd.f32 %v1942, %v1972
    %v1993 = vadd.f32 %v1943, %v1974
    %v1994 = vadd.f32 %v1944, %v1976
    %v1995 = vadd.f32 %v1945, %v1978
    %v1996 = vadd.f32 %v1946, %v1980
    %v1997 = vld [vmem:[%s835] sm:$0xff]
    %v1998 = vld [vmem:[%s835 + $0x8] sm:$0xff]
    %v1999 = vld [vmem:[%s835 + $0x10] sm:$0xff]
    %v2000 = vld [vmem:[%s835 + $0x18] sm:$0xff]
    %v2001 = vld [vmem:[%s835 + $0x78] sm:$0xff]
    %v2002 = vld [vmem:[%s835 + $0x80] sm:$0xff]
    %v2003 = vld [vmem:[%s835 + $0x88] sm:$0xff]
    %v2004 = vld [vmem:[%s835 + $0x90] sm:$0xff]
    %s2005 = sld [smem:[#allocation4 + $0x2d]]
    %v2006 = vstv %s2005
    %v2007 = vmul.f32 %v2006, %v1997
    %v2008 = vmul.f32 %v2006, %v1998
    %v2009 = vmul.f32 %v2006, %v1999
    %v2010 = vmul.f32 %v2006, %v2000
    %v2011 = vmul.f32 %v2006, %v2001
    %v2012 = vmul.f32 %v2006, %v2002
    %v2013 = vmul.f32 %v2006, %v2003
    %v2014 = vmul.f32 %v2006, %v2004
    %v2015 = vadd.f32 %v1989, %v2007
    %v2016 = vadd.f32 %v1990, %v2008
    %v2017 = vadd.f32 %v1991, %v2009
    %v2018 = vadd.f32 %v1992, %v2010
    %v2019 = vadd.f32 %v1993, %v2011
    %v2020 = vadd.f32 %v1994, %v2012
    %v2021 = vadd.f32 %v1995, %v2013
    %v2022 = vadd.f32 %v1996, %v2014
    %s2023 = sld [smem:[#allocation4 + $0x2e]]
    %v2024 = vstv %s2023
    %v2025 = vmul.f32 %v2024, %v1997
    %v2026 = vmul.f32 %v2024, %v1998
    %v2027 = vmul.f32 %v2024, %v1999
    %v2028 = vmul.f32 %v2024, %v2000
    %v2029 = vmul.f32 %v2024, %v2001
    %v2030 = vmul.f32 %v2024, %v2002
    %v2031 = vmul.f32 %v2024, %v2003
    %v2032 = vmul.f32 %v2024, %v2004
    %2041 = vrot.lane.b32.xlu0 %v2025, 127
    %v2042 = vpop.permute.xlu0 %2041
    %2043 = vrot.lane.b32.xlu0 %v2026, 127
    %v2044 = vpop.permute.xlu0 %2043
    %2045 = vrot.lane.b32.xlu0 %v2027, 127
    %v2046 = vpop.permute.xlu0 %2045
    %2047 = vrot.lane.b32.xlu0 %v2028, 127
    %v2048 = vpop.permute.xlu0 %2047
    %2049 = vrot.lane.b32.xlu0 %v2029, 127
    %v2050 = vpop.permute.xlu0 %2049
    %2051 = vrot.lane.b32.xlu0 %v2030, 127
    %v2052 = vpop.permute.xlu0 %2051
    %2053 = vrot.lane.b32.xlu0 %v2031, 127
    %v2054 = vpop.permute.xlu0 %2053
    %2055 = vrot.lane.b32.xlu0 %v2032, 127
    %v2056 = vpop.permute.xlu0 %2055
    %v2065 = vadd.f32 %v2015, %v2042
    %v2066 = vadd.f32 %v2016, %v2044
    %v2067 = vadd.f32 %v2017, %v2046
    %v2068 = vadd.f32 %v2018, %v2048
    %v2069 = vadd.f32 %v2019, %v2050
    %v2070 = vadd.f32 %v2020, %v2052
    %v2071 = vadd.f32 %v2021, %v2054
    %v2072 = vadd.f32 %v2022, %v2056
    %s2073 = sld [smem:[#allocation4 + $0x2f]]
    %v2074 = vstv %s2073
    %v2075 = vmul.f32 %v2074, %v1997
    %v2076 = vmul.f32 %v2074, %v1998
    %v2077 = vmul.f32 %v2074, %v1999
    %v2078 = vmul.f32 %v2074, %v2000
    %v2079 = vmul.f32 %v2074, %v2001
    %v2080 = vmul.f32 %v2074, %v2002
    %v2081 = vmul.f32 %v2074, %v2003
    %v2082 = vmul.f32 %v2074, %v2004
    %2091 = vrot.lane.b32.xlu0 %v2075, 126
    %v2092 = vpop.permute.xlu0 %2091
    %2093 = vrot.lane.b32.xlu0 %v2076, 126
    %v2094 = vpop.permute.xlu0 %2093
    %2095 = vrot.lane.b32.xlu0 %v2077, 126
    %v2096 = vpop.permute.xlu0 %2095
    %2097 = vrot.lane.b32.xlu0 %v2078, 126
    %v2098 = vpop.permute.xlu0 %2097
    %2099 = vrot.lane.b32.xlu0 %v2079, 126
    %v2100 = vpop.permute.xlu0 %2099
    %2101 = vrot.lane.b32.xlu0 %v2080, 126
    %v2102 = vpop.permute.xlu0 %2101
    %2103 = vrot.lane.b32.xlu0 %v2081, 126
    %v2104 = vpop.permute.xlu0 %2103
    %2105 = vrot.lane.b32.xlu0 %v2082, 126
    %v2106 = vpop.permute.xlu0 %2105
    %v2115 = vadd.f32 %v2065, %v2092
    %v2116 = vadd.f32 %v2066, %v2094
    %v2117 = vadd.f32 %v2067, %v2096
    %v2118 = vadd.f32 %v2068, %v2098
    %v2119 = vadd.f32 %v2069, %v2100
    %v2120 = vadd.f32 %v2070, %v2102
    %v2121 = vadd.f32 %v2071, %v2104
    %v2122 = vadd.f32 %v2072, %v2106
    %v2123 = vld [vmem:[%s835 + $0x1] sm:$0xff]
    %v2124 = vld [vmem:[%s835 + $0x9] sm:$0xff]
    %v2125 = vld [vmem:[%s835 + $0x11] sm:$0xff]
    %v2126 = vld [vmem:[%s835 + $0x19] sm:$0xff]
    %v2127 = vld [vmem:[%s835 + $0x79] sm:$0xff]
    %v2128 = vld [vmem:[%s835 + $0x81] sm:$0xff]
    %v2129 = vld [vmem:[%s835 + $0x89] sm:$0xff]
    %v2130 = vld [vmem:[%s835 + $0x91] sm:$0xff]
    %s2131 = sld [smem:[#allocation4 + $0x30]]
    %v2132 = vstv %s2131
    %v2133 = vmul.f32 %v2132, %v2123
    %v2134 = vmul.f32 %v2132, %v2124
    %v2135 = vmul.f32 %v2132, %v2125
    %v2136 = vmul.f32 %v2132, %v2126
    %v2137 = vmul.f32 %v2132, %v2127
    %v2138 = vmul.f32 %v2132, %v2128
    %v2139 = vmul.f32 %v2132, %v2129
    %v2140 = vmul.f32 %v2132, %v2130
    %v2141 = vadd.f32 %v2115, %v2133
    %v2142 = vadd.f32 %v2116, %v2134
    %v2143 = vadd.f32 %v2117, %v2135
    %v2144 = vadd.f32 %v2118, %v2136
    %v2145 = vadd.f32 %v2119, %v2137
    %v2146 = vadd.f32 %v2120, %v2138
    %v2147 = vadd.f32 %v2121, %v2139
    %v2148 = vadd.f32 %v2122, %v2140
    %s2149 = sld [smem:[#allocation4 + $0x31]]
    %v2150 = vstv %s2149
    %v2151 = vmul.f32 %v2150, %v2123
    %v2152 = vmul.f32 %v2150, %v2124
    %v2153 = vmul.f32 %v2150, %v2125
    %v2154 = vmul.f32 %v2150, %v2126
    %v2155 = vmul.f32 %v2150, %v2127
    %v2156 = vmul.f32 %v2150, %v2128
    %v2157 = vmul.f32 %v2150, %v2129
    %v2158 = vmul.f32 %v2150, %v2130
    %2167 = vrot.lane.b32.xlu0 %v2151, 127
    %v2168 = vpop.permute.xlu0 %2167
    %2169 = vrot.lane.b32.xlu0 %v2152, 127
    %v2170 = vpop.permute.xlu0 %2169
    %2171 = vrot.lane.b32.xlu0 %v2153, 127
    %v2172 = vpop.permute.xlu0 %2171
    %2173 = vrot.lane.b32.xlu0 %v2154, 127
    %v2174 = vpop.permute.xlu0 %2173
    %2175 = vrot.lane.b32.xlu0 %v2155, 127
    %v2176 = vpop.permute.xlu0 %2175
    %2177 = vrot.lane.b32.xlu0 %v2156, 127
    %v2178 = vpop.permute.xlu0 %2177
    %2179 = vrot.lane.b32.xlu0 %v2157, 127
    %v2180 = vpop.permute.xlu0 %2179
    %2181 = vrot.lane.b32.xlu0 %v2158, 127
    %v2182 = vpop.permute.xlu0 %2181
    %v2191 = vadd.f32 %v2141, %v2168
    %v2192 = vadd.f32 %v2142, %v2170
    %v2193 = vadd.f32 %v2143, %v2172
    %v2194 = vadd.f32 %v2144, %v2174
    %v2195 = vadd.f32 %v2145, %v2176
    %v2196 = vadd.f32 %v2146, %v2178
    %v2197 = vadd.f32 %v2147, %v2180
    %v2198 = vadd.f32 %v2148, %v2182
    %s2199 = sld [smem:[#allocation4 + $0x32]]
    %v2200 = vstv %s2199
    %v2201 = vmul.f32 %v2200, %v2123
    %v2202 = vmul.f32 %v2200, %v2124
    %v2203 = vmul.f32 %v2200, %v2125
    %v2204 = vmul.f32 %v2200, %v2126
    %v2205 = vmul.f32 %v2200, %v2127
    %v2206 = vmul.f32 %v2200, %v2128
    %v2207 = vmul.f32 %v2200, %v2129
    %v2208 = vmul.f32 %v2200, %v2130
    %2217 = vrot.lane.b32.xlu0 %v2201, 126
    %v2218 = vpop.permute.xlu0 %2217
    %2219 = vrot.lane.b32.xlu0 %v2202, 126
    %v2220 = vpop.permute.xlu0 %2219
    %2221 = vrot.lane.b32.xlu0 %v2203, 126
    %v2222 = vpop.permute.xlu0 %2221
    %2223 = vrot.lane.b32.xlu0 %v2204, 126
    %v2224 = vpop.permute.xlu0 %2223
    %2225 = vrot.lane.b32.xlu0 %v2205, 126
    %v2226 = vpop.permute.xlu0 %2225
    %2227 = vrot.lane.b32.xlu0 %v2206, 126
    %v2228 = vpop.permute.xlu0 %2227
    %2229 = vrot.lane.b32.xlu0 %v2207, 126
    %v2230 = vpop.permute.xlu0 %2229
    %2231 = vrot.lane.b32.xlu0 %v2208, 126
    %v2232 = vpop.permute.xlu0 %2231
    %v2241 = vadd.f32 %v2191, %v2218
    %v2242 = vadd.f32 %v2192, %v2220
    %v2243 = vadd.f32 %v2193, %v2222
    %v2244 = vadd.f32 %v2194, %v2224
    %v2245 = vadd.f32 %v2195, %v2226
    %v2246 = vadd.f32 %v2196, %v2228
    %v2247 = vadd.f32 %v2197, %v2230
    %v2248 = vadd.f32 %v2198, %v2232
    %v2249 = vld [vmem:[%s835 + $0x2] sm:$0xff]
    %v2250 = vld [vmem:[%s835 + $0xa] sm:$0xff]
    %v2251 = vld [vmem:[%s835 + $0x12] sm:$0xff]
    %v2252 = vld [vmem:[%s835 + $0x1a] sm:$0xff]
    %v2253 = vld [vmem:[%s835 + $0x7a] sm:$0xff]
    %v2254 = vld [vmem:[%s835 + $0x82] sm:$0xff]
    %v2255 = vld [vmem:[%s835 + $0x8a] sm:$0xff]
    %v2256 = vld [vmem:[%s835 + $0x92] sm:$0xff]
    %s2257 = sld [smem:[#allocation4 + $0x33]]
    %v2258 = vstv %s2257
    %v2259 = vmul.f32 %v2258, %v2249
    %v2260 = vmul.f32 %v2258, %v2250
    %v2261 = vmul.f32 %v2258, %v2251
    %v2262 = vmul.f32 %v2258, %v2252
    %v2263 = vmul.f32 %v2258, %v2253
    %v2264 = vmul.f32 %v2258, %v2254
    %v2265 = vmul.f32 %v2258, %v2255
    %v2266 = vmul.f32 %v2258, %v2256
    %v2267 = vadd.f32 %v2241, %v2259
    %v2268 = vadd.f32 %v2242, %v2260
    %v2269 = vadd.f32 %v2243, %v2261
    %v2270 = vadd.f32 %v2244, %v2262
    %v2271 = vadd.f32 %v2245, %v2263
    %v2272 = vadd.f32 %v2246, %v2264
    %v2273 = vadd.f32 %v2247, %v2265
    %v2274 = vadd.f32 %v2248, %v2266
    %s2275 = sld [smem:[#allocation4 + $0x34]]
    %v2276 = vstv %s2275
    %v2277 = vmul.f32 %v2276, %v2249
    %v2278 = vmul.f32 %v2276, %v2250
    %v2279 = vmul.f32 %v2276, %v2251
    %v2280 = vmul.f32 %v2276, %v2252
    %v2281 = vmul.f32 %v2276, %v2253
    %v2282 = vmul.f32 %v2276, %v2254
    %v2283 = vmul.f32 %v2276, %v2255
    %v2284 = vmul.f32 %v2276, %v2256
    %2293 = vrot.lane.b32.xlu0 %v2277, 127
    %v2294 = vpop.permute.xlu0 %2293
    %2295 = vrot.lane.b32.xlu0 %v2278, 127
    %v2296 = vpop.permute.xlu0 %2295
    %2297 = vrot.lane.b32.xlu0 %v2279, 127
    %v2298 = vpop.permute.xlu0 %2297
    %2299 = vrot.lane.b32.xlu0 %v2280, 127
    %v2300 = vpop.permute.xlu0 %2299
    %2301 = vrot.lane.b32.xlu0 %v2281, 127
    %v2302 = vpop.permute.xlu0 %2301
    %2303 = vrot.lane.b32.xlu0 %v2282, 127
    %v2304 = vpop.permute.xlu0 %2303
    %2305 = vrot.lane.b32.xlu0 %v2283, 127
    %v2306 = vpop.permute.xlu0 %2305
    %2307 = vrot.lane.b32.xlu0 %v2284, 127
    %v2308 = vpop.permute.xlu0 %2307
    %v2317 = vadd.f32 %v2267, %v2294
    %v2318 = vadd.f32 %v2268, %v2296
    %v2319 = vadd.f32 %v2269, %v2298
    %v2320 = vadd.f32 %v2270, %v2300
    %v2321 = vadd.f32 %v2271, %v2302
    %v2322 = vadd.f32 %v2272, %v2304
    %v2323 = vadd.f32 %v2273, %v2306
    %v2324 = vadd.f32 %v2274, %v2308
    %s2325 = sld [smem:[#allocation4 + $0x35]]
    %v2326 = vstv %s2325
    %v2327 = vmul.f32 %v2326, %v2249
    %v2328 = vmul.f32 %v2326, %v2250
    %v2329 = vmul.f32 %v2326, %v2251
    %v2330 = vmul.f32 %v2326, %v2252
    %v2331 = vmul.f32 %v2326, %v2253
    %v2332 = vmul.f32 %v2326, %v2254
    %v2333 = vmul.f32 %v2326, %v2255
    %v2334 = vmul.f32 %v2326, %v2256
    %2343 = vrot.lane.b32.xlu0 %v2327, 126
    %v2344 = vpop.permute.xlu0 %2343
    %2345 = vrot.lane.b32.xlu0 %v2328, 126
    %v2346 = vpop.permute.xlu0 %2345
    %2347 = vrot.lane.b32.xlu0 %v2329, 126
    %v2348 = vpop.permute.xlu0 %2347
    %2349 = vrot.lane.b32.xlu0 %v2330, 126
    %v2350 = vpop.permute.xlu0 %2349
    %2351 = vrot.lane.b32.xlu0 %v2331, 126
    %v2352 = vpop.permute.xlu0 %2351
    %2353 = vrot.lane.b32.xlu0 %v2332, 126
    %v2354 = vpop.permute.xlu0 %2353
    %2355 = vrot.lane.b32.xlu0 %v2333, 126
    %v2356 = vpop.permute.xlu0 %2355
    %2357 = vrot.lane.b32.xlu0 %v2334, 126
    %v2358 = vpop.permute.xlu0 %2357
    %v2367 = vadd.f32 %v2317, %v2344
    %v2368 = vadd.f32 %v2318, %v2346
    %v2369 = vadd.f32 %v2319, %v2348
    %v2370 = vadd.f32 %v2320, %v2350
    %v2371 = vadd.f32 %v2321, %v2352
    %v2372 = vadd.f32 %v2322, %v2354
    %v2373 = vadd.f32 %v2323, %v2356
    %v2374 = vadd.f32 %v2324, %v2358
    %s2375 = sld [smem:[#allocation7 + $0x1]]
    %v2376 = vstv %s2375
    %v2377 = vadd.f32 %v2367, %v2376
    %v2378 = vadd.f32 %v2368, %v2376
    %v2379 = vadd.f32 %v2369, %v2376
    %v2380 = vadd.f32 %v2370, %v2376
    %v2381 = vadd.f32 %v2371, %v2376
    %v2382 = vadd.f32 %v2372, %v2376
    %v2383 = vadd.f32 %v2373, %v2376
    %v2384 = vadd.f32 %v2374, %v2376
    %v2385 = vmax.f32 %v2377, 0.0
    %v2386 = vmax.f32 %v2378, 0.0
    %v2387 = vmax.f32 %v2379, 0.0
    %v2388 = vmax.f32 %v2380, 0.0
    %v2389 = vmax.f32 %v2381, 0.0
    %v2390 = vmax.f32 %v2382, 0.0
    %v2391 = vmax.f32 %v2383, 0.0
    %v2392 = vmax.f32 %v2384, 0.0
    %s2393 = scalar_lea.vmem [#allocation2], 40
    %2394 = vst.msk [vmem:[%s2393] sm:$0xff] %vm1232, %v2385
    %2395 = vst.msk [vmem:[%s2393 + $0x8] sm:$0xff] %vm1232, %v2386
    %2396 = vst.msk [vmem:[%s2393 + $0x10] sm:$0xff] %vm1232, %v2387
    %2397 = vst.msk [vmem:[%s2393 + $0x18] sm:$0xff] %vm1232, %v2388
    %2398 = vst.msk [vmem:[%s2393 + $0x78] sm:$0xff] %vm1232, %v2389
    %2399 = vst.msk [vmem:[%s2393 + $0x80] sm:$0xff] %vm1232, %v2390
    %2400 = vst.msk [vmem:[%s2393 + $0x88] sm:$0xff] %vm1232, %v2391
    %2401 = vst.msk [vmem:[%s2393 + $0x90] sm:$0xff] %vm1232, %v2392
    %v2402 = vld [vmem:[%s2] sm:$0xff]
    %v2403 = vld [vmem:[%s2 + $0x8] sm:$0xff]
    %v2404 = vld [vmem:[%s2 + $0x10] sm:$0xff]
    %v2405 = vld [vmem:[%s2 + $0x18] sm:$0xff]
    %v2406 = vld [vmem:[%s2 + $0x78] sm:$0xff]
    %v2407 = vld [vmem:[%s2 + $0x80] sm:$0xff]
    %v2408 = vld [vmem:[%s2 + $0x88] sm:$0xff]
    %v2409 = vld [vmem:[%s2 + $0x90] sm:$0xff]
    %s2410 = sld [smem:[#allocation4 + $0x36]]
    %v2411 = vstv %s2410
    %v2412 = vmul.f32 %v2411, %v2402
    %v2413 = vmul.f32 %v2411, %v2403
    %v2414 = vmul.f32 %v2411, %v2404
    %v2415 = vmul.f32 %v2411, %v2405
    %v2416 = vmul.f32 %v2411, %v2406
    %v2417 = vmul.f32 %v2411, %v2407
    %v2418 = vmul.f32 %v2411, %v2408
    %v2419 = vmul.f32 %v2411, %v2409
    %v2420 = vadd.f32 %v2412, 0.0
    %v2421 = vadd.f32 %v2413, 0.0
    %v2422 = vadd.f32 %v2414, 0.0
    %v2423 = vadd.f32 %v2415, 0.0
    %v2424 = vadd.f32 %v2416, 0.0
    %v2425 = vadd.f32 %v2417, 0.0
    %v2426 = vadd.f32 %v2418, 0.0
    %v2427 = vadd.f32 %v2419, 0.0
    %s2428 = sld [smem:[#allocation4 + $0x37]]
    %v2429 = vstv %s2428
    %v2430 = vmul.f32 %v2429, %v2402
    %v2431 = vmul.f32 %v2429, %v2403
    %v2432 = vmul.f32 %v2429, %v2404
    %v2433 = vmul.f32 %v2429, %v2405
    %v2434 = vmul.f32 %v2429, %v2406
    %v2435 = vmul.f32 %v2429, %v2407
    %v2436 = vmul.f32 %v2429, %v2408
    %v2437 = vmul.f32 %v2429, %v2409
    %2446 = vrot.lane.b32.xlu0 %v2430, 127
    %v2447 = vpop.permute.xlu0 %2446
    %2448 = vrot.lane.b32.xlu0 %v2431, 127
    %v2449 = vpop.permute.xlu0 %2448
    %2450 = vrot.lane.b32.xlu0 %v2432, 127
    %v2451 = vpop.permute.xlu0 %2450
    %2452 = vrot.lane.b32.xlu0 %v2433, 127
    %v2453 = vpop.permute.xlu0 %2452
    %2454 = vrot.lane.b32.xlu0 %v2434, 127
    %v2455 = vpop.permute.xlu0 %2454
    %2456 = vrot.lane.b32.xlu0 %v2435, 127
    %v2457 = vpop.permute.xlu0 %2456
    %2458 = vrot.lane.b32.xlu0 %v2436, 127
    %v2459 = vpop.permute.xlu0 %2458
    %2460 = vrot.lane.b32.xlu0 %v2437, 127
    %v2461 = vpop.permute.xlu0 %2460
    %v2470 = vadd.f32 %v2420, %v2447
    %v2471 = vadd.f32 %v2421, %v2449
    %v2472 = vadd.f32 %v2422, %v2451
    %v2473 = vadd.f32 %v2423, %v2453
    %v2474 = vadd.f32 %v2424, %v2455
    %v2475 = vadd.f32 %v2425, %v2457
    %v2476 = vadd.f32 %v2426, %v2459
    %v2477 = vadd.f32 %v2427, %v2461
    %s2478 = sld [smem:[#allocation4 + $0x38]]
    %v2479 = vstv %s2478
    %v2480 = vmul.f32 %v2479, %v2402
    %v2481 = vmul.f32 %v2479, %v2403
    %v2482 = vmul.f32 %v2479, %v2404
    %v2483 = vmul.f32 %v2479, %v2405
    %v2484 = vmul.f32 %v2479, %v2406
    %v2485 = vmul.f32 %v2479, %v2407
    %v2486 = vmul.f32 %v2479, %v2408
    %v2487 = vmul.f32 %v2479, %v2409
    %2496 = vrot.lane.b32.xlu0 %v2480, 126
    %v2497 = vpop.permute.xlu0 %2496
    %2498 = vrot.lane.b32.xlu0 %v2481, 126
    %v2499 = vpop.permute.xlu0 %2498
    %2500 = vrot.lane.b32.xlu0 %v2482, 126
    %v2501 = vpop.permute.xlu0 %2500
    %2502 = vrot.lane.b32.xlu0 %v2483, 126
    %v2503 = vpop.permute.xlu0 %2502
    %2504 = vrot.lane.b32.xlu0 %v2484, 126
    %v2505 = vpop.permute.xlu0 %2504
    %2506 = vrot.lane.b32.xlu0 %v2485, 126
    %v2507 = vpop.permute.xlu0 %2506
    %2508 = vrot.lane.b32.xlu0 %v2486, 126
    %v2509 = vpop.permute.xlu0 %2508
    %2510 = vrot.lane.b32.xlu0 %v2487, 126
    %v2511 = vpop.permute.xlu0 %2510
    %v2520 = vadd.f32 %v2470, %v2497
    %v2521 = vadd.f32 %v2471, %v2499
    %v2522 = vadd.f32 %v2472, %v2501
    %v2523 = vadd.f32 %v2473, %v2503
    %v2524 = vadd.f32 %v2474, %v2505
    %v2525 = vadd.f32 %v2475, %v2507
    %v2526 = vadd.f32 %v2476, %v2509
    %v2527 = vadd.f32 %v2477, %v2511
    %v2528 = vld [vmem:[%s2 + $0x1] sm:$0xff]
    %v2529 = vld [vmem:[%s2 + $0x9] sm:$0xff]
    %v2530 = vld [vmem:[%s2 + $0x11] sm:$0xff]
    %v2531 = vld [vmem:[%s2 + $0x19] sm:$0xff]
    %v2532 = vld [vmem:[%s2 + $0x79] sm:$0xff]
    %v2533 = vld [vmem:[%s2 + $0x81] sm:$0xff]
    %v2534 = vld [vmem:[%s2 + $0x89] sm:$0xff]
    %v2535 = vld [vmem:[%s2 + $0x91] sm:$0xff]
    %s2536 = sld [smem:[#allocation4 + $0x39]]
    %v2537 = vstv %s2536
    %v2538 = vmul.f32 %v2537, %v2528
    %v2539 = vmul.f32 %v2537, %v2529
    %v2540 = vmul.f32 %v2537, %v2530
    %v2541 = vmul.f32 %v2537, %v2531
    %v2542 = vmul.f32 %v2537, %v2532
    %v2543 = vmul.f32 %v2537, %v2533
    %v2544 = vmul.f32 %v2537, %v2534
    %v2545 = vmul.f32 %v2537, %v2535
    %v2546 = vadd.f32 %v2520, %v2538
    %v2547 = vadd.f32 %v2521, %v2539
    %v2548 = vadd.f32 %v2522, %v2540
    %v2549 = vadd.f32 %v2523, %v2541
    %v2550 = vadd.f32 %v2524, %v2542
    %v2551 = vadd.f32 %v2525, %v2543
    %v2552 = vadd.f32 %v2526, %v2544
    %v2553 = vadd.f32 %v2527, %v2545
    %s2554 = sld [smem:[#allocation4 + $0x3a]]
    %v2555 = vstv %s2554
    %v2556 = vmul.f32 %v2555, %v2528
    %v2557 = vmul.f32 %v2555, %v2529
    %v2558 = vmul.f32 %v2555, %v2530
    %v2559 = vmul.f32 %v2555, %v2531
    %v2560 = vmul.f32 %v2555, %v2532
    %v2561 = vmul.f32 %v2555, %v2533
    %v2562 = vmul.f32 %v2555, %v2534
    %v2563 = vmul.f32 %v2555, %v2535
    %2572 = vrot.lane.b32.xlu0 %v2556, 127
    %v2573 = vpop.permute.xlu0 %2572
    %2574 = vrot.lane.b32.xlu0 %v2557, 127
    %v2575 = vpop.permute.xlu0 %2574
    %2576 = vrot.lane.b32.xlu0 %v2558, 127
    %v2577 = vpop.permute.xlu0 %2576
    %2578 = vrot.lane.b32.xlu0 %v2559, 127
    %v2579 = vpop.permute.xlu0 %2578
    %2580 = vrot.lane.b32.xlu0 %v2560, 127
    %v2581 = vpop.permute.xlu0 %2580
    %2582 = vrot.lane.b32.xlu0 %v2561, 127
    %v2583 = vpop.permute.xlu0 %2582
    %2584 = vrot.lane.b32.xlu0 %v2562, 127
    %v2585 = vpop.permute.xlu0 %2584
    %2586 = vrot.lane.b32.xlu0 %v2563, 127
    %v2587 = vpop.permute.xlu0 %2586
    %v2596 = vadd.f32 %v2546, %v2573
    %v2597 = vadd.f32 %v2547, %v2575
    %v2598 = vadd.f32 %v2548, %v2577
    %v2599 = vadd.f32 %v2549, %v2579
    %v2600 = vadd.f32 %v2550, %v2581
    %v2601 = vadd.f32 %v2551, %v2583
    %v2602 = vadd.f32 %v2552, %v2585
    %v2603 = vadd.f32 %v2553, %v2587
    %s2604 = sld [smem:[#allocation4 + $0x3b]]
    %v2605 = vstv %s2604
    %v2606 = vmul.f32 %v2605, %v2528
    %v2607 = vmul.f32 %v2605, %v2529
    %v2608 = vmul.f32 %v2605, %v2530
    %v2609 = vmul.f32 %v2605, %v2531
    %v2610 = vmul.f32 %v2605, %v2532
    %v2611 = vmul.f32 %v2605, %v2533
    %v2612 = vmul.f32 %v2605, %v2534
    %v2613 = vmul.f32 %v2605, %v2535
    %2622 = vrot.lane.b32.xlu0 %v2606, 126
    %v2623 = vpop.permute.xlu0 %2622
    %2624 = vrot.lane.b32.xlu0 %v2607, 126
    %v2625 = vpop.permute.xlu0 %2624
    %2626 = vrot.lane.b32.xlu0 %v2608, 126
    %v2627 = vpop.permute.xlu0 %2626
    %2628 = vrot.lane.b32.xlu0 %v2609, 126
    %v2629 = vpop.permute.xlu0 %2628
    %2630 = vrot.lane.b32.xlu0 %v2610, 126
    %v2631 = vpop.permute.xlu0 %2630
    %2632 = vrot.lane.b32.xlu0 %v2611, 126
    %v2633 = vpop.permute.xlu0 %2632
    %2634 = vrot.lane.b32.xlu0 %v2612, 126
    %v2635 = vpop.permute.xlu0 %2634
    %2636 = vrot.lane.b32.xlu0 %v2613, 126
    %v2637 = vpop.permute.xlu0 %2636
    %v2646 = vadd.f32 %v2596, %v2623
    %v2647 = vadd.f32 %v2597, %v2625
    %v2648 = vadd.f32 %v2598, %v2627
    %v2649 = vadd.f32 %v2599, %v2629
    %v2650 = vadd.f32 %v2600, %v2631
    %v2651 = vadd.f32 %v2601, %v2633
    %v2652 = vadd.f32 %v2602, %v2635
    %v2653 = vadd.f32 %v2603, %v2637
    %v2654 = vld [vmem:[%s2 + $0x2] sm:$0xff]
    %v2655 = vld [vmem:[%s2 + $0xa] sm:$0xff]
    %v2656 = vld [vmem:[%s2 + $0x12] sm:$0xff]
    %v2657 = vld [vmem:[%s2 + $0x1a] sm:$0xff]
    %v2658 = vld [vmem:[%s2 + $0x7a] sm:$0xff]
    %v2659 = vld [vmem:[%s2 + $0x82] sm:$0xff]
    %v2660 = vld [vmem:[%s2 + $0x8a] sm:$0xff]
    %v2661 = vld [vmem:[%s2 + $0x92] sm:$0xff]
    %s2662 = sld [smem:[#allocation4 + $0x3c]]
    %v2663 = vstv %s2662
    %v2664 = vmul.f32 %v2663, %v2654
    %v2665 = vmul.f32 %v2663, %v2655
    %v2666 = vmul.f32 %v2663, %v2656
    %v2667 = vmul.f32 %v2663, %v2657
    %v2668 = vmul.f32 %v2663, %v2658
    %v2669 = vmul.f32 %v2663, %v2659
    %v2670 = vmul.f32 %v2663, %v2660
    %v2671 = vmul.f32 %v2663, %v2661
    %v2672 = vadd.f32 %v2646, %v2664
    %v2673 = vadd.f32 %v2647, %v2665
    %v2674 = vadd.f32 %v2648, %v2666
    %v2675 = vadd.f32 %v2649, %v2667
    %v2676 = vadd.f32 %v2650, %v2668
    %v2677 = vadd.f32 %v2651, %v2669
    %v2678 = vadd.f32 %v2652, %v2670
    %v2679 = vadd.f32 %v2653, %v2671
    %s2680 = sld [smem:[#allocation4 + $0x3d]]
    %v2681 = vstv %s2680
    %v2682 = vmul.f32 %v2681, %v2654
    %v2683 = vmul.f32 %v2681, %v2655
    %v2684 = vmul.f32 %v2681, %v2656
    %v2685 = vmul.f32 %v2681, %v2657
    %v2686 = vmul.f32 %v2681, %v2658
    %v2687 = vmul.f32 %v2681, %v2659
    %v2688 = vmul.f32 %v2681, %v2660
    %v2689 = vmul.f32 %v2681, %v2661
    %2698 = vrot.lane.b32.xlu0 %v2682, 127
    %v2699 = vpop.permute.xlu0 %2698
    %2700 = vrot.lane.b32.xlu0 %v2683, 127
    %v2701 = vpop.permute.xlu0 %2700
    %2702 = vrot.lane.b32.xlu0 %v2684, 127
    %v2703 = vpop.permute.xlu0 %2702
    %2704 = vrot.lane.b32.xlu0 %v2685, 127
    %v2705 = vpop.permute.xlu0 %2704
    %2706 = vrot.lane.b32.xlu0 %v2686, 127
    %v2707 = vpop.permute.xlu0 %2706
    %2708 = vrot.lane.b32.xlu0 %v2687, 127
    %v2709 = vpop.permute.xlu0 %2708
    %2710 = vrot.lane.b32.xlu0 %v2688, 127
    %v2711 = vpop.permute.xlu0 %2710
    %2712 = vrot.lane.b32.xlu0 %v2689, 127
    %v2713 = vpop.permute.xlu0 %2712
    %v2722 = vadd.f32 %v2672, %v2699
    %v2723 = vadd.f32 %v2673, %v2701
    %v2724 = vadd.f32 %v2674, %v2703
    %v2725 = vadd.f32 %v2675, %v2705
    %v2726 = vadd.f32 %v2676, %v2707
    %v2727 = vadd.f32 %v2677, %v2709
    %v2728 = vadd.f32 %v2678, %v2711
    %v2729 = vadd.f32 %v2679, %v2713
    %s2730 = sld [smem:[#allocation4 + $0x3e]]
    %v2731 = vstv %s2730
    %v2732 = vmul.f32 %v2731, %v2654
    %v2733 = vmul.f32 %v2731, %v2655
    %v2734 = vmul.f32 %v2731, %v2656
    %v2735 = vmul.f32 %v2731, %v2657
    %v2736 = vmul.f32 %v2731, %v2658
    %v2737 = vmul.f32 %v2731, %v2659
    %v2738 = vmul.f32 %v2731, %v2660
    %v2739 = vmul.f32 %v2731, %v2661
    %2748 = vrot.lane.b32.xlu0 %v2732, 126
    %v2749 = vpop.permute.xlu0 %2748
    %2750 = vrot.lane.b32.xlu0 %v2733, 126
    %v2751 = vpop.permute.xlu0 %2750
    %2752 = vrot.lane.b32.xlu0 %v2734, 126
    %v2753 = vpop.permute.xlu0 %2752
    %2754 = vrot.lane.b32.xlu0 %v2735, 126
    %v2755 = vpop.permute.xlu0 %2754
    %2756 = vrot.lane.b32.xlu0 %v2736, 126
    %v2757 = vpop.permute.xlu0 %2756
    %2758 = vrot.lane.b32.xlu0 %v2737, 126
    %v2759 = vpop.permute.xlu0 %2758
    %2760 = vrot.lane.b32.xlu0 %v2738, 126
    %v2761 = vpop.permute.xlu0 %2760
    %2762 = vrot.lane.b32.xlu0 %v2739, 126
    %v2763 = vpop.permute.xlu0 %2762
    %v2772 = vadd.f32 %v2722, %v2749
    %v2773 = vadd.f32 %v2723, %v2751
    %v2774 = vadd.f32 %v2724, %v2753
    %v2775 = vadd.f32 %v2725, %v2755
    %v2776 = vadd.f32 %v2726, %v2757
    %v2777 = vadd.f32 %v2727, %v2759
    %v2778 = vadd.f32 %v2728, %v2761
    %v2779 = vadd.f32 %v2729, %v2763
    %v2780 = vld [vmem:[%s456] sm:$0xff]
    %v2781 = vld [vmem:[%s456 + $0x8] sm:$0xff]
    %v2782 = vld [vmem:[%s456 + $0x10] sm:$0xff]
    %v2783 = vld [vmem:[%s456 + $0x18] sm:$0xff]
    %v2784 = vld [vmem:[%s456 + $0x78] sm:$0xff]
    %v2785 = vld [vmem:[%s456 + $0x80] sm:$0xff]
    %v2786 = vld [vmem:[%s456 + $0x88] sm:$0xff]
    %v2787 = vld [vmem:[%s456 + $0x90] sm:$0xff]
    %s2788 = sld [smem:[#allocation4 + $0x3f]]
    %v2789 = vstv %s2788
    %v2790 = vmul.f32 %v2789, %v2780
    %v2791 = vmul.f32 %v2789, %v2781
    %v2792 = vmul.f32 %v2789, %v2782
    %v2793 = vmul.f32 %v2789, %v2783
    %v2794 = vmul.f32 %v2789, %v2784
    %v2795 = vmul.f32 %v2789, %v2785
    %v2796 = vmul.f32 %v2789, %v2786
    %v2797 = vmul.f32 %v2789, %v2787
    %v2798 = vadd.f32 %v2772, %v2790
    %v2799 = vadd.f32 %v2773, %v2791
    %v2800 = vadd.f32 %v2774, %v2792
    %v2801 = vadd.f32 %v2775, %v2793
    %v2802 = vadd.f32 %v2776, %v2794
    %v2803 = vadd.f32 %v2777, %v2795
    %v2804 = vadd.f32 %v2778, %v2796
    %v2805 = vadd.f32 %v2779, %v2797
    %s2806 = sld [smem:[#allocation4 + $0x40]]
    %v2807 = vstv %s2806
    %v2808 = vmul.f32 %v2807, %v2780
    %v2809 = vmul.f32 %v2807, %v2781
    %v2810 = vmul.f32 %v2807, %v2782
    %v2811 = vmul.f32 %v2807, %v2783
    %v2812 = vmul.f32 %v2807, %v2784
    %v2813 = vmul.f32 %v2807, %v2785
    %v2814 = vmul.f32 %v2807, %v2786
    %v2815 = vmul.f32 %v2807, %v2787
    %2824 = vrot.lane.b32.xlu0 %v2808, 127
    %v2825 = vpop.permute.xlu0 %2824
    %2826 = vrot.lane.b32.xlu0 %v2809, 127
    %v2827 = vpop.permute.xlu0 %2826
    %2828 = vrot.lane.b32.xlu0 %v2810, 127
    %v2829 = vpop.permute.xlu0 %2828
    %2830 = vrot.lane.b32.xlu0 %v2811, 127
    %v2831 = vpop.permute.xlu0 %2830
    %2832 = vrot.lane.b32.xlu0 %v2812, 127
    %v2833 = vpop.permute.xlu0 %2832
    %2834 = vrot.lane.b32.xlu0 %v2813, 127
    %v2835 = vpop.permute.xlu0 %2834
    %2836 = vrot.lane.b32.xlu0 %v2814, 127
    %v2837 = vpop.permute.xlu0 %2836
    %2838 = vrot.lane.b32.xlu0 %v2815, 127
    %v2839 = vpop.permute.xlu0 %2838
    %v2848 = vadd.f32 %v2798, %v2825
    %v2849 = vadd.f32 %v2799, %v2827
    %v2850 = vadd.f32 %v2800, %v2829
    %v2851 = vadd.f32 %v2801, %v2831
    %v2852 = vadd.f32 %v2802, %v2833
    %v2853 = vadd.f32 %v2803, %v2835
    %v2854 = vadd.f32 %v2804, %v2837
    %v2855 = vadd.f32 %v2805, %v2839
    %s2856 = sld [smem:[#allocation4 + $0x41]]
    %v2857 = vstv %s2856
    %v2858 = vmul.f32 %v2857, %v2780
    %v2859 = vmul.f32 %v2857, %v2781
    %v2860 = vmul.f32 %v2857, %v2782
    %v2861 = vmul.f32 %v2857, %v2783
    %v2862 = vmul.f32 %v2857, %v2784
    %v2863 = vmul.f32 %v2857, %v2785
    %v2864 = vmul.f32 %v2857, %v2786
    %v2865 = vmul.f32 %v2857, %v2787
    %2874 = vrot.lane.b32.xlu0 %v2858, 126
    %v2875 = vpop.permute.xlu0 %2874
    %2876 = vrot.lane.b32.xlu0 %v2859, 126
    %v2877 = vpop.permute.xlu0 %2876
    %2878 = vrot.lane.b32.xlu0 %v2860, 126
    %v2879 = vpop.permute.xlu0 %2878
    %2880 = vrot.lane.b32.xlu0 %v2861, 126
    %v2881 = vpop.permute.xlu0 %2880
    %2882 = vrot.lane.b32.xlu0 %v2862, 126
    %v2883 = vpop.permute.xlu0 %2882
    %2884 = vrot.lane.b32.xlu0 %v2863, 126
    %v2885 = vpop.permute.xlu0 %2884
    %2886 = vrot.lane.b32.xlu0 %v2864, 126
    %v2887 = vpop.permute.xlu0 %2886
    %2888 = vrot.lane.b32.xlu0 %v2865, 126
    %v2889 = vpop.permute.xlu0 %2888
    %v2898 = vadd.f32 %v2848, %v2875
    %v2899 = vadd.f32 %v2849, %v2877
    %v2900 = vadd.f32 %v2850, %v2879
    %v2901 = vadd.f32 %v2851, %v2881
    %v2902 = vadd.f32 %v2852, %v2883
    %v2903 = vadd.f32 %v2853, %v2885
    %v2904 = vadd.f32 %v2854, %v2887
    %v2905 = vadd.f32 %v2855, %v2889
    %v2906 = vld [vmem:[%s456 + $0x1] sm:$0xff]
    %v2907 = vld [vmem:[%s456 + $0x9] sm:$0xff]
    %v2908 = vld [vmem:[%s456 + $0x11] sm:$0xff]
    %v2909 = vld [vmem:[%s456 + $0x19] sm:$0xff]
    %v2910 = vld [vmem:[%s456 + $0x79] sm:$0xff]
    %v2911 = vld [vmem:[%s456 + $0x81] sm:$0xff]
    %v2912 = vld [vmem:[%s456 + $0x89] sm:$0xff]
    %v2913 = vld [vmem:[%s456 + $0x91] sm:$0xff]
    %s2914 = sld [smem:[#allocation4 + $0x42]]
    %v2915 = vstv %s2914
    %v2916 = vmul.f32 %v2915, %v2906
    %v2917 = vmul.f32 %v2915, %v2907
    %v2918 = vmul.f32 %v2915, %v2908
    %v2919 = vmul.f32 %v2915, %v2909
    %v2920 = vmul.f32 %v2915, %v2910
    %v2921 = vmul.f32 %v2915, %v2911
    %v2922 = vmul.f32 %v2915, %v2912
    %v2923 = vmul.f32 %v2915, %v2913
    %v2924 = vadd.f32 %v2898, %v2916
    %v2925 = vadd.f32 %v2899, %v2917
    %v2926 = vadd.f32 %v2900, %v2918
    %v2927 = vadd.f32 %v2901, %v2919
    %v2928 = vadd.f32 %v2902, %v2920
    %v2929 = vadd.f32 %v2903, %v2921
    %v2930 = vadd.f32 %v2904, %v2922
    %v2931 = vadd.f32 %v2905, %v2923
    %s2932 = sld [smem:[#allocation4 + $0x43]]
    %v2933 = vstv %s2932
    %v2934 = vmul.f32 %v2933, %v2906
    %v2935 = vmul.f32 %v2933, %v2907
    %v2936 = vmul.f32 %v2933, %v2908
    %v2937 = vmul.f32 %v2933, %v2909
    %v2938 = vmul.f32 %v2933, %v2910
    %v2939 = vmul.f32 %v2933, %v2911
    %v2940 = vmul.f32 %v2933, %v2912
    %v2941 = vmul.f32 %v2933, %v2913
    %2950 = vrot.lane.b32.xlu0 %v2934, 127
    %v2951 = vpop.permute.xlu0 %2950
    %2952 = vrot.lane.b32.xlu0 %v2935, 127
    %v2953 = vpop.permute.xlu0 %2952
    %2954 = vrot.lane.b32.xlu0 %v2936, 127
    %v2955 = vpop.permute.xlu0 %2954
    %2956 = vrot.lane.b32.xlu0 %v2937, 127
    %v2957 = vpop.permute.xlu0 %2956
    %2958 = vrot.lane.b32.xlu0 %v2938, 127
    %v2959 = vpop.permute.xlu0 %2958
    %2960 = vrot.lane.b32.xlu0 %v2939, 127
    %v2961 = vpop.permute.xlu0 %2960
    %2962 = vrot.lane.b32.xlu0 %v2940, 127
    %v2963 = vpop.permute.xlu0 %2962
    %2964 = vrot.lane.b32.xlu0 %v2941, 127
    %v2965 = vpop.permute.xlu0 %2964
    %v2974 = vadd.f32 %v2924, %v2951
    %v2975 = vadd.f32 %v2925, %v2953
    %v2976 = vadd.f32 %v2926, %v2955
    %v2977 = vadd.f32 %v2927, %v2957
    %v2978 = vadd.f32 %v2928, %v2959
    %v2979 = vadd.f32 %v2929, %v2961
    %v2980 = vadd.f32 %v2930, %v2963
    %v2981 = vadd.f32 %v2931, %v2965
    %s2982 = sld [smem:[#allocation4 + $0x44]]
    %v2983 = vstv %s2982
    %v2984 = vmul.f32 %v2983, %v2906
    %v2985 = vmul.f32 %v2983, %v2907
    %v2986 = vmul.f32 %v2983, %v2908
    %v2987 = vmul.f32 %v2983, %v2909
    %v2988 = vmul.f32 %v2983, %v2910
    %v2989 = vmul.f32 %v2983, %v2911
    %v2990 = vmul.f32 %v2983, %v2912
    %v2991 = vmul.f32 %v2983, %v2913
    %3000 = vrot.lane.b32.xlu0 %v2984, 126
    %v3001 = vpop.permute.xlu0 %3000
    %3002 = vrot.lane.b32.xlu0 %v2985, 126
    %v3003 = vpop.permute.xlu0 %3002
    %3004 = vrot.lane.b32.xlu0 %v2986, 126
    %v3005 = vpop.permute.xlu0 %3004
    %3006 = vrot.lane.b32.xlu0 %v2987, 126
    %v3007 = vpop.permute.xlu0 %3006
    %3008 = vrot.lane.b32.xlu0 %v2988, 126
    %v3009 = vpop.permute.xlu0 %3008
    %3010 = vrot.lane.b32.xlu0 %v2989, 126
    %v3011 = vpop.permute.xlu0 %3010
    %3012 = vrot.lane.b32.xlu0 %v2990, 126
    %v3013 = vpop.permute.xlu0 %3012
    %3014 = vrot.lane.b32.xlu0 %v2991, 126
    %v3015 = vpop.permute.xlu0 %3014
    %v3024 = vadd.f32 %v2974, %v3001
    %v3025 = vadd.f32 %v2975, %v3003
    %v3026 = vadd.f32 %v2976, %v3005
    %v3027 = vadd.f32 %v2977, %v3007
    %v3028 = vadd.f32 %v2978, %v3009
    %v3029 = vadd.f32 %v2979, %v3011
    %v3030 = vadd.f32 %v2980, %v3013
    %v3031 = vadd.f32 %v2981, %v3015
    %v3032 = vld [vmem:[%s456 + $0x2] sm:$0xff]
    %v3033 = vld [vmem:[%s456 + $0xa] sm:$0xff]
    %v3034 = vld [vmem:[%s456 + $0x12] sm:$0xff]
    %v3035 = vld [vmem:[%s456 + $0x1a] sm:$0xff]
    %v3036 = vld [vmem:[%s456 + $0x7a] sm:$0xff]
    %v3037 = vld [vmem:[%s456 + $0x82] sm:$0xff]
    %v3038 = vld [vmem:[%s456 + $0x8a] sm:$0xff]
    %v3039 = vld [vmem:[%s456 + $0x92] sm:$0xff]
    %s3040 = sld [smem:[#allocation4 + $0x45]]
    %v3041 = vstv %s3040
    %v3042 = vmul.f32 %v3041, %v3032
    %v3043 = vmul.f32 %v3041, %v3033
    %v3044 = vmul.f32 %v3041, %v3034
    %v3045 = vmul.f32 %v3041, %v3035
    %v3046 = vmul.f32 %v3041, %v3036
    %v3047 = vmul.f32 %v3041, %v3037
    %v3048 = vmul.f32 %v3041, %v3038
    %v3049 = vmul.f32 %v3041, %v3039
    %v3050 = vadd.f32 %v3024, %v3042
    %v3051 = vadd.f32 %v3025, %v3043
    %v3052 = vadd.f32 %v3026, %v3044
    %v3053 = vadd.f32 %v3027, %v3045
    %v3054 = vadd.f32 %v3028, %v3046
    %v3055 = vadd.f32 %v3029, %v3047
    %v3056 = vadd.f32 %v3030, %v3048
    %v3057 = vadd.f32 %v3031, %v3049
    %s3058 = sld [smem:[#allocation4 + $0x46]]
    %v3059 = vstv %s3058
    %v3060 = vmul.f32 %v3059, %v3032
    %v3061 = vmul.f32 %v3059, %v3033
    %v3062 = vmul.f32 %v3059, %v3034
    %v3063 = vmul.f32 %v3059, %v3035
    %v3064 = vmul.f32 %v3059, %v3036
    %v3065 = vmul.f32 %v3059, %v3037
    %v3066 = vmul.f32 %v3059, %v3038
    %v3067 = vmul.f32 %v3059, %v3039
    %3076 = vrot.lane.b32.xlu0 %v3060, 127
    %v3077 = vpop.permute.xlu0 %3076
    %3078 = vrot.lane.b32.xlu0 %v3061, 127
    %v3079 = vpop.permute.xlu0 %3078
    %3080 = vrot.lane.b32.xlu0 %v3062, 127
    %v3081 = vpop.permute.xlu0 %3080
    %3082 = vrot.lane.b32.xlu0 %v3063, 127
    %v3083 = vpop.permute.xlu0 %3082
    %3084 = vrot.lane.b32.xlu0 %v3064, 127
    %v3085 = vpop.permute.xlu0 %3084
    %3086 = vrot.lane.b32.xlu0 %v3065, 127
    %v3087 = vpop.permute.xlu0 %3086
    %3088 = vrot.lane.b32.xlu0 %v3066, 127
    %v3089 = vpop.permute.xlu0 %3088
    %3090 = vrot.lane.b32.xlu0 %v3067, 127
    %v3091 = vpop.permute.xlu0 %3090
    %v3100 = vadd.f32 %v3050, %v3077
    %v3101 = vadd.f32 %v3051, %v3079
    %v3102 = vadd.f32 %v3052, %v3081
    %v3103 = vadd.f32 %v3053, %v3083
    %v3104 = vadd.f32 %v3054, %v3085
    %v3105 = vadd.f32 %v3055, %v3087
    %v3106 = vadd.f32 %v3056, %v3089
    %v3107 = vadd.f32 %v3057, %v3091
    %s3108 = sld [smem:[#allocation4 + $0x47]]
    %v3109 = vstv %s3108
    %v3110 = vmul.f32 %v3109, %v3032
    %v3111 = vmul.f32 %v3109, %v3033
    %v3112 = vmul.f32 %v3109, %v3034
    %v3113 = vmul.f32 %v3109, %v3035
    %v3114 = vmul.f32 %v3109, %v3036
    %v3115 = vmul.f32 %v3109, %v3037
    %v3116 = vmul.f32 %v3109, %v3038
    %v3117 = vmul.f32 %v3109, %v3039
    %3126 = vrot.lane.b32.xlu0 %v3110, 126
    %v3127 = vpop.permute.xlu0 %3126
    %3128 = vrot.lane.b32.xlu0 %v3111, 126
    %v3129 = vpop.permute.xlu0 %3128
    %3130 = vrot.lane.b32.xlu0 %v3112, 126
    %v3131 = vpop.permute.xlu0 %3130
    %3132 = vrot.lane.b32.xlu0 %v3113, 126
    %v3133 = vpop.permute.xlu0 %3132
    %3134 = vrot.lane.b32.xlu0 %v3114, 126
    %v3135 = vpop.permute.xlu0 %3134
    %3136 = vrot.lane.b32.xlu0 %v3115, 126
    %v3137 = vpop.permute.xlu0 %3136
    %3138 = vrot.lane.b32.xlu0 %v3116, 126
    %v3139 = vpop.permute.xlu0 %3138
    %3140 = vrot.lane.b32.xlu0 %v3117, 126
    %v3141 = vpop.permute.xlu0 %3140
    %v3150 = vadd.f32 %v3100, %v3127
    %v3151 = vadd.f32 %v3101, %v3129
    %v3152 = vadd.f32 %v3102, %v3131
    %v3153 = vadd.f32 %v3103, %v3133
    %v3154 = vadd.f32 %v3104, %v3135
    %v3155 = vadd.f32 %v3105, %v3137
    %v3156 = vadd.f32 %v3106, %v3139
    %v3157 = vadd.f32 %v3107, %v3141
    %v3158 = vld [vmem:[%s835] sm:$0xff]
    %v3159 = vld [vmem:[%s835 + $0x8] sm:$0xff]
    %v3160 = vld [vmem:[%s835 + $0x10] sm:$0xff]
    %v3161 = vld [vmem:[%s835 + $0x18] sm:$0xff]
    %v3162 = vld [vmem:[%s835 + $0x78] sm:$0xff]
    %v3163 = vld [vmem:[%s835 + $0x80] sm:$0xff]
    %v3164 = vld [vmem:[%s835 + $0x88] sm:$0xff]
    %v3165 = vld [vmem:[%s835 + $0x90] sm:$0xff]
    %s3166 = sld [smem:[#allocation4 + $0x48]]
    %v3167 = vstv %s3166
    %v3168 = vmul.f32 %v3167, %v3158
    %v3169 = vmul.f32 %v3167, %v3159
    %v3170 = vmul.f32 %v3167, %v3160
    %v3171 = vmul.f32 %v3167, %v3161
    %v3172 = vmul.f32 %v3167, %v3162
    %v3173 = vmul.f32 %v3167, %v3163
    %v3174 = vmul.f32 %v3167, %v3164
    %v3175 = vmul.f32 %v3167, %v3165
    %v3176 = vadd.f32 %v3150, %v3168
    %v3177 = vadd.f32 %v3151, %v3169
    %v3178 = vadd.f32 %v3152, %v3170
    %v3179 = vadd.f32 %v3153, %v3171
    %v3180 = vadd.f32 %v3154, %v3172
    %v3181 = vadd.f32 %v3155, %v3173
    %v3182 = vadd.f32 %v3156, %v3174
    %v3183 = vadd.f32 %v3157, %v3175
    %s3184 = sld [smem:[#allocation4 + $0x49]]
    %v3185 = vstv %s3184
    %v3186 = vmul.f32 %v3185, %v3158
    %v3187 = vmul.f32 %v3185, %v3159
    %v3188 = vmul.f32 %v3185, %v3160
    %v3189 = vmul.f32 %v3185, %v3161
    %v3190 = vmul.f32 %v3185, %v3162
    %v3191 = vmul.f32 %v3185, %v3163
    %v3192 = vmul.f32 %v3185, %v3164
    %v3193 = vmul.f32 %v3185, %v3165
    %3202 = vrot.lane.b32.xlu0 %v3186, 127
    %v3203 = vpop.permute.xlu0 %3202
    %3204 = vrot.lane.b32.xlu0 %v3187, 127
    %v3205 = vpop.permute.xlu0 %3204
    %3206 = vrot.lane.b32.xlu0 %v3188, 127
    %v3207 = vpop.permute.xlu0 %3206
    %3208 = vrot.lane.b32.xlu0 %v3189, 127
    %v3209 = vpop.permute.xlu0 %3208
    %3210 = vrot.lane.b32.xlu0 %v3190, 127
    %v3211 = vpop.permute.xlu0 %3210
    %3212 = vrot.lane.b32.xlu0 %v3191, 127
    %v3213 = vpop.permute.xlu0 %3212
    %3214 = vrot.lane.b32.xlu0 %v3192, 127
    %v3215 = vpop.permute.xlu0 %3214
    %3216 = vrot.lane.b32.xlu0 %v3193, 127
    %v3217 = vpop.permute.xlu0 %3216
    %v3226 = vadd.f32 %v3176, %v3203
    %v3227 = vadd.f32 %v3177, %v3205
    %v3228 = vadd.f32 %v3178, %v3207
    %v3229 = vadd.f32 %v3179, %v3209
    %v3230 = vadd.f32 %v3180, %v3211
    %v3231 = vadd.f32 %v3181, %v3213
    %v3232 = vadd.f32 %v3182, %v3215
    %v3233 = vadd.f32 %v3183, %v3217
    %s3234 = sld [smem:[#allocation4 + $0x4a]]
    %v3235 = vstv %s3234
    %v3236 = vmul.f32 %v3235, %v3158
    %v3237 = vmul.f32 %v3235, %v3159
    %v3238 = vmul.f32 %v3235, %v3160
    %v3239 = vmul.f32 %v3235, %v3161
    %v3240 = vmul.f32 %v3235, %v3162
    %v3241 = vmul.f32 %v3235, %v3163
    %v3242 = vmul.f32 %v3235, %v3164
    %v3243 = vmul.f32 %v3235, %v3165
    %3252 = vrot.lane.b32.xlu0 %v3236, 126
    %v3253 = vpop.permute.xlu0 %3252
    %3254 = vrot.lane.b32.xlu0 %v3237, 126
    %v3255 = vpop.permute.xlu0 %3254
    %3256 = vrot.lane.b32.xlu0 %v3238, 126
    %v3257 = vpop.permute.xlu0 %3256
    %3258 = vrot.lane.b32.xlu0 %v3239, 126
    %v3259 = vpop.permute.xlu0 %3258
    %3260 = vrot.lane.b32.xlu0 %v3240, 126
    %v3261 = vpop.permute.xlu0 %3260
    %3262 = vrot.lane.b32.xlu0 %v3241, 126
    %v3263 = vpop.permute.xlu0 %3262
    %3264 = vrot.lane.b32.xlu0 %v3242, 126
    %v3265 = vpop.permute.xlu0 %3264
    %3266 = vrot.lane.b32.xlu0 %v3243, 126
    %v3267 = vpop.permute.xlu0 %3266
    %v3276 = vadd.f32 %v3226, %v3253
    %v3277 = vadd.f32 %v3227, %v3255
    %v3278 = vadd.f32 %v3228, %v3257
    %v3279 = vadd.f32 %v3229, %v3259
    %v3280 = vadd.f32 %v3230, %v3261
    %v3281 = vadd.f32 %v3231, %v3263
    %v3282 = vadd.f32 %v3232, %v3265
    %v3283 = vadd.f32 %v3233, %v3267
    %v3284 = vld [vmem:[%s835 + $0x1] sm:$0xff]
    %v3285 = vld [vmem:[%s835 + $0x9] sm:$0xff]
    %v3286 = vld [vmem:[%s835 + $0x11] sm:$0xff]
    %v3287 = vld [vmem:[%s835 + $0x19] sm:$0xff]
    %v3288 = vld [vmem:[%s835 + $0x79] sm:$0xff]
    %v3289 = vld [vmem:[%s835 + $0x81] sm:$0xff]
    %v3290 = vld [vmem:[%s835 + $0x89] sm:$0xff]
    %v3291 = vld [vmem:[%s835 + $0x91] sm:$0xff]
    %s3292 = sld [smem:[#allocation4 + $0x4b]]
    %v3293 = vstv %s3292
    %v3294 = vmul.f32 %v3293, %v3284
    %v3295 = vmul.f32 %v3293, %v3285
    %v3296 = vmul.f32 %v3293, %v3286
    %v3297 = vmul.f32 %v3293, %v3287
    %v3298 = vmul.f32 %v3293, %v3288
    %v3299 = vmul.f32 %v3293, %v3289
    %v3300 = vmul.f32 %v3293, %v3290
    %v3301 = vmul.f32 %v3293, %v3291
    %v3302 = vadd.f32 %v3276, %v3294
    %v3303 = vadd.f32 %v3277, %v3295
    %v3304 = vadd.f32 %v3278, %v3296
    %v3305 = vadd.f32 %v3279, %v3297
    %v3306 = vadd.f32 %v3280, %v3298
    %v3307 = vadd.f32 %v3281, %v3299
    %v3308 = vadd.f32 %v3282, %v3300
    %v3309 = vadd.f32 %v3283, %v3301
    %s3310 = sld [smem:[#allocation4 + $0x4c]]
    %v3311 = vstv %s3310
    %v3312 = vmul.f32 %v3311, %v3284
    %v3313 = vmul.f32 %v3311, %v3285
    %v3314 = vmul.f32 %v3311, %v3286
    %v3315 = vmul.f32 %v3311, %v3287
    %v3316 = vmul.f32 %v3311, %v3288
    %v3317 = vmul.f32 %v3311, %v3289
    %v3318 = vmul.f32 %v3311, %v3290
    %v3319 = vmul.f32 %v3311, %v3291
    %3328 = vrot.lane.b32.xlu0 %v3312, 127
    %v3329 = vpop.permute.xlu0 %3328
    %3330 = vrot.lane.b32.xlu0 %v3313, 127
    %v3331 = vpop.permute.xlu0 %3330
    %3332 = vrot.lane.b32.xlu0 %v3314, 127
    %v3333 = vpop.permute.xlu0 %3332
    %3334 = vrot.lane.b32.xlu0 %v3315, 127
    %v3335 = vpop.permute.xlu0 %3334
    %3336 = vrot.lane.b32.xlu0 %v3316, 127
    %v3337 = vpop.permute.xlu0 %3336
    %3338 = vrot.lane.b32.xlu0 %v3317, 127
    %v3339 = vpop.permute.xlu0 %3338
    %3340 = vrot.lane.b32.xlu0 %v3318, 127
    %v3341 = vpop.permute.xlu0 %3340
    %3342 = vrot.lane.b32.xlu0 %v3319, 127
    %v3343 = vpop.permute.xlu0 %3342
    %v3352 = vadd.f32 %v3302, %v3329
    %v3353 = vadd.f32 %v3303, %v3331
    %v3354 = vadd.f32 %v3304, %v3333
    %v3355 = vadd.f32 %v3305, %v3335
    %v3356 = vadd.f32 %v3306, %v3337
    %v3357 = vadd.f32 %v3307, %v3339
    %v3358 = vadd.f32 %v3308, %v3341
    %v3359 = vadd.f32 %v3309, %v3343
    %s3360 = sld [smem:[#allocation4 + $0x4d]]
    %v3361 = vstv %s3360
    %v3362 = vmul.f32 %v3361, %v3284
    %v3363 = vmul.f32 %v3361, %v3285
    %v3364 = vmul.f32 %v3361, %v3286
    %v3365 = vmul.f32 %v3361, %v3287
    %v3366 = vmul.f32 %v3361, %v3288
    %v3367 = vmul.f32 %v3361, %v3289
    %v3368 = vmul.f32 %v3361, %v3290
    %v3369 = vmul.f32 %v3361, %v3291
    %3378 = vrot.lane.b32.xlu0 %v3362, 126
    %v3379 = vpop.permute.xlu0 %3378
    %3380 = vrot.lane.b32.xlu0 %v3363, 126
    %v3381 = vpop.permute.xlu0 %3380
    %3382 = vrot.lane.b32.xlu0 %v3364, 126
    %v3383 = vpop.permute.xlu0 %3382
    %3384 = vrot.lane.b32.xlu0 %v3365, 126
    %v3385 = vpop.permute.xlu0 %3384
    %3386 = vrot.lane.b32.xlu0 %v3366, 126
    %v3387 = vpop.permute.xlu0 %3386
    %3388 = vrot.lane.b32.xlu0 %v3367, 126
    %v3389 = vpop.permute.xlu0 %3388
    %3390 = vrot.lane.b32.xlu0 %v3368, 126
    %v3391 = vpop.permute.xlu0 %3390
    %3392 = vrot.lane.b32.xlu0 %v3369, 126
    %v3393 = vpop.permute.xlu0 %3392
    %v3402 = vadd.f32 %v3352, %v3379
    %v3403 = vadd.f32 %v3353, %v3381
    %v3404 = vadd.f32 %v3354, %v3383
    %v3405 = vadd.f32 %v3355, %v3385
    %v3406 = vadd.f32 %v3356, %v3387
    %v3407 = vadd.f32 %v3357, %v3389
    %v3408 = vadd.f32 %v3358, %v3391
    %v3409 = vadd.f32 %v3359, %v3393
    %v3410 = vld [vmem:[%s835 + $0x2] sm:$0xff]
    %v3411 = vld [vmem:[%s835 + $0xa] sm:$0xff]
    %v3412 = vld [vmem:[%s835 + $0x12] sm:$0xff]
    %v3413 = vld [vmem:[%s835 + $0x1a] sm:$0xff]
    %v3414 = vld [vmem:[%s835 + $0x7a] sm:$0xff]
    %v3415 = vld [vmem:[%s835 + $0x82] sm:$0xff]
    %v3416 = vld [vmem:[%s835 + $0x8a] sm:$0xff]
    %v3417 = vld [vmem:[%s835 + $0x92] sm:$0xff]
    %s3418 = sld [smem:[#allocation4 + $0x4e]]
    %v3419 = vstv %s3418
    %v3420 = vmul.f32 %v3419, %v3410
    %v3421 = vmul.f32 %v3419, %v3411
    %v3422 = vmul.f32 %v3419, %v3412
    %v3423 = vmul.f32 %v3419, %v3413
    %v3424 = vmul.f32 %v3419, %v3414
    %v3425 = vmul.f32 %v3419, %v3415
    %v3426 = vmul.f32 %v3419, %v3416
    %v3427 = vmul.f32 %v3419, %v3417
    %v3428 = vadd.f32 %v3402, %v3420
    %v3429 = vadd.f32 %v3403, %v3421
    %v3430 = vadd.f32 %v3404, %v3422
    %v3431 = vadd.f32 %v3405, %v3423
    %v3432 = vadd.f32 %v3406, %v3424
    %v3433 = vadd.f32 %v3407, %v3425
    %v3434 = vadd.f32 %v3408, %v3426
    %v3435 = vadd.f32 %v3409, %v3427
    %s3436 = sld [smem:[#allocation4 + $0x4f]]
    %v3437 = vstv %s3436
    %v3438 = vmul.f32 %v3437, %v3410
    %v3439 = vmul.f32 %v3437, %v3411
    %v3440 = vmul.f32 %v3437, %v3412
    %v3441 = vmul.f32 %v3437, %v3413
    %v3442 = vmul.f32 %v3437, %v3414
    %v3443 = vmul.f32 %v3437, %v3415
    %v3444 = vmul.f32 %v3437, %v3416
    %v3445 = vmul.f32 %v3437, %v3417
    %3454 = vrot.lane.b32.xlu0 %v3438, 127
    %v3455 = vpop.permute.xlu0 %3454
    %3456 = vrot.lane.b32.xlu0 %v3439, 127
    %v3457 = vpop.permute.xlu0 %3456
    %3458 = vrot.lane.b32.xlu0 %v3440, 127
    %v3459 = vpop.permute.xlu0 %3458
    %3460 = vrot.lane.b32.xlu0 %v3441, 127
    %v3461 = vpop.permute.xlu0 %3460
    %3462 = vrot.lane.b32.xlu0 %v3442, 127
    %v3463 = vpop.permute.xlu0 %3462
    %3464 = vrot.lane.b32.xlu0 %v3443, 127
    %v3465 = vpop.permute.xlu0 %3464
    %3466 = vrot.lane.b32.xlu0 %v3444, 127
    %v3467 = vpop.permute.xlu0 %3466
    %3468 = vrot.lane.b32.xlu0 %v3445, 127
    %v3469 = vpop.permute.xlu0 %3468
    %v3478 = vadd.f32 %v3428, %v3455
    %v3479 = vadd.f32 %v3429, %v3457
    %v3480 = vadd.f32 %v3430, %v3459
    %v3481 = vadd.f32 %v3431, %v3461
    %v3482 = vadd.f32 %v3432, %v3463
    %v3483 = vadd.f32 %v3433, %v3465
    %v3484 = vadd.f32 %v3434, %v3467
    %v3485 = vadd.f32 %v3435, %v3469
    %s3486 = sld [smem:[#allocation4 + $0x50]]
    %v3487 = vstv %s3486
    %v3488 = vmul.f32 %v3487, %v3410
    %v3489 = vmul.f32 %v3487, %v3411
    %v3490 = vmul.f32 %v3487, %v3412
    %v3491 = vmul.f32 %v3487, %v3413
    %v3492 = vmul.f32 %v3487, %v3414
    %v3493 = vmul.f32 %v3487, %v3415
    %v3494 = vmul.f32 %v3487, %v3416
    %v3495 = vmul.f32 %v3487, %v3417
    %3504 = vrot.lane.b32.xlu0 %v3488, 126
    %v3505 = vpop.permute.xlu0 %3504
    %3506 = vrot.lane.b32.xlu0 %v3489, 126
    %v3507 = vpop.permute.xlu0 %3506
    %3508 = vrot.lane.b32.xlu0 %v3490, 126
    %v3509 = vpop.permute.xlu0 %3508
    %3510 = vrot.lane.b32.xlu0 %v3491, 126
    %v3511 = vpop.permute.xlu0 %3510
    %3512 = vrot.lane.b32.xlu0 %v3492, 126
    %v3513 = vpop.permute.xlu0 %3512
    %3514 = vrot.lane.b32.xlu0 %v3493, 126
    %v3515 = vpop.permute.xlu0 %3514
    %3516 = vrot.lane.b32.xlu0 %v3494, 126
    %v3517 = vpop.permute.xlu0 %3516
    %3518 = vrot.lane.b32.xlu0 %v3495, 126
    %v3519 = vpop.permute.xlu0 %3518
    %v3528 = vadd.f32 %v3478, %v3505
    %v3529 = vadd.f32 %v3479, %v3507
    %v3530 = vadd.f32 %v3480, %v3509
    %v3531 = vadd.f32 %v3481, %v3511
    %v3532 = vadd.f32 %v3482, %v3513
    %v3533 = vadd.f32 %v3483, %v3515
    %v3534 = vadd.f32 %v3484, %v3517
    %v3535 = vadd.f32 %v3485, %v3519
    %s3536 = sld [smem:[#allocation7 + $0x2]]
    %v3537 = vstv %s3536
    %v3538 = vadd.f32 %v3528, %v3537
    %v3539 = vadd.f32 %v3529, %v3537
    %v3540 = vadd.f32 %v3530, %v3537
    %v3541 = vadd.f32 %v3531, %v3537
    %v3542 = vadd.f32 %v3532, %v3537
    %v3543 = vadd.f32 %v3533, %v3537
    %v3544 = vadd.f32 %v3534, %v3537
    %v3545 = vadd.f32 %v3535, %v3537
    %v3546 = vmax.f32 %v3538, 0.0
    %v3547 = vmax.f32 %v3539, 0.0
    %v3548 = vmax.f32 %v3540, 0.0
    %v3549 = vmax.f32 %v3541, 0.0
    %v3550 = vmax.f32 %v3542, 0.0
    %v3551 = vmax.f32 %v3543, 0.0
    %v3552 = vmax.f32 %v3544, 0.0
    %v3553 = vmax.f32 %v3545, 0.0
    %s3554 = scalar_lea.vmem [#allocation2], 80
    %3555 = vst.msk [vmem:[%s3554] sm:$0xff] %vm1232, %v3546
    %3556 = vst.msk [vmem:[%s3554 + $0x8] sm:$0xff] %vm1232, %v3547
    %3557 = vst.msk [vmem:[%s3554 + $0x10] sm:$0xff] %vm1232, %v3548
    %3558 = vst.msk [vmem:[%s3554 + $0x18] sm:$0xff] %vm1232, %v3549
    %3559 = vst.msk [vmem:[%s3554 + $0x78] sm:$0xff] %vm1232, %v3550
    %3560 = vst.msk [vmem:[%s3554 + $0x80] sm:$0xff] %vm1232, %v3551
    %3561 = vst.msk [vmem:[%s3554 + $0x88] sm:$0xff] %vm1232, %v3552
    %3562 = vst.msk [vmem:[%s3554 + $0x90] sm:$0xff] %vm1232, %v3553
    %v3563 = vld [vmem:[#allocation2] sm:$0x1]
    %v3564 = vld [vmem:[#allocation2 + $0x78] sm:$0x1]
    %v3565 = vld [vmem:[#allocation2 + $0x1] sm:$0x1]
    %v3566 = vld [vmem:[#allocation2 + $0x79] sm:$0x1]
    %v3567 = vmax.f32 %v3563, %v3565
    %v3568 = vmax.f32 %v3564, %v3566
    %v3569 = vld [vmem:[#allocation2 + $0x2] sm:$0x1]
    %v3570 = vld [vmem:[#allocation2 + $0x7a] sm:$0x1]
    %v3571 = vmax.f32 %v3567, %v3569
    %v3572 = vmax.f32 %v3568, %v3570
    %3575 = vrot.lane.b32.xlu0 %v3571, 127
    %v3576 = vpop.permute.xlu0 %3575
    %3577 = vrot.lane.b32.xlu0 %v3572, 127
    %v3578 = vpop.permute.xlu0 %3577
    %v3581 = vmax.f32 %v3571, %v3576
    %v3582 = vmax.f32 %v3572, %v3578
    %3583 = vrot.lane.b32.xlu0 %v3571, 126
    %v3584 = vpop.permute.xlu0 %3583
    %3585 = vrot.lane.b32.xlu0 %v3572, 126
    %v3586 = vpop.permute.xlu0 %3585
    %v3589 = vmax.f32 %v3581, %v3584
    %v3590 = vmax.f32 %v3582, %v3586
    %vm3593 = vcmask 1044484
    %v3594 = vsel %vm3593, %v3589, %v3589
    %vm3595 = vcmask 1046534
    %v3596 = vsel %vm3595, %v3589, %v3594
    %v3597 = vrot.slane %v3590, 7
    %vm3598 = vcmask 1041409
    %v3599 = vsel %vm3598, %v3597, %v3596
    %vm3600 = vcmask 1043459
    %v3601 = vsel %vm3600, %v3597, %v3599
    %vm3602 = vcmask 1045509
    %v3603 = vsel %vm3602, %v3597, %v3601
    %vm3604 = vcmask 1047559
    %v3605 = vsel %vm3604, %v3597, %v3603
    %vm3607 = vcmask 254976
    %3608 = vst.msk [vmem:[#allocation3] sm:$0x3] %vm3607, %v3605
    %v3609 = vld [vmem:[#allocation2 + $0x2] sm:$0x1]
    %v3610 = vld [vmem:[#allocation2 + $0x7a] sm:$0x1]
    %v3611 = vld [vmem:[#allocation2 + $0x3] sm:$0x1]
    %v3612 = vld [vmem:[#allocation2 + $0x7b] sm:$0x1]
    %v3613 = vmax.f32 %v3609, %v3611
    %v3614 = vmax.f32 %v3610, %v3612
    %v3615 = vld [vmem:[#allocation2 + $0x4] sm:$0x1]
    %v3616 = vld [vmem:[#allocation2 + $0x7c] sm:$0x1]
    %v3617 = vmax.f32 %v3613, %v3615
    %v3618 = vmax.f32 %v3614, %v3616
    %3621 = vrot.lane.b32.xlu0 %v3617, 127
    %v3622 = vpop.permute.xlu0 %3621
    %3623 = vrot.lane.b32.xlu0 %v3618, 127
    %v3624 = vpop.permute.xlu0 %3623
    %v3627 = vmax.f32 %v3617, %v3622
    %v3628 = vmax.f32 %v3618, %v3624
    %3629 = vrot.lane.b32.xlu0 %v3617, 126
    %v3630 = vpop.permute.xlu0 %3629
    %3631 = vrot.lane.b32.xlu0 %v3618, 126
    %v3632 = vpop.permute.xlu0 %3631
    %v3635 = vmax.f32 %v3627, %v3630
    %v3636 = vmax.f32 %v3628, %v3632
    %v3639 = vsel %vm3593, %v3635, %v3635
    %v3640 = vsel %vm3595, %v3635, %v3639
    %v3641 = vrot.slane %v3636, 7
    %v3642 = vsel %vm3598, %v3641, %v3640
    %v3643 = vsel %vm3600, %v3641, %v3642
    %v3644 = vsel %vm3602, %v3641, %v3643
    %v3645 = vsel %vm3604, %v3641, %v3644
    %3646 = vrot.lane.b32.xlu0 %v3645, 32
    %v3647 = vpop.permute.xlu0 %3646
    %vm3649 = vcmask 517376
    %3650 = vst.msk [vmem:[#allocation3] sm:$0x3] %vm3649, %v3647
    %v3651 = vld [vmem:[#allocation2 + $0x4] sm:$0x1]
    %v3652 = vld [vmem:[#allocation2 + $0x7c] sm:$0x1]
    %v3653 = vld [vmem:[#allocation2 + $0x5] sm:$0x1]
    %v3654 = vld [vmem:[#allocation2 + $0x7d] sm:$0x1]
    %v3655 = vmax.f32 %v3651, %v3653
    %v3656 = vmax.f32 %v3652, %v3654
    %v3657 = vld [vmem:[#allocation2 + $0x6] sm:$0x1]
    %v3658 = vld [vmem:[#allocation2 + $0x7e] sm:$0x1]
    %v3659 = vmax.f32 %v3655, %v3657
    %v3660 = vmax.f32 %v3656, %v3658
    %3663 = vrot.lane.b32.xlu0 %v3659, 127
    %v3664 = vpop.permute.xlu0 %3663
    %3665 = vrot.lane.b32.xlu0 %v3660, 127
    %v3666 = vpop.permute.xlu0 %3665
    %v3669 = vmax.f32 %v3659, %v3664
    %v3670 = vmax.f32 %v3660, %v3666
    %3671 = vrot.lane.b32.xlu0 %v3659, 126
    %v3672 = vpop.permute.xlu0 %3671
    %3673 = vrot.lane.b32.xlu0 %v3660, 126
    %v3674 = vpop.permute.xlu0 %3673
    %v3677 = vmax.f32 %v3669, %v3672
    %v3678 = vmax.f32 %v3670, %v3674
    %v3681 = vsel %vm3593, %v3677, %v3677
    %v3682 = vsel %vm3595, %v3677, %v3681
    %v3683 = vrot.slane %v3678, 7
    %v3684 = vsel %vm3598, %v3683, %v3682
    %v3685 = vsel %vm3600, %v3683, %v3684
    %v3686 = vsel %vm3602, %v3683, %v3685
    %v3687 = vsel %vm3604, %v3683, %v3686
    %3688 = vrot.lane.b32.xlu0 %v3687, 64
    %v3689 = vpop.permute.xlu0 %3688
    %vm3691 = vcmask 779776
    %3692 = vst.msk [vmem:[#allocation3] sm:$0x3] %vm3691, %v3689
    %v3693 = vld [vmem:[#allocation2 + $0x6] sm:$0x1]
    %v3694 = vld [vmem:[#allocation2 + $0x7e] sm:$0x1]
    %v3695 = vld [vmem:[#allocation2 + $0x7] sm:$0x1]
    %v3696 = vld [vmem:[#allocation2 + $0x7f] sm:$0x1]
    %v3697 = vmax.f32 %v3693, %v3695
    %v3698 = vmax.f32 %v3694, %v3696
    %v3699 = vld [vmem:[#allocation2 + $0x8] sm:$0x1]
    %v3700 = vld [vmem:[#allocation2 + $0x80] sm:$0x1]
    %v3701 = vmax.f32 %v3697, %v3699
    %v3702 = vmax.f32 %v3698, %v3700
    %3705 = vrot.lane.b32.xlu0 %v3701, 127
    %v3706 = vpop.permute.xlu0 %3705
    %3707 = vrot.lane.b32.xlu0 %v3702, 127
    %v3708 = vpop.permute.xlu0 %3707
    %v3711 = vmax.f32 %v3701, %v3706
    %v3712 = vmax.f32 %v3702, %v3708
    %3713 = vrot.lane.b32.xlu0 %v3701, 126
    %v3714 = vpop.permute.xlu0 %3713
    %3715 = vrot.lane.b32.xlu0 %v3702, 126
    %v3716 = vpop.permute.xlu0 %3715
    %v3719 = vmax.f32 %v3711, %v3714
    %v3720 = vmax.f32 %v3712, %v3716
    %v3723 = vsel %vm3593, %v3719, %v3719
    %v3724 = vsel %vm3595, %v3719, %v3723
    %v3725 = vrot.slane %v3720, 7
    %v3726 = vsel %vm3598, %v3725, %v3724
    %v3727 = vsel %vm3600, %v3725, %v3726
    %v3728 = vsel %vm3602, %v3725, %v3727
    %v3729 = vsel %vm3604, %v3725, %v3728
    %3730 = vrot.lane.b32.xlu0 %v3729, 96
    %v3731 = vpop.permute.xlu0 %3730
    %vm3733 = vcmask 1042176
    %3734 = vst.msk [vmem:[#allocation3] sm:$0x3] %vm3733, %v3731
    %v3735 = vld [vmem:[#allocation2 + $0x8] sm:$0x1]
    %v3736 = vld [vmem:[#allocation2 + $0x80] sm:$0x1]
    %v3737 = vld [vmem:[#allocation2 + $0x9] sm:$0x1]
    %v3738 = vld [vmem:[#allocation2 + $0x81] sm:$0x1]
    %v3739 = vmax.f32 %v3735, %v3737
    %v3740 = vmax.f32 %v3736, %v3738
    %v3741 = vld [vmem:[#allocation2 + $0xa] sm:$0x1]
    %v3742 = vld [vmem:[#allocation2 + $0x82] sm:$0x1]
    %v3743 = vmax.f32 %v3739, %v3741
    %v3744 = vmax.f32 %v3740, %v3742
    %3747 = vrot.lane.b32.xlu0 %v3743, 127
    %v3748 = vpop.permute.xlu0 %3747
    %3749 = vrot.lane.b32.xlu0 %v3744, 127
    %v3750 = vpop.permute.xlu0 %3749
    %v3753 = vmax.f32 %v3743, %v3748
    %v3754 = vmax.f32 %v3744, %v3750
    %3755 = vrot.lane.b32.xlu0 %v3743, 126
    %v3756 = vpop.permute.xlu0 %3755
    %3757 = vrot.lane.b32.xlu0 %v3744, 126
    %v3758 = vpop.permute.xlu0 %3757
    %v3761 = vmax.f32 %v3753, %v3756
    %v3762 = vmax.f32 %v3754, %v3758
    %v3765 = vsel %vm3593, %v3761, %v3761
    %v3766 = vsel %vm3595, %v3761, %v3765
    %v3767 = vrot.slane %v3762, 7
    %v3768 = vsel %vm3598, %v3767, %v3766
    %v3769 = vsel %vm3600, %v3767, %v3768
    %v3770 = vsel %vm3602, %v3767, %v3769
    %v3771 = vsel %vm3604, %v3767, %v3770
    %3773 = vst.msk [vmem:[#allocation3 + $0x2] sm:$0x3] %vm3607, %v3771
    %v3774 = vld [vmem:[#allocation2 + $0xa] sm:$0x1]
    %v3775 = vld [vmem:[#allocation2 + $0x82] sm:$0x1]
    %v3776 = vld [vmem:[#allocation2 + $0xb] sm:$0x1]
    %v3777 = vld [vmem:[#allocation2 + $0x83] sm:$0x1]
    %v3778 = vmax.f32 %v3774, %v3776
    %v3779 = vmax.f32 %v3775, %v3777
    %v3780 = vld [vmem:[#allocation2 + $0xc] sm:$0x1]
    %v3781 = vld [vmem:[#allocation2 + $0x84] sm:$0x1]
    %v3782 = vmax.f32 %v3778, %v3780
    %v3783 = vmax.f32 %v3779, %v3781
    %3786 = vrot.lane.b32.xlu0 %v3782, 127
    %v3787 = vpop.permute.xlu0 %3786
    %3788 = vrot.lane.b32.xlu0 %v3783, 127
    %v3789 = vpop.permute.xlu0 %3788
    %v3792 = vmax.f32 %v3782, %v3787
    %v3793 = vmax.f32 %v3783, %v3789
    %3794 = vrot.lane.b32.xlu0 %v3782, 126
    %v3795 = vpop.permute.xlu0 %3794
    %3796 = vrot.lane.b32.xlu0 %v3783, 126
    %v3797 = vpop.permute.xlu0 %3796
    %v3800 = vmax.f32 %v3792, %v3795
    %v3801 = vmax.f32 %v3793, %v3797
    %v3804 = vsel %vm3593, %v3800, %v3800
    %v3805 = vsel %vm3595, %v3800, %v3804
    %v3806 = vrot.slane %v3801, 7
    %v3807 = vsel %vm3598, %v3806, %v3805
    %v3808 = vsel %vm3600, %v3806, %v3807
    %v3809 = vsel %vm3602, %v3806, %v3808
    %v3810 = vsel %vm3604, %v3806, %v3809
    %3811 = vrot.lane.b32.xlu0 %v3810, 32
    %v3812 = vpop.permute.xlu0 %3811
    %3814 = vst.msk [vmem:[#allocation3 + $0x2] sm:$0x3] %vm3649, %v3812
    %v3815 = vld [vmem:[#allocation2 + $0xc] sm:$0x1]
    %v3816 = vld [vmem:[#allocation2 + $0x84] sm:$0x1]
    %v3817 = vld [vmem:[#allocation2 + $0xd] sm:$0x1]
    %v3818 = vld [vmem:[#allocation2 + $0x85] sm:$0x1]
    %v3819 = vmax.f32 %v3815, %v3817
    %v3820 = vmax.f32 %v3816, %v3818
    %v3821 = vld [vmem:[#allocation2 + $0xe] sm:$0x1]
    %v3822 = vld [vmem:[#allocation2 + $0x86] sm:$0x1]
    %v3823 = vmax.f32 %v3819, %v3821
    %v3824 = vmax.f32 %v3820, %v3822
    %3827 = vrot.lane.b32.xlu0 %v3823, 127
    %v3828 = vpop.permute.xlu0 %3827
    %3829 = vrot.lane.b32.xlu0 %v3824, 127
    %v3830 = vpop.permute.xlu0 %3829
    %v3833 = vmax.f32 %v3823, %v3828
    %v3834 = vmax.f32 %v3824, %v3830
    %3835 = vrot.lane.b32.xlu0 %v3823, 126
    %v3836 = vpop.permute.xlu0 %3835
    %3837 = vrot.lane.b32.xlu0 %v3824, 126
    %v3838 = vpop.permute.xlu0 %3837
    %v3841 = vmax.f32 %v3833, %v3836
    %v3842 = vmax.f32 %v3834, %v3838
    %v3845 = vsel %vm3593, %v3841, %v3841
    %v3846 = vsel %vm3595, %v3841, %v3845
    %v3847 = vrot.slane %v3842, 7
    %v3848 = vsel %vm3598, %v3847, %v3846
    %v3849 = vsel %vm3600, %v3847, %v3848
    %v3850 = vsel %vm3602, %v3847, %v3849
    %v3851 = vsel %vm3604, %v3847, %v3850
    %3852 = vrot.lane.b32.xlu0 %v3851, 64
    %v3853 = vpop.permute.xlu0 %3852
    %3855 = vst.msk [vmem:[#allocation3 + $0x2] sm:$0x3] %vm3691, %v3853
    %v3856 = vld [vmem:[#allocation2 + $0xe] sm:$0x1]
    %v3857 = vld [vmem:[#allocation2 + $0x86] sm:$0x1]
    %v3858 = vld [vmem:[#allocation2 + $0xf] sm:$0x1]
    %v3859 = vld [vmem:[#allocation2 + $0x87] sm:$0x1]
    %v3860 = vmax.f32 %v3856, %v3858
    %v3861 = vmax.f32 %v3857, %v3859
    %v3862 = vld [vmem:[#allocation2 + $0x10] sm:$0x1]
    %v3863 = vld [vmem:[#allocation2 + $0x88] sm:$0x1]
    %v3864 = vmax.f32 %v3860, %v3862
    %v3865 = vmax.f32 %v3861, %v3863
    %3868 = vrot.lane.b32.xlu0 %v3864, 127
    %v3869 = vpop.permute.xlu0 %3868
    %3870 = vrot.lane.b32.xlu0 %v3865, 127
    %v3871 = vpop.permute.xlu0 %3870
    %v3874 = vmax.f32 %v3864, %v3869
    %v3875 = vmax.f32 %v3865, %v3871
    %3876 = vrot.lane.b32.xlu0 %v3864, 126
    %v3877 = vpop.permute.xlu0 %3876
    %3878 = vrot.lane.b32.xlu0 %v3865, 126
    %v3879 = vpop.permute.xlu0 %3878
    %v3882 = vmax.f32 %v3874, %v3877
    %v3883 = vmax.f32 %v3875, %v3879
    %v3886 = vsel %vm3593, %v3882, %v3882
    %v3887 = vsel %vm3595, %v3882, %v3886
    %v3888 = vrot.slane %v3883, 7
    %v3889 = vsel %vm3598, %v3888, %v3887
    %v3890 = vsel %vm3600, %v3888, %v3889
    %v3891 = vsel %vm3602, %v3888, %v3890
    %v3892 = vsel %vm3604, %v3888, %v3891
    %3893 = vrot.lane.b32.xlu0 %v3892, 96
    %v3894 = vpop.permute.xlu0 %3893
    %3896 = vst.msk [vmem:[#allocation3 + $0x2] sm:$0x3] %vm3733, %v3894
    %v3897 = vld [vmem:[#allocation2 + $0x10] sm:$0x1]
    %v3898 = vld [vmem:[#allocation2 + $0x88] sm:$0x1]
    %v3899 = vld [vmem:[#allocation2 + $0x11] sm:$0x1]
    %v3900 = vld [vmem:[#allocation2 + $0x89] sm:$0x1]
    %v3901 = vmax.f32 %v3897, %v3899
    %v3902 = vmax.f32 %v3898, %v3900
    %v3903 = vld [vmem:[#allocation2 + $0x12] sm:$0x1]
    %v3904 = vld [vmem:[#allocation2 + $0x8a] sm:$0x1]
    %v3905 = vmax.f32 %v3901, %v3903
    %v3906 = vmax.f32 %v3902, %v3904
    %3909 = vrot.lane.b32.xlu0 %v3905, 127
    %v3910 = vpop.permute.xlu0 %3909
    %3911 = vrot.lane.b32.xlu0 %v3906, 127
    %v3912 = vpop.permute.xlu0 %3911
    %v3915 = vmax.f32 %v3905, %v3910
    %v3916 = vmax.f32 %v3906, %v3912
    %3917 = vrot.lane.b32.xlu0 %v3905, 126
    %v3918 = vpop.permute.xlu0 %3917
    %3919 = vrot.lane.b32.xlu0 %v3906, 126
    %v3920 = vpop.permute.xlu0 %3919
    %v3923 = vmax.f32 %v3915, %v3918
    %v3924 = vmax.f32 %v3916, %v3920
    %v3927 = vsel %vm3593, %v3923, %v3923
    %v3928 = vsel %vm3595, %v3923, %v3927
    %v3929 = vrot.slane %v3924, 7
    %v3930 = vsel %vm3598, %v3929, %v3928
    %v3931 = vsel %vm3600, %v3929, %v3930
    %v3932 = vsel %vm3602, %v3929, %v3931
    %v3933 = vsel %vm3604, %v3929, %v3932
    %3935 = vst.msk [vmem:[#allocation3 + $0x4] sm:$0x3] %vm3607, %v3933
    %v3936 = vld [vmem:[#allocation2 + $0x12] sm:$0x1]
    %v3937 = vld [vmem:[#allocation2 + $0x8a] sm:$0x1]
    %v3938 = vld [vmem:[#allocation2 + $0x13] sm:$0x1]
    %v3939 = vld [vmem:[#allocation2 + $0x8b] sm:$0x1]
    %v3940 = vmax.f32 %v3936, %v3938
    %v3941 = vmax.f32 %v3937, %v3939
    %v3942 = vld [vmem:[#allocation2 + $0x14] sm:$0x1]
    %v3943 = vld [vmem:[#allocation2 + $0x8c] sm:$0x1]
    %v3944 = vmax.f32 %v3940, %v3942
    %v3945 = vmax.f32 %v3941, %v3943
    %3948 = vrot.lane.b32.xlu0 %v3944, 127
    %v3949 = vpop.permute.xlu0 %3948
    %3950 = vrot.lane.b32.xlu0 %v3945, 127
    %v3951 = vpop.permute.xlu0 %3950
    %v3954 = vmax.f32 %v3944, %v3949
    %v3955 = vmax.f32 %v3945, %v3951
    %3956 = vrot.lane.b32.xlu0 %v3944, 126
    %v3957 = vpop.permute.xlu0 %3956
    %3958 = vrot.lane.b32.xlu0 %v3945, 126
    %v3959 = vpop.permute.xlu0 %3958
    %v3962 = vmax.f32 %v3954, %v3957
    %v3963 = vmax.f32 %v3955, %v3959
    %v3966 = vsel %vm3593, %v3962, %v3962
    %v3967 = vsel %vm3595, %v3962, %v3966
    %v3968 = vrot.slane %v3963, 7
    %v3969 = vsel %vm3598, %v3968, %v3967
    %v3970 = vsel %vm3600, %v3968, %v3969
    %v3971 = vsel %vm3602, %v3968, %v3970
    %v3972 = vsel %vm3604, %v3968, %v3971
    %3973 = vrot.lane.b32.xlu0 %v3972, 32
    %v3974 = vpop.permute.xlu0 %3973
    %3976 = vst.msk [vmem:[#allocation3 + $0x4] sm:$0x3] %vm3649, %v3974
    %v3977 = vld [vmem:[#allocation2 + $0x14] sm:$0x1]
    %v3978 = vld [vmem:[#allocation2 + $0x8c] sm:$0x1]
    %v3979 = vld [vmem:[#allocation2 + $0x15] sm:$0x1]
    %v3980 = vld [vmem:[#allocation2 + $0x8d] sm:$0x1]
    %v3981 = vmax.f32 %v3977, %v3979
    %v3982 = vmax.f32 %v3978, %v3980
    %v3983 = vld [vmem:[#allocation2 + $0x16] sm:$0x1]
    %v3984 = vld [vmem:[#allocation2 + $0x8e] sm:$0x1]
    %v3985 = vmax.f32 %v3981, %v3983
    %v3986 = vmax.f32 %v3982, %v3984
    %3989 = vrot.lane.b32.xlu0 %v3985, 127
    %v3990 = vpop.permute.xlu0 %3989
    %3991 = vrot.lane.b32.xlu0 %v3986, 127
    %v3992 = vpop.permute.xlu0 %3991
    %v3995 = vmax.f32 %v3985, %v3990
    %v3996 = vmax.f32 %v3986, %v3992
    %3997 = vrot.lane.b32.xlu0 %v3985, 126
    %v3998 = vpop.permute.xlu0 %3997
    %3999 = vrot.lane.b32.xlu0 %v3986, 126
    %v4000 = vpop.permute.xlu0 %3999
    %v4003 = vmax.f32 %v3995, %v3998
    %v4004 = vmax.f32 %v3996, %v4000
    %v4007 = vsel %vm3593, %v4003, %v4003
    %v4008 = vsel %vm3595, %v4003, %v4007
    %v4009 = vrot.slane %v4004, 7
    %v4010 = vsel %vm3598, %v4009, %v4008
    %v4011 = vsel %vm3600, %v4009, %v4010
    %v4012 = vsel %vm3602, %v4009, %v4011
    %v4013 = vsel %vm3604, %v4009, %v4012
    %4014 = vrot.lane.b32.xlu0 %v4013, 64
    %v4015 = vpop.permute.xlu0 %4014
    %4017 = vst.msk [vmem:[#allocation3 + $0x4] sm:$0x3] %vm3691, %v4015
    %v4018 = vld [vmem:[#allocation2 + $0x16] sm:$0x1]
    %v4019 = vld [vmem:[#allocation2 + $0x8e] sm:$0x1]
    %v4020 = vld [vmem:[#allocation2 + $0x17] sm:$0x1]
    %v4021 = vld [vmem:[#allocation2 + $0x8f] sm:$0x1]
    %v4022 = vmax.f32 %v4018, %v4020
    %v4023 = vmax.f32 %v4019, %v4021
    %v4024 = vld [vmem:[#allocation2 + $0x18] sm:$0x1]
    %v4025 = vld [vmem:[#allocation2 + $0x90] sm:$0x1]
    %v4026 = vmax.f32 %v4022, %v4024
    %v4027 = vmax.f32 %v4023, %v4025
    %4030 = vrot.lane.b32.xlu0 %v4026, 127
    %v4031 = vpop.permute.xlu0 %4030
    %4032 = vrot.lane.b32.xlu0 %v4027, 127
    %v4033 = vpop.permute.xlu0 %4032
    %v4036 = vmax.f32 %v4026, %v4031
    %v4037 = vmax.f32 %v4027, %v4033
    %4038 = vrot.lane.b32.xlu0 %v4026, 126
    %v4039 = vpop.permute.xlu0 %4038
    %4040 = vrot.lane.b32.xlu0 %v4027, 126
    %v4041 = vpop.permute.xlu0 %4040
    %v4044 = vmax.f32 %v4036, %v4039
    %v4045 = vmax.f32 %v4037, %v4041
    %v4048 = vsel %vm3593, %v4044, %v4044
    %v4049 = vsel %vm3595, %v4044, %v4048
    %v4050 = vrot.slane %v4045, 7
    %v4051 = vsel %vm3598, %v4050, %v4049
    %v4052 = vsel %vm3600, %v4050, %v4051
    %v4053 = vsel %vm3602, %v4050, %v4052
    %v4054 = vsel %vm3604, %v4050, %v4053
    %4055 = vrot.lane.b32.xlu0 %v4054, 96
    %v4056 = vpop.permute.xlu0 %4055
    %4058 = vst.msk [vmem:[#allocation3 + $0x4] sm:$0x3] %vm3733, %v4056
    %v4059 = vld [vmem:[#allocation2 + $0x18] sm:$0x1]
    %v4060 = vld [vmem:[#allocation2 + $0x90] sm:$0x1]
    %v4061 = vld [vmem:[#allocation2 + $0x19] sm:$0x1]
    %v4062 = vld [vmem:[#allocation2 + $0x91] sm:$0x1]
    %v4063 = vmax.f32 %v4059, %v4061
    %v4064 = vmax.f32 %v4060, %v4062
    %v4065 = vld [vmem:[#allocation2 + $0x1a] sm:$0x1]
    %v4066 = vld [vmem:[#allocation2 + $0x92] sm:$0x1]
    %v4067 = vmax.f32 %v4063, %v4065
    %v4068 = vmax.f32 %v4064, %v4066
    %4071 = vrot.lane.b32.xlu0 %v4067, 127
    %v4072 = vpop.permute.xlu0 %4071
    %4073 = vrot.lane.b32.xlu0 %v4068, 127
    %v4074 = vpop.permute.xlu0 %4073
    %v4077 = vmax.f32 %v4067, %v4072
    %v4078 = vmax.f32 %v4068, %v4074
    %4079 = vrot.lane.b32.xlu0 %v4067, 126
    %v4080 = vpop.permute.xlu0 %4079
    %4081 = vrot.lane.b32.xlu0 %v4068, 126
    %v4082 = vpop.permute.xlu0 %4081
    %v4085 = vmax.f32 %v4077, %v4080
    %v4086 = vmax.f32 %v4078, %v4082
    %v4089 = vsel %vm3593, %v4085, %v4085
    %v4090 = vsel %vm3595, %v4085, %v4089
    %v4091 = vrot.slane %v4086, 7
    %v4092 = vsel %vm3598, %v4091, %v4090
    %v4093 = vsel %vm3600, %v4091, %v4092
    %v4094 = vsel %vm3602, %v4091, %v4093
    %v4095 = vsel %vm3604, %v4091, %v4094
    %4097 = vst.msk [vmem:[#allocation3 + $0x6] sm:$0x3] %vm3607, %v4095
    %v4098 = vld [vmem:[#allocation2 + $0x1a] sm:$0x1]
    %v4099 = vld [vmem:[#allocation2 + $0x92] sm:$0x1]
    %v4100 = vld [vmem:[#allocation2 + $0x1b] sm:$0x1]
    %v4101 = vld [vmem:[#allocation2 + $0x93] sm:$0x1]
    %v4102 = vmax.f32 %v4098, %v4100
    %v4103 = vmax.f32 %v4099, %v4101
    %v4104 = vld [vmem:[#allocation2 + $0x1c] sm:$0x1]
    %v4105 = vld [vmem:[#allocation2 + $0x94] sm:$0x1]
    %v4106 = vmax.f32 %v4102, %v4104
    %v4107 = vmax.f32 %v4103, %v4105
    %4110 = vrot.lane.b32.xlu0 %v4106, 127
    %v4111 = vpop.permute.xlu0 %4110
    %4112 = vrot.lane.b32.xlu0 %v4107, 127
    %v4113 = vpop.permute.xlu0 %4112
    %v4116 = vmax.f32 %v4106, %v4111
    %v4117 = vmax.f32 %v4107, %v4113
    %4118 = vrot.lane.b32.xlu0 %v4106, 126
    %v4119 = vpop.permute.xlu0 %4118
    %4120 = vrot.lane.b32.xlu0 %v4107, 126
    %v4121 = vpop.permute.xlu0 %4120
    %v4124 = vmax.f32 %v4116, %v4119
    %v4125 = vmax.f32 %v4117, %v4121
    %v4128 = vsel %vm3593, %v4124, %v4124
    %v4129 = vsel %vm3595, %v4124, %v4128
    %v4130 = vrot.slane %v4125, 7
    %v4131 = vsel %vm3598, %v4130, %v4129
    %v4132 = vsel %vm3600, %v4130, %v4131
    %v4133 = vsel %vm3602, %v4130, %v4132
    %v4134 = vsel %vm3604, %v4130, %v4133
    %4135 = vrot.lane.b32.xlu0 %v4134, 32
    %v4136 = vpop.permute.xlu0 %4135
    %4138 = vst.msk [vmem:[#allocation3 + $0x6] sm:$0x3] %vm3649, %v4136
    %v4139 = vld [vmem:[#allocation2 + $0x1c] sm:$0x1]
    %v4140 = vld [vmem:[#allocation2 + $0x94] sm:$0x1]
    %v4141 = vld [vmem:[#allocation2 + $0x1d] sm:$0x1]
    %v4142 = vld [vmem:[#allocation2 + $0x95] sm:$0x1]
    %v4143 = vmax.f32 %v4139, %v4141
    %v4144 = vmax.f32 %v4140, %v4142
    %v4145 = vld [vmem:[#allocation2 + $0x1e] sm:$0x1]
    %v4146 = vld [vmem:[#allocation2 + $0x96] sm:$0x1]
    %v4147 = vmax.f32 %v4143, %v4145
    %v4148 = vmax.f32 %v4144, %v4146
    %4151 = vrot.lane.b32.xlu0 %v4147, 127
    %v4152 = vpop.permute.xlu0 %4151
    %4153 = vrot.lane.b32.xlu0 %v4148, 127
    %v4154 = vpop.permute.xlu0 %4153
    %v4157 = vmax.f32 %v4147, %v4152
    %v4158 = vmax.f32 %v4148, %v4154
    %4159 = vrot.lane.b32.xlu0 %v4147, 126
    %v4160 = vpop.permute.xlu0 %4159
    %4161 = vrot.lane.b32.xlu0 %v4148, 126
    %v4162 = vpop.permute.xlu0 %4161
    %v4165 = vmax.f32 %v4157, %v4160
    %v4166 = vmax.f32 %v4158, %v4162
    %v4169 = vsel %vm3593, %v4165, %v4165
    %v4170 = vsel %vm3595, %v4165, %v4169
    %v4171 = vrot.slane %v4166, 7
    %v4172 = vsel %vm3598, %v4171, %v4170
    %v4173 = vsel %vm3600, %v4171, %v4172
    %v4174 = vsel %vm3602, %v4171, %v4173
    %v4175 = vsel %vm3604, %v4171, %v4174
    %4176 = vrot.lane.b32.xlu0 %v4175, 64
    %v4177 = vpop.permute.xlu0 %4176
    %4179 = vst.msk [vmem:[#allocation3 + $0x6] sm:$0x3] %vm3691, %v4177
    %v4180 = vld [vmem:[#allocation2 + $0x1e] sm:$0x1]
    %v4181 = vld [vmem:[#allocation2 + $0x96] sm:$0x1]
    %v4182 = vld [vmem:[#allocation2 + $0x1f] sm:$0x1]
    %v4183 = vld [vmem:[#allocation2 + $0x97] sm:$0x1]
    %v4184 = vmax.f32 %v4180, %v4182
    %v4185 = vmax.f32 %v4181, %v4183
    %v4186 = vld [vmem:[#allocation2 + $0x20] sm:$0x1]
    %v4187 = vld [vmem:[#allocation2 + $0x98] sm:$0x1]
    %v4188 = vmax.f32 %v4184, %v4186
    %v4189 = vmax.f32 %v4185, %v4187
    %4192 = vrot.lane.b32.xlu0 %v4188, 127
    %v4193 = vpop.permute.xlu0 %4192
    %4194 = vrot.lane.b32.xlu0 %v4189, 127
    %v4195 = vpop.permute.xlu0 %4194
    %v4198 = vmax.f32 %v4188, %v4193
    %v4199 = vmax.f32 %v4189, %v4195
    %4200 = vrot.lane.b32.xlu0 %v4188, 126
    %v4201 = vpop.permute.xlu0 %4200
    %4202 = vrot.lane.b32.xlu0 %v4189, 126
    %v4203 = vpop.permute.xlu0 %4202
    %v4206 = vmax.f32 %v4198, %v4201
    %v4207 = vmax.f32 %v4199, %v4203
    %v4210 = vsel %vm3593, %v4206, %v4206
    %v4211 = vsel %vm3595, %v4206, %v4210
    %v4212 = vrot.slane %v4207, 7
    %v4213 = vsel %vm3598, %v4212, %v4211
    %v4214 = vsel %vm3600, %v4212, %v4213
    %v4215 = vsel %vm3602, %v4212, %v4214
    %v4216 = vsel %vm3604, %v4212, %v4215
    %4217 = vrot.lane.b32.xlu0 %v4216, 96
    %v4218 = vpop.permute.xlu0 %4217
    %4220 = vst.msk [vmem:[#allocation3 + $0x6] sm:$0x3] %vm3733, %v4218
    %v4221 = vld [vmem:[%s2393] sm:$0x1]
    %v4222 = vld [vmem:[%s2393 + $0x78] sm:$0x1]
    %v4223 = vld [vmem:[%s2393 + $0x1] sm:$0x1]
    %v4224 = vld [vmem:[%s2393 + $0x79] sm:$0x1]
    %v4225 = vmax.f32 %v4221, %v4223
    %v4226 = vmax.f32 %v4222, %v4224
    %v4227 = vld [vmem:[%s2393 + $0x2] sm:$0x1]
    %v4228 = vld [vmem:[%s2393 + $0x7a] sm:$0x1]
    %v4229 = vmax.f32 %v4225, %v4227
    %v4230 = vmax.f32 %v4226, %v4228
    %4233 = vrot.lane.b32.xlu0 %v4229, 127
    %v4234 = vpop.permute.xlu0 %4233
    %4235 = vrot.lane.b32.xlu0 %v4230, 127
    %v4236 = vpop.permute.xlu0 %4235
    %v4239 = vmax.f32 %v4229, %v4234
    %v4240 = vmax.f32 %v4230, %v4236
    %4241 = vrot.lane.b32.xlu0 %v4229, 126
    %v4242 = vpop.permute.xlu0 %4241
    %4243 = vrot.lane.b32.xlu0 %v4230, 126
    %v4244 = vpop.permute.xlu0 %4243
    %v4247 = vmax.f32 %v4239, %v4242
    %v4248 = vmax.f32 %v4240, %v4244
    %v4251 = vsel %vm3593, %v4247, %v4247
    %v4252 = vsel %vm3595, %v4247, %v4251
    %v4253 = vrot.slane %v4248, 7
    %v4254 = vsel %vm3598, %v4253, %v4252
    %v4255 = vsel %vm3600, %v4253, %v4254
    %v4256 = vsel %vm3602, %v4253, %v4255
    %v4257 = vsel %vm3604, %v4253, %v4256
    %4259 = vst.msk [vmem:[#allocation3 + $0x8] sm:$0x3] %vm3607, %v4257
    %v4260 = vld [vmem:[%s2393 + $0x2] sm:$0x1]
    %v4261 = vld [vmem:[%s2393 + $0x7a] sm:$0x1]
    %v4262 = vld [vmem:[%s2393 + $0x3] sm:$0x1]
    %v4263 = vld [vmem:[%s2393 + $0x7b] sm:$0x1]
    %v4264 = vmax.f32 %v4260, %v4262
    %v4265 = vmax.f32 %v4261, %v4263
    %v4266 = vld [vmem:[%s2393 + $0x4] sm:$0x1]
    %v4267 = vld [vmem:[%s2393 + $0x7c] sm:$0x1]
    %v4268 = vmax.f32 %v4264, %v4266
    %v4269 = vmax.f32 %v4265, %v4267
    %4272 = vrot.lane.b32.xlu0 %v4268, 127
    %v4273 = vpop.permute.xlu0 %4272
    %4274 = vrot.lane.b32.xlu0 %v4269, 127
    %v4275 = vpop.permute.xlu0 %4274
    %v4278 = vmax.f32 %v4268, %v4273
    %v4279 = vmax.f32 %v4269, %v4275
    %4280 = vrot.lane.b32.xlu0 %v4268, 126
    %v4281 = vpop.permute.xlu0 %4280
    %4282 = vrot.lane.b32.xlu0 %v4269, 126
    %v4283 = vpop.permute.xlu0 %4282
    %v4286 = vmax.f32 %v4278, %v4281
    %v4287 = vmax.f32 %v4279, %v4283
    %v4290 = vsel %vm3593, %v4286, %v4286
    %v4291 = vsel %vm3595, %v4286, %v4290
    %v4292 = vrot.slane %v4287, 7
    %v4293 = vsel %vm3598, %v4292, %v4291
    %v4294 = vsel %vm3600, %v4292, %v4293
    %v4295 = vsel %vm3602, %v4292, %v4294
    %v4296 = vsel %vm3604, %v4292, %v4295
    %4297 = vrot.lane.b32.xlu0 %v4296, 32
    %v4298 = vpop.permute.xlu0 %4297
    %4300 = vst.msk [vmem:[#allocation3 + $0x8] sm:$0x3] %vm3649, %v4298
    %v4301 = vld [vmem:[%s2393 + $0x4] sm:$0x1]
    %v4302 = vld [vmem:[%s2393 + $0x7c] sm:$0x1]
    %v4303 = vld [vmem:[%s2393 + $0x5] sm:$0x1]
    %v4304 = vld [vmem:[%s2393 + $0x7d] sm:$0x1]
    %v4305 = vmax.f32 %v4301, %v4303
    %v4306 = vmax.f32 %v4302, %v4304
    %v4307 = vld [vmem:[%s2393 + $0x6] sm:$0x1]
    %v4308 = vld [vmem:[%s2393 + $0x7e] sm:$0x1]
    %v4309 = vmax.f32 %v4305, %v4307
    %v4310 = vmax.f32 %v4306, %v4308
    %4313 = vrot.lane.b32.xlu0 %v4309, 127
    %v4314 = vpop.permute.xlu0 %4313
    %4315 = vrot.lane.b32.xlu0 %v4310, 127
    %v4316 = vpop.permute.xlu0 %4315
    %v4319 = vmax.f32 %v4309, %v4314
    %v4320 = vmax.f32 %v4310, %v4316
    %4321 = vrot.lane.b32.xlu0 %v4309, 126
    %v4322 = vpop.permute.xlu0 %4321
    %4323 = vrot.lane.b32.xlu0 %v4310, 126
    %v4324 = vpop.permute.xlu0 %4323
    %v4327 = vmax.f32 %v4319, %v4322
    %v4328 = vmax.f32 %v4320, %v4324
    %v4331 = vsel %vm3593, %v4327, %v4327
    %v4332 = vsel %vm3595, %v4327, %v4331
    %v4333 = vrot.slane %v4328, 7
    %v4334 = vsel %vm3598, %v4333, %v4332
    %v4335 = vsel %vm3600, %v4333, %v4334
    %v4336 = vsel %vm3602, %v4333, %v4335
    %v4337 = vsel %vm3604, %v4333, %v4336
    %4338 = vrot.lane.b32.xlu0 %v4337, 64
    %v4339 = vpop.permute.xlu0 %4338
    %4341 = vst.msk [vmem:[#allocation3 + $0x8] sm:$0x3] %vm3691, %v4339
    %v4342 = vld [vmem:[%s2393 + $0x6] sm:$0x1]
    %v4343 = vld [vmem:[%s2393 + $0x7e] sm:$0x1]
    %v4344 = vld [vmem:[%s2393 + $0x7] sm:$0x1]
    %v4345 = vld [vmem:[%s2393 + $0x7f] sm:$0x1]
    %v4346 = vmax.f32 %v4342, %v4344
    %v4347 = vmax.f32 %v4343, %v4345
    %v4348 = vld [vmem:[%s2393 + $0x8] sm:$0x1]
    %v4349 = vld [vmem:[%s2393 + $0x80] sm:$0x1]
    %v4350 = vmax.f32 %v4346, %v4348
    %v4351 = vmax.f32 %v4347, %v4349
    %4354 = vrot.lane.b32.xlu0 %v4350, 127
    %v4355 = vpop.permute.xlu0 %4354
    %4356 = vrot.lane.b32.xlu0 %v4351, 127
    %v4357 = vpop.permute.xlu0 %4356
    %v4360 = vmax.f32 %v4350, %v4355
    %v4361 = vmax.f32 %v4351, %v4357
    %4362 = vrot.lane.b32.xlu0 %v4350, 126
    %v4363 = vpop.permute.xlu0 %4362
    %4364 = vrot.lane.b32.xlu0 %v4351, 126
    %v4365 = vpop.permute.xlu0 %4364
    %v4368 = vmax.f32 %v4360, %v4363
    %v4369 = vmax.f32 %v4361, %v4365
    %v4372 = vsel %vm3593, %v4368, %v4368
    %v4373 = vsel %vm3595, %v4368, %v4372
    %v4374 = vrot.slane %v4369, 7
    %v4375 = vsel %vm3598, %v4374, %v4373
    %v4376 = vsel %vm3600, %v4374, %v4375
    %v4377 = vsel %vm3602, %v4374, %v4376
    %v4378 = vsel %vm3604, %v4374, %v4377
    %4379 = vrot.lane.b32.xlu0 %v4378, 96
    %v4380 = vpop.permute.xlu0 %4379
    %4382 = vst.msk [vmem:[#allocation3 + $0x8] sm:$0x3] %vm3733, %v4380
    %v4383 = vld [vmem:[%s2393 + $0x8] sm:$0x1]
    %v4384 = vld [vmem:[%s2393 + $0x80] sm:$0x1]
    %v4385 = vld [vmem:[%s2393 + $0x9] sm:$0x1]
    %v4386 = vld [vmem:[%s2393 + $0x81] sm:$0x1]
    %v4387 = vmax.f32 %v4383, %v4385
    %v4388 = vmax.f32 %v4384, %v4386
    %v4389 = vld [vmem:[%s2393 + $0xa] sm:$0x1]
    %v4390 = vld [vmem:[%s2393 + $0x82] sm:$0x1]
    %v4391 = vmax.f32 %v4387, %v4389
    %v4392 = vmax.f32 %v4388, %v4390
    %4395 = vrot.lane.b32.xlu0 %v4391, 127
    %v4396 = vpop.permute.xlu0 %4395
    %4397 = vrot.lane.b32.xlu0 %v4392, 127
    %v4398 = vpop.permute.xlu0 %4397
    %v4401 = vmax.f32 %v4391, %v4396
    %v4402 = vmax.f32 %v4392, %v4398
    %4403 = vrot.lane.b32.xlu0 %v4391, 126
    %v4404 = vpop.permute.xlu0 %4403
    %4405 = vrot.lane.b32.xlu0 %v4392, 126
    %v4406 = vpop.permute.xlu0 %4405
    %v4409 = vmax.f32 %v4401, %v4404
    %v4410 = vmax.f32 %v4402, %v4406
    %v4413 = vsel %vm3593, %v4409, %v4409
    %v4414 = vsel %vm3595, %v4409, %v4413
    %v4415 = vrot.slane %v4410, 7
    %v4416 = vsel %vm3598, %v4415, %v4414
    %v4417 = vsel %vm3600, %v4415, %v4416
    %v4418 = vsel %vm3602, %v4415, %v4417
    %v4419 = vsel %vm3604, %v4415, %v4418
    %4421 = vst.msk [vmem:[#allocation3 + $0xa] sm:$0x3] %vm3607, %v4419
    %v4422 = vld [vmem:[%s2393 + $0xa] sm:$0x1]
    %v4423 = vld [vmem:[%s2393 + $0x82] sm:$0x1]
    %v4424 = vld [vmem:[%s2393 + $0xb] sm:$0x1]
    %v4425 = vld [vmem:[%s2393 + $0x83] sm:$0x1]
    %v4426 = vmax.f32 %v4422, %v4424
    %v4427 = vmax.f32 %v4423, %v4425
    %v4428 = vld [vmem:[%s2393 + $0xc] sm:$0x1]
    %v4429 = vld [vmem:[%s2393 + $0x84] sm:$0x1]
    %v4430 = vmax.f32 %v4426, %v4428
    %v4431 = vmax.f32 %v4427, %v4429
    %4434 = vrot.lane.b32.xlu0 %v4430, 127
    %v4435 = vpop.permute.xlu0 %4434
    %4436 = vrot.lane.b32.xlu0 %v4431, 127
    %v4437 = vpop.permute.xlu0 %4436
    %v4440 = vmax.f32 %v4430, %v4435
    %v4441 = vmax.f32 %v4431, %v4437
    %4442 = vrot.lane.b32.xlu0 %v4430, 126
    %v4443 = vpop.permute.xlu0 %4442
    %4444 = vrot.lane.b32.xlu0 %v4431, 126
    %v4445 = vpop.permute.xlu0 %4444
    %v4448 = vmax.f32 %v4440, %v4443
    %v4449 = vmax.f32 %v4441, %v4445
    %v4452 = vsel %vm3593, %v4448, %v4448
    %v4453 = vsel %vm3595, %v4448, %v4452
    %v4454 = vrot.slane %v4449, 7
    %v4455 = vsel %vm3598, %v4454, %v4453
    %v4456 = vsel %vm3600, %v4454, %v4455
    %v4457 = vsel %vm3602, %v4454, %v4456
    %v4458 = vsel %vm3604, %v4454, %v4457
    %4459 = vrot.lane.b32.xlu0 %v4458, 32
    %v4460 = vpop.permute.xlu0 %4459
    %4462 = vst.msk [vmem:[#allocation3 + $0xa] sm:$0x3] %vm3649, %v4460
    %v4463 = vld [vmem:[%s2393 + $0xc] sm:$0x1]
    %v4464 = vld [vmem:[%s2393 + $0x84] sm:$0x1]
    %v4465 = vld [vmem:[%s2393 + $0xd] sm:$0x1]
    %v4466 = vld [vmem:[%s2393 + $0x85] sm:$0x1]
    %v4467 = vmax.f32 %v4463, %v4465
    %v4468 = vmax.f32 %v4464, %v4466
    %v4469 = vld [vmem:[%s2393 + $0xe] sm:$0x1]
    %v4470 = vld [vmem:[%s2393 + $0x86] sm:$0x1]
    %v4471 = vmax.f32 %v4467, %v4469
    %v4472 = vmax.f32 %v4468, %v4470
    %4475 = vrot.lane.b32.xlu0 %v4471, 127
    %v4476 = vpop.permute.xlu0 %4475
    %4477 = vrot.lane.b32.xlu0 %v4472, 127
    %v4478 = vpop.permute.xlu0 %4477
    %v4481 = vmax.f32 %v4471, %v4476
    %v4482 = vmax.f32 %v4472, %v4478
    %4483 = vrot.lane.b32.xlu0 %v4471, 126
    %v4484 = vpop.permute.xlu0 %4483
    %4485 = vrot.lane.b32.xlu0 %v4472, 126
    %v4486 = vpop.permute.xlu0 %4485
    %v4489 = vmax.f32 %v4481, %v4484
    %v4490 = vmax.f32 %v4482, %v4486
    %v4493 = vsel %vm3593, %v4489, %v4489
    %v4494 = vsel %vm3595, %v4489, %v4493
    %v4495 = vrot.slane %v4490, 7
    %v4496 = vsel %vm3598, %v4495, %v4494
    %v4497 = vsel %vm3600, %v4495, %v4496
    %v4498 = vsel %vm3602, %v4495, %v4497
    %v4499 = vsel %vm3604, %v4495, %v4498
    %4500 = vrot.lane.b32.xlu0 %v4499, 64
    %v4501 = vpop.permute.xlu0 %4500
    %4503 = vst.msk [vmem:[#allocation3 + $0xa] sm:$0x3] %vm3691, %v4501
    %v4504 = vld [vmem:[%s2393 + $0xe] sm:$0x1]
    %v4505 = vld [vmem:[%s2393 + $0x86] sm:$0x1]
    %v4506 = vld [vmem:[%s2393 + $0xf] sm:$0x1]
    %v4507 = vld [vmem:[%s2393 + $0x87] sm:$0x1]
    %v4508 = vmax.f32 %v4504, %v4506
    %v4509 = vmax.f32 %v4505, %v4507
    %v4510 = vld [vmem:[%s2393 + $0x10] sm:$0x1]
    %v4511 = vld [vmem:[%s2393 + $0x88] sm:$0x1]
    %v4512 = vmax.f32 %v4508, %v4510
    %v4513 = vmax.f32 %v4509, %v4511
    %4516 = vrot.lane.b32.xlu0 %v4512, 127
    %v4517 = vpop.permute.xlu0 %4516
    %4518 = vrot.lane.b32.xlu0 %v4513, 127
    %v4519 = vpop.permute.xlu0 %4518
    %v4522 = vmax.f32 %v4512, %v4517
    %v4523 = vmax.f32 %v4513, %v4519
    %4524 = vrot.lane.b32.xlu0 %v4512, 126
    %v4525 = vpop.permute.xlu0 %4524
    %4526 = vrot.lane.b32.xlu0 %v4513, 126
    %v4527 = vpop.permute.xlu0 %4526
    %v4530 = vmax.f32 %v4522, %v4525
    %v4531 = vmax.f32 %v4523, %v4527
    %v4534 = vsel %vm3593, %v4530, %v4530
    %v4535 = vsel %vm3595, %v4530, %v4534
    %v4536 = vrot.slane %v4531, 7
    %v4537 = vsel %vm3598, %v4536, %v4535
    %v4538 = vsel %vm3600, %v4536, %v4537
    %v4539 = vsel %vm3602, %v4536, %v4538
    %v4540 = vsel %vm3604, %v4536, %v4539
    %4541 = vrot.lane.b32.xlu0 %v4540, 96
    %v4542 = vpop.permute.xlu0 %4541
    %4544 = vst.msk [vmem:[#allocation3 + $0xa] sm:$0x3] %vm3733, %v4542
    %v4545 = vld [vmem:[%s2393 + $0x10] sm:$0x1]
    %v4546 = vld [vmem:[%s2393 + $0x88] sm:$0x1]
    %v4547 = vld [vmem:[%s2393 + $0x11] sm:$0x1]
    %v4548 = vld [vmem:[%s2393 + $0x89] sm:$0x1]
    %v4549 = vmax.f32 %v4545, %v4547
    %v4550 = vmax.f32 %v4546, %v4548
    %v4551 = vld [vmem:[%s2393 + $0x12] sm:$0x1]
    %v4552 = vld [vmem:[%s2393 + $0x8a] sm:$0x1]
    %v4553 = vmax.f32 %v4549, %v4551
    %v4554 = vmax.f32 %v4550, %v4552
    %4557 = vrot.lane.b32.xlu0 %v4553, 127
    %v4558 = vpop.permute.xlu0 %4557
    %4559 = vrot.lane.b32.xlu0 %v4554, 127
    %v4560 = vpop.permute.xlu0 %4559
    %v4563 = vmax.f32 %v4553, %v4558
    %v4564 = vmax.f32 %v4554, %v4560
    %4565 = vrot.lane.b32.xlu0 %v4553, 126
    %v4566 = vpop.permute.xlu0 %4565
    %4567 = vrot.lane.b32.xlu0 %v4554, 126
    %v4568 = vpop.permute.xlu0 %4567
    %v4571 = vmax.f32 %v4563, %v4566
    %v4572 = vmax.f32 %v4564, %v4568
    %v4575 = vsel %vm3593, %v4571, %v4571
    %v4576 = vsel %vm3595, %v4571, %v4575
    %v4577 = vrot.slane %v4572, 7
    %v4578 = vsel %vm3598, %v4577, %v4576
    %v4579 = vsel %vm3600, %v4577, %v4578
    %v4580 = vsel %vm3602, %v4577, %v4579
    %v4581 = vsel %vm3604, %v4577, %v4580
    %4583 = vst.msk [vmem:[#allocation3 + $0xc] sm:$0x3] %vm3607, %v4581
    %v4584 = vld [vmem:[%s2393 + $0x12] sm:$0x1]
    %v4585 = vld [vmem:[%s2393 + $0x8a] sm:$0x1]
    %v4586 = vld [vmem:[%s2393 + $0x13] sm:$0x1]
    %v4587 = vld [vmem:[%s2393 + $0x8b] sm:$0x1]
    %v4588 = vmax.f32 %v4584, %v4586
    %v4589 = vmax.f32 %v4585, %v4587
    %v4590 = vld [vmem:[%s2393 + $0x14] sm:$0x1]
    %v4591 = vld [vmem:[%s2393 + $0x8c] sm:$0x1]
    %v4592 = vmax.f32 %v4588, %v4590
    %v4593 = vmax.f32 %v4589, %v4591
    %4596 = vrot.lane.b32.xlu0 %v4592, 127
    %v4597 = vpop.permute.xlu0 %4596
    %4598 = vrot.lane.b32.xlu0 %v4593, 127
    %v4599 = vpop.permute.xlu0 %4598
    %v4602 = vmax.f32 %v4592, %v4597
    %v4603 = vmax.f32 %v4593, %v4599
    %4604 = vrot.lane.b32.xlu0 %v4592, 126
    %v4605 = vpop.permute.xlu0 %4604
    %4606 = vrot.lane.b32.xlu0 %v4593, 126
    %v4607 = vpop.permute.xlu0 %4606
    %v4610 = vmax.f32 %v4602, %v4605
    %v4611 = vmax.f32 %v4603, %v4607
    %v4614 = vsel %vm3593, %v4610, %v4610
    %v4615 = vsel %vm3595, %v4610, %v4614
    %v4616 = vrot.slane %v4611, 7
    %v4617 = vsel %vm3598, %v4616, %v4615
    %v4618 = vsel %vm3600, %v4616, %v4617
    %v4619 = vsel %vm3602, %v4616, %v4618
    %v4620 = vsel %vm3604, %v4616, %v4619
    %4621 = vrot.lane.b32.xlu0 %v4620, 32
    %v4622 = vpop.permute.xlu0 %4621
    %4624 = vst.msk [vmem:[#allocation3 + $0xc] sm:$0x3] %vm3649, %v4622
    %v4625 = vld [vmem:[%s2393 + $0x14] sm:$0x1]
    %v4626 = vld [vmem:[%s2393 + $0x8c] sm:$0x1]
    %v4627 = vld [vmem:[%s2393 + $0x15] sm:$0x1]
    %v4628 = vld [vmem:[%s2393 + $0x8d] sm:$0x1]
    %v4629 = vmax.f32 %v4625, %v4627
    %v4630 = vmax.f32 %v4626, %v4628
    %v4631 = vld [vmem:[%s2393 + $0x16] sm:$0x1]
    %v4632 = vld [vmem:[%s2393 + $0x8e] sm:$0x1]
    %v4633 = vmax.f32 %v4629, %v4631
    %v4634 = vmax.f32 %v4630, %v4632
    %4637 = vrot.lane.b32.xlu0 %v4633, 127
    %v4638 = vpop.permute.xlu0 %4637
    %4639 = vrot.lane.b32.xlu0 %v4634, 127
    %v4640 = vpop.permute.xlu0 %4639
    %v4643 = vmax.f32 %v4633, %v4638
    %v4644 = vmax.f32 %v4634, %v4640
    %4645 = vrot.lane.b32.xlu0 %v4633, 126
    %v4646 = vpop.permute.xlu0 %4645
    %4647 = vrot.lane.b32.xlu0 %v4634, 126
    %v4648 = vpop.permute.xlu0 %4647
    %v4651 = vmax.f32 %v4643, %v4646
    %v4652 = vmax.f32 %v4644, %v4648
    %v4655 = vsel %vm3593, %v4651, %v4651
    %v4656 = vsel %vm3595, %v4651, %v4655
    %v4657 = vrot.slane %v4652, 7
    %v4658 = vsel %vm3598, %v4657, %v4656
    %v4659 = vsel %vm3600, %v4657, %v4658
    %v4660 = vsel %vm3602, %v4657, %v4659
    %v4661 = vsel %vm3604, %v4657, %v4660
    %4662 = vrot.lane.b32.xlu0 %v4661, 64
    %v4663 = vpop.permute.xlu0 %4662
    %4665 = vst.msk [vmem:[#allocation3 + $0xc] sm:$0x3] %vm3691, %v4663
    %v4666 = vld [vmem:[%s2393 + $0x16] sm:$0x1]
    %v4667 = vld [vmem:[%s2393 + $0x8e] sm:$0x1]
    %v4668 = vld [vmem:[%s2393 + $0x17] sm:$0x1]
    %v4669 = vld [vmem:[%s2393 + $0x8f] sm:$0x1]
    %v4670 = vmax.f32 %v4666, %v4668
    %v4671 = vmax.f32 %v4667, %v4669
    %v4672 = vld [vmem:[%s2393 + $0x18] sm:$0x1]
    %v4673 = vld [vmem:[%s2393 + $0x90] sm:$0x1]
    %v4674 = vmax.f32 %v4670, %v4672
    %v4675 = vmax.f32 %v4671, %v4673
    %4678 = vrot.lane.b32.xlu0 %v4674, 127
    %v4679 = vpop.permute.xlu0 %4678
    %4680 = vrot.lane.b32.xlu0 %v4675, 127
    %v4681 = vpop.permute.xlu0 %4680
    %v4684 = vmax.f32 %v4674, %v4679
    %v4685 = vmax.f32 %v4675, %v4681
    %4686 = vrot.lane.b32.xlu0 %v4674, 126
    %v4687 = vpop.permute.xlu0 %4686
    %4688 = vrot.lane.b32.xlu0 %v4675, 126
    %v4689 = vpop.permute.xlu0 %4688
    %v4692 = vmax.f32 %v4684, %v4687
    %v4693 = vmax.f32 %v4685, %v4689
    %v4696 = vsel %vm3593, %v4692, %v4692
    %v4697 = vsel %vm3595, %v4692, %v4696
    %v4698 = vrot.slane %v4693, 7
    %v4699 = vsel %vm3598, %v4698, %v4697
    %v4700 = vsel %vm3600, %v4698, %v4699
    %v4701 = vsel %vm3602, %v4698, %v4700
    %v4702 = vsel %vm3604, %v4698, %v4701
    %4703 = vrot.lane.b32.xlu0 %v4702, 96
    %v4704 = vpop.permute.xlu0 %4703
    %4706 = vst.msk [vmem:[#allocation3 + $0xc] sm:$0x3] %vm3733, %v4704
    %v4707 = vld [vmem:[%s2393 + $0x18] sm:$0x1]
    %v4708 = vld [vmem:[%s2393 + $0x90] sm:$0x1]
    %v4709 = vld [vmem:[%s2393 + $0x19] sm:$0x1]
    %v4710 = vld [vmem:[%s2393 + $0x91] sm:$0x1]
    %v4711 = vmax.f32 %v4707, %v4709
    %v4712 = vmax.f32 %v4708, %v4710
    %v4713 = vld [vmem:[%s2393 + $0x1a] sm:$0x1]
    %v4714 = vld [vmem:[%s2393 + $0x92] sm:$0x1]
    %v4715 = vmax.f32 %v4711, %v4713
    %v4716 = vmax.f32 %v4712, %v4714
    %4719 = vrot.lane.b32.xlu0 %v4715, 127
    %v4720 = vpop.permute.xlu0 %4719
    %4721 = vrot.lane.b32.xlu0 %v4716, 127
    %v4722 = vpop.permute.xlu0 %4721
    %v4725 = vmax.f32 %v4715, %v4720
    %v4726 = vmax.f32 %v4716, %v4722
    %4727 = vrot.lane.b32.xlu0 %v4715, 126
    %v4728 = vpop.permute.xlu0 %4727
    %4729 = vrot.lane.b32.xlu0 %v4716, 126
    %v4730 = vpop.permute.xlu0 %4729
    %v4733 = vmax.f32 %v4725, %v4728
    %v4734 = vmax.f32 %v4726, %v4730
    %v4737 = vsel %vm3593, %v4733, %v4733
    %v4738 = vsel %vm3595, %v4733, %v4737
    %v4739 = vrot.slane %v4734, 7
    %v4740 = vsel %vm3598, %v4739, %v4738
    %v4741 = vsel %vm3600, %v4739, %v4740
    %v4742 = vsel %vm3602, %v4739, %v4741
    %v4743 = vsel %vm3604, %v4739, %v4742
    %4745 = vst.msk [vmem:[#allocation3 + $0xe] sm:$0x3] %vm3607, %v4743
    %v4746 = vld [vmem:[%s2393 + $0x1a] sm:$0x1]
    %v4747 = vld [vmem:[%s2393 + $0x92] sm:$0x1]
    %v4748 = vld [vmem:[%s2393 + $0x1b] sm:$0x1]
    %v4749 = vld [vmem:[%s2393 + $0x93] sm:$0x1]
    %v4750 = vmax.f32 %v4746, %v4748
    %v4751 = vmax.f32 %v4747, %v4749
    %v4752 = vld [vmem:[%s2393 + $0x1c] sm:$0x1]
    %v4753 = vld [vmem:[%s2393 + $0x94] sm:$0x1]
    %v4754 = vmax.f32 %v4750, %v4752
    %v4755 = vmax.f32 %v4751, %v4753
    %4758 = vrot.lane.b32.xlu0 %v4754, 127
    %v4759 = vpop.permute.xlu0 %4758
    %4760 = vrot.lane.b32.xlu0 %v4755, 127
    %v4761 = vpop.permute.xlu0 %4760
    %v4764 = vmax.f32 %v4754, %v4759
    %v4765 = vmax.f32 %v4755, %v4761
    %4766 = vrot.lane.b32.xlu0 %v4754, 126
    %v4767 = vpop.permute.xlu0 %4766
    %4768 = vrot.lane.b32.xlu0 %v4755, 126
    %v4769 = vpop.permute.xlu0 %4768
    %v4772 = vmax.f32 %v4764, %v4767
    %v4773 = vmax.f32 %v4765, %v4769
    %v4776 = vsel %vm3593, %v4772, %v4772
    %v4777 = vsel %vm3595, %v4772, %v4776
    %v4778 = vrot.slane %v4773, 7
    %v4779 = vsel %vm3598, %v4778, %v4777
    %v4780 = vsel %vm3600, %v4778, %v4779
    %v4781 = vsel %vm3602, %v4778, %v4780
    %v4782 = vsel %vm3604, %v4778, %v4781
    %4783 = vrot.lane.b32.xlu0 %v4782, 32
    %v4784 = vpop.permute.xlu0 %4783
    %4786 = vst.msk [vmem:[#allocation3 + $0xe] sm:$0x3] %vm3649, %v4784
    %v4787 = vld [vmem:[%s2393 + $0x1c] sm:$0x1]
    %v4788 = vld [vmem:[%s2393 + $0x94] sm:$0x1]
    %v4789 = vld [vmem:[%s2393 + $0x1d] sm:$0x1]
    %v4790 = vld [vmem:[%s2393 + $0x95] sm:$0x1]
    %v4791 = vmax.f32 %v4787, %v4789
    %v4792 = vmax.f32 %v4788, %v4790
    %v4793 = vld [vmem:[%s2393 + $0x1e] sm:$0x1]
    %v4794 = vld [vmem:[%s2393 + $0x96] sm:$0x1]
    %v4795 = vmax.f32 %v4791, %v4793
    %v4796 = vmax.f32 %v4792, %v4794
    %4799 = vrot.lane.b32.xlu0 %v4795, 127
    %v4800 = vpop.permute.xlu0 %4799
    %4801 = vrot.lane.b32.xlu0 %v4796, 127
    %v4802 = vpop.permute.xlu0 %4801
    %v4805 = vmax.f32 %v4795, %v4800
    %v4806 = vmax.f32 %v4796, %v4802
    %4807 = vrot.lane.b32.xlu0 %v4795, 126
    %v4808 = vpop.permute.xlu0 %4807
    %4809 = vrot.lane.b32.xlu0 %v4796, 126
    %v4810 = vpop.permute.xlu0 %4809
    %v4813 = vmax.f32 %v4805, %v4808
    %v4814 = vmax.f32 %v4806, %v4810
    %v4817 = vsel %vm3593, %v4813, %v4813
    %v4818 = vsel %vm3595, %v4813, %v4817
    %v4819 = vrot.slane %v4814, 7
    %v4820 = vsel %vm3598, %v4819, %v4818
    %v4821 = vsel %vm3600, %v4819, %v4820
    %v4822 = vsel %vm3602, %v4819, %v4821
    %v4823 = vsel %vm3604, %v4819, %v4822
    %4824 = vrot.lane.b32.xlu0 %v4823, 64
    %v4825 = vpop.permute.xlu0 %4824
    %4827 = vst.msk [vmem:[#allocation3 + $0xe] sm:$0x3] %vm3691, %v4825
    %v4828 = vld [vmem:[%s2393 + $0x1e] sm:$0x1]
    %v4829 = vld [vmem:[%s2393 + $0x96] sm:$0x1]
    %v4830 = vld [vmem:[%s2393 + $0x1f] sm:$0x1]
    %v4831 = vld [vmem:[%s2393 + $0x97] sm:$0x1]
    %v4832 = vmax.f32 %v4828, %v4830
    %v4833 = vmax.f32 %v4829, %v4831
    %v4834 = vld [vmem:[%s2393 + $0x20] sm:$0x1]
    %v4835 = vld [vmem:[%s2393 + $0x98] sm:$0x1]
    %v4836 = vmax.f32 %v4832, %v4834
    %v4837 = vmax.f32 %v4833, %v4835
    %4840 = vrot.lane.b32.xlu0 %v4836, 127
    %v4841 = vpop.permute.xlu0 %4840
    %4842 = vrot.lane.b32.xlu0 %v4837, 127
    %v4843 = vpop.permute.xlu0 %4842
    %v4846 = vmax.f32 %v4836, %v4841
    %v4847 = vmax.f32 %v4837, %v4843
    %4848 = vrot.lane.b32.xlu0 %v4836, 126
    %v4849 = vpop.permute.xlu0 %4848
    %4850 = vrot.lane.b32.xlu0 %v4837, 126
    %v4851 = vpop.permute.xlu0 %4850
    %v4854 = vmax.f32 %v4846, %v4849
    %v4855 = vmax.f32 %v4847, %v4851
    %v4858 = vsel %vm3593, %v4854, %v4854
    %v4859 = vsel %vm3595, %v4854, %v4858
    %v4860 = vrot.slane %v4855, 7
    %v4861 = vsel %vm3598, %v4860, %v4859
    %v4862 = vsel %vm3600, %v4860, %v4861
    %v4863 = vsel %vm3602, %v4860, %v4862
    %v4864 = vsel %vm3604, %v4860, %v4863
    %4865 = vrot.lane.b32.xlu0 %v4864, 96
    %v4866 = vpop.permute.xlu0 %4865
    %4868 = vst.msk [vmem:[#allocation3 + $0xe] sm:$0x3] %vm3733, %v4866
    %v4869 = vld [vmem:[%s3554] sm:$0x1]
    %v4870 = vld [vmem:[%s3554 + $0x78] sm:$0x1]
    %v4871 = vld [vmem:[%s3554 + $0x1] sm:$0x1]
    %v4872 = vld [vmem:[%s3554 + $0x79] sm:$0x1]
    %v4873 = vmax.f32 %v4869, %v4871
    %v4874 = vmax.f32 %v4870, %v4872
    %v4875 = vld [vmem:[%s3554 + $0x2] sm:$0x1]
    %v4876 = vld [vmem:[%s3554 + $0x7a] sm:$0x1]
    %v4877 = vmax.f32 %v4873, %v4875
    %v4878 = vmax.f32 %v4874, %v4876
    %4881 = vrot.lane.b32.xlu0 %v4877, 127
    %v4882 = vpop.permute.xlu0 %4881
    %4883 = vrot.lane.b32.xlu0 %v4878, 127
    %v4884 = vpop.permute.xlu0 %4883
    %v4887 = vmax.f32 %v4877, %v4882
    %v4888 = vmax.f32 %v4878, %v4884
    %4889 = vrot.lane.b32.xlu0 %v4877, 126
    %v4890 = vpop.permute.xlu0 %4889
    %4891 = vrot.lane.b32.xlu0 %v4878, 126
    %v4892 = vpop.permute.xlu0 %4891
    %v4895 = vmax.f32 %v4887, %v4890
    %v4896 = vmax.f32 %v4888, %v4892
    %v4899 = vsel %vm3593, %v4895, %v4895
    %v4900 = vsel %vm3595, %v4895, %v4899
    %v4901 = vrot.slane %v4896, 7
    %v4902 = vsel %vm3598, %v4901, %v4900
    %v4903 = vsel %vm3600, %v4901, %v4902
    %v4904 = vsel %vm3602, %v4901, %v4903
    %v4905 = vsel %vm3604, %v4901, %v4904
    %4907 = vst.msk [vmem:[#allocation3 + $0x10] sm:$0x3] %vm3607, %v4905
    %v4908 = vld [vmem:[%s3554 + $0x2] sm:$0x1]
    %v4909 = vld [vmem:[%s3554 + $0x7a] sm:$0x1]
    %v4910 = vld [vmem:[%s3554 + $0x3] sm:$0x1]
    %v4911 = vld [vmem:[%s3554 + $0x7b] sm:$0x1]
    %v4912 = vmax.f32 %v4908, %v4910
    %v4913 = vmax.f32 %v4909, %v4911
    %v4914 = vld [vmem:[%s3554 + $0x4] sm:$0x1]
    %v4915 = vld [vmem:[%s3554 + $0x7c] sm:$0x1]
    %v4916 = vmax.f32 %v4912, %v4914
    %v4917 = vmax.f32 %v4913, %v4915
    %4920 = vrot.lane.b32.xlu0 %v4916, 127
    %v4921 = vpop.permute.xlu0 %4920
    %4922 = vrot.lane.b32.xlu0 %v4917, 127
    %v4923 = vpop.permute.xlu0 %4922
    %v4926 = vmax.f32 %v4916, %v4921
    %v4927 = vmax.f32 %v4917, %v4923
    %4928 = vrot.lane.b32.xlu0 %v4916, 126
    %v4929 = vpop.permute.xlu0 %4928
    %4930 = vrot.lane.b32.xlu0 %v4917, 126
    %v4931 = vpop.permute.xlu0 %4930
    %v4934 = vmax.f32 %v4926, %v4929
    %v4935 = vmax.f32 %v4927, %v4931
    %v4938 = vsel %vm3593, %v4934, %v4934
    %v4939 = vsel %vm3595, %v4934, %v4938
    %v4940 = vrot.slane %v4935, 7
    %v4941 = vsel %vm3598, %v4940, %v4939
    %v4942 = vsel %vm3600, %v4940, %v4941
    %v4943 = vsel %vm3602, %v4940, %v4942
    %v4944 = vsel %vm3604, %v4940, %v4943
    %4945 = vrot.lane.b32.xlu0 %v4944, 32
    %v4946 = vpop.permute.xlu0 %4945
    %4948 = vst.msk [vmem:[#allocation3 + $0x10] sm:$0x3] %vm3649, %v4946
    %v4949 = vld [vmem:[%s3554 + $0x4] sm:$0x1]
    %v4950 = vld [vmem:[%s3554 + $0x7c] sm:$0x1]
    %v4951 = vld [vmem:[%s3554 + $0x5] sm:$0x1]
    %v4952 = vld [vmem:[%s3554 + $0x7d] sm:$0x1]
    %v4953 = vmax.f32 %v4949, %v4951
    %v4954 = vmax.f32 %v4950, %v4952
    %v4955 = vld [vmem:[%s3554 + $0x6] sm:$0x1]
    %v4956 = vld [vmem:[%s3554 + $0x7e] sm:$0x1]
    %v4957 = vmax.f32 %v4953, %v4955
    %v4958 = vmax.f32 %v4954, %v4956
    %4961 = vrot.lane.b32.xlu0 %v4957, 127
    %v4962 = vpop.permute.xlu0 %4961
    %4963 = vrot.lane.b32.xlu0 %v4958, 127
    %v4964 = vpop.permute.xlu0 %4963
    %v4967 = vmax.f32 %v4957, %v4962
    %v4968 = vmax.f32 %v4958, %v4964
    %4969 = vrot.lane.b32.xlu0 %v4957, 126
    %v4970 = vpop.permute.xlu0 %4969
    %4971 = vrot.lane.b32.xlu0 %v4958, 126
    %v4972 = vpop.permute.xlu0 %4971
    %v4975 = vmax.f32 %v4967, %v4970
    %v4976 = vmax.f32 %v4968, %v4972
    %v4979 = vsel %vm3593, %v4975, %v4975
    %v4980 = vsel %vm3595, %v4975, %v4979
    %v4981 = vrot.slane %v4976, 7
    %v4982 = vsel %vm3598, %v4981, %v4980
    %v4983 = vsel %vm3600, %v4981, %v4982
    %v4984 = vsel %vm3602, %v4981, %v4983
    %v4985 = vsel %vm3604, %v4981, %v4984
    %4986 = vrot.lane.b32.xlu0 %v4985, 64
    %v4987 = vpop.permute.xlu0 %4986
    %4989 = vst.msk [vmem:[#allocation3 + $0x10] sm:$0x3] %vm3691, %v4987
    %v4990 = vld [vmem:[%s3554 + $0x6] sm:$0x1]
    %v4991 = vld [vmem:[%s3554 + $0x7e] sm:$0x1]
    %v4992 = vld [vmem:[%s3554 + $0x7] sm:$0x1]
    %v4993 = vld [vmem:[%s3554 + $0x7f] sm:$0x1]
    %v4994 = vmax.f32 %v4990, %v4992
    %v4995 = vmax.f32 %v4991, %v4993
    %v4996 = vld [vmem:[%s3554 + $0x8] sm:$0x1]
    %v4997 = vld [vmem:[%s3554 + $0x80] sm:$0x1]
    %v4998 = vmax.f32 %v4994, %v4996
    %v4999 = vmax.f32 %v4995, %v4997
    %5002 = vrot.lane.b32.xlu0 %v4998, 127
    %v5003 = vpop.permute.xlu0 %5002
    %5004 = vrot.lane.b32.xlu0 %v4999, 127
    %v5005 = vpop.permute.xlu0 %5004
    %v5008 = vmax.f32 %v4998, %v5003
    %v5009 = vmax.f32 %v4999, %v5005
    %5010 = vrot.lane.b32.xlu0 %v4998, 126
    %v5011 = vpop.permute.xlu0 %5010
    %5012 = vrot.lane.b32.xlu0 %v4999, 126
    %v5013 = vpop.permute.xlu0 %5012
    %v5016 = vmax.f32 %v5008, %v5011
    %v5017 = vmax.f32 %v5009, %v5013
    %v5020 = vsel %vm3593, %v5016, %v5016
    %v5021 = vsel %vm3595, %v5016, %v5020
    %v5022 = vrot.slane %v5017, 7
    %v5023 = vsel %vm3598, %v5022, %v5021
    %v5024 = vsel %vm3600, %v5022, %v5023
    %v5025 = vsel %vm3602, %v5022, %v5024
    %v5026 = vsel %vm3604, %v5022, %v5025
    %5027 = vrot.lane.b32.xlu0 %v5026, 96
    %v5028 = vpop.permute.xlu0 %5027
    %5030 = vst.msk [vmem:[#allocation3 + $0x10] sm:$0x3] %vm3733, %v5028
    %v5031 = vld [vmem:[%s3554 + $0x8] sm:$0x1]
    %v5032 = vld [vmem:[%s3554 + $0x80] sm:$0x1]
    %v5033 = vld [vmem:[%s3554 + $0x9] sm:$0x1]
    %v5034 = vld [vmem:[%s3554 + $0x81] sm:$0x1]
    %v5035 = vmax.f32 %v5031, %v5033
    %v5036 = vmax.f32 %v5032, %v5034
    %v5037 = vld [vmem:[%s3554 + $0xa] sm:$0x1]
    %v5038 = vld [vmem:[%s3554 + $0x82] sm:$0x1]
    %v5039 = vmax.f32 %v5035, %v5037
    %v5040 = vmax.f32 %v5036, %v5038
    %5043 = vrot.lane.b32.xlu0 %v5039, 127
    %v5044 = vpop.permute.xlu0 %5043
    %5045 = vrot.lane.b32.xlu0 %v5040, 127
    %v5046 = vpop.permute.xlu0 %5045
    %v5049 = vmax.f32 %v5039, %v5044
    %v5050 = vmax.f32 %v5040, %v5046
    %5051 = vrot.lane.b32.xlu0 %v5039, 126
    %v5052 = vpop.permute.xlu0 %5051
    %5053 = vrot.lane.b32.xlu0 %v5040, 126
    %v5054 = vpop.permute.xlu0 %5053
    %v5057 = vmax.f32 %v5049, %v5052
    %v5058 = vmax.f32 %v5050, %v5054
    %v5061 = vsel %vm3593, %v5057, %v5057
    %v5062 = vsel %vm3595, %v5057, %v5061
    %v5063 = vrot.slane %v5058, 7
    %v5064 = vsel %vm3598, %v5063, %v5062
    %v5065 = vsel %vm3600, %v5063, %v5064
    %v5066 = vsel %vm3602, %v5063, %v5065
    %v5067 = vsel %vm3604, %v5063, %v5066
    %5069 = vst.msk [vmem:[#allocation3 + $0x12] sm:$0x3] %vm3607, %v5067
    %v5070 = vld [vmem:[%s3554 + $0xa] sm:$0x1]
    %v5071 = vld [vmem:[%s3554 + $0x82] sm:$0x1]
    %v5072 = vld [vmem:[%s3554 + $0xb] sm:$0x1]
    %v5073 = vld [vmem:[%s3554 + $0x83] sm:$0x1]
    %v5074 = vmax.f32 %v5070, %v5072
    %v5075 = vmax.f32 %v5071, %v5073
    %v5076 = vld [vmem:[%s3554 + $0xc] sm:$0x1]
    %v5077 = vld [vmem:[%s3554 + $0x84] sm:$0x1]
    %v5078 = vmax.f32 %v5074, %v5076
    %v5079 = vmax.f32 %v5075, %v5077
    %5082 = vrot.lane.b32.xlu0 %v5078, 127
    %v5083 = vpop.permute.xlu0 %5082
    %5084 = vrot.lane.b32.xlu0 %v5079, 127
    %v5085 = vpop.permute.xlu0 %5084
    %v5088 = vmax.f32 %v5078, %v5083
    %v5089 = vmax.f32 %v5079, %v5085
    %5090 = vrot.lane.b32.xlu0 %v5078, 126
    %v5091 = vpop.permute.xlu0 %5090
    %5092 = vrot.lane.b32.xlu0 %v5079, 126
    %v5093 = vpop.permute.xlu0 %5092
    %v5096 = vmax.f32 %v5088, %v5091
    %v5097 = vmax.f32 %v5089, %v5093
    %v5100 = vsel %vm3593, %v5096, %v5096
    %v5101 = vsel %vm3595, %v5096, %v5100
    %v5102 = vrot.slane %v5097, 7
    %v5103 = vsel %vm3598, %v5102, %v5101
    %v5104 = vsel %vm3600, %v5102, %v5103
    %v5105 = vsel %vm3602, %v5102, %v5104
    %v5106 = vsel %vm3604, %v5102, %v5105
    %5107 = vrot.lane.b32.xlu0 %v5106, 32
    %v5108 = vpop.permute.xlu0 %5107
    %5110 = vst.msk [vmem:[#allocation3 + $0x12] sm:$0x3] %vm3649, %v5108
    %v5111 = vld [vmem:[%s3554 + $0xc] sm:$0x1]
    %v5112 = vld [vmem:[%s3554 + $0x84] sm:$0x1]
    %v5113 = vld [vmem:[%s3554 + $0xd] sm:$0x1]
    %v5114 = vld [vmem:[%s3554 + $0x85] sm:$0x1]
    %v5115 = vmax.f32 %v5111, %v5113
    %v5116 = vmax.f32 %v5112, %v5114
    %v5117 = vld [vmem:[%s3554 + $0xe] sm:$0x1]
    %v5118 = vld [vmem:[%s3554 + $0x86] sm:$0x1]
    %v5119 = vmax.f32 %v5115, %v5117
    %v5120 = vmax.f32 %v5116, %v5118
    %5123 = vrot.lane.b32.xlu0 %v5119, 127
    %v5124 = vpop.permute.xlu0 %5123
    %5125 = vrot.lane.b32.xlu0 %v5120, 127
    %v5126 = vpop.permute.xlu0 %5125
    %v5129 = vmax.f32 %v5119, %v5124
    %v5130 = vmax.f32 %v5120, %v5126
    %5131 = vrot.lane.b32.xlu0 %v5119, 126
    %v5132 = vpop.permute.xlu0 %5131
    %5133 = vrot.lane.b32.xlu0 %v5120, 126
    %v5134 = vpop.permute.xlu0 %5133
    %v5137 = vmax.f32 %v5129, %v5132
    %v5138 = vmax.f32 %v5130, %v5134
    %v5141 = vsel %vm3593, %v5137, %v5137
    %v5142 = vsel %vm3595, %v5137, %v5141
    %v5143 = vrot.slane %v5138, 7
    %v5144 = vsel %vm3598, %v5143, %v5142
    %v5145 = vsel %vm3600, %v5143, %v5144
    %v5146 = vsel %vm3602, %v5143, %v5145
    %v5147 = vsel %vm3604, %v5143, %v5146
    %5148 = vrot.lane.b32.xlu0 %v5147, 64
    %v5149 = vpop.permute.xlu0 %5148
    %5151 = vst.msk [vmem:[#allocation3 + $0x12] sm:$0x3] %vm3691, %v5149
    %v5152 = vld [vmem:[%s3554 + $0xe] sm:$0x1]
    %v5153 = vld [vmem:[%s3554 + $0x86] sm:$0x1]
    %v5154 = vld [vmem:[%s3554 + $0xf] sm:$0x1]
    %v5155 = vld [vmem:[%s3554 + $0x87] sm:$0x1]
    %v5156 = vmax.f32 %v5152, %v5154
    %v5157 = vmax.f32 %v5153, %v5155
    %v5158 = vld [vmem:[%s3554 + $0x10] sm:$0x1]
    %v5159 = vld [vmem:[%s3554 + $0x88] sm:$0x1]
    %v5160 = vmax.f32 %v5156, %v5158
    %v5161 = vmax.f32 %v5157, %v5159
    %5164 = vrot.lane.b32.xlu0 %v5160, 127
    %v5165 = vpop.permute.xlu0 %5164
    %5166 = vrot.lane.b32.xlu0 %v5161, 127
    %v5167 = vpop.permute.xlu0 %5166
    %v5170 = vmax.f32 %v5160, %v5165
    %v5171 = vmax.f32 %v5161, %v5167
    %5172 = vrot.lane.b32.xlu0 %v5160, 126
    %v5173 = vpop.permute.xlu0 %5172
    %5174 = vrot.lane.b32.xlu0 %v5161, 126
    %v5175 = vpop.permute.xlu0 %5174
    %v5178 = vmax.f32 %v5170, %v5173
    %v5179 = vmax.f32 %v5171, %v5175
    %v5182 = vsel %vm3593, %v5178, %v5178
    %v5183 = vsel %vm3595, %v5178, %v5182
    %v5184 = vrot.slane %v5179, 7
    %v5185 = vsel %vm3598, %v5184, %v5183
    %v5186 = vsel %vm3600, %v5184, %v5185
    %v5187 = vsel %vm3602, %v5184, %v5186
    %v5188 = vsel %vm3604, %v5184, %v5187
    %5189 = vrot.lane.b32.xlu0 %v5188, 96
    %v5190 = vpop.permute.xlu0 %5189
    %5192 = vst.msk [vmem:[#allocation3 + $0x12] sm:$0x3] %vm3733, %v5190
    %v5193 = vld [vmem:[%s3554 + $0x10] sm:$0x1]
    %v5194 = vld [vmem:[%s3554 + $0x88] sm:$0x1]
    %v5195 = vld [vmem:[%s3554 + $0x11] sm:$0x1]
    %v5196 = vld [vmem:[%s3554 + $0x89] sm:$0x1]
    %v5197 = vmax.f32 %v5193, %v5195
    %v5198 = vmax.f32 %v5194, %v5196
    %v5199 = vld [vmem:[%s3554 + $0x12] sm:$0x1]
    %v5200 = vld [vmem:[%s3554 + $0x8a] sm:$0x1]
    %v5201 = vmax.f32 %v5197, %v5199
    %v5202 = vmax.f32 %v5198, %v5200
    %5205 = vrot.lane.b32.xlu0 %v5201, 127
    %v5206 = vpop.permute.xlu0 %5205
    %5207 = vrot.lane.b32.xlu0 %v5202, 127
    %v5208 = vpop.permute.xlu0 %5207
    %v5211 = vmax.f32 %v5201, %v5206
    %v5212 = vmax.f32 %v5202, %v5208
    %5213 = vrot.lane.b32.xlu0 %v5201, 126
    %v5214 = vpop.permute.xlu0 %5213
    %5215 = vrot.lane.b32.xlu0 %v5202, 126
    %v5216 = vpop.permute.xlu0 %5215
    %v5219 = vmax.f32 %v5211, %v5214
    %v5220 = vmax.f32 %v5212, %v5216
    %v5223 = vsel %vm3593, %v5219, %v5219
    %v5224 = vsel %vm3595, %v5219, %v5223
    %v5225 = vrot.slane %v5220, 7
    %v5226 = vsel %vm3598, %v5225, %v5224
    %v5227 = vsel %vm3600, %v5225, %v5226
    %v5228 = vsel %vm3602, %v5225, %v5227
    %v5229 = vsel %vm3604, %v5225, %v5228
    %5231 = vst.msk [vmem:[#allocation3 + $0x14] sm:$0x3] %vm3607, %v5229
    %v5232 = vld [vmem:[%s3554 + $0x12] sm:$0x1]
    %v5233 = vld [vmem:[%s3554 + $0x8a] sm:$0x1]
    %v5234 = vld [vmem:[%s3554 + $0x13] sm:$0x1]
    %v5235 = vld [vmem:[%s3554 + $0x8b] sm:$0x1]
    %v5236 = vmax.f32 %v5232, %v5234
    %v5237 = vmax.f32 %v5233, %v5235
    %v5238 = vld [vmem:[%s3554 + $0x14] sm:$0x1]
    %v5239 = vld [vmem:[%s3554 + $0x8c] sm:$0x1]
    %v5240 = vmax.f32 %v5236, %v5238
    %v5241 = vmax.f32 %v5237, %v5239
    %5244 = vrot.lane.b32.xlu0 %v5240, 127
    %v5245 = vpop.permute.xlu0 %5244
    %5246 = vrot.lane.b32.xlu0 %v5241, 127
    %v5247 = vpop.permute.xlu0 %5246
    %v5250 = vmax.f32 %v5240, %v5245
    %v5251 = vmax.f32 %v5241, %v5247
    %5252 = vrot.lane.b32.xlu0 %v5240, 126
    %v5253 = vpop.permute.xlu0 %5252
    %5254 = vrot.lane.b32.xlu0 %v5241, 126
    %v5255 = vpop.permute.xlu0 %5254
    %v5258 = vmax.f32 %v5250, %v5253
    %v5259 = vmax.f32 %v5251, %v5255
    %v5262 = vsel %vm3593, %v5258, %v5258
    %v5263 = vsel %vm3595, %v5258, %v5262
    %v5264 = vrot.slane %v5259, 7
    %v5265 = vsel %vm3598, %v5264, %v5263
    %v5266 = vsel %vm3600, %v5264, %v5265
    %v5267 = vsel %vm3602, %v5264, %v5266
    %v5268 = vsel %vm3604, %v5264, %v5267
    %5269 = vrot.lane.b32.xlu0 %v5268, 32
    %v5270 = vpop.permute.xlu0 %5269
    %5272 = vst.msk [vmem:[#allocation3 + $0x14] sm:$0x3] %vm3649, %v5270
    %v5273 = vld [vmem:[%s3554 + $0x14] sm:$0x1]
    %v5274 = vld [vmem:[%s3554 + $0x8c] sm:$0x1]
    %v5275 = vld [vmem:[%s3554 + $0x15] sm:$0x1]
    %v5276 = vld [vmem:[%s3554 + $0x8d] sm:$0x1]
    %v5277 = vmax.f32 %v5273, %v5275
    %v5278 = vmax.f32 %v5274, %v5276
    %v5279 = vld [vmem:[%s3554 + $0x16] sm:$0x1]
    %v5280 = vld [vmem:[%s3554 + $0x8e] sm:$0x1]
    %v5281 = vmax.f32 %v5277, %v5279
    %v5282 = vmax.f32 %v5278, %v5280
    %5285 = vrot.lane.b32.xlu0 %v5281, 127
    %v5286 = vpop.permute.xlu0 %5285
    %5287 = vrot.lane.b32.xlu0 %v5282, 127
    %v5288 = vpop.permute.xlu0 %5287
    %v5291 = vmax.f32 %v5281, %v5286
    %v5292 = vmax.f32 %v5282, %v5288
    %5293 = vrot.lane.b32.xlu0 %v5281, 126
    %v5294 = vpop.permute.xlu0 %5293
    %5295 = vrot.lane.b32.xlu0 %v5282, 126
    %v5296 = vpop.permute.xlu0 %5295
    %v5299 = vmax.f32 %v5291, %v5294
    %v5300 = vmax.f32 %v5292, %v5296
    %v5303 = vsel %vm3593, %v5299, %v5299
    %v5304 = vsel %vm3595, %v5299, %v5303
    %v5305 = vrot.slane %v5300, 7
    %v5306 = vsel %vm3598, %v5305, %v5304
    %v5307 = vsel %vm3600, %v5305, %v5306
    %v5308 = vsel %vm3602, %v5305, %v5307
    %v5309 = vsel %vm3604, %v5305, %v5308
    %5310 = vrot.lane.b32.xlu0 %v5309, 64
    %v5311 = vpop.permute.xlu0 %5310
    %5313 = vst.msk [vmem:[#allocation3 + $0x14] sm:$0x3] %vm3691, %v5311
    %v5314 = vld [vmem:[%s3554 + $0x16] sm:$0x1]
    %v5315 = vld [vmem:[%s3554 + $0x8e] sm:$0x1]
    %v5316 = vld [vmem:[%s3554 + $0x17] sm:$0x1]
    %v5317 = vld [vmem:[%s3554 + $0x8f] sm:$0x1]
    %v5318 = vmax.f32 %v5314, %v5316
    %v5319 = vmax.f32 %v5315, %v5317
    %v5320 = vld [vmem:[%s3554 + $0x18] sm:$0x1]
    %v5321 = vld [vmem:[%s3554 + $0x90] sm:$0x1]
    %v5322 = vmax.f32 %v5318, %v5320
    %v5323 = vmax.f32 %v5319, %v5321
    %5326 = vrot.lane.b32.xlu0 %v5322, 127
    %v5327 = vpop.permute.xlu0 %5326
    %5328 = vrot.lane.b32.xlu0 %v5323, 127
    %v5329 = vpop.permute.xlu0 %5328
    %v5332 = vmax.f32 %v5322, %v5327
    %v5333 = vmax.f32 %v5323, %v5329
    %5334 = vrot.lane.b32.xlu0 %v5322, 126
    %v5335 = vpop.permute.xlu0 %5334
    %5336 = vrot.lane.b32.xlu0 %v5323, 126
    %v5337 = vpop.permute.xlu0 %5336
    %v5340 = vmax.f32 %v5332, %v5335
    %v5341 = vmax.f32 %v5333, %v5337
    %v5344 = vsel %vm3593, %v5340, %v5340
    %v5345 = vsel %vm3595, %v5340, %v5344
    %v5346 = vrot.slane %v5341, 7
    %v5347 = vsel %vm3598, %v5346, %v5345
    %v5348 = vsel %vm3600, %v5346, %v5347
    %v5349 = vsel %vm3602, %v5346, %v5348
    %v5350 = vsel %vm3604, %v5346, %v5349
    %5351 = vrot.lane.b32.xlu0 %v5350, 96
    %v5352 = vpop.permute.xlu0 %5351
    %5354 = vst.msk [vmem:[#allocation3 + $0x14] sm:$0x3] %vm3733, %v5352
    %v5355 = vld [vmem:[%s3554 + $0x18] sm:$0x1]
    %v5356 = vld [vmem:[%s3554 + $0x90] sm:$0x1]
    %v5357 = vld [vmem:[%s3554 + $0x19] sm:$0x1]
    %v5358 = vld [vmem:[%s3554 + $0x91] sm:$0x1]
    %v5359 = vmax.f32 %v5355, %v5357
    %v5360 = vmax.f32 %v5356, %v5358
    %v5361 = vld [vmem:[%s3554 + $0x1a] sm:$0x1]
    %v5362 = vld [vmem:[%s3554 + $0x92] sm:$0x1]
    %v5363 = vmax.f32 %v5359, %v5361
    %v5364 = vmax.f32 %v5360, %v5362
    %5367 = vrot.lane.b32.xlu0 %v5363, 127
    %v5368 = vpop.permute.xlu0 %5367
    %5369 = vrot.lane.b32.xlu0 %v5364, 127
    %v5370 = vpop.permute.xlu0 %5369
    %v5373 = vmax.f32 %v5363, %v5368
    %v5374 = vmax.f32 %v5364, %v5370
    %5375 = vrot.lane.b32.xlu0 %v5363, 126
    %v5376 = vpop.permute.xlu0 %5375
    %5377 = vrot.lane.b32.xlu0 %v5364, 126
    %v5378 = vpop.permute.xlu0 %5377
    %v5381 = vmax.f32 %v5373, %v5376
    %v5382 = vmax.f32 %v5374, %v5378
    %v5385 = vsel %vm3593, %v5381, %v5381
    %v5386 = vsel %vm3595, %v5381, %v5385
    %v5387 = vrot.slane %v5382, 7
    %v5388 = vsel %vm3598, %v5387, %v5386
    %v5389 = vsel %vm3600, %v5387, %v5388
    %v5390 = vsel %vm3602, %v5387, %v5389
    %v5391 = vsel %vm3604, %v5387, %v5390
    %5393 = vst.msk [vmem:[#allocation3 + $0x16] sm:$0x3] %vm3607, %v5391
    %v5394 = vld [vmem:[%s3554 + $0x1a] sm:$0x1]
    %v5395 = vld [vmem:[%s3554 + $0x92] sm:$0x1]
    %v5396 = vld [vmem:[%s3554 + $0x1b] sm:$0x1]
    %v5397 = vld [vmem:[%s3554 + $0x93] sm:$0x1]
    %v5398 = vmax.f32 %v5394, %v5396
    %v5399 = vmax.f32 %v5395, %v5397
    %v5400 = vld [vmem:[%s3554 + $0x1c] sm:$0x1]
    %v5401 = vld [vmem:[%s3554 + $0x94] sm:$0x1]
    %v5402 = vmax.f32 %v5398, %v5400
    %v5403 = vmax.f32 %v5399, %v5401
    %5406 = vrot.lane.b32.xlu0 %v5402, 127
    %v5407 = vpop.permute.xlu0 %5406
    %5408 = vrot.lane.b32.xlu0 %v5403, 127
    %v5409 = vpop.permute.xlu0 %5408
    %v5412 = vmax.f32 %v5402, %v5407
    %v5413 = vmax.f32 %v5403, %v5409
    %5414 = vrot.lane.b32.xlu0 %v5402, 126
    %v5415 = vpop.permute.xlu0 %5414
    %5416 = vrot.lane.b32.xlu0 %v5403, 126
    %v5417 = vpop.permute.xlu0 %5416
    %v5420 = vmax.f32 %v5412, %v5415
    %v5421 = vmax.f32 %v5413, %v5417
    %v5424 = vsel %vm3593, %v5420, %v5420
    %v5425 = vsel %vm3595, %v5420, %v5424
    %v5426 = vrot.slane %v5421, 7
    %v5427 = vsel %vm3598, %v5426, %v5425
    %v5428 = vsel %vm3600, %v5426, %v5427
    %v5429 = vsel %vm3602, %v5426, %v5428
    %v5430 = vsel %vm3604, %v5426, %v5429
    %5431 = vrot.lane.b32.xlu0 %v5430, 32
    %v5432 = vpop.permute.xlu0 %5431
    %5434 = vst.msk [vmem:[#allocation3 + $0x16] sm:$0x3] %vm3649, %v5432
    %v5435 = vld [vmem:[%s3554 + $0x1c] sm:$0x1]
    %v5436 = vld [vmem:[%s3554 + $0x94] sm:$0x1]
    %v5437 = vld [vmem:[%s3554 + $0x1d] sm:$0x1]
    %v5438 = vld [vmem:[%s3554 + $0x95] sm:$0x1]
    %v5439 = vmax.f32 %v5435, %v5437
    %v5440 = vmax.f32 %v5436, %v5438
    %v5441 = vld [vmem:[%s3554 + $0x1e] sm:$0x1]
    %v5442 = vld [vmem:[%s3554 + $0x96] sm:$0x1]
    %v5443 = vmax.f32 %v5439, %v5441
    %v5444 = vmax.f32 %v5440, %v5442
    %5447 = vrot.lane.b32.xlu0 %v5443, 127
    %v5448 = vpop.permute.xlu0 %5447
    %5449 = vrot.lane.b32.xlu0 %v5444, 127
    %v5450 = vpop.permute.xlu0 %5449
    %v5453 = vmax.f32 %v5443, %v5448
    %v5454 = vmax.f32 %v5444, %v5450
    %5455 = vrot.lane.b32.xlu0 %v5443, 126
    %v5456 = vpop.permute.xlu0 %5455
    %5457 = vrot.lane.b32.xlu0 %v5444, 126
    %v5458 = vpop.permute.xlu0 %5457
    %v5461 = vmax.f32 %v5453, %v5456
    %v5462 = vmax.f32 %v5454, %v5458
    %v5465 = vsel %vm3593, %v5461, %v5461
    %v5466 = vsel %vm3595, %v5461, %v5465
    %v5467 = vrot.slane %v5462, 7
    %v5468 = vsel %vm3598, %v5467, %v5466
    %v5469 = vsel %vm3600, %v5467, %v5468
    %v5470 = vsel %vm3602, %v5467, %v5469
    %v5471 = vsel %vm3604, %v5467, %v5470
    %5472 = vrot.lane.b32.xlu0 %v5471, 64
    %v5473 = vpop.permute.xlu0 %5472
    %5475 = vst.msk [vmem:[#allocation3 + $0x16] sm:$0x3] %vm3691, %v5473
    %v5476 = vld [vmem:[%s3554 + $0x1e] sm:$0x1]
    %v5477 = vld [vmem:[%s3554 + $0x96] sm:$0x1]
    %v5478 = vld [vmem:[%s3554 + $0x1f] sm:$0x1]
    %v5479 = vld [vmem:[%s3554 + $0x97] sm:$0x1]
    %v5480 = vmax.f32 %v5476, %v5478
    %v5481 = vmax.f32 %v5477, %v5479
    %v5482 = vld [vmem:[%s3554 + $0x20] sm:$0x1]
    %v5483 = vld [vmem:[%s3554 + $0x98] sm:$0x1]
    %v5484 = vmax.f32 %v5480, %v5482
    %v5485 = vmax.f32 %v5481, %v5483
    %5488 = vrot.lane.b32.xlu0 %v5484, 127
    %v5489 = vpop.permute.xlu0 %5488
    %5490 = vrot.lane.b32.xlu0 %v5485, 127
    %v5491 = vpop.permute.xlu0 %5490
    %v5494 = vmax.f32 %v5484, %v5489
    %v5495 = vmax.f32 %v5485, %v5491
    %5496 = vrot.lane.b32.xlu0 %v5484, 126
    %v5497 = vpop.permute.xlu0 %5496
    %5498 = vrot.lane.b32.xlu0 %v5485, 126
    %v5499 = vpop.permute.xlu0 %5498
    %v5502 = vmax.f32 %v5494, %v5497
    %v5503 = vmax.f32 %v5495, %v5499
    %v5506 = vsel %vm3593, %v5502, %v5502
    %v5507 = vsel %vm3595, %v5502, %v5506
    %v5508 = vrot.slane %v5503, 7
    %v5509 = vsel %vm3598, %v5508, %v5507
    %v5510 = vsel %vm3600, %v5508, %v5509
    %v5511 = vsel %vm3602, %v5508, %v5510
    %v5512 = vsel %vm3604, %v5508, %v5511
    %5513 = vrot.lane.b32.xlu0 %v5512, 96
    %v5514 = vpop.permute.xlu0 %5513
    %5516 = vst.msk [vmem:[#allocation3 + $0x16] sm:$0x3] %vm3733, %v5514
    %v5517 = vld [vmem:[#allocation3] sm:$0xff]
    %v5518 = vld [vmem:[#allocation3 + $0x8] sm:$0xff]
    %v5519 = vld [vmem:[#allocation3 + $0x10] sm:$0xff]
    %v5520 = vld [vmem:[%s3] sm:$0xff]
    %v5521 = vld [vmem:[%s3 + $0x8] sm:$0xff]
    %v5522 = vld [vmem:[%s3 + $0x10] sm:$0xff]
    %v5523 = vld [vmem:[%s3 + $0x18] sm:$0xff]
    %v5524 = vld [vmem:[%s3 + $0x20] sm:$0xff]
    %v5525 = vld [vmem:[%s3 + $0x28] sm:$0xff]
    %v5526 = vld [vmem:[%s3 + $0x30] sm:$0xff]
    %v5527 = vld [vmem:[%s3 + $0x38] sm:$0xff]
    %v5528 = vld [vmem:[%s3 + $0x40] sm:$0xff]
    %v5529 = vld [vmem:[%s3 + $0x48] sm:$0xff]
    %v5530 = vld [vmem:[%s3 + $0x50] sm:$0xff]
    %v5531 = vld [vmem:[%s3 + $0x58] sm:$0xff]
    %v5532 = vld [vmem:[%s3 + $0x60] sm:$0xff]
    %v5533 = vld [vmem:[%s3 + $0x68] sm:$0xff]
    %v5534 = vld [vmem:[%s3 + $0x70] sm:$0xff]
    %v5535 = vld [vmem:[%s3 + $0x78] sm:$0xff]
    %v5536 = vld [vmem:[%s3 + $0x80] sm:$0xff]
    %v5537 = vld [vmem:[%s3 + $0x88] sm:$0xff]
    %v5538 = vld [vmem:[%s3 + $0x90] sm:$0xff]
    %v5539 = vld [vmem:[%s3 + $0x98] sm:$0xff]
    %v5540 = vld [vmem:[%s3 + $0xa0] sm:$0xff]
    %v5541 = vld [vmem:[%s3 + $0xa8] sm:$0xff]
    %v5542 = vld [vmem:[%s3 + $0xb0] sm:$0xff]
    %v5543 = vld [vmem:[%s3 + $0xb8] sm:$0xff]
    %v5544 = vld [vmem:[%s3 + $0xc0] sm:$0xff]
    %v5545 = vld [vmem:[%s3 + $0xc8] sm:$0xff]
    %v5546 = vld [vmem:[%s3 + $0xd0] sm:$0xff]
    %v5547 = vld [vmem:[%s3 + $0xd8] sm:$0xff]
    %v5548 = vld [vmem:[%s3 + $0xe0] sm:$0xff]
    %v5549 = vld [vmem:[%s3 + $0xe8] sm:$0xff]
    %v5550 = vld [vmem:[%s3 + $0xf0] sm:$0xff]
    %v5551 = vld [vmem:[%s3 + $0xf8] sm:$0xff]
    %v5552 = vld [vmem:[%s3 + $0x100] sm:$0xff]
    %v5553 = vld [vmem:[%s3 + $0x108] sm:$0xff]
    %v5554 = vld [vmem:[%s3 + $0x110] sm:$0xff]
    %v5555 = vld [vmem:[%s3 + $0x118] sm:$0xff]
    %v5556 = vld [vmem:[%s3 + $0x120] sm:$0xff]
    %v5557 = vld [vmem:[%s3 + $0x128] sm:$0xff]
    %v5558 = vld [vmem:[%s3 + $0x130] sm:$0xff]
    %v5559 = vld [vmem:[%s3 + $0x138] sm:$0xff]
    %v5560 = vld [vmem:[%s3 + $0x140] sm:$0xff]
    %v5561 = vld [vmem:[%s3 + $0x148] sm:$0xff]
    %v5562 = vld [vmem:[%s3 + $0x150] sm:$0xff]
    %v5563 = vld [vmem:[%s3 + $0x158] sm:$0xff]
    %v5564 = vld [vmem:[%s3 + $0x160] sm:$0xff]
    %v5565 = vld [vmem:[%s3 + $0x168] sm:$0xff]
    %v5566 = vld [vmem:[%s3 + $0x170] sm:$0xff]
    %v5567 = vld [vmem:[%s3 + $0x178] sm:$0xff]
    %v5568 = vld [vmem:[%s3 + $0x180] sm:$0xff]
    %v5569 = vld [vmem:[%s3 + $0x188] sm:$0xff]
    %v5570 = vld [vmem:[%s3 + $0x190] sm:$0xff]
    %v5571 = vld [vmem:[%s3 + $0x198] sm:$0xff]
    %v5572 = vld [vmem:[%s3 + $0x1a0] sm:$0xff]
    %v5573 = vld [vmem:[%s3 + $0x1a8] sm:$0xff]
    %v5574 = vld [vmem:[%s3 + $0x1b0] sm:$0xff]
    %v5575 = vld [vmem:[%s3 + $0x1b8] sm:$0xff]
    %v5576 = vld [vmem:[%s3 + $0x1c0] sm:$0xff]
    %v5577 = vld [vmem:[%s3 + $0x1c8] sm:$0xff]
    %v5578 = vld [vmem:[%s3 + $0x1d0] sm:$0xff]
    %v5579 = vld [vmem:[%s3 + $0x1d8] sm:$0xff]
    %v5580 = vld [vmem:[%s3 + $0x1e0] sm:$0xff]
    %v5581 = vld [vmem:[%s3 + $0x1e8] sm:$0xff]
    %v5582 = vld [vmem:[%s3 + $0x1f0] sm:$0xff]
    %v5583 = vld [vmem:[%s3 + $0x1f8] sm:$0xff]
    %v5584 = vld [vmem:[%s3 + $0x200] sm:$0xff]
    %v5585 = vld [vmem:[%s3 + $0x208] sm:$0xff]
    %v5586 = vld [vmem:[%s3 + $0x210] sm:$0xff]
    %v5587 = vld [vmem:[%s3 + $0x218] sm:$0xff]
    %v5588 = vld [vmem:[%s3 + $0x220] sm:$0xff]
    %v5589 = vld [vmem:[%s3 + $0x228] sm:$0xff]
    %v5590 = vld [vmem:[%s3 + $0x230] sm:$0xff]
    %v5591 = vld [vmem:[%s3 + $0x238] sm:$0xff]
    %v5592 = vld [vmem:[%s3 + $0x240] sm:$0xff]
    %v5593 = vld [vmem:[%s3 + $0x248] sm:$0xff]
    %v5594 = vld [vmem:[%s3 + $0x250] sm:$0xff]
    %v5595 = vld [vmem:[%s3 + $0x258] sm:$0xff]
    %v5596 = vld [vmem:[%s3 + $0x260] sm:$0xff]
    %v5597 = vld [vmem:[%s3 + $0x268] sm:$0xff]
    %v5598 = vld [vmem:[%s3 + $0x270] sm:$0xff]
    %v5599 = vld [vmem:[%s3 + $0x278] sm:$0xff]
    %v5600 = vld [vmem:[%s3 + $0x280] sm:$0xff]
    %v5601 = vld [vmem:[%s3 + $0x288] sm:$0xff]
    %v5602 = vld [vmem:[%s3 + $0x290] sm:$0xff]
    %v5603 = vld [vmem:[%s3 + $0x298] sm:$0xff]
    %v5604 = vld [vmem:[%s3 + $0x2a0] sm:$0xff]
    %v5605 = vld [vmem:[%s3 + $0x2a8] sm:$0xff]
    %v5606 = vld [vmem:[%s3 + $0x2b0] sm:$0xff]
    %v5607 = vld [vmem:[%s3 + $0x2b8] sm:$0xff]
    %v5608 = vld [vmem:[%s3 + $0x2c0] sm:$0xff]
    %v5609 = vld [vmem:[%s3 + $0x2c8] sm:$0xff]
    %v5610 = vld [vmem:[%s3 + $0x2d0] sm:$0xff]
    %v5611 = vld [vmem:[%s3 + $0x2d8] sm:$0xff]
    %v5612 = vld [vmem:[%s3 + $0x2e0] sm:$0xff]
    %v5613 = vld [vmem:[%s3 + $0x2e8] sm:$0xff]
    %v5614 = vld [vmem:[%s3 + $0x2f0] sm:$0xff]
    %v5615 = vld [vmem:[%s3 + $0x2f8] sm:$0xff]
    %v5616 = vld [vmem:[%s3 + $0x300] sm:$0xff]
    %v5617 = vld [vmem:[%s3 + $0x308] sm:$0xff]
    %v5618 = vld [vmem:[%s3 + $0x310] sm:$0xff]
    %v5619 = vld [vmem:[%s3 + $0x318] sm:$0xff]
    %v5620 = vld [vmem:[%s3 + $0x320] sm:$0xff]
    %v5621 = vld [vmem:[%s3 + $0x328] sm:$0xff]
    %v5622 = vld [vmem:[%s3 + $0x330] sm:$0xff]
    %v5623 = vld [vmem:[%s3 + $0x338] sm:$0xff]
    %v5624 = vld [vmem:[%s3 + $0x340] sm:$0xff]
    %v5625 = vld [vmem:[%s3 + $0x348] sm:$0xff]
    %v5626 = vld [vmem:[%s3 + $0x350] sm:$0xff]
    %v5627 = vld [vmem:[%s3 + $0x358] sm:$0xff]
    %v5628 = vld [vmem:[%s3 + $0x360] sm:$0xff]
    %v5629 = vld [vmem:[%s3 + $0x368] sm:$0xff]
    %v5630 = vld [vmem:[%s3 + $0x370] sm:$0xff]
    %v5631 = vld [vmem:[%s3 + $0x378] sm:$0xff]
    %v5632 = vld [vmem:[%s3 + $0x380] sm:$0xff]
    %v5633 = vld [vmem:[%s3 + $0x388] sm:$0xff]
    %v5634 = vld [vmem:[%s3 + $0x390] sm:$0xff]
    %v5635 = vld [vmem:[%s3 + $0x398] sm:$0xff]
    %v5636 = vld [vmem:[%s3 + $0x3a0] sm:$0xff]
    %v5637 = vld [vmem:[%s3 + $0x3a8] sm:$0xff]
    %v5638 = vld [vmem:[%s3 + $0x3b0] sm:$0xff]
    %v5639 = vld [vmem:[%s3 + $0x3b8] sm:$0xff]
    %v5640 = vld [vmem:[%s3 + $0x3c0] sm:$0xff]
    %v5641 = vld [vmem:[%s3 + $0x3c8] sm:$0xff]
    %v5642 = vld [vmem:[%s3 + $0x3d0] sm:$0xff]
    %v5643 = vld [vmem:[%s3 + $0x3d8] sm:$0xff]
    %v5644 = vld [vmem:[%s3 + $0x3e0] sm:$0xff]
    %v5645 = vld [vmem:[%s3 + $0x3e8] sm:$0xff]
    %v5646 = vld [vmem:[%s3 + $0x3f0] sm:$0xff]
    %v5647 = vld [vmem:[%s3 + $0x3f8] sm:$0xff]
    %v5648 = vld [vmem:[%s3 + $0x400] sm:$0xff]
    %v5649 = vld [vmem:[%s3 + $0x408] sm:$0xff]
    %v5650 = vld [vmem:[%s3 + $0x410] sm:$0xff]
    %v5651 = vld [vmem:[%s3 + $0x418] sm:$0xff]
    %v5652 = vld [vmem:[%s3 + $0x420] sm:$0xff]
    %v5653 = vld [vmem:[%s3 + $0x428] sm:$0xff]
    %v5654 = vld [vmem:[%s3 + $0x430] sm:$0xff]
    %v5655 = vld [vmem:[%s3 + $0x438] sm:$0xff]
    %v5656 = vld [vmem:[%s3 + $0x440] sm:$0xff]
    %v5657 = vld [vmem:[%s3 + $0x448] sm:$0xff]
    %v5658 = vld [vmem:[%s3 + $0x450] sm:$0xff]
    %v5659 = vld [vmem:[%s3 + $0x458] sm:$0xff]
    %v5660 = vld [vmem:[%s3 + $0x460] sm:$0xff]
    %v5661 = vld [vmem:[%s3 + $0x468] sm:$0xff]
    %v5662 = vld [vmem:[%s3 + $0x470] sm:$0xff]
    %v5663 = vld [vmem:[%s3 + $0x478] sm:$0xff]
    %v5664 = vld [vmem:[%s3 + $0x480] sm:$0xff]
    %v5665 = vld [vmem:[%s3 + $0x488] sm:$0xff]
    %v5666 = vld [vmem:[%s3 + $0x490] sm:$0xff]
    %v5667 = vld [vmem:[%s3 + $0x498] sm:$0xff]
    %v5668 = vld [vmem:[%s3 + $0x4a0] sm:$0xff]
    %v5669 = vld [vmem:[%s3 + $0x4a8] sm:$0xff]
    %v5670 = vld [vmem:[%s3 + $0x4b0] sm:$0xff]
    %v5671 = vld [vmem:[%s3 + $0x4b8] sm:$0xff]
    %v5672 = vld [vmem:[%s3 + $0x4c0] sm:$0xff]
    %v5673 = vld [vmem:[%s3 + $0x4c8] sm:$0xff]
    %v5674 = vld [vmem:[%s3 + $0x4d0] sm:$0xff]
    %v5675 = vld [vmem:[%s3 + $0x4d8] sm:$0xff]
    %v5676 = vld [vmem:[%s3 + $0x4e0] sm:$0xff]
    %v5677 = vld [vmem:[%s3 + $0x4e8] sm:$0xff]
    %v5678 = vld [vmem:[%s3 + $0x4f0] sm:$0xff]
    %v5679 = vld [vmem:[%s3 + $0x4f8] sm:$0xff]
    %v5680 = vld [vmem:[%s3 + $0x500] sm:$0xff]
    %v5681 = vld [vmem:[%s3 + $0x508] sm:$0xff]
    %v5682 = vld [vmem:[%s3 + $0x510] sm:$0xff]
    %v5683 = vld [vmem:[%s3 + $0x518] sm:$0xff]
    %v5684 = vld [vmem:[%s3 + $0x520] sm:$0xff]
    %v5685 = vld [vmem:[%s3 + $0x528] sm:$0xff]
    %v5686 = vld [vmem:[%s3 + $0x530] sm:$0xff]
    %v5687 = vld [vmem:[%s3 + $0x538] sm:$0xff]
    %v5688 = vld [vmem:[%s3 + $0x540] sm:$0xff]
    %v5689 = vld [vmem:[%s3 + $0x548] sm:$0xff]
    %v5690 = vld [vmem:[%s3 + $0x550] sm:$0xff]
    %v5691 = vld [vmem:[%s3 + $0x558] sm:$0xff]
    %v5692 = vld [vmem:[%s3 + $0x560] sm:$0xff]
    %v5693 = vld [vmem:[%s3 + $0x568] sm:$0xff]
    %v5694 = vld [vmem:[%s3 + $0x570] sm:$0xff]
    %v5695 = vld [vmem:[%s3 + $0x578] sm:$0xff]
    %v5696 = vld [vmem:[%s3 + $0x580] sm:$0xff]
    %v5697 = vld [vmem:[%s3 + $0x588] sm:$0xff]
    %v5698 = vld [vmem:[%s3 + $0x590] sm:$0xff]
    %v5699 = vld [vmem:[%s3 + $0x598] sm:$0xff]
    %v5700 = vld [vmem:[%s3 + $0x5a0] sm:$0xff]
    %v5701 = vld [vmem:[%s3 + $0x5a8] sm:$0xff]
    %v5702 = vld [vmem:[%s3 + $0x5b0] sm:$0xff]
    %v5703 = vld [vmem:[%s3 + $0x5b8] sm:$0xff]
    %v5704 = vld [vmem:[%s3 + $0x5c0] sm:$0xff]
    %v5705 = vld [vmem:[%s3 + $0x5c8] sm:$0xff]
    %v5706 = vld [vmem:[%s3 + $0x5d0] sm:$0xff]
    %v5707 = vld [vmem:[%s3 + $0x5d8] sm:$0xff]
    %v5708 = vld [vmem:[%s3 + $0x5e0] sm:$0xff]
    %v5709 = vld [vmem:[%s3 + $0x5e8] sm:$0xff]
    %v5710 = vld [vmem:[%s3 + $0x5f0] sm:$0xff]
    %v5711 = vld [vmem:[%s3 + $0x5f8] sm:$0xff]
    %v5712 = vld [vmem:[%s4] sm:$0x1]
    %v5714 = vperm.slane %v5712, 0
    %5719 = vst [vmem:[#allocation1] ss:$4 sm:$0xff] %v5517
    %s5720 = scalar_lea.vmem [#allocation1], 32
    %5721 = vst [vmem:[%s5720] ss:$4 sm:$0xff] %v5518
    %v5722 = vld.sshfl [vmem:[#allocation1] sm:$0xff pattern:$0x73625140]
    %v5723 = vld.sshfl [vmem:[#allocation1 + $0x8] sm:$0xff pattern:$0x73625140]
    %v5724 = vld.sshfl [vmem:[#allocation1 + $0x10] sm:$0xff pattern:$0x73625140]
    %v5725 = vld.sshfl [vmem:[#allocation1 + $0x18] sm:$0xff pattern:$0x73625140]
    %v5726 = vld.sshfl [vmem:[#allocation1 + $0x20] sm:$0xff pattern:$0x73625140]
    %v5727 = vld.sshfl [vmem:[#allocation1 + $0x28] sm:$0xff pattern:$0x73625140]
    %v5728 = vld.sshfl [vmem:[#allocation1 + $0x30] sm:$0xff pattern:$0x73625140]
    %v5729 = vld.sshfl [vmem:[#allocation1 + $0x38] sm:$0xff pattern:$0x73625140]
    %5730 = vst [vmem:[#allocation1] ss:$4 sm:$0xff] %v5519
    %v5731 = vld.sshfl [vmem:[#allocation1] sm:$0xff pattern:$0x73625140]
    %v5732 = vld.sshfl [vmem:[#allocation1 + $0x8] sm:$0xff pattern:$0x73625140]
    %v5733 = vld.sshfl [vmem:[#allocation1 + $0x10] sm:$0xff pattern:$0x73625140]
    %v5734 = vld.sshfl [vmem:[#allocation1 + $0x18] sm:$0xff pattern:$0x73625140]
    %5747 = vmatpush.msra.mxu0 %v5535
    %5748 = vmatpush.msra.mxu0 %v5534
    %5749 = vmatpush.msra.mxu0 %v5533
    %5750 = vmatpush.msra.mxu0 %v5532
    %5751 = vmatpush.msra.mxu0 %v5531
    %5752 = vmatpush.msra.mxu0 %v5530
    %5753 = vmatpush.msra.mxu0 %v5529
    %5754 = vmatpush.msra.mxu0 %v5528
    %5755 = vmatpush.msra.mxu0 %v5527
    %5756 = vmatpush.msra.mxu0 %v5526
    %5757 = vmatpush.msra.mxu0 %v5525
    %5758 = vmatpush.msra.mxu0 %v5524
    %5759 = vmatpush.msra.mxu0 %v5523
    %5760 = vmatpush.msra.mxu0 %v5522
    %5761 = vmatpush.msra.mxu0 %v5521
    %5762 = vmatpush.msra.mxu0 %v5520
    %5763 = vmatmul.f32.gmra.mxu0 %v5722
    %v5764 = vpop.f32.mrf.mxu0
    %v5765 = vadd.f32 %v5714, %v5764
    %5766 = vdwg.mxu0
    %5767 = vmatpush.msra.mxu0 %v5551
    %5768 = vmatpush.msra.mxu0 %v5550
    %5769 = vmatpush.msra.mxu0 %v5549
    %5770 = vmatpush.msra.mxu0 %v5548
    %5771 = vmatpush.msra.mxu0 %v5547
    %5772 = vmatpush.msra.mxu0 %v5546
    %5773 = vmatpush.msra.mxu0 %v5545
    %5774 = vmatpush.msra.mxu0 %v5544
    %5775 = vmatpush.msra.mxu0 %v5543
    %5776 = vmatpush.msra.mxu0 %v5542
    %5777 = vmatpush.msra.mxu0 %v5541
    %5778 = vmatpush.msra.mxu0 %v5540
    %5779 = vmatpush.msra.mxu0 %v5539
    %5780 = vmatpush.msra.mxu0 %v5538
    %5781 = vmatpush.msra.mxu0 %v5537
    %5782 = vmatpush.msra.mxu0 %v5536
    %5783 = vmatmul.f32.gmra.mxu0 %v5723
    %v5784 = vpop.f32.mrf.mxu0
    %v5785 = vadd.f32 %v5765, %v5784
    %5786 = vdwg.mxu0
    %5787 = vmatpush.msra.mxu0 %v5567
    %5788 = vmatpush.msra.mxu0 %v5566
    %5789 = vmatpush.msra.mxu0 %v5565
    %5790 = vmatpush.msra.mxu0 %v5564
    %5791 = vmatpush.msra.mxu0 %v5563
    %5792 = vmatpush.msra.mxu0 %v5562
    %5793 = vmatpush.msra.mxu0 %v5561
    %5794 = vmatpush.msra.mxu0 %v5560
    %5795 = vmatpush.msra.mxu0 %v5559
    %5796 = vmatpush.msra.mxu0 %v5558
    %5797 = vmatpush.msra.mxu0 %v5557
    %5798 = vmatpush.msra.mxu0 %v5556
    %5799 = vmatpush.msra.mxu0 %v5555
    %5800 = vmatpush.msra.mxu0 %v5554
    %5801 = vmatpush.msra.mxu0 %v5553
    %5802 = vmatpush.msra.mxu0 %v5552
    %5803 = vmatmul.f32.gmra.mxu0 %v5724
    %v5804 = vpop.f32.mrf.mxu0
    %v5805 = vadd.f32 %v5785, %v5804
    %5806 = vdwg.mxu0
    %5807 = vmatpush.msra.mxu0 %v5583
    %5808 = vmatpush.msra.mxu0 %v5582
    %5809 = vmatpush.msra.mxu0 %v5581
    %5810 = vmatpush.msra.mxu0 %v5580
    %5811 = vmatpush.msra.mxu0 %v5579
    %5812 = vmatpush.msra.mxu0 %v5578
    %5813 = vmatpush.msra.mxu0 %v5577
    %5814 = vmatpush.msra.mxu0 %v5576
    %5815 = vmatpush.msra.mxu0 %v5575
    %5816 = vmatpush.msra.mxu0 %v5574
    %5817 = vmatpush.msra.mxu0 %v5573
    %5818 = vmatpush.msra.mxu0 %v5572
    %5819 = vmatpush.msra.mxu0 %v5571
    %5820 = vmatpush.msra.mxu0 %v5570
    %5821 = vmatpush.msra.mxu0 %v5569
    %5822 = vmatpush.msra.mxu0 %v5568
    %5823 = vmatmul.f32.gmra.mxu0 %v5725
    %v5824 = vpop.f32.mrf.mxu0
    %v5825 = vadd.f32 %v5805, %v5824
    %5826 = vdwg.mxu0
    %5827 = vmatpush.msra.mxu0 %v5599
    %5828 = vmatpush.msra.mxu0 %v5598
    %5829 = vmatpush.msra.mxu0 %v5597
    %5830 = vmatpush.msra.mxu0 %v5596
    %5831 = vmatpush.msra.mxu0 %v5595
    %5832 = vmatpush.msra.mxu0 %v5594
    %5833 = vmatpush.msra.mxu0 %v5593
    %5834 = vmatpush.msra.mxu0 %v5592
    %5835 = vmatpush.msra.mxu0 %v5591
    %5836 = vmatpush.msra.mxu0 %v5590
    %5837 = vmatpush.msra.mxu0 %v5589
    %5838 = vmatpush.msra.mxu0 %v5588
    %5839 = vmatpush.msra.mxu0 %v5587
    %5840 = vmatpush.msra.mxu0 %v5586
    %5841 = vmatpush.msra.mxu0 %v5585
    %5842 = vmatpush.msra.mxu0 %v5584
    %5843 = vmatmul.f32.gmra.mxu0 %v5726
    %v5844 = vpop.f32.mrf.mxu0
    %v5845 = vadd.f32 %v5825, %v5844
    %5846 = vdwg.mxu0
    %5847 = vmatpush.msra.mxu0 %v5615
    %5848 = vmatpush.msra.mxu0 %v5614
    %5849 = vmatpush.msra.mxu0 %v5613
    %5850 = vmatpush.msra.mxu0 %v5612
    %5851 = vmatpush.msra.mxu0 %v5611
    %5852 = vmatpush.msra.mxu0 %v5610
    %5853 = vmatpush.msra.mxu0 %v5609
    %5854 = vmatpush.msra.mxu0 %v5608
    %5855 = vmatpush.msra.mxu0 %v5607
    %5856 = vmatpush.msra.mxu0 %v5606
    %5857 = vmatpush.msra.mxu0 %v5605
    %5858 = vmatpush.msra.mxu0 %v5604
    %5859 = vmatpush.msra.mxu0 %v5603
    %5860 = vmatpush.msra.mxu0 %v5602
    %5861 = vmatpush.msra.mxu0 %v5601
    %5862 = vmatpush.msra.mxu0 %v5600
    %5863 = vmatmul.f32.gmra.mxu0 %v5727
    %v5864 = vpop.f32.mrf.mxu0
    %v5865 = vadd.f32 %v5845, %v5864
    %5866 = vdwg.mxu0
    %5867 = vmatpush.msra.mxu0 %v5631
    %5868 = vmatpush.msra.mxu0 %v5630
    %5869 = vmatpush.msra.mxu0 %v5629
    %5870 = vmatpush.msra.mxu0 %v5628
    %5871 = vmatpush.msra.mxu0 %v5627
    %5872 = vmatpush.msra.mxu0 %v5626
    %5873 = vmatpush.msra.mxu0 %v5625
    %5874 = vmatpush.msra.mxu0 %v5624
    %5875 = vmatpush.msra.mxu0 %v5623
    %5876 = vmatpush.msra.mxu0 %v5622
    %5877 = vmatpush.msra.mxu0 %v5621
    %5878 = vmatpush.msra.mxu0 %v5620
    %5879 = vmatpush.msra.mxu0 %v5619
    %5880 = vmatpush.msra.mxu0 %v5618
    %5881 = vmatpush.msra.mxu0 %v5617
    %5882 = vmatpush.msra.mxu0 %v5616
    %5883 = vmatmul.f32.gmra.mxu0 %v5728
    %v5884 = vpop.f32.mrf.mxu0
    %v5885 = vadd.f32 %v5865, %v5884
    %5886 = vdwg.mxu0
    %5887 = vmatpush.msra.mxu0 %v5647
    %5888 = vmatpush.msra.mxu0 %v5646
    %5889 = vmatpush.msra.mxu0 %v5645
    %5890 = vmatpush.msra.mxu0 %v5644
    %5891 = vmatpush.msra.mxu0 %v5643
    %5892 = vmatpush.msra.mxu0 %v5642
    %5893 = vmatpush.msra.mxu0 %v5641
    %5894 = vmatpush.msra.mxu0 %v5640
    %5895 = vmatpush.msra.mxu0 %v5639
    %5896 = vmatpush.msra.mxu0 %v5638
    %5897 = vmatpush.msra.mxu0 %v5637
    %5898 = vmatpush.msra.mxu0 %v5636
    %5899 = vmatpush.msra.mxu0 %v5635
    %5900 = vmatpush.msra.mxu0 %v5634
    %5901 = vmatpush.msra.mxu0 %v5633
    %5902 = vmatpush.msra.mxu0 %v5632
    %5903 = vmatmul.f32.gmra.mxu0 %v5729
    %v5904 = vpop.f32.mrf.mxu0
    %v5905 = vadd.f32 %v5885, %v5904
    %5906 = vdwg.mxu0
    %5907 = vmatpush.msra.mxu0 %v5663
    %5908 = vmatpush.msra.mxu0 %v5662
    %5909 = vmatpush.msra.mxu0 %v5661
    %5910 = vmatpush.msra.mxu0 %v5660
    %5911 = vmatpush.msra.mxu0 %v5659
    %5912 = vmatpush.msra.mxu0 %v5658
    %5913 = vmatpush.msra.mxu0 %v5657
    %5914 = vmatpush.msra.mxu0 %v5656
    %5915 = vmatpush.msra.mxu0 %v5655
    %5916 = vmatpush.msra.mxu0 %v5654
    %5917 = vmatpush.msra.mxu0 %v5653
    %5918 = vmatpush.msra.mxu0 %v5652
    %5919 = vmatpush.msra.mxu0 %v5651
    %5920 = vmatpush.msra.mxu0 %v5650
    %5921 = vmatpush.msra.mxu0 %v5649
    %5922 = vmatpush.msra.mxu0 %v5648
    %5923 = vmatmul.f32.gmra.mxu0 %v5731
    %v5924 = vpop.f32.mrf.mxu0
    %v5925 = vadd.f32 %v5905, %v5924
    %5926 = vdwg.mxu0
    %5927 = vmatpush.msra.mxu0 %v5679
    %5928 = vmatpush.msra.mxu0 %v5678
    %5929 = vmatpush.msra.mxu0 %v5677
    %5930 = vmatpush.msra.mxu0 %v5676
    %5931 = vmatpush.msra.mxu0 %v5675
    %5932 = vmatpush.msra.mxu0 %v5674
    %5933 = vmatpush.msra.mxu0 %v5673
    %5934 = vmatpush.msra.mxu0 %v5672
    %5935 = vmatpush.msra.mxu0 %v5671
    %5936 = vmatpush.msra.mxu0 %v5670
    %5937 = vmatpush.msra.mxu0 %v5669
    %5938 = vmatpush.msra.mxu0 %v5668
    %5939 = vmatpush.msra.mxu0 %v5667
    %5940 = vmatpush.msra.mxu0 %v5666
    %5941 = vmatpush.msra.mxu0 %v5665
    %5942 = vmatpush.msra.mxu0 %v5664
    %5943 = vmatmul.f32.gmra.mxu0 %v5732
    %v5944 = vpop.f32.mrf.mxu0
    %v5945 = vadd.f32 %v5925, %v5944
    %5946 = vdwg.mxu0
    %5947 = vmatpush.msra.mxu0 %v5695
    %5948 = vmatpush.msra.mxu0 %v5694
    %5949 = vmatpush.msra.mxu0 %v5693
    %5950 = vmatpush.msra.mxu0 %v5692
    %5951 = vmatpush.msra.mxu0 %v5691
    %5952 = vmatpush.msra.mxu0 %v5690
    %5953 = vmatpush.msra.mxu0 %v5689
    %5954 = vmatpush.msra.mxu0 %v5688
    %5955 = vmatpush.msra.mxu0 %v5687
    %5956 = vmatpush.msra.mxu0 %v5686
    %5957 = vmatpush.msra.mxu0 %v5685
    %5958 = vmatpush.msra.mxu0 %v5684
    %5959 = vmatpush.msra.mxu0 %v5683
    %5960 = vmatpush.msra.mxu0 %v5682
    %5961 = vmatpush.msra.mxu0 %v5681
    %5962 = vmatpush.msra.mxu0 %v5680
    %5963 = vmatmul.f32.gmra.mxu0 %v5733
    %v5964 = vpop.f32.mrf.mxu0
    %v5965 = vadd.f32 %v5945, %v5964
    %5966 = vdwg.mxu0
    %5967 = vmatpush.msra.mxu0 %v5711
    %5968 = vmatpush.msra.mxu0 %v5710
    %5969 = vmatpush.msra.mxu0 %v5709
    %5970 = vmatpush.msra.mxu0 %v5708
    %5971 = vmatpush.msra.mxu0 %v5707
    %5972 = vmatpush.msra.mxu0 %v5706
    %5973 = vmatpush.msra.mxu0 %v5705
    %5974 = vmatpush.msra.mxu0 %v5704
    %5975 = vmatpush.msra.mxu0 %v5703
    %5976 = vmatpush.msra.mxu0 %v5702
    %5977 = vmatpush.msra.mxu0 %v5701
    %5978 = vmatpush.msra.mxu0 %v5700
    %5979 = vmatpush.msra.mxu0 %v5699
    %5980 = vmatpush.msra.mxu0 %v5698
    %5981 = vmatpush.msra.mxu0 %v5697
    %5982 = vmatpush.msra.mxu0 %v5696
    %5983 = vmatmul.f32.gmra.mxu0 %v5734
    %v5984 = vpop.f32.mrf.mxu0
    %v5985 = vadd.f32 %v5965, %v5984
    %5986 = vdwg.mxu0
    %vm5987 = vcmask 74752
    %5988 = vst.msk [vmem:[#allocation9] sm:$0x3] %vm5987, %v5985
    // Predicated region
    $region30: #{tudui_forward.1} parent=1 // pred_check
      _
    $region31: #{tudui_forward.1} parent=1 // pred_check_branch
      %5990 = sbr.rel (0) target = $region33
    $region32: #{tudui_forward.1} parent=1 // pred_region
      %5992 = vsyncadd [#allocation5], 0
      %s5994 = sshll.u32 [#allocation9], 4
      %s5995 = int_to_ptr.vmem [resolvable:$true] %s5994
      %s5996 = sshll.u32 %s5, 4
      %s5997 = int_to_ptr.hbm [resolvable:$true] %s5996
      %5999 = dma.vmem_to_hbm [thread:$0]  %s5995, 32, %s5997, [#allocation5]
    $region33: #{tudui_forward.1} parent=1 // pred_fallthru
      _
    // Predicated region
    $region34: #{tudui_forward.1} parent=1 // pred_check
      _
    $region35: #{tudui_forward.1} parent=1 // pred_check_branch
      %6001 = sbr.rel (0) target = $region37
    $region36: #{tudui_forward.1} parent=1 // pred_region
      %6003 = dma.done [#allocation5], 32
    $region37: #{tudui_forward.1} parent=1 // pred_fallthru
      _
    %6004 = vsyncpa [#allocation5], 1
    %6005 = vsyncpa [#allocation6], 1
    %6006 = vsyncpa [#allocation8], 1

</llo_original>
